<compile_context>
chip_gen: v5e
topology: v5e:2x2
jax: 0.10.0
libtpu: 0.0.40
codegen_flags: <defaults>
</compile_context>

<pallas_src>
import functools

import jax
import jax.numpy as jnp
from jax.experimental import pallas as pl
from jax.experimental.pallas import tpu as pltpu


def _softplus_beta(x, beta=50.0, threshold=20.0):
    # PyTorch nn.Softplus(beta=50): (1/beta)*log1p(exp(beta*x)); linear where
    # beta*x > threshold (threshold defaults to 20).
    inv_beta = 1.0 / beta
    bx = beta * x
    safe = jnp.minimum(bx, threshold)   # keep exp() in range on the unused branch
    return jnp.where(bx > threshold, x, jnp.log1p(jnp.exp(safe)) * inv_beta)


def _implicit_lightmap_kernel(num_dir_freqs, matmul_dtype,
                              x_ref, w1_ref, b1_ref, w2_ref, b2_ref,
                              w3_ref, b3_ref, o_ref):
    # x_ref: (3, TM) f32 -- rows (samples) live on the 128-lane axis.
    x = x_ref[...].astype(jnp.float32)

    # --- positional encoding (ori=True), lane-dense (3, TM) blocks ----------
    feats = [x]
    for k in range(num_dir_freqs):
        f = float(2 ** k)
        feats.append(jnp.sin(f * x))
        feats.append(jnp.cos(f * x))

    # --- layer 1: h = W1^T @ PE + b1, as a sum of per-feature matmuls -------
    acc = None
    for k, feat in enumerate(feats):
        p = jnp.dot(w1_ref[k], feat.astype(matmul_dtype),
                    preferred_element_type=jnp.float32)            # (DH, TM)
        acc = p if acc is None else acc + p
    h = _softplus_beta(acc + b1_ref[...])                           # f32

    # --- layer 2 -------------------------------------------------------------
    h = jnp.dot(w2_ref[...], h.astype(matmul_dtype),
                preferred_element_type=jnp.float32) + b2_ref[...]
    h = _softplus_beta(h)

    # --- layer 3: (OUT, TM) output -> lane-dense stores ----------------------
    out = jnp.dot(w3_ref[...], h.astype(matmul_dtype),
                  preferred_element_type=jnp.float32) + b3_ref[...]
    o_ref[...] = out.astype(o_ref.dtype)


def _prepare_params(params, num_dir_freqs, matmul_dtype):
    """Transpose / stack the logical (in, out) weights into kernel layout."""
    w1, b1, w2, b2, w3, b3 = params
    n_feat = 1 + 2 * num_dir_freqs
    dh = w1.shape[1]
    assert w1.shape[0] == 3 * n_feat
    w1t = w1.T                                                      # (DH, 3*n_feat)
    w1_stack = jnp.stack(
        [w1t[:, 3 * k:3 * (k + 1)] for k in range(n_feat)], axis=0
    ).astype(matmul_dtype)                                          # (n_feat, DH, 3)
    w2t = w2.T.astype(matmul_dtype)                                 # (DH, DH)
    w3t = w3.T.astype(matmul_dtype)                                 # (OUT, DH)
    b1c = b1.reshape(dh, 1).astype(jnp.float32)
    b2c = b2.reshape(dh, 1).astype(jnp.float32)
    b3c = b3.reshape(-1, 1).astype(jnp.float32)
    return w1_stack, b1c, w2t, b2c, w3t, b3c


def implicit_lightmap(x, params, *, num_dir_freqs=2, tm=1024,
                      matmul_dtype=jnp.bfloat16):
    """x: (N, 3) directions.  Returns (N, out_dim)."""
    N, C = x.shape
    assert C == 3
    assert tm % 128 == 0, "row tile must be a multiple of the 128-lane width"

    # Adaptive tile: big enough to amortize grid-step overhead, but never
    # larger than N rounded up to a lane multiple (avoids heavy zero-padding).
    tm_eff = min(tm, pl.cdiv(N, 128) * 128)

    w1_stack, b1c, w2t, b2c, w3t, b3c = _prepare_params(
        params, num_dir_freqs, matmul_dtype)
    n_feat, dh, _ = w1_stack.shape
    out_dim = w3t.shape[0]

    # Transposed, lane-dense layout: rows on lanes; zero-pad rows to a tile multiple.
    n_pad = pl.cdiv(N, tm_eff) * tm_eff
    x_t = x.T.astype(jnp.float32)                                   # (3, N)
    if n_pad != N:
        x_t = jnp.pad(x_t, ((0, 0), (0, n_pad - N)))

    kernel = functools.partial(_implicit_lightmap_kernel,
                               num_dir_freqs, matmul_dtype)

    def rep(shape):
        # Whole-array (replicated) spec for the small weights: constant block
        # index -> stays resident in VMEM across grid steps.
        ndim = len(shape)
        return pl.BlockSpec(shape, lambda i, _n=ndim: (0,) * _n)

    out_t = pl.pallas_call(
        kernel,
        out_shape=jax.ShapeDtypeStruct((out_dim, n_pad), jnp.float32),
        grid_spec=pltpu.PrefetchScalarGridSpec(
            num_scalar_prefetch=0,
            grid=(n_pad // tm_eff,),
            in_specs=[
                pl.BlockSpec((C, tm_eff), lambda i: (0, i)),        # x tile (3, tm)
                rep((n_feat, dh, 3)),                               # W1^T split (5,128,3)
                rep((dh, 1)),                                       # b1
                rep((dh, dh)),                                      # W2^T (128,128)
                rep((dh, 1)),                                       # b2
                rep((out_dim, dh)),                                 # W3^T (3,128)
                rep((out_dim, 1)),                                  # b3
            ],
            out_specs=pl.BlockSpec((out_dim, tm_eff), lambda i: (0, i)),
        ),
        compiler_params=pltpu.CompilerParams(
            dimension_semantics=("parallel",),
            vmem_limit_bytes=64 * 1024 * 1024,
        ),
    )(x_t, w1_stack, b1c, w2t, b2c, w3t, b3c)

    return out_t[:, :N].T.astype(x.dtype)


def init_params(key, *, num_dir_freqs=2, dim_hidden=128, out_dim=3):
    """Deterministic synthetic init matching the nn.Linear shapes.
    Weights are stored as (in, out), i.e. transposed vs PyTorch's (out, in)."""
    in_c = 3 + 2 * 3 * num_dir_freqs  # 15
    dims = [(in_c, dim_hidden), (dim_hidden, dim_hidden), (dim_hidden, out_dim)]
    params = []
    for din, dout in dims:
        key, kw, kb = jax.random.split(key, 3)
        scale = 1.0 / jnp.sqrt(jnp.float32(din))
        w = jax.random.uniform(kw, (din, dout), jnp.float32, -scale, scale)
        b = jax.random.uniform(kb, (dout,), jnp.float32, -scale, scale)
        params += [w, b]
    return tuple(params)


def _reference(x, params, num_dir_freqs=2, matmul_dtype=jnp.bfloat16):
    """Pure-JAX reference with matched matmul precision (bf16 operands, f32 acc)."""
    w1, b1, w2, b2, w3, b3 = params
    feats = [x]
    for k in range(num_dir_freqs):
        f = float(2 ** k)
        feats += [jnp.sin(f * x), jnp.cos(f * x)]
    pe = jnp.concatenate(feats, -1)

    def mm(a, w):
        return jnp.dot(a.astype(matmul_dtype), w.astype(matmul_dtype),
                       preferred_element_type=jnp.float32)

    h = _softplus_beta(mm(pe, w1) + b1)
    h = _softplus_beta(mm(h, w2) + b2)
    return mm(h, w3) + b3


if __name__ == "__main__":
    key = jax.random.PRNGKey(0)
    kx, kp = jax.random.split(key)

    N = 1000  # number of direction samples (non-multiple of 128 -> exercises padding)
    x = jax.random.normal(kx, (N, 3), jnp.float32)
    x = x / jnp.linalg.norm(x, axis=-1, keepdims=True)   # unit directions

    params = init_params(kp)

    out = implicit_lightmap(x, params, tm=1024)
    out = jax.block_until_ready(out)

    ref = _reference(x, params)
    assert out.shape == (N, 3)
    max_err = float(jnp.max(jnp.abs(out - ref)))
    assert jnp.allclose(out, ref, atol=1e-3, rtol=1e-3), f"mismatch vs reference: {max_err}"

    print("KERNEL_OK")
</pallas_src>

<mosaic_0001>
module attributes {stable_mosaic.version = 11 : i64} {
  func.func @_implicit_lightmap_kernel(%arg0: i32, %arg1: memref<3x1024xf32, #tpu.memory_space<vmem>>, %arg2: memref<5x128x3xbf16, #tpu.memory_space<vmem>>, %arg3: memref<128x1xf32, #tpu.memory_space<vmem>>, %arg4: memref<128x128xbf16, #tpu.memory_space<vmem>>, %arg5: memref<128x1xf32, #tpu.memory_space<vmem>>, %arg6: memref<3x128xbf16, #tpu.memory_space<vmem>>, %arg7: memref<3x1xf32, #tpu.memory_space<vmem>>, %arg8: memref<3x1024xf32, #tpu.memory_space<vmem>>) attributes {dimension_semantics = [#tpu.dimension_semantics<parallel>], iteration_bounds = array<i64: 1>, scalar_prefetch = 0 : i64, scratch_operands = 0 : i64, tpu.core_type = #tpu.core_type<tc>, window_params = [{transform_indices = @transform_0, window_bounds = array<i64: 3, 1024>}, {pipeline_mode = #tpu.pipeline_mode<synchronous>, transform_indices = @transform_1, window_bounds = array<i64: 5, 128, 3>}, {pipeline_mode = #tpu.pipeline_mode<synchronous>, transform_indices = @transform_2, window_bounds = array<i64: 128, 1>}, {pipeline_mode = #tpu.pipeline_mode<synchronous>, transform_indices = @transform_3, window_bounds = array<i64: 128, 128>}, {pipeline_mode = #tpu.pipeline_mode<synchronous>, transform_indices = @transform_4, window_bounds = array<i64: 128, 1>}, {pipeline_mode = #tpu.pipeline_mode<synchronous>, transform_indices = @transform_5, window_bounds = array<i64: 3, 128>}, {pipeline_mode = #tpu.pipeline_mode<synchronous>, transform_indices = @transform_6, window_bounds = array<i64: 3, 1>}, {transform_indices = @transform_7, window_bounds = array<i64: 3, 1024>}]} {
    %c0 = arith.constant 0 : index
    %c0_0 = arith.constant 0 : index
    %0 = vector.load %arg1[%c0, %c0_0] : memref<3x1024xf32, #tpu.memory_space<vmem>>, vector<3x1024xf32>
    %cst = arith.constant 1.000000e+00 : f32
    %1 = vector.broadcast %cst : f32 to vector<3x1024xf32>
    %2 = arith.mulf %1, %0 : vector<3x1024xf32>
    %3 = math.sin %2 : vector<3x1024xf32>
    %cst_1 = arith.constant 1.000000e+00 : f32
    %4 = vector.broadcast %cst_1 : f32 to vector<3x1024xf32>
    %5 = arith.mulf %4, %0 : vector<3x1024xf32>
    %6 = math.cos %5 : vector<3x1024xf32>
    %cst_2 = arith.constant 2.000000e+00 : f32
    %7 = vector.broadcast %cst_2 : f32 to vector<3x1024xf32>
    %8 = arith.mulf %7, %0 : vector<3x1024xf32>
    %9 = math.sin %8 : vector<3x1024xf32>
    %cst_3 = arith.constant 2.000000e+00 : f32
    %10 = vector.broadcast %cst_3 : f32 to vector<3x1024xf32>
    %11 = arith.mulf %10, %0 : vector<3x1024xf32>
    %12 = math.cos %11 : vector<3x1024xf32>
    %c0_4 = arith.constant 0 : index
    %c0_5 = arith.constant 0 : index
    %c0_6 = arith.constant 0 : index
    %13 = vector.load %arg2[%c0_4, %c0_5, %c0_6] : memref<5x128x3xbf16, #tpu.memory_space<vmem>>, vector<1x128x3xbf16>
    %14 = vector.shape_cast %13 : vector<1x128x3xbf16> to vector<128x3xbf16>
    %15 = arith.truncf %0 : vector<3x1024xf32> to vector<3x1024xbf16>
    %cst_7 = arith.constant dense<0.000000e+00> : vector<128x1024xf32>
    %16 = tpu.matmul %14, %15, %cst_7 {dimension_numbers = #tpu.dot_dimension_numbers<[1], [0], [0], [1], [0, 0, 1, 1], [], []>} : vector<128x3xbf16>, vector<3x1024xbf16>, vector<128x1024xf32> -> vector<128x1024xf32>
    %c1 = arith.constant 1 : index
    %c0_8 = arith.constant 0 : index
    %c0_9 = arith.constant 0 : index
    %17 = vector.load %arg2[%c1, %c0_8, %c0_9] : memref<5x128x3xbf16, #tpu.memory_space<vmem>>, vector<1x128x3xbf16>
    %18 = vector.shape_cast %17 : vector<1x128x3xbf16> to vector<128x3xbf16>
    %19 = arith.truncf %3 : vector<3x1024xf32> to vector<3x1024xbf16>
    %cst_10 = arith.constant dense<0.000000e+00> : vector<128x1024xf32>
    %20 = tpu.matmul %18, %19, %cst_10 {dimension_numbers = #tpu.dot_dimension_numbers<[1], [0], [0], [1], [0, 0, 1, 1], [], []>} : vector<128x3xbf16>, vector<3x1024xbf16>, vector<128x1024xf32> -> vector<128x1024xf32>
    %21 = arith.addf %16, %20 : vector<128x1024xf32>
    %c2 = arith.constant 2 : index
    %c0_11 = arith.constant 0 : index
    %c0_12 = arith.constant 0 : index
    %22 = vector.load %arg2[%c2, %c0_11, %c0_12] : memref<5x128x3xbf16, #tpu.memory_space<vmem>>, vector<1x128x3xbf16>
    %23 = vector.shape_cast %22 : vector<1x128x3xbf16> to vector<128x3xbf16>
    %24 = arith.truncf %6 : vector<3x1024xf32> to vector<3x1024xbf16>
    %cst_13 = arith.constant dense<0.000000e+00> : vector<128x1024xf32>
    %25 = tpu.matmul %23, %24, %cst_13 {dimension_numbers = #tpu.dot_dimension_numbers<[1], [0], [0], [1], [0, 0, 1, 1], [], []>} : vector<128x3xbf16>, vector<3x1024xbf16>, vector<128x1024xf32> -> vector<128x1024xf32>
    %26 = arith.addf %21, %25 : vector<128x1024xf32>
    %c3 = arith.constant 3 : index
    %c0_14 = arith.constant 0 : index
    %c0_15 = arith.constant 0 : index
    %27 = vector.load %arg2[%c3, %c0_14, %c0_15] : memref<5x128x3xbf16, #tpu.memory_space<vmem>>, vector<1x128x3xbf16>
    %28 = vector.shape_cast %27 : vector<1x128x3xbf16> to vector<128x3xbf16>
    %29 = arith.truncf %9 : vector<3x1024xf32> to vector<3x1024xbf16>
    %cst_16 = arith.constant dense<0.000000e+00> : vector<128x1024xf32>
    %30 = tpu.matmul %28, %29, %cst_16 {dimension_numbers = #tpu.dot_dimension_numbers<[1], [0], [0], [1], [0, 0, 1, 1], [], []>} : vector<128x3xbf16>, vector<3x1024xbf16>, vector<128x1024xf32> -> vector<128x1024xf32>
    %31 = arith.addf %26, %30 : vector<128x1024xf32>
    %c4 = arith.constant 4 : index
    %c0_17 = arith.constant 0 : index
    %c0_18 = arith.constant 0 : index
    %32 = vector.load %arg2[%c4, %c0_17, %c0_18] : memref<5x128x3xbf16, #tpu.memory_space<vmem>>, vector<1x128x3xbf16>
    %33 = vector.shape_cast %32 : vector<1x128x3xbf16> to vector<128x3xbf16>
    %34 = arith.truncf %12 : vector<3x1024xf32> to vector<3x1024xbf16>
    %cst_19 = arith.constant dense<0.000000e+00> : vector<128x1024xf32>
    %35 = tpu.matmul %33, %34, %cst_19 {dimension_numbers = #tpu.dot_dimension_numbers<[1], [0], [0], [1], [0, 0, 1, 1], [], []>} : vector<128x3xbf16>, vector<3x1024xbf16>, vector<128x1024xf32> -> vector<128x1024xf32>
    %36 = arith.addf %31, %35 : vector<128x1024xf32>
    %c0_20 = arith.constant 0 : index
    %c0_21 = arith.constant 0 : index
    %37 = vector.load %arg3[%c0_20, %c0_21] : memref<128x1xf32, #tpu.memory_space<vmem>>, vector<128x1xf32>
    %38 = vector.broadcast %37 : vector<128x1xf32> to vector<128x1024xf32>
    %39 = arith.addf %36, %38 : vector<128x1024xf32>
    %cst_22 = arith.constant 5.000000e+01 : f32
    %40 = vector.broadcast %cst_22 : f32 to vector<128x1024xf32>
    %41 = arith.mulf %40, %39 : vector<128x1024xf32>
    %cst_23 = arith.constant 2.000000e+01 : f32
    %42 = vector.broadcast %cst_23 : f32 to vector<128x1024xf32>
    %43 = arith.minimumf %41, %42 : vector<128x1024xf32>
    %cst_24 = arith.constant 2.000000e+01 : f32
    %44 = vector.broadcast %cst_24 : f32 to vector<128x1024xf32>
    %45 = arith.cmpf ogt, %41, %44 : vector<128x1024xf32>
    %46 = math.exp %43 : vector<128x1024xf32>
    %47 = math.log1p %46 : vector<128x1024xf32>
    %cst_25 = arith.constant 2.000000e-02 : f32
    %48 = vector.broadcast %cst_25 : f32 to vector<128x1024xf32>
    %49 = arith.mulf %47, %48 : vector<128x1024xf32>
    %50 = arith.select %45, %39, %49 : vector<128x1024xi1>, vector<128x1024xf32>
    %c0_26 = arith.constant 0 : index
    %c0_27 = arith.constant 0 : index
    %51 = vector.load %arg4[%c0_26, %c0_27] : memref<128x128xbf16, #tpu.memory_space<vmem>>, vector<128x128xbf16>
    %52 = arith.truncf %50 : vector<128x1024xf32> to vector<128x1024xbf16>
    %cst_28 = arith.constant dense<0.000000e+00> : vector<128x1024xf32>
    %53 = tpu.matmul %51, %52, %cst_28 {dimension_numbers = #tpu.dot_dimension_numbers<[1], [0], [0], [1], [0, 0, 1, 1], [], []>} : vector<128x128xbf16>, vector<128x1024xbf16>, vector<128x1024xf32> -> vector<128x1024xf32>
    %c0_29 = arith.constant 0 : index
    %c0_30 = arith.constant 0 : index
    %54 = vector.load %arg5[%c0_29, %c0_30] : memref<128x1xf32, #tpu.memory_space<vmem>>, vector<128x1xf32>
    %55 = vector.broadcast %54 : vector<128x1xf32> to vector<128x1024xf32>
    %56 = arith.addf %53, %55 : vector<128x1024xf32>
    %cst_31 = arith.constant 5.000000e+01 : f32
    %57 = vector.broadcast %cst_31 : f32 to vector<128x1024xf32>
    %58 = arith.mulf %57, %56 : vector<128x1024xf32>
    %cst_32 = arith.constant 2.000000e+01 : f32
    %59 = vector.broadcast %cst_32 : f32 to vector<128x1024xf32>
    %60 = arith.minimumf %58, %59 : vector<128x1024xf32>
    %cst_33 = arith.constant 2.000000e+01 : f32
    %61 = vector.broadcast %cst_33 : f32 to vector<128x1024xf32>
    %62 = arith.cmpf ogt, %58, %61 : vector<128x1024xf32>
    %63 = math.exp %60 : vector<128x1024xf32>
    %64 = math.log1p %63 : vector<128x1024xf32>
    %cst_34 = arith.constant 2.000000e-02 : f32
    %65 = vector.broadcast %cst_34 : f32 to vector<128x1024xf32>
    %66 = arith.mulf %64, %65 : vector<128x1024xf32>
    %67 = arith.select %62, %56, %66 : vector<128x1024xi1>, vector<128x1024xf32>
    %c0_35 = arith.constant 0 : index
    %c0_36 = arith.constant 0 : index
    %68 = vector.load %arg6[%c0_35, %c0_36] : memref<3x128xbf16, #tpu.memory_space<vmem>>, vector<3x128xbf16>
    %69 = arith.truncf %67 : vector<128x1024xf32> to vector<128x1024xbf16>
    %cst_37 = arith.constant dense<0.000000e+00> : vector<3x1024xf32>
    %70 = tpu.matmul %68, %69, %cst_37 {dimension_numbers = #tpu.dot_dimension_numbers<[1], [0], [0], [1], [0, 0, 1, 1], [], []>} : vector<3x128xbf16>, vector<128x1024xbf16>, vector<3x1024xf32> -> vector<3x1024xf32>
    %c0_38 = arith.constant 0 : index
    %c0_39 = arith.constant 0 : index
    %71 = vector.load %arg7[%c0_38, %c0_39] : memref<3x1xf32, #tpu.memory_space<vmem>>, vector<3x1xf32>
    %72 = vector.broadcast %71 : vector<3x1xf32> to vector<3x1024xf32>
    %73 = arith.addf %70, %72 : vector<3x1024xf32>
    %c0_40 = arith.constant 0 : index
    %c0_41 = arith.constant 0 : index
    %74 = vector.load %arg8[%c0_40, %c0_41] : memref<3x1024xf32, #tpu.memory_space<vmem>>, vector<3x1024xf32>
    tpu.vector_store %arg8[%c0_40, %c0_41], %73 {strides = array<i32>} : memref<3x1024xf32, #tpu.memory_space<vmem>>, vector<3x1024xf32>,
    return
  }
  func.func @transform_0(%arg0: i32) -> (i32, i32) {
    %c0_i32 = arith.constant 0 : i32
    %c0_i32_0 = arith.constant 0 : i32
    return %c0_i32, %arg0 : i32, i32
  }
  func.func @transform_1(%arg0: i32) -> (i32, i32, i32) {
    %c0_i32 = arith.constant 0 : i32
    %c0_i32_0 = arith.constant 0 : i32
    %c0_i32_1 = arith.constant 0 : i32
    %c0_i32_2 = arith.constant 0 : i32
    return %c0_i32, %c0_i32_0, %c0_i32_1 : i32, i32, i32
  }
  func.func @transform_2(%arg0: i32) -> (i32, i32) {
    %c0_i32 = arith.constant 0 : i32
    %c0_i32_0 = arith.constant 0 : i32
    %c0_i32_1 = arith.constant 0 : i32
    return %c0_i32, %c0_i32_0 : i32, i32
  }
  func.func @transform_3(%arg0: i32) -> (i32, i32) {
    %c0_i32 = arith.constant 0 : i32
    %c0_i32_0 = arith.constant 0 : i32
    %c0_i32_1 = arith.constant 0 : i32
    return %c0_i32, %c0_i32_0 : i32, i32
  }
  func.func @transform_4(%arg0: i32) -> (i32, i32) {
    %c0_i32 = arith.constant 0 : i32
    %c0_i32_0 = arith.constant 0 : i32
    %c0_i32_1 = arith.constant 0 : i32
    return %c0_i32, %c0_i32_0 : i32, i32
  }
  func.func @transform_5(%arg0: i32) -> (i32, i32) {
    %c0_i32 = arith.constant 0 : i32
    %c0_i32_0 = arith.constant 0 : i32
    %c0_i32_1 = arith.constant 0 : i32
    return %c0_i32, %c0_i32_0 : i32, i32
  }
  func.func @transform_6(%arg0: i32) -> (i32, i32) {
    %c0_i32 = arith.constant 0 : i32
    %c0_i32_0 = arith.constant 0 : i32
    %c0_i32_1 = arith.constant 0 : i32
    return %c0_i32, %c0_i32_0 : i32, i32
  }
  func.func @transform_7(%arg0: i32) -> (i32, i32) {
    %c0_i32 = arith.constant 0 : i32
    %c0_i32_0 = arith.constant 0 : i32
    return %c0_i32, %arg0 : i32, i32
  }
}

</mosaic_0001>

<llo_original>
// kernel: tpu_custom_call.1
$region0: #{tpu_custom_call.1}
  #allocation0 [shape = 'u32[]', space=smem, size = 0x4, offset = 0x4, fixed_abs, tag = 'smem constant byte address 0x4 - core index']
  #allocation1 [shape = 'u32[72,128]{1,0:T(1,128)}', space=vmem, size = 0x9000, scoped, tag = 'internal scratch']
  %s0 = inlined_call_operand.vmem [shape: f32[3,1024], index: 0, kind: input, shape index: {}]
  %s1 = inlined_call_operand.vmem [shape: bf16[5,128,3], index: 1, kind: input, shape index: {}]
  %s2 = inlined_call_operand.vmem [shape: f32[128,1], index: 2, kind: input, shape index: {}]
  %s3 = inlined_call_operand.vmem [shape: bf16[128,128], index: 3, kind: input, shape index: {}]
  %s4 = inlined_call_operand.vmem [shape: f32[128,1], index: 4, kind: input, shape index: {}]
  %s5 = inlined_call_operand.vmem [shape: bf16[3,128], index: 5, kind: input, shape index: {}]
  %s6 = inlined_call_operand.vmem [shape: f32[3,1], index: 6, kind: input, shape index: {}]
  %s7 = inlined_call_operand.hbm [shape: f32[3,1024], index: 7, kind: output, shape index: {}]
  %s8 = sld [smem:[#allocation0]]
  $region38: #{tpu_custom_call.1} parent=0
    _
  %s10 = ssub.s32 1, %s8
  %s11 = scalar_select 0, %s10, %s8
  $region1: #{tpu_custom_call.1} parent=0
    #allocation2 [shape = 'u8[16384]{0}', space=vmem, size = 0x4000, scoped, tag = 'output window, operand 0, single buffered']
    #allocation3 [shape = 's32[1]{0}', space=sflag, size = 0x4, scoped, tag = 'scoped memory for tpu_custom_call.1']
    %12 = vsyncpa [#allocation3], 0
    // Predicated region
    $region2: #{tpu_custom_call.1} parent=1 // pred_check
      _
    $region3: #{tpu_custom_call.1} parent=1 // pred_check_branch
      %14 = sbr.rel (0) target = $region5
    $region4: #{tpu_custom_call.1} parent=1 // pred_region
      _
    $region5: #{tpu_custom_call.1} parent=1 // pred_fallthru
      _
    // Predicated region
    $region6: #{tpu_custom_call.1} parent=1 // pred_check
      _
    $region7: #{tpu_custom_call.1} parent=1 // pred_check_branch
      %16 = sbr.rel (0) target = $region9
    $region8: #{tpu_custom_call.1} parent=1 // pred_region
      _
    $region9: #{tpu_custom_call.1} parent=1 // pred_fallthru
      _
    // Predicated region
    $region10: #{tpu_custom_call.1} parent=1 // pred_check
      _
    $region11: #{tpu_custom_call.1} parent=1 // pred_check_branch
      %18 = sbr.rel (0) target = $region13
    $region12: #{tpu_custom_call.1} parent=1 // pred_region
      _
    $region13: #{tpu_custom_call.1} parent=1 // pred_fallthru
      _
    // Predicated region
    $region14: #{tpu_custom_call.1} parent=1 // pred_check
      _
    $region15: #{tpu_custom_call.1} parent=1 // pred_check_branch
      %20 = sbr.rel (0) target = $region17
    $region16: #{tpu_custom_call.1} parent=1 // pred_region
      _
    $region17: #{tpu_custom_call.1} parent=1 // pred_fallthru
      _
    // Predicated region
    $region18: #{tpu_custom_call.1} parent=1 // pred_check
      _
    $region19: #{tpu_custom_call.1} parent=1 // pred_check_branch
      %22 = sbr.rel (0) target = $region21
    $region20: #{tpu_custom_call.1} parent=1 // pred_region
      _
    $region21: #{tpu_custom_call.1} parent=1 // pred_fallthru
      _
    // Predicated region
    $region22: #{tpu_custom_call.1} parent=1 // pred_check
      _
    $region23: #{tpu_custom_call.1} parent=1 // pred_check_branch
      %24 = sbr.rel (0) target = $region25
    $region24: #{tpu_custom_call.1} parent=1 // pred_region
      _
    $region25: #{tpu_custom_call.1} parent=1 // pred_fallthru
      _
    // Predicated region
    $region26: #{tpu_custom_call.1} parent=1 // pred_check
      _
    $region27: #{tpu_custom_call.1} parent=1 // pred_check_branch
      %26 = sbr.rel (0) target = $region29
    $region28: #{tpu_custom_call.1} parent=1 // pred_region
      _
    $region29: #{tpu_custom_call.1} parent=1 // pred_fallthru
      _
    %v28 = vld [vmem:[%s0] sm:$0x77]
    %v29 = vld [vmem:[%s0 + $0x8] sm:$0x77]
    %v30 = vld [vmem:[%s0 + $0x10] sm:$0x77]
    %v31 = vld [vmem:[%s0 + $0x18] sm:$0x77]
    %v32 = vand.u32 2147483647, %v28
    %vm33 = vcmp.le.f32.partialorder %v32, 0.7853982
    %vm34 = vcmp.lt.s32.totalorder %v28, 0
    %v35 = vand.u32 %v28, 2139095040
    %v36 = vshrl.u32 %v35, 23
    %v37 = vsub.s32 %v36, 127
    %v38 = vand.u32 2147483647, %v28
    %v39 = vand.u32 %v38, 8388607
    %v40 = vor.u32 %v39, 8388608
    %v41 = vsub.s32 0, %v40
    %v42 = vadd.s32 %v37, 1
    %vm43 = vcmp.gt.s32.totalorder %v42, 0
    %v44 = vsel %vm43, %v42, 0
    %v45 = vshrl.u32 %v44, 5
    %v46 = vand.u32 %v44, 31
    %v47 = vsub.s32 32, %v46
    %v48 = vshrl.u32 683565275, %v47
    %v49 = vshll.u32 683565275, %v46
    %v50 = vshrl.u32 2475754826, %v47
    %v51 = vor.u32 %v49, %v50
    %v52 = vshll.u32 2475754826, %v46
    %v53 = vshrl.u32 2131351028, %v47
    %v54 = vor.u32 %v52, %v53
    %v55 = vshll.u32 2131351028, %v46
    %v56 = vshrl.u32 2102212464, %v47
    %v57 = vor.u32 %v55, %v56
    %v58 = vshll.u32 2102212464, %v46
    %v59 = vshrl.u32 920167782, %v47
    %v60 = vor.u32 %v58, %v59
    %v61 = vshll.u32 920167782, %v46
    %v62 = vshrl.u32 1326507024, %v47
    %v63 = vor.u32 %v61, %v62
    %vm64 = vcmp.lt.s32.totalorder %v45, 1
    %vm65 = vcmp.lt.s32.totalorder %v45, 2
    %vm66 = vcmp.lt.s32.totalorder %v45, 3
    %vm67 = vcmp.lt.s32.totalorder %v45, 4
    %v68 = vsel %vm64, %v48, %v51
    %v69 = vsel %vm67, %v57, 2102212464
    %v70 = vsel %vm66, %v54, %v69
    %v71 = vsel %vm65, %v68, %v70
    %v72 = vsel %vm64, %v51, %v54
    %v73 = vsel %vm67, %v60, 920167782
    %v74 = vsel %vm66, %v57, %v73
    %v75 = vsel %vm65, %v72, %v74
    %v76 = vsel %vm64, %v54, %v57
    %v77 = vsel %vm67, %v63, 1326507024
    %v78 = vsel %vm66, %v60, %v77
    %v79 = vsel %vm65, %v76, %v78
    %v80 = vshll.u32 %v40, 8
    %v81 = vand.u32 %v80, 65535
    %v82 = vshrl.u32 %v80, 16
    %v83 = vand.u32 %v79, 65535
    %v84 = vshrl.u32 %v79, 16
    %v85 = vmul.u32 %v81, %v83
    %v86 = vmul.u32 %v81, %v84
    %v87 = vmul.u32 %v82, %v83
    %v88 = vmul.u32 %v82, %v84
    %v89 = vshll.u32 %v86, 16
    %v90 = vshrl.u32 %v86, 16
    %v91 = vshll.u32 %v87, 16
    %v92 = vshrl.u32 %v87, 16
    %vm93 = vc.u32 %v85, %v89
    %v94 = vsel %vm93, 1, 0
    %v95 = vadd.s32 %v85, %v89
    %v96 = vadd.s32 %v88, %v94
    %vm97 = vc.u32 %v95, %v91
    %v98 = vsel %vm97, 1, 0
    %v99 = vadd.s32 %v95, %v91
    %v100 = vadd.s32 %v96, %v98
    %v101 = vadd.s32 %v100, %v90
    %v102 = vadd.s32 %v101, %v92
    %v103 = vand.u32 %v80, 65535
    %v104 = vshrl.u32 %v80, 16
    %v105 = vand.u32 %v75, 65535
    %v106 = vshrl.u32 %v75, 16
    %v107 = vmul.u32 %v103, %v105
    %v108 = vmul.u32 %v103, %v106
    %v109 = vmul.u32 %v104, %v105
    %v110 = vmul.u32 %v104, %v106
    %v111 = vshll.u32 %v108, 16
    %v112 = vshrl.u32 %v108, 16
    %v113 = vshll.u32 %v109, 16
    %v114 = vshrl.u32 %v109, 16
    %vm115 = vc.u32 %v107, %v111
    %v116 = vsel %vm115, 1, 0
    %v117 = vadd.s32 %v107, %v111
    %v118 = vadd.s32 %v110, %v116
    %vm119 = vc.u32 %v117, %v113
    %v120 = vsel %vm119, 1, 0
    %v121 = vadd.s32 %v117, %v113
    %v122 = vadd.s32 %v118, %v120
    %v123 = vadd.s32 %v122, %v112
    %v124 = vadd.s32 %v123, %v114
    %v125 = vmul.u32 %v80, %v71
    %v126 = vadd.s32 %v102, %v121
    %vm127 = vc.u32 %v102, %v121
    %v128 = vadd.s32 %v124, 1
    %v129 = vsel %vm127, %v128, %v124
    %v130 = vadd.s32 %v125, %v129
    %v131 = vadd.s32 %v130, 536870912
    %v132 = vshrl.u32 %v131, 30
    %v133 = vshll.u32 %v132, 30
    %v134 = vsub.s32 %v130, %v133
    %vm135 = vcmp.lt.s32.totalorder %v134, 0
    %v136 = vsub.s32 0, %v134
    %v137 = vsel %vm135, %v136, %v134
    %v138 = vclz %v137
    %v139 = vsub.s32 %v138, 2
    %vm140 = vcmp.gt.s32.totalorder 0, %v139
    %v141 = vsel %vm140, 0, %v139
    %v142 = vsub.s32 32, %v141
    %v143 = vshll.u32 %v134, %v141
    %v144 = vshrl.u32 %v126, %v142
    %v145 = vor.u32 %v143, %v144
    %v146 = vsub.s32 4294967266, %v141
    %v147 = vadd.s32 %v146, 127
    %v148 = vshll.u32 %v147, 23
    %v149 = vor.u32 4788187, %v148
    %v150 = vand.u32 2147483647, %v149
    %v152 = vcvt.s32.f32 %v145
    %v153 = vmul.f32 %v152, %v150
    %v154 = vxor.u32 %v153, 2147483648
    %v155 = vsel %vm34, %v154, %v153
    %v156 = vsub.s32 4, %v132
    %v157 = vsel %vm34, %v156, %v132
    %v158 = vsel %vm33, %v28, %v155
    %v159 = vsel %vm33, 0, %v157
    %v160 = vmul.f32 %v158, %v158
    %v161 = vmul.f32 %v160, -0.001358992
    %v162 = vadd.f32 %v161, 0.041655596
    %v163 = vmul.f32 %v160, %v162
    %v164 = vadd.f32 %v163, -0.4999988
    %v165 = vmul.f32 %v160, %v164
    %v166 = vadd.f32 1.0, %v165
    %v167 = vmul.f32 %v158, %v158
    %v168 = vmul.f32 %v167, -0.00019511016
    %v169 = vadd.f32 %v168, 0.008332121
    %v170 = vmul.f32 %v167, %v169
    %v171 = vadd.f32 %v170, -0.16666654
    %v172 = vmul.f32 %v167, %v171
    %v173 = vadd.f32 %v172, 1.0
    %v174 = vmul.f32 %v173, %v158
    %vm175 = vweird.f32 %v28
    %v176 = vadd.s32 %v159, 3
    %v177 = vand.u32 %v176, 3
    %vm178 = vcmp.lt.s32.totalorder %v177, 2
    %vm179 = vcmp.eq.s32.totalorder %v177, 0
    %v180 = vxor.u32 %v174, 2147483648
    %v181 = vsel %vm179, %v166, %v180
    %vm182 = vcmp.eq.s32.totalorder %v177, 2
    %v183 = vxor.u32 %v166, 2147483648
    %v184 = vsel %vm182, %v183, %v174
    %v185 = vsel %vm178, %v181, %v184
    %v186 = vsel %vm175, nan, %v185
    %v187 = vand.u32 2147483647, %v29
    %vm188 = vcmp.le.f32.partialorder %v187, 0.7853982
    %vm189 = vcmp.lt.s32.totalorder %v29, 0
    %v190 = vand.u32 %v29, 2139095040
    %v191 = vshrl.u32 %v190, 23
    %v192 = vsub.s32 %v191, 127
    %v193 = vand.u32 2147483647, %v29
    %v194 = vand.u32 %v193, 8388607
    %v195 = vor.u32 %v194, 8388608
    %v196 = vsub.s32 0, %v195
    %v197 = vadd.s32 %v192, 1
    %vm198 = vcmp.gt.s32.totalorder %v197, 0
    %v199 = vsel %vm198, %v197, 0
    %v200 = vshrl.u32 %v199, 5
    %v201 = vand.u32 %v199, 31
    %v202 = vsub.s32 32, %v201
    %v203 = vshrl.u32 683565275, %v202
    %v204 = vshll.u32 683565275, %v201
    %v205 = vshrl.u32 2475754826, %v202
    %v206 = vor.u32 %v204, %v205
    %v207 = vshll.u32 2475754826, %v201
    %v208 = vshrl.u32 2131351028, %v202
    %v209 = vor.u32 %v207, %v208
    %v210 = vshll.u32 2131351028, %v201
    %v211 = vshrl.u32 2102212464, %v202
    %v212 = vor.u32 %v210, %v211
    %v213 = vshll.u32 2102212464, %v201
    %v214 = vshrl.u32 920167782, %v202
    %v215 = vor.u32 %v213, %v214
    %v216 = vshll.u32 920167782, %v201
    %v217 = vshrl.u32 1326507024, %v202
    %v218 = vor.u32 %v216, %v217
    %vm219 = vcmp.lt.s32.totalorder %v200, 1
    %vm220 = vcmp.lt.s32.totalorder %v200, 2
    %vm221 = vcmp.lt.s32.totalorder %v200, 3
    %vm222 = vcmp.lt.s32.totalorder %v200, 4
    %v223 = vsel %vm219, %v203, %v206
    %v224 = vsel %vm222, %v212, 2102212464
    %v225 = vsel %vm221, %v209, %v224
    %v226 = vsel %vm220, %v223, %v225
    %v227 = vsel %vm219, %v206, %v209
    %v228 = vsel %vm222, %v215, 920167782
    %v229 = vsel %vm221, %v212, %v228
    %v230 = vsel %vm220, %v227, %v229
    %v231 = vsel %vm219, %v209, %v212
    %v232 = vsel %vm222, %v218, 1326507024
    %v233 = vsel %vm221, %v215, %v232
    %v234 = vsel %vm220, %v231, %v233
    %v235 = vshll.u32 %v195, 8
    %v236 = vand.u32 %v235, 65535
    %v237 = vshrl.u32 %v235, 16
    %v238 = vand.u32 %v234, 65535
    %v239 = vshrl.u32 %v234, 16
    %v240 = vmul.u32 %v236, %v238
    %v241 = vmul.u32 %v236, %v239
    %v242 = vmul.u32 %v237, %v238
    %v243 = vmul.u32 %v237, %v239
    %v244 = vshll.u32 %v241, 16
    %v245 = vshrl.u32 %v241, 16
    %v246 = vshll.u32 %v242, 16
    %v247 = vshrl.u32 %v242, 16
    %vm248 = vc.u32 %v240, %v244
    %v249 = vsel %vm248, 1, 0
    %v250 = vadd.s32 %v240, %v244
    %v251 = vadd.s32 %v243, %v249
    %vm252 = vc.u32 %v250, %v246
    %v253 = vsel %vm252, 1, 0
    %v254 = vadd.s32 %v250, %v246
    %v255 = vadd.s32 %v251, %v253
    %v256 = vadd.s32 %v255, %v245
    %v257 = vadd.s32 %v256, %v247
    %v258 = vand.u32 %v235, 65535
    %v259 = vshrl.u32 %v235, 16
    %v260 = vand.u32 %v230, 65535
    %v261 = vshrl.u32 %v230, 16
    %v262 = vmul.u32 %v258, %v260
    %v263 = vmul.u32 %v258, %v261
    %v264 = vmul.u32 %v259, %v260
    %v265 = vmul.u32 %v259, %v261
    %v266 = vshll.u32 %v263, 16
    %v267 = vshrl.u32 %v263, 16
    %v268 = vshll.u32 %v264, 16
    %v269 = vshrl.u32 %v264, 16
    %vm270 = vc.u32 %v262, %v266
    %v271 = vsel %vm270, 1, 0
    %v272 = vadd.s32 %v262, %v266
    %v273 = vadd.s32 %v265, %v271
    %vm274 = vc.u32 %v272, %v268
    %v275 = vsel %vm274, 1, 0
    %v276 = vadd.s32 %v272, %v268
    %v277 = vadd.s32 %v273, %v275
    %v278 = vadd.s32 %v277, %v267
    %v279 = vadd.s32 %v278, %v269
    %v280 = vmul.u32 %v235, %v226
    %v281 = vadd.s32 %v257, %v276
    %vm282 = vc.u32 %v257, %v276
    %v283 = vadd.s32 %v279, 1
    %v284 = vsel %vm282, %v283, %v279
    %v285 = vadd.s32 %v280, %v284
    %v286 = vadd.s32 %v285, 536870912
    %v287 = vshrl.u32 %v286, 30
    %v288 = vshll.u32 %v287, 30
    %v289 = vsub.s32 %v285, %v288
    %vm290 = vcmp.lt.s32.totalorder %v289, 0
    %v291 = vsub.s32 0, %v289
    %v292 = vsel %vm290, %v291, %v289
    %v293 = vclz %v292
    %v294 = vsub.s32 %v293, 2
    %vm295 = vcmp.gt.s32.totalorder 0, %v294
    %v296 = vsel %vm295, 0, %v294
    %v297 = vsub.s32 32, %v296
    %v298 = vshll.u32 %v289, %v296
    %v299 = vshrl.u32 %v281, %v297
    %v300 = vor.u32 %v298, %v299
    %v301 = vsub.s32 4294967266, %v296
    %v302 = vadd.s32 %v301, 127
    %v303 = vshll.u32 %v302, 23
    %v304 = vor.u32 4788187, %v303
    %v305 = vand.u32 2147483647, %v304
    %v307 = vcvt.s32.f32 %v300
    %v308 = vmul.f32 %v307, %v305
    %v309 = vxor.u32 %v308, 2147483648
    %v310 = vsel %vm189, %v309, %v308
    %v311 = vsub.s32 4, %v287
    %v312 = vsel %vm189, %v311, %v287
    %v313 = vsel %vm188, %v29, %v310
    %v314 = vsel %vm188, 0, %v312
    %v315 = vmul.f32 %v313, %v313
    %v316 = vmul.f32 %v315, -0.001358992
    %v317 = vadd.f32 %v316, 0.041655596
    %v318 = vmul.f32 %v315, %v317
    %v319 = vadd.f32 %v318, -0.4999988
    %v320 = vmul.f32 %v315, %v319
    %v321 = vadd.f32 1.0, %v320
    %v322 = vmul.f32 %v313, %v313
    %v323 = vmul.f32 %v322, -0.00019511016
    %v324 = vadd.f32 %v323, 0.008332121
    %v325 = vmul.f32 %v322, %v324
    %v326 = vadd.f32 %v325, -0.16666654
    %v327 = vmul.f32 %v322, %v326
    %v328 = vadd.f32 %v327, 1.0
    %v329 = vmul.f32 %v328, %v313
    %vm330 = vweird.f32 %v29
    %v331 = vadd.s32 %v314, 3
    %v332 = vand.u32 %v331, 3
    %vm333 = vcmp.lt.s32.totalorder %v332, 2
    %vm334 = vcmp.eq.s32.totalorder %v332, 0
    %v335 = vxor.u32 %v329, 2147483648
    %v336 = vsel %vm334, %v321, %v335
    %vm337 = vcmp.eq.s32.totalorder %v332, 2
    %v338 = vxor.u32 %v321, 2147483648
    %v339 = vsel %vm337, %v338, %v329
    %v340 = vsel %vm333, %v336, %v339
    %v341 = vsel %vm330, nan, %v340
    %v342 = vand.u32 2147483647, %v30
    %vm343 = vcmp.le.f32.partialorder %v342, 0.7853982
    %vm344 = vcmp.lt.s32.totalorder %v30, 0
    %v345 = vand.u32 %v30, 2139095040
    %v346 = vshrl.u32 %v345, 23
    %v347 = vsub.s32 %v346, 127
    %v348 = vand.u32 2147483647, %v30
    %v349 = vand.u32 %v348, 8388607
    %v350 = vor.u32 %v349, 8388608
    %v351 = vsub.s32 0, %v350
    %v352 = vadd.s32 %v347, 1
    %vm353 = vcmp.gt.s32.totalorder %v352, 0
    %v354 = vsel %vm353, %v352, 0
    %v355 = vshrl.u32 %v354, 5
    %v356 = vand.u32 %v354, 31
    %v357 = vsub.s32 32, %v356
    %v358 = vshrl.u32 683565275, %v357
    %v359 = vshll.u32 683565275, %v356
    %v360 = vshrl.u32 2475754826, %v357
    %v361 = vor.u32 %v359, %v360
    %v362 = vshll.u32 2475754826, %v356
    %v363 = vshrl.u32 2131351028, %v357
    %v364 = vor.u32 %v362, %v363
    %v365 = vshll.u32 2131351028, %v356
    %v366 = vshrl.u32 2102212464, %v357
    %v367 = vor.u32 %v365, %v366
    %v368 = vshll.u32 2102212464, %v356
    %v369 = vshrl.u32 920167782, %v357
    %v370 = vor.u32 %v368, %v369
    %v371 = vshll.u32 920167782, %v356
    %v372 = vshrl.u32 1326507024, %v357
    %v373 = vor.u32 %v371, %v372
    %vm374 = vcmp.lt.s32.totalorder %v355, 1
    %vm375 = vcmp.lt.s32.totalorder %v355, 2
    %vm376 = vcmp.lt.s32.totalorder %v355, 3
    %vm377 = vcmp.lt.s32.totalorder %v355, 4
    %v378 = vsel %vm374, %v358, %v361
    %v379 = vsel %vm377, %v367, 2102212464
    %v380 = vsel %vm376, %v364, %v379
    %v381 = vsel %vm375, %v378, %v380
    %v382 = vsel %vm374, %v361, %v364
    %v383 = vsel %vm377, %v370, 920167782
    %v384 = vsel %vm376, %v367, %v383
    %v385 = vsel %vm375, %v382, %v384
    %v386 = vsel %vm374, %v364, %v367
    %v387 = vsel %vm377, %v373, 1326507024
    %v388 = vsel %vm376, %v370, %v387
    %v389 = vsel %vm375, %v386, %v388
    %v390 = vshll.u32 %v350, 8
    %v391 = vand.u32 %v390, 65535
    %v392 = vshrl.u32 %v390, 16
    %v393 = vand.u32 %v389, 65535
    %v394 = vshrl.u32 %v389, 16
    %v395 = vmul.u32 %v391, %v393
    %v396 = vmul.u32 %v391, %v394
    %v397 = vmul.u32 %v392, %v393
    %v398 = vmul.u32 %v392, %v394
    %v399 = vshll.u32 %v396, 16
    %v400 = vshrl.u32 %v396, 16
    %v401 = vshll.u32 %v397, 16
    %v402 = vshrl.u32 %v397, 16
    %vm403 = vc.u32 %v395, %v399
    %v404 = vsel %vm403, 1, 0
    %v405 = vadd.s32 %v395, %v399
    %v406 = vadd.s32 %v398, %v404
    %vm407 = vc.u32 %v405, %v401
    %v408 = vsel %vm407, 1, 0
    %v409 = vadd.s32 %v405, %v401
    %v410 = vadd.s32 %v406, %v408
    %v411 = vadd.s32 %v410, %v400
    %v412 = vadd.s32 %v411, %v402
    %v413 = vand.u32 %v390, 65535
    %v414 = vshrl.u32 %v390, 16
    %v415 = vand.u32 %v385, 65535
    %v416 = vshrl.u32 %v385, 16
    %v417 = vmul.u32 %v413, %v415
    %v418 = vmul.u32 %v413, %v416
    %v419 = vmul.u32 %v414, %v415
    %v420 = vmul.u32 %v414, %v416
    %v421 = vshll.u32 %v418, 16
    %v422 = vshrl.u32 %v418, 16
    %v423 = vshll.u32 %v419, 16
    %v424 = vshrl.u32 %v419, 16
    %vm425 = vc.u32 %v417, %v421
    %v426 = vsel %vm425, 1, 0
    %v427 = vadd.s32 %v417, %v421
    %v428 = vadd.s32 %v420, %v426
    %vm429 = vc.u32 %v427, %v423
    %v430 = vsel %vm429, 1, 0
    %v431 = vadd.s32 %v427, %v423
    %v432 = vadd.s32 %v428, %v430
    %v433 = vadd.s32 %v432, %v422
    %v434 = vadd.s32 %v433, %v424
    %v435 = vmul.u32 %v390, %v381
    %v436 = vadd.s32 %v412, %v431
    %vm437 = vc.u32 %v412, %v431
    %v438 = vadd.s32 %v434, 1
    %v439 = vsel %vm437, %v438, %v434
    %v440 = vadd.s32 %v435, %v439
    %v441 = vadd.s32 %v440, 536870912
    %v442 = vshrl.u32 %v441, 30
    %v443 = vshll.u32 %v442, 30
    %v444 = vsub.s32 %v440, %v443
    %vm445 = vcmp.lt.s32.totalorder %v444, 0
    %v446 = vsub.s32 0, %v444
    %v447 = vsel %vm445, %v446, %v444
    %v448 = vclz %v447
    %v449 = vsub.s32 %v448, 2
    %vm450 = vcmp.gt.s32.totalorder 0, %v449
    %v451 = vsel %vm450, 0, %v449
    %v452 = vsub.s32 32, %v451
    %v453 = vshll.u32 %v444, %v451
    %v454 = vshrl.u32 %v436, %v452
    %v455 = vor.u32 %v453, %v454
    %v456 = vsub.s32 4294967266, %v451
    %v457 = vadd.s32 %v456, 127
    %v458 = vshll.u32 %v457, 23
    %v459 = vor.u32 4788187, %v458
    %v460 = vand.u32 2147483647, %v459
    %v462 = vcvt.s32.f32 %v455
    %v463 = vmul.f32 %v462, %v460
    %v464 = vxor.u32 %v463, 2147483648
    %v465 = vsel %vm344, %v464, %v463
    %v466 = vsub.s32 4, %v442
    %v467 = vsel %vm344, %v466, %v442
    %v468 = vsel %vm343, %v30, %v465
    %v469 = vsel %vm343, 0, %v467
    %v470 = vmul.f32 %v468, %v468
    %v471 = vmul.f32 %v470, -0.001358992
    %v472 = vadd.f32 %v471, 0.041655596
    %v473 = vmul.f32 %v470, %v472
    %v474 = vadd.f32 %v473, -0.4999988
    %v475 = vmul.f32 %v470, %v474
    %v476 = vadd.f32 1.0, %v475
    %v477 = vmul.f32 %v468, %v468
    %v478 = vmul.f32 %v477, -0.00019511016
    %v479 = vadd.f32 %v478, 0.008332121
    %v480 = vmul.f32 %v477, %v479
    %v481 = vadd.f32 %v480, -0.16666654
    %v482 = vmul.f32 %v477, %v481
    %v483 = vadd.f32 %v482, 1.0
    %v484 = vmul.f32 %v483, %v468
    %vm485 = vweird.f32 %v30
    %v486 = vadd.s32 %v469, 3
    %v487 = vand.u32 %v486, 3
    %vm488 = vcmp.lt.s32.totalorder %v487, 2
    %vm489 = vcmp.eq.s32.totalorder %v487, 0
    %v490 = vxor.u32 %v484, 2147483648
    %v491 = vsel %vm489, %v476, %v490
    %vm492 = vcmp.eq.s32.totalorder %v487, 2
    %v493 = vxor.u32 %v476, 2147483648
    %v494 = vsel %vm492, %v493, %v484
    %v495 = vsel %vm488, %v491, %v494
    %v496 = vsel %vm485, nan, %v495
    %v497 = vand.u32 2147483647, %v31
    %vm498 = vcmp.le.f32.partialorder %v497, 0.7853982
    %vm499 = vcmp.lt.s32.totalorder %v31, 0
    %v500 = vand.u32 %v31, 2139095040
    %v501 = vshrl.u32 %v500, 23
    %v502 = vsub.s32 %v501, 127
    %v503 = vand.u32 2147483647, %v31
    %v504 = vand.u32 %v503, 8388607
    %v505 = vor.u32 %v504, 8388608
    %v506 = vsub.s32 0, %v505
    %v507 = vadd.s32 %v502, 1
    %vm508 = vcmp.gt.s32.totalorder %v507, 0
    %v509 = vsel %vm508, %v507, 0
    %v510 = vshrl.u32 %v509, 5
    %v511 = vand.u32 %v509, 31
    %v512 = vsub.s32 32, %v511
    %v513 = vshrl.u32 683565275, %v512
    %v514 = vshll.u32 683565275, %v511
    %v515 = vshrl.u32 2475754826, %v512
    %v516 = vor.u32 %v514, %v515
    %v517 = vshll.u32 2475754826, %v511
    %v518 = vshrl.u32 2131351028, %v512
    %v519 = vor.u32 %v517, %v518
    %v520 = vshll.u32 2131351028, %v511
    %v521 = vshrl.u32 2102212464, %v512
    %v522 = vor.u32 %v520, %v521
    %v523 = vshll.u32 2102212464, %v511
    %v524 = vshrl.u32 920167782, %v512
    %v525 = vor.u32 %v523, %v524
    %v526 = vshll.u32 920167782, %v511
    %v527 = vshrl.u32 1326507024, %v512
    %v528 = vor.u32 %v526, %v527
    %vm529 = vcmp.lt.s32.totalorder %v510, 1
    %vm530 = vcmp.lt.s32.totalorder %v510, 2
    %vm531 = vcmp.lt.s32.totalorder %v510, 3
    %vm532 = vcmp.lt.s32.totalorder %v510, 4
    %v533 = vsel %vm529, %v513, %v516
    %v534 = vsel %vm532, %v522, 2102212464
    %v535 = vsel %vm531, %v519, %v534
    %v536 = vsel %vm530, %v533, %v535
    %v537 = vsel %vm529, %v516, %v519
    %v538 = vsel %vm532, %v525, 920167782
    %v539 = vsel %vm531, %v522, %v538
    %v540 = vsel %vm530, %v537, %v539
    %v541 = vsel %vm529, %v519, %v522
    %v542 = vsel %vm532, %v528, 1326507024
    %v543 = vsel %vm531, %v525, %v542
    %v544 = vsel %vm530, %v541, %v543
    %v545 = vshll.u32 %v505, 8
    %v546 = vand.u32 %v545, 65535
    %v547 = vshrl.u32 %v545, 16
    %v548 = vand.u32 %v544, 65535
    %v549 = vshrl.u32 %v544, 16
    %v550 = vmul.u32 %v546, %v548
    %v551 = vmul.u32 %v546, %v549
    %v552 = vmul.u32 %v547, %v548
    %v553 = vmul.u32 %v547, %v549
    %v554 = vshll.u32 %v551, 16
    %v555 = vshrl.u32 %v551, 16
    %v556 = vshll.u32 %v552, 16
    %v557 = vshrl.u32 %v552, 16
    %vm558 = vc.u32 %v550, %v554
    %v559 = vsel %vm558, 1, 0
    %v560 = vadd.s32 %v550, %v554
    %v561 = vadd.s32 %v553, %v559
    %vm562 = vc.u32 %v560, %v556
    %v563 = vsel %vm562, 1, 0
    %v564 = vadd.s32 %v560, %v556
    %v565 = vadd.s32 %v561, %v563
    %v566 = vadd.s32 %v565, %v555
    %v567 = vadd.s32 %v566, %v557
    %v568 = vand.u32 %v545, 65535
    %v569 = vshrl.u32 %v545, 16
    %v570 = vand.u32 %v540, 65535
    %v571 = vshrl.u32 %v540, 16
    %v572 = vmul.u32 %v568, %v570
    %v573 = vmul.u32 %v568, %v571
    %v574 = vmul.u32 %v569, %v570
    %v575 = vmul.u32 %v569, %v571
    %v576 = vshll.u32 %v573, 16
    %v577 = vshrl.u32 %v573, 16
    %v578 = vshll.u32 %v574, 16
    %v579 = vshrl.u32 %v574, 16
    %vm580 = vc.u32 %v572, %v576
    %v581 = vsel %vm580, 1, 0
    %v582 = vadd.s32 %v572, %v576
    %v583 = vadd.s32 %v575, %v581
    %vm584 = vc.u32 %v582, %v578
    %v585 = vsel %vm584, 1, 0
    %v586 = vadd.s32 %v582, %v578
    %v587 = vadd.s32 %v583, %v585
    %v588 = vadd.s32 %v587, %v577
    %v589 = vadd.s32 %v588, %v579
    %v590 = vmul.u32 %v545, %v536
    %v591 = vadd.s32 %v567, %v586
    %vm592 = vc.u32 %v567, %v586
    %v593 = vadd.s32 %v589, 1
    %v594 = vsel %vm592, %v593, %v589
    %v595 = vadd.s32 %v590, %v594
    %v596 = vadd.s32 %v595, 536870912
    %v597 = vshrl.u32 %v596, 30
    %v598 = vshll.u32 %v597, 30
    %v599 = vsub.s32 %v595, %v598
    %vm600 = vcmp.lt.s32.totalorder %v599, 0
    %v601 = vsub.s32 0, %v599
    %v602 = vsel %vm600, %v601, %v599
    %v603 = vclz %v602
    %v604 = vsub.s32 %v603, 2
    %vm605 = vcmp.gt.s32.totalorder 0, %v604
    %v606 = vsel %vm605, 0, %v604
    %v607 = vsub.s32 32, %v606
    %v608 = vshll.u32 %v599, %v606
    %v609 = vshrl.u32 %v591, %v607
    %v610 = vor.u32 %v608, %v609
    %v611 = vsub.s32 4294967266, %v606
    %v612 = vadd.s32 %v611, 127
    %v613 = vshll.u32 %v612, 23
    %v614 = vor.u32 4788187, %v613
    %v615 = vand.u32 2147483647, %v614
    %v617 = vcvt.s32.f32 %v610
    %v618 = vmul.f32 %v617, %v615
    %v619 = vxor.u32 %v618, 2147483648
    %v620 = vsel %vm499, %v619, %v618
    %v621 = vsub.s32 4, %v597
    %v622 = vsel %vm499, %v621, %v597
    %v623 = vsel %vm498, %v31, %v620
    %v624 = vsel %vm498, 0, %v622
    %v625 = vmul.f32 %v623, %v623
    %v626 = vmul.f32 %v625, -0.001358992
    %v627 = vadd.f32 %v626, 0.041655596
    %v628 = vmul.f32 %v625, %v627
    %v629 = vadd.f32 %v628, -0.4999988
    %v630 = vmul.f32 %v625, %v629
    %v631 = vadd.f32 1.0, %v630
    %v632 = vmul.f32 %v623, %v623
    %v633 = vmul.f32 %v632, -0.00019511016
    %v634 = vadd.f32 %v633, 0.008332121
    %v635 = vmul.f32 %v632, %v634
    %v636 = vadd.f32 %v635, -0.16666654
    %v637 = vmul.f32 %v632, %v636
    %v638 = vadd.f32 %v637, 1.0
    %v639 = vmul.f32 %v638, %v623
    %vm640 = vweird.f32 %v31
    %v641 = vadd.s32 %v624, 3
    %v642 = vand.u32 %v641, 3
    %vm643 = vcmp.lt.s32.totalorder %v642, 2
    %vm644 = vcmp.eq.s32.totalorder %v642, 0
    %v645 = vxor.u32 %v639, 2147483648
    %v646 = vsel %vm644, %v631, %v645
    %vm647 = vcmp.eq.s32.totalorder %v642, 2
    %v648 = vxor.u32 %v631, 2147483648
    %v649 = vsel %vm647, %v648, %v639
    %v650 = vsel %vm643, %v646, %v649
    %v651 = vsel %vm640, nan, %v650
    %v652 = vand.u32 2147483647, %v28
    %vm653 = vcmp.le.f32.partialorder %v652, 0.7853982
    %vm654 = vcmp.lt.s32.totalorder %v28, 0
    %v655 = vand.u32 %v28, 2139095040
    %v656 = vshrl.u32 %v655, 23
    %v657 = vsub.s32 %v656, 127
    %v658 = vand.u32 2147483647, %v28
    %v659 = vand.u32 %v658, 8388607
    %v660 = vor.u32 %v659, 8388608
    %v661 = vsub.s32 0, %v660
    %v662 = vadd.s32 %v657, 1
    %vm663 = vcmp.gt.s32.totalorder %v662, 0
    %v664 = vsel %vm663, %v662, 0
    %v665 = vshrl.u32 %v664, 5
    %v666 = vand.u32 %v664, 31
    %v667 = vsub.s32 32, %v666
    %v668 = vshrl.u32 683565275, %v667
    %v669 = vshll.u32 683565275, %v666
    %v670 = vshrl.u32 2475754826, %v667
    %v671 = vor.u32 %v669, %v670
    %v672 = vshll.u32 2475754826, %v666
    %v673 = vshrl.u32 2131351028, %v667
    %v674 = vor.u32 %v672, %v673
    %v675 = vshll.u32 2131351028, %v666
    %v676 = vshrl.u32 2102212464, %v667
    %v677 = vor.u32 %v675, %v676
    %v678 = vshll.u32 2102212464, %v666
    %v679 = vshrl.u32 920167782, %v667
    %v680 = vor.u32 %v678, %v679
    %v681 = vshll.u32 920167782, %v666
    %v682 = vshrl.u32 1326507024, %v667
    %v683 = vor.u32 %v681, %v682
    %vm684 = vcmp.lt.s32.totalorder %v665, 1
    %vm685 = vcmp.lt.s32.totalorder %v665, 2
    %vm686 = vcmp.lt.s32.totalorder %v665, 3
    %vm687 = vcmp.lt.s32.totalorder %v665, 4
    %v688 = vsel %vm684, %v668, %v671
    %v689 = vsel %vm687, %v677, 2102212464
    %v690 = vsel %vm686, %v674, %v689
    %v691 = vsel %vm685, %v688, %v690
    %v692 = vsel %vm684, %v671, %v674
    %v693 = vsel %vm687, %v680, 920167782
    %v694 = vsel %vm686, %v677, %v693
    %v695 = vsel %vm685, %v692, %v694
    %v696 = vsel %vm684, %v674, %v677
    %v697 = vsel %vm687, %v683, 1326507024
    %v698 = vsel %vm686, %v680, %v697
    %v699 = vsel %vm685, %v696, %v698
    %v700 = vshll.u32 %v660, 8
    %v701 = vand.u32 %v700, 65535
    %v702 = vshrl.u32 %v700, 16
    %v703 = vand.u32 %v699, 65535
    %v704 = vshrl.u32 %v699, 16
    %v705 = vmul.u32 %v701, %v703
    %v706 = vmul.u32 %v701, %v704
    %v707 = vmul.u32 %v702, %v703
    %v708 = vmul.u32 %v702, %v704
    %v709 = vshll.u32 %v706, 16
    %v710 = vshrl.u32 %v706, 16
    %v711 = vshll.u32 %v707, 16
    %v712 = vshrl.u32 %v707, 16
    %vm713 = vc.u32 %v705, %v709
    %v714 = vsel %vm713, 1, 0
    %v715 = vadd.s32 %v705, %v709
    %v716 = vadd.s32 %v708, %v714
    %vm717 = vc.u32 %v715, %v711
    %v718 = vsel %vm717, 1, 0
    %v719 = vadd.s32 %v715, %v711
    %v720 = vadd.s32 %v716, %v718
    %v721 = vadd.s32 %v720, %v710
    %v722 = vadd.s32 %v721, %v712
    %v723 = vand.u32 %v700, 65535
    %v724 = vshrl.u32 %v700, 16
    %v725 = vand.u32 %v695, 65535
    %v726 = vshrl.u32 %v695, 16
    %v727 = vmul.u32 %v723, %v725
    %v728 = vmul.u32 %v723, %v726
    %v729 = vmul.u32 %v724, %v725
    %v730 = vmul.u32 %v724, %v726
    %v731 = vshll.u32 %v728, 16
    %v732 = vshrl.u32 %v728, 16
    %v733 = vshll.u32 %v729, 16
    %v734 = vshrl.u32 %v729, 16
    %vm735 = vc.u32 %v727, %v731
    %v736 = vsel %vm735, 1, 0
    %v737 = vadd.s32 %v727, %v731
    %v738 = vadd.s32 %v730, %v736
    %vm739 = vc.u32 %v737, %v733
    %v740 = vsel %vm739, 1, 0
    %v741 = vadd.s32 %v737, %v733
    %v742 = vadd.s32 %v738, %v740
    %v743 = vadd.s32 %v742, %v732
    %v744 = vadd.s32 %v743, %v734
    %v745 = vmul.u32 %v700, %v691
    %v746 = vadd.s32 %v722, %v741
    %vm747 = vc.u32 %v722, %v741
    %v748 = vadd.s32 %v744, 1
    %v749 = vsel %vm747, %v748, %v744
    %v750 = vadd.s32 %v745, %v749
    %v751 = vadd.s32 %v750, 536870912
    %v752 = vshrl.u32 %v751, 30
    %v753 = vshll.u32 %v752, 30
    %v754 = vsub.s32 %v750, %v753
    %vm755 = vcmp.lt.s32.totalorder %v754, 0
    %v756 = vsub.s32 0, %v754
    %v757 = vsel %vm755, %v756, %v754
    %v758 = vclz %v757
    %v759 = vsub.s32 %v758, 2
    %vm760 = vcmp.gt.s32.totalorder 0, %v759
    %v761 = vsel %vm760, 0, %v759
    %v762 = vsub.s32 32, %v761
    %v763 = vshll.u32 %v754, %v761
    %v764 = vshrl.u32 %v746, %v762
    %v765 = vor.u32 %v763, %v764
    %v766 = vsub.s32 4294967266, %v761
    %v767 = vadd.s32 %v766, 127
    %v768 = vshll.u32 %v767, 23
    %v769 = vor.u32 4788187, %v768
    %v770 = vand.u32 2147483647, %v769
    %v772 = vcvt.s32.f32 %v765
    %v773 = vmul.f32 %v772, %v770
    %v774 = vxor.u32 %v773, 2147483648
    %v775 = vsel %vm654, %v774, %v773
    %v776 = vsub.s32 4, %v752
    %v777 = vsel %vm654, %v776, %v752
    %v778 = vsel %vm653, %v28, %v775
    %v779 = vsel %vm653, 0, %v777
    %v780 = vmul.f32 %v778, %v778
    %v781 = vmul.f32 %v780, -0.001358992
    %v782 = vadd.f32 %v781, 0.041655596
    %v783 = vmul.f32 %v780, %v782
    %v784 = vadd.f32 %v783, -0.4999988
    %v785 = vmul.f32 %v780, %v784
    %v786 = vadd.f32 1.0, %v785
    %v787 = vmul.f32 %v778, %v778
    %v788 = vmul.f32 %v787, -0.00019511016
    %v789 = vadd.f32 %v788, 0.008332121
    %v790 = vmul.f32 %v787, %v789
    %v791 = vadd.f32 %v790, -0.16666654
    %v792 = vmul.f32 %v787, %v791
    %v793 = vadd.f32 %v792, 1.0
    %v794 = vmul.f32 %v793, %v778
    %vm795 = vweird.f32 %v28
    %v796 = vand.u32 %v779, 3
    %vm797 = vcmp.lt.s32.totalorder %v796, 2
    %vm798 = vcmp.eq.s32.totalorder %v796, 0
    %v799 = vxor.u32 %v794, 2147483648
    %v800 = vsel %vm798, %v786, %v799
    %vm801 = vcmp.eq.s32.totalorder %v796, 2
    %v802 = vxor.u32 %v786, 2147483648
    %v803 = vsel %vm801, %v802, %v794
    %v804 = vsel %vm797, %v800, %v803
    %v805 = vsel %vm795, nan, %v804
    %v806 = vand.u32 2147483647, %v29
    %vm807 = vcmp.le.f32.partialorder %v806, 0.7853982
    %vm808 = vcmp.lt.s32.totalorder %v29, 0
    %v809 = vand.u32 %v29, 2139095040
    %v810 = vshrl.u32 %v809, 23
    %v811 = vsub.s32 %v810, 127
    %v812 = vand.u32 2147483647, %v29
    %v813 = vand.u32 %v812, 8388607
    %v814 = vor.u32 %v813, 8388608
    %v815 = vsub.s32 0, %v814
    %v816 = vadd.s32 %v811, 1
    %vm817 = vcmp.gt.s32.totalorder %v816, 0
    %v818 = vsel %vm817, %v816, 0
    %v819 = vshrl.u32 %v818, 5
    %v820 = vand.u32 %v818, 31
    %v821 = vsub.s32 32, %v820
    %v822 = vshrl.u32 683565275, %v821
    %v823 = vshll.u32 683565275, %v820
    %v824 = vshrl.u32 2475754826, %v821
    %v825 = vor.u32 %v823, %v824
    %v826 = vshll.u32 2475754826, %v820
    %v827 = vshrl.u32 2131351028, %v821
    %v828 = vor.u32 %v826, %v827
    %v829 = vshll.u32 2131351028, %v820
    %v830 = vshrl.u32 2102212464, %v821
    %v831 = vor.u32 %v829, %v830
    %v832 = vshll.u32 2102212464, %v820
    %v833 = vshrl.u32 920167782, %v821
    %v834 = vor.u32 %v832, %v833
    %v835 = vshll.u32 920167782, %v820
    %v836 = vshrl.u32 1326507024, %v821
    %v837 = vor.u32 %v835, %v836
    %vm838 = vcmp.lt.s32.totalorder %v819, 1
    %vm839 = vcmp.lt.s32.totalorder %v819, 2
    %vm840 = vcmp.lt.s32.totalorder %v819, 3
    %vm841 = vcmp.lt.s32.totalorder %v819, 4
    %v842 = vsel %vm838, %v822, %v825
    %v843 = vsel %vm841, %v831, 2102212464
    %v844 = vsel %vm840, %v828, %v843
    %v845 = vsel %vm839, %v842, %v844
    %v846 = vsel %vm838, %v825, %v828
    %v847 = vsel %vm841, %v834, 920167782
    %v848 = vsel %vm840, %v831, %v847
    %v849 = vsel %vm839, %v846, %v848
    %v850 = vsel %vm838, %v828, %v831
    %v851 = vsel %vm841, %v837, 1326507024
    %v852 = vsel %vm840, %v834, %v851
    %v853 = vsel %vm839, %v850, %v852
    %v854 = vshll.u32 %v814, 8
    %v855 = vand.u32 %v854, 65535
    %v856 = vshrl.u32 %v854, 16
    %v857 = vand.u32 %v853, 65535
    %v858 = vshrl.u32 %v853, 16
    %v859 = vmul.u32 %v855, %v857
    %v860 = vmul.u32 %v855, %v858
    %v861 = vmul.u32 %v856, %v857
    %v862 = vmul.u32 %v856, %v858
    %v863 = vshll.u32 %v860, 16
    %v864 = vshrl.u32 %v860, 16
    %v865 = vshll.u32 %v861, 16
    %v866 = vshrl.u32 %v861, 16
    %vm867 = vc.u32 %v859, %v863
    %v868 = vsel %vm867, 1, 0
    %v869 = vadd.s32 %v859, %v863
    %v870 = vadd.s32 %v862, %v868
    %vm871 = vc.u32 %v869, %v865
    %v872 = vsel %vm871, 1, 0
    %v873 = vadd.s32 %v869, %v865
    %v874 = vadd.s32 %v870, %v872
    %v875 = vadd.s32 %v874, %v864
    %v876 = vadd.s32 %v875, %v866
    %v877 = vand.u32 %v854, 65535
    %v878 = vshrl.u32 %v854, 16
    %v879 = vand.u32 %v849, 65535
    %v880 = vshrl.u32 %v849, 16
    %v881 = vmul.u32 %v877, %v879
    %v882 = vmul.u32 %v877, %v880
    %v883 = vmul.u32 %v878, %v879
    %v884 = vmul.u32 %v878, %v880
    %v885 = vshll.u32 %v882, 16
    %v886 = vshrl.u32 %v882, 16
    %v887 = vshll.u32 %v883, 16
    %v888 = vshrl.u32 %v883, 16
    %vm889 = vc.u32 %v881, %v885
    %v890 = vsel %vm889, 1, 0
    %v891 = vadd.s32 %v881, %v885
    %v892 = vadd.s32 %v884, %v890
    %vm893 = vc.u32 %v891, %v887
    %v894 = vsel %vm893, 1, 0
    %v895 = vadd.s32 %v891, %v887
    %v896 = vadd.s32 %v892, %v894
    %v897 = vadd.s32 %v896, %v886
    %v898 = vadd.s32 %v897, %v888
    %v899 = vmul.u32 %v854, %v845
    %v900 = vadd.s32 %v876, %v895
    %vm901 = vc.u32 %v876, %v895
    %v902 = vadd.s32 %v898, 1
    %v903 = vsel %vm901, %v902, %v898
    %v904 = vadd.s32 %v899, %v903
    %v905 = vadd.s32 %v904, 536870912
    %v906 = vshrl.u32 %v905, 30
    %v907 = vshll.u32 %v906, 30
    %v908 = vsub.s32 %v904, %v907
    %vm909 = vcmp.lt.s32.totalorder %v908, 0
    %v910 = vsub.s32 0, %v908
    %v911 = vsel %vm909, %v910, %v908
    %v912 = vclz %v911
    %v913 = vsub.s32 %v912, 2
    %vm914 = vcmp.gt.s32.totalorder 0, %v913
    %v915 = vsel %vm914, 0, %v913
    %v916 = vsub.s32 32, %v915
    %v917 = vshll.u32 %v908, %v915
    %v918 = vshrl.u32 %v900, %v916
    %v919 = vor.u32 %v917, %v918
    %v920 = vsub.s32 4294967266, %v915
    %v921 = vadd.s32 %v920, 127
    %v922 = vshll.u32 %v921, 23
    %v923 = vor.u32 4788187, %v922
    %v924 = vand.u32 2147483647, %v923
    %v926 = vcvt.s32.f32 %v919
    %v927 = vmul.f32 %v926, %v924
    %v928 = vxor.u32 %v927, 2147483648
    %v929 = vsel %vm808, %v928, %v927
    %v930 = vsub.s32 4, %v906
    %v931 = vsel %vm808, %v930, %v906
    %v932 = vsel %vm807, %v29, %v929
    %v933 = vsel %vm807, 0, %v931
    %v934 = vmul.f32 %v932, %v932
    %v935 = vmul.f32 %v934, -0.001358992
    %v936 = vadd.f32 %v935, 0.041655596
    %v937 = vmul.f32 %v934, %v936
    %v938 = vadd.f32 %v937, -0.4999988
    %v939 = vmul.f32 %v934, %v938
    %v940 = vadd.f32 1.0, %v939
    %v941 = vmul.f32 %v932, %v932
    %v942 = vmul.f32 %v941, -0.00019511016
    %v943 = vadd.f32 %v942, 0.008332121
    %v944 = vmul.f32 %v941, %v943
    %v945 = vadd.f32 %v944, -0.16666654
    %v946 = vmul.f32 %v941, %v945
    %v947 = vadd.f32 %v946, 1.0
    %v948 = vmul.f32 %v947, %v932
    %vm949 = vweird.f32 %v29
    %v950 = vand.u32 %v933, 3
    %vm951 = vcmp.lt.s32.totalorder %v950, 2
    %vm952 = vcmp.eq.s32.totalorder %v950, 0
    %v953 = vxor.u32 %v948, 2147483648
    %v954 = vsel %vm952, %v940, %v953
    %vm955 = vcmp.eq.s32.totalorder %v950, 2
    %v956 = vxor.u32 %v940, 2147483648
    %v957 = vsel %vm955, %v956, %v948
    %v958 = vsel %vm951, %v954, %v957
    %v959 = vsel %vm949, nan, %v958
    %v960 = vand.u32 2147483647, %v30
    %vm961 = vcmp.le.f32.partialorder %v960, 0.7853982
    %vm962 = vcmp.lt.s32.totalorder %v30, 0
    %v963 = vand.u32 %v30, 2139095040
    %v964 = vshrl.u32 %v963, 23
    %v965 = vsub.s32 %v964, 127
    %v966 = vand.u32 2147483647, %v30
    %v967 = vand.u32 %v966, 8388607
    %v968 = vor.u32 %v967, 8388608
    %v969 = vsub.s32 0, %v968
    %v970 = vadd.s32 %v965, 1
    %vm971 = vcmp.gt.s32.totalorder %v970, 0
    %v972 = vsel %vm971, %v970, 0
    %v973 = vshrl.u32 %v972, 5
    %v974 = vand.u32 %v972, 31
    %v975 = vsub.s32 32, %v974
    %v976 = vshrl.u32 683565275, %v975
    %v977 = vshll.u32 683565275, %v974
    %v978 = vshrl.u32 2475754826, %v975
    %v979 = vor.u32 %v977, %v978
    %v980 = vshll.u32 2475754826, %v974
    %v981 = vshrl.u32 2131351028, %v975
    %v982 = vor.u32 %v980, %v981
    %v983 = vshll.u32 2131351028, %v974
    %v984 = vshrl.u32 2102212464, %v975
    %v985 = vor.u32 %v983, %v984
    %v986 = vshll.u32 2102212464, %v974
    %v987 = vshrl.u32 920167782, %v975
    %v988 = vor.u32 %v986, %v987
    %v989 = vshll.u32 920167782, %v974
    %v990 = vshrl.u32 1326507024, %v975
    %v991 = vor.u32 %v989, %v990
    %vm992 = vcmp.lt.s32.totalorder %v973, 1
    %vm993 = vcmp.lt.s32.totalorder %v973, 2
    %vm994 = vcmp.lt.s32.totalorder %v973, 3
    %vm995 = vcmp.lt.s32.totalorder %v973, 4
    %v996 = vsel %vm992, %v976, %v979
    %v997 = vsel %vm995, %v985, 2102212464
    %v998 = vsel %vm994, %v982, %v997
    %v999 = vsel %vm993, %v996, %v998
    %v1000 = vsel %vm992, %v979, %v982
    %v1001 = vsel %vm995, %v988, 920167782
    %v1002 = vsel %vm994, %v985, %v1001
    %v1003 = vsel %vm993, %v1000, %v1002
    %v1004 = vsel %vm992, %v982, %v985
    %v1005 = vsel %vm995, %v991, 1326507024
    %v1006 = vsel %vm994, %v988, %v1005
    %v1007 = vsel %vm993, %v1004, %v1006
    %v1008 = vshll.u32 %v968, 8
    %v1009 = vand.u32 %v1008, 65535
    %v1010 = vshrl.u32 %v1008, 16
    %v1011 = vand.u32 %v1007, 65535
    %v1012 = vshrl.u32 %v1007, 16
    %v1013 = vmul.u32 %v1009, %v1011
    %v1014 = vmul.u32 %v1009, %v1012
    %v1015 = vmul.u32 %v1010, %v1011
    %v1016 = vmul.u32 %v1010, %v1012
    %v1017 = vshll.u32 %v1014, 16
    %v1018 = vshrl.u32 %v1014, 16
    %v1019 = vshll.u32 %v1015, 16
    %v1020 = vshrl.u32 %v1015, 16
    %vm1021 = vc.u32 %v1013, %v1017
    %v1022 = vsel %vm1021, 1, 0
    %v1023 = vadd.s32 %v1013, %v1017
    %v1024 = vadd.s32 %v1016, %v1022
    %vm1025 = vc.u32 %v1023, %v1019
    %v1026 = vsel %vm1025, 1, 0
    %v1027 = vadd.s32 %v1023, %v1019
    %v1028 = vadd.s32 %v1024, %v1026
    %v1029 = vadd.s32 %v1028, %v1018
    %v1030 = vadd.s32 %v1029, %v1020
    %v1031 = vand.u32 %v1008, 65535
    %v1032 = vshrl.u32 %v1008, 16
    %v1033 = vand.u32 %v1003, 65535
    %v1034 = vshrl.u32 %v1003, 16
    %v1035 = vmul.u32 %v1031, %v1033
    %v1036 = vmul.u32 %v1031, %v1034
    %v1037 = vmul.u32 %v1032, %v1033
    %v1038 = vmul.u32 %v1032, %v1034
    %v1039 = vshll.u32 %v1036, 16
    %v1040 = vshrl.u32 %v1036, 16
    %v1041 = vshll.u32 %v1037, 16
    %v1042 = vshrl.u32 %v1037, 16
    %vm1043 = vc.u32 %v1035, %v1039
    %v1044 = vsel %vm1043, 1, 0
    %v1045 = vadd.s32 %v1035, %v1039
    %v1046 = vadd.s32 %v1038, %v1044
    %vm1047 = vc.u32 %v1045, %v1041
    %v1048 = vsel %vm1047, 1, 0
    %v1049 = vadd.s32 %v1045, %v1041
    %v1050 = vadd.s32 %v1046, %v1048
    %v1051 = vadd.s32 %v1050, %v1040
    %v1052 = vadd.s32 %v1051, %v1042
    %v1053 = vmul.u32 %v1008, %v999
    %v1054 = vadd.s32 %v1030, %v1049
    %vm1055 = vc.u32 %v1030, %v1049
    %v1056 = vadd.s32 %v1052, 1
    %v1057 = vsel %vm1055, %v1056, %v1052
    %v1058 = vadd.s32 %v1053, %v1057
    %v1059 = vadd.s32 %v1058, 536870912
    %v1060 = vshrl.u32 %v1059, 30
    %v1061 = vshll.u32 %v1060, 30
    %v1062 = vsub.s32 %v1058, %v1061
    %vm1063 = vcmp.lt.s32.totalorder %v1062, 0
    %v1064 = vsub.s32 0, %v1062
    %v1065 = vsel %vm1063, %v1064, %v1062
    %v1066 = vclz %v1065
    %v1067 = vsub.s32 %v1066, 2
    %vm1068 = vcmp.gt.s32.totalorder 0, %v1067
    %v1069 = vsel %vm1068, 0, %v1067
    %v1070 = vsub.s32 32, %v1069
    %v1071 = vshll.u32 %v1062, %v1069
    %v1072 = vshrl.u32 %v1054, %v1070
    %v1073 = vor.u32 %v1071, %v1072
    %v1074 = vsub.s32 4294967266, %v1069
    %v1075 = vadd.s32 %v1074, 127
    %v1076 = vshll.u32 %v1075, 23
    %v1077 = vor.u32 4788187, %v1076
    %v1078 = vand.u32 2147483647, %v1077
    %v1080 = vcvt.s32.f32 %v1073
    %v1081 = vmul.f32 %v1080, %v1078
    %v1082 = vxor.u32 %v1081, 2147483648
    %v1083 = vsel %vm962, %v1082, %v1081
    %v1084 = vsub.s32 4, %v1060
    %v1085 = vsel %vm962, %v1084, %v1060
    %v1086 = vsel %vm961, %v30, %v1083
    %v1087 = vsel %vm961, 0, %v1085
    %v1088 = vmul.f32 %v1086, %v1086
    %v1089 = vmul.f32 %v1088, -0.001358992
    %v1090 = vadd.f32 %v1089, 0.041655596
    %v1091 = vmul.f32 %v1088, %v1090
    %v1092 = vadd.f32 %v1091, -0.4999988
    %v1093 = vmul.f32 %v1088, %v1092
    %v1094 = vadd.f32 1.0, %v1093
    %v1095 = vmul.f32 %v1086, %v1086
    %v1096 = vmul.f32 %v1095, -0.00019511016
    %v1097 = vadd.f32 %v1096, 0.008332121
    %v1098 = vmul.f32 %v1095, %v1097
    %v1099 = vadd.f32 %v1098, -0.16666654
    %v1100 = vmul.f32 %v1095, %v1099
    %v1101 = vadd.f32 %v1100, 1.0
    %v1102 = vmul.f32 %v1101, %v1086
    %vm1103 = vweird.f32 %v30
    %v1104 = vand.u32 %v1087, 3
    %vm1105 = vcmp.lt.s32.totalorder %v1104, 2
    %vm1106 = vcmp.eq.s32.totalorder %v1104, 0
    %v1107 = vxor.u32 %v1102, 2147483648
    %v1108 = vsel %vm1106, %v1094, %v1107
    %vm1109 = vcmp.eq.s32.totalorder %v1104, 2
    %v1110 = vxor.u32 %v1094, 2147483648
    %v1111 = vsel %vm1109, %v1110, %v1102
    %v1112 = vsel %vm1105, %v1108, %v1111
    %v1113 = vsel %vm1103, nan, %v1112
    %v1114 = vand.u32 2147483647, %v31
    %vm1115 = vcmp.le.f32.partialorder %v1114, 0.7853982
    %vm1116 = vcmp.lt.s32.totalorder %v31, 0
    %v1117 = vand.u32 %v31, 2139095040
    %v1118 = vshrl.u32 %v1117, 23
    %v1119 = vsub.s32 %v1118, 127
    %v1120 = vand.u32 2147483647, %v31
    %v1121 = vand.u32 %v1120, 8388607
    %v1122 = vor.u32 %v1121, 8388608
    %v1123 = vsub.s32 0, %v1122
    %v1124 = vadd.s32 %v1119, 1
    %vm1125 = vcmp.gt.s32.totalorder %v1124, 0
    %v1126 = vsel %vm1125, %v1124, 0
    %v1127 = vshrl.u32 %v1126, 5
    %v1128 = vand.u32 %v1126, 31
    %v1129 = vsub.s32 32, %v1128
    %v1130 = vshrl.u32 683565275, %v1129
    %v1131 = vshll.u32 683565275, %v1128
    %v1132 = vshrl.u32 2475754826, %v1129
    %v1133 = vor.u32 %v1131, %v1132
    %v1134 = vshll.u32 2475754826, %v1128
    %v1135 = vshrl.u32 2131351028, %v1129
    %v1136 = vor.u32 %v1134, %v1135
    %v1137 = vshll.u32 2131351028, %v1128
    %v1138 = vshrl.u32 2102212464, %v1129
    %v1139 = vor.u32 %v1137, %v1138
    %v1140 = vshll.u32 2102212464, %v1128
    %v1141 = vshrl.u32 920167782, %v1129
    %v1142 = vor.u32 %v1140, %v1141
    %v1143 = vshll.u32 920167782, %v1128
    %v1144 = vshrl.u32 1326507024, %v1129
    %v1145 = vor.u32 %v1143, %v1144
    %vm1146 = vcmp.lt.s32.totalorder %v1127, 1
    %vm1147 = vcmp.lt.s32.totalorder %v1127, 2
    %vm1148 = vcmp.lt.s32.totalorder %v1127, 3
    %vm1149 = vcmp.lt.s32.totalorder %v1127, 4
    %v1150 = vsel %vm1146, %v1130, %v1133
    %v1151 = vsel %vm1149, %v1139, 2102212464
    %v1152 = vsel %vm1148, %v1136, %v1151
    %v1153 = vsel %vm1147, %v1150, %v1152
    %v1154 = vsel %vm1146, %v1133, %v1136
    %v1155 = vsel %vm1149, %v1142, 920167782
    %v1156 = vsel %vm1148, %v1139, %v1155
    %v1157 = vsel %vm1147, %v1154, %v1156
    %v1158 = vsel %vm1146, %v1136, %v1139
    %v1159 = vsel %vm1149, %v1145, 1326507024
    %v1160 = vsel %vm1148, %v1142, %v1159
    %v1161 = vsel %vm1147, %v1158, %v1160
    %v1162 = vshll.u32 %v1122, 8
    %v1163 = vand.u32 %v1162, 65535
    %v1164 = vshrl.u32 %v1162, 16
    %v1165 = vand.u32 %v1161, 65535
    %v1166 = vshrl.u32 %v1161, 16
    %v1167 = vmul.u32 %v1163, %v1165
    %v1168 = vmul.u32 %v1163, %v1166
    %v1169 = vmul.u32 %v1164, %v1165
    %v1170 = vmul.u32 %v1164, %v1166
    %v1171 = vshll.u32 %v1168, 16
    %v1172 = vshrl.u32 %v1168, 16
    %v1173 = vshll.u32 %v1169, 16
    %v1174 = vshrl.u32 %v1169, 16
    %vm1175 = vc.u32 %v1167, %v1171
    %v1176 = vsel %vm1175, 1, 0
    %v1177 = vadd.s32 %v1167, %v1171
    %v1178 = vadd.s32 %v1170, %v1176
    %vm1179 = vc.u32 %v1177, %v1173
    %v1180 = vsel %vm1179, 1, 0
    %v1181 = vadd.s32 %v1177, %v1173
    %v1182 = vadd.s32 %v1178, %v1180
    %v1183 = vadd.s32 %v1182, %v1172
    %v1184 = vadd.s32 %v1183, %v1174
    %v1185 = vand.u32 %v1162, 65535
    %v1186 = vshrl.u32 %v1162, 16
    %v1187 = vand.u32 %v1157, 65535
    %v1188 = vshrl.u32 %v1157, 16
    %v1189 = vmul.u32 %v1185, %v1187
    %v1190 = vmul.u32 %v1185, %v1188
    %v1191 = vmul.u32 %v1186, %v1187
    %v1192 = vmul.u32 %v1186, %v1188
    %v1193 = vshll.u32 %v1190, 16
    %v1194 = vshrl.u32 %v1190, 16
    %v1195 = vshll.u32 %v1191, 16
    %v1196 = vshrl.u32 %v1191, 16
    %vm1197 = vc.u32 %v1189, %v1193
    %v1198 = vsel %vm1197, 1, 0
    %v1199 = vadd.s32 %v1189, %v1193
    %v1200 = vadd.s32 %v1192, %v1198
    %vm1201 = vc.u32 %v1199, %v1195
    %v1202 = vsel %vm1201, 1, 0
    %v1203 = vadd.s32 %v1199, %v1195
    %v1204 = vadd.s32 %v1200, %v1202
    %v1205 = vadd.s32 %v1204, %v1194
    %v1206 = vadd.s32 %v1205, %v1196
    %v1207 = vmul.u32 %v1162, %v1153
    %v1208 = vadd.s32 %v1184, %v1203
    %vm1209 = vc.u32 %v1184, %v1203
    %v1210 = vadd.s32 %v1206, 1
    %v1211 = vsel %vm1209, %v1210, %v1206
    %v1212 = vadd.s32 %v1207, %v1211
    %v1213 = vadd.s32 %v1212, 536870912
    %v1214 = vshrl.u32 %v1213, 30
    %v1215 = vshll.u32 %v1214, 30
    %v1216 = vsub.s32 %v1212, %v1215
    %vm1217 = vcmp.lt.s32.totalorder %v1216, 0
    %v1218 = vsub.s32 0, %v1216
    %v1219 = vsel %vm1217, %v1218, %v1216
    %v1220 = vclz %v1219
    %v1221 = vsub.s32 %v1220, 2
    %vm1222 = vcmp.gt.s32.totalorder 0, %v1221
    %v1223 = vsel %vm1222, 0, %v1221
    %v1224 = vsub.s32 32, %v1223
    %v1225 = vshll.u32 %v1216, %v1223
    %v1226 = vshrl.u32 %v1208, %v1224
    %v1227 = vor.u32 %v1225, %v1226
    %v1228 = vsub.s32 4294967266, %v1223
    %v1229 = vadd.s32 %v1228, 127
    %v1230 = vshll.u32 %v1229, 23
    %v1231 = vor.u32 4788187, %v1230
    %v1232 = vand.u32 2147483647, %v1231
    %v1234 = vcvt.s32.f32 %v1227
    %v1235 = vmul.f32 %v1234, %v1232
    %v1236 = vxor.u32 %v1235, 2147483648
    %v1237 = vsel %vm1116, %v1236, %v1235
    %v1238 = vsub.s32 4, %v1214
    %v1239 = vsel %vm1116, %v1238, %v1214
    %v1240 = vsel %vm1115, %v31, %v1237
    %v1241 = vsel %vm1115, 0, %v1239
    %v1242 = vmul.f32 %v1240, %v1240
    %v1243 = vmul.f32 %v1242, -0.001358992
    %v1244 = vadd.f32 %v1243, 0.041655596
    %v1245 = vmul.f32 %v1242, %v1244
    %v1246 = vadd.f32 %v1245, -0.4999988
    %v1247 = vmul.f32 %v1242, %v1246
    %v1248 = vadd.f32 1.0, %v1247
    %v1249 = vmul.f32 %v1240, %v1240
    %v1250 = vmul.f32 %v1249, -0.00019511016
    %v1251 = vadd.f32 %v1250, 0.008332121
    %v1252 = vmul.f32 %v1249, %v1251
    %v1253 = vadd.f32 %v1252, -0.16666654
    %v1254 = vmul.f32 %v1249, %v1253
    %v1255 = vadd.f32 %v1254, 1.0
    %v1256 = vmul.f32 %v1255, %v1240
    %vm1257 = vweird.f32 %v31
    %v1258 = vand.u32 %v1241, 3
    %vm1259 = vcmp.lt.s32.totalorder %v1258, 2
    %vm1260 = vcmp.eq.s32.totalorder %v1258, 0
    %v1261 = vxor.u32 %v1256, 2147483648
    %v1262 = vsel %vm1260, %v1248, %v1261
    %vm1263 = vcmp.eq.s32.totalorder %v1258, 2
    %v1264 = vxor.u32 %v1248, 2147483648
    %v1265 = vsel %vm1263, %v1264, %v1256
    %v1266 = vsel %vm1259, %v1262, %v1265
    %v1267 = vsel %vm1257, nan, %v1266
    %v1268 = vmul.f32 %v28, 2.0
    %v1269 = vmul.f32 %v29, 2.0
    %v1270 = vmul.f32 %v30, 2.0
    %v1271 = vmul.f32 %v31, 2.0
    %v1272 = vand.u32 2147483647, %v1268
    %vm1273 = vcmp.le.f32.partialorder %v1272, 0.7853982
    %vm1274 = vcmp.lt.s32.totalorder %v1268, 0
    %v1275 = vand.u32 %v1268, 2139095040
    %v1276 = vshrl.u32 %v1275, 23
    %v1277 = vsub.s32 %v1276, 127
    %v1278 = vand.u32 2147483647, %v1268
    %v1279 = vand.u32 %v1278, 8388607
    %v1280 = vor.u32 %v1279, 8388608
    %v1281 = vsub.s32 0, %v1280
    %v1282 = vadd.s32 %v1277, 1
    %vm1283 = vcmp.gt.s32.totalorder %v1282, 0
    %v1284 = vsel %vm1283, %v1282, 0
    %v1285 = vshrl.u32 %v1284, 5
    %v1286 = vand.u32 %v1284, 31
    %v1287 = vsub.s32 32, %v1286
    %v1288 = vshrl.u32 683565275, %v1287
    %v1289 = vshll.u32 683565275, %v1286
    %v1290 = vshrl.u32 2475754826, %v1287
    %v1291 = vor.u32 %v1289, %v1290
    %v1292 = vshll.u32 2475754826, %v1286
    %v1293 = vshrl.u32 2131351028, %v1287
    %v1294 = vor.u32 %v1292, %v1293
    %v1295 = vshll.u32 2131351028, %v1286
    %v1296 = vshrl.u32 2102212464, %v1287
    %v1297 = vor.u32 %v1295, %v1296
    %v1298 = vshll.u32 2102212464, %v1286
    %v1299 = vshrl.u32 920167782, %v1287
    %v1300 = vor.u32 %v1298, %v1299
    %v1301 = vshll.u32 920167782, %v1286
    %v1302 = vshrl.u32 1326507024, %v1287
    %v1303 = vor.u32 %v1301, %v1302
    %vm1304 = vcmp.lt.s32.totalorder %v1285, 1
    %vm1305 = vcmp.lt.s32.totalorder %v1285, 2
    %vm1306 = vcmp.lt.s32.totalorder %v1285, 3
    %vm1307 = vcmp.lt.s32.totalorder %v1285, 4
    %v1308 = vsel %vm1304, %v1288, %v1291
    %v1309 = vsel %vm1307, %v1297, 2102212464
    %v1310 = vsel %vm1306, %v1294, %v1309
    %v1311 = vsel %vm1305, %v1308, %v1310
    %v1312 = vsel %vm1304, %v1291, %v1294
    %v1313 = vsel %vm1307, %v1300, 920167782
    %v1314 = vsel %vm1306, %v1297, %v1313
    %v1315 = vsel %vm1305, %v1312, %v1314
    %v1316 = vsel %vm1304, %v1294, %v1297
    %v1317 = vsel %vm1307, %v1303, 1326507024
    %v1318 = vsel %vm1306, %v1300, %v1317
    %v1319 = vsel %vm1305, %v1316, %v1318
    %v1320 = vshll.u32 %v1280, 8
    %v1321 = vand.u32 %v1320, 65535
    %v1322 = vshrl.u32 %v1320, 16
    %v1323 = vand.u32 %v1319, 65535
    %v1324 = vshrl.u32 %v1319, 16
    %v1325 = vmul.u32 %v1321, %v1323
    %v1326 = vmul.u32 %v1321, %v1324
    %v1327 = vmul.u32 %v1322, %v1323
    %v1328 = vmul.u32 %v1322, %v1324
    %v1329 = vshll.u32 %v1326, 16
    %v1330 = vshrl.u32 %v1326, 16
    %v1331 = vshll.u32 %v1327, 16
    %v1332 = vshrl.u32 %v1327, 16
    %vm1333 = vc.u32 %v1325, %v1329
    %v1334 = vsel %vm1333, 1, 0
    %v1335 = vadd.s32 %v1325, %v1329
    %v1336 = vadd.s32 %v1328, %v1334
    %vm1337 = vc.u32 %v1335, %v1331
    %v1338 = vsel %vm1337, 1, 0
    %v1339 = vadd.s32 %v1335, %v1331
    %v1340 = vadd.s32 %v1336, %v1338
    %v1341 = vadd.s32 %v1340, %v1330
    %v1342 = vadd.s32 %v1341, %v1332
    %v1343 = vand.u32 %v1320, 65535
    %v1344 = vshrl.u32 %v1320, 16
    %v1345 = vand.u32 %v1315, 65535
    %v1346 = vshrl.u32 %v1315, 16
    %v1347 = vmul.u32 %v1343, %v1345
    %v1348 = vmul.u32 %v1343, %v1346
    %v1349 = vmul.u32 %v1344, %v1345
    %v1350 = vmul.u32 %v1344, %v1346
    %v1351 = vshll.u32 %v1348, 16
    %v1352 = vshrl.u32 %v1348, 16
    %v1353 = vshll.u32 %v1349, 16
    %v1354 = vshrl.u32 %v1349, 16
    %vm1355 = vc.u32 %v1347, %v1351
    %v1356 = vsel %vm1355, 1, 0
    %v1357 = vadd.s32 %v1347, %v1351
    %v1358 = vadd.s32 %v1350, %v1356
    %vm1359 = vc.u32 %v1357, %v1353
    %v1360 = vsel %vm1359, 1, 0
    %v1361 = vadd.s32 %v1357, %v1353
    %v1362 = vadd.s32 %v1358, %v1360
    %v1363 = vadd.s32 %v1362, %v1352
    %v1364 = vadd.s32 %v1363, %v1354
    %v1365 = vmul.u32 %v1320, %v1311
    %v1366 = vadd.s32 %v1342, %v1361
    %vm1367 = vc.u32 %v1342, %v1361
    %v1368 = vadd.s32 %v1364, 1
    %v1369 = vsel %vm1367, %v1368, %v1364
    %v1370 = vadd.s32 %v1365, %v1369
    %v1371 = vadd.s32 %v1370, 536870912
    %v1372 = vshrl.u32 %v1371, 30
    %v1373 = vshll.u32 %v1372, 30
    %v1374 = vsub.s32 %v1370, %v1373
    %vm1375 = vcmp.lt.s32.totalorder %v1374, 0
    %v1376 = vsub.s32 0, %v1374
    %v1377 = vsel %vm1375, %v1376, %v1374
    %v1378 = vclz %v1377
    %v1379 = vsub.s32 %v1378, 2
    %vm1380 = vcmp.gt.s32.totalorder 0, %v1379
    %v1381 = vsel %vm1380, 0, %v1379
    %v1382 = vsub.s32 32, %v1381
    %v1383 = vshll.u32 %v1374, %v1381
    %v1384 = vshrl.u32 %v1366, %v1382
    %v1385 = vor.u32 %v1383, %v1384
    %v1386 = vsub.s32 4294967266, %v1381
    %v1387 = vadd.s32 %v1386, 127
    %v1388 = vshll.u32 %v1387, 23
    %v1389 = vor.u32 4788187, %v1388
    %v1390 = vand.u32 2147483647, %v1389
    %v1392 = vcvt.s32.f32 %v1385
    %v1393 = vmul.f32 %v1392, %v1390
    %v1394 = vxor.u32 %v1393, 2147483648
    %v1395 = vsel %vm1274, %v1394, %v1393
    %v1396 = vsub.s32 4, %v1372
    %v1397 = vsel %vm1274, %v1396, %v1372
    %v1398 = vsel %vm1273, %v1268, %v1395
    %v1399 = vsel %vm1273, 0, %v1397
    %v1400 = vmul.f32 %v1398, %v1398
    %v1401 = vmul.f32 %v1400, -0.001358992
    %v1402 = vadd.f32 %v1401, 0.041655596
    %v1403 = vmul.f32 %v1400, %v1402
    %v1404 = vadd.f32 %v1403, -0.4999988
    %v1405 = vmul.f32 %v1400, %v1404
    %v1406 = vadd.f32 1.0, %v1405
    %v1407 = vmul.f32 %v1398, %v1398
    %v1408 = vmul.f32 %v1407, -0.00019511016
    %v1409 = vadd.f32 %v1408, 0.008332121
    %v1410 = vmul.f32 %v1407, %v1409
    %v1411 = vadd.f32 %v1410, -0.16666654
    %v1412 = vmul.f32 %v1407, %v1411
    %v1413 = vadd.f32 %v1412, 1.0
    %v1414 = vmul.f32 %v1413, %v1398
    %vm1415 = vweird.f32 %v1268
    %v1416 = vadd.s32 %v1399, 3
    %v1417 = vand.u32 %v1416, 3
    %vm1418 = vcmp.lt.s32.totalorder %v1417, 2
    %vm1419 = vcmp.eq.s32.totalorder %v1417, 0
    %v1420 = vxor.u32 %v1414, 2147483648
    %v1421 = vsel %vm1419, %v1406, %v1420
    %vm1422 = vcmp.eq.s32.totalorder %v1417, 2
    %v1423 = vxor.u32 %v1406, 2147483648
    %v1424 = vsel %vm1422, %v1423, %v1414
    %v1425 = vsel %vm1418, %v1421, %v1424
    %v1426 = vsel %vm1415, nan, %v1425
    %v1427 = vand.u32 2147483647, %v1269
    %vm1428 = vcmp.le.f32.partialorder %v1427, 0.7853982
    %vm1429 = vcmp.lt.s32.totalorder %v1269, 0
    %v1430 = vand.u32 %v1269, 2139095040
    %v1431 = vshrl.u32 %v1430, 23
    %v1432 = vsub.s32 %v1431, 127
    %v1433 = vand.u32 2147483647, %v1269
    %v1434 = vand.u32 %v1433, 8388607
    %v1435 = vor.u32 %v1434, 8388608
    %v1436 = vsub.s32 0, %v1435
    %v1437 = vadd.s32 %v1432, 1
    %vm1438 = vcmp.gt.s32.totalorder %v1437, 0
    %v1439 = vsel %vm1438, %v1437, 0
    %v1440 = vshrl.u32 %v1439, 5
    %v1441 = vand.u32 %v1439, 31
    %v1442 = vsub.s32 32, %v1441
    %v1443 = vshrl.u32 683565275, %v1442
    %v1444 = vshll.u32 683565275, %v1441
    %v1445 = vshrl.u32 2475754826, %v1442
    %v1446 = vor.u32 %v1444, %v1445
    %v1447 = vshll.u32 2475754826, %v1441
    %v1448 = vshrl.u32 2131351028, %v1442
    %v1449 = vor.u32 %v1447, %v1448
    %v1450 = vshll.u32 2131351028, %v1441
    %v1451 = vshrl.u32 2102212464, %v1442
    %v1452 = vor.u32 %v1450, %v1451
    %v1453 = vshll.u32 2102212464, %v1441
    %v1454 = vshrl.u32 920167782, %v1442
    %v1455 = vor.u32 %v1453, %v1454
    %v1456 = vshll.u32 920167782, %v1441
    %v1457 = vshrl.u32 1326507024, %v1442
    %v1458 = vor.u32 %v1456, %v1457
    %vm1459 = vcmp.lt.s32.totalorder %v1440, 1
    %vm1460 = vcmp.lt.s32.totalorder %v1440, 2
    %vm1461 = vcmp.lt.s32.totalorder %v1440, 3
    %vm1462 = vcmp.lt.s32.totalorder %v1440, 4
    %v1463 = vsel %vm1459, %v1443, %v1446
    %v1464 = vsel %vm1462, %v1452, 2102212464
    %v1465 = vsel %vm1461, %v1449, %v1464
    %v1466 = vsel %vm1460, %v1463, %v1465
    %v1467 = vsel %vm1459, %v1446, %v1449
    %v1468 = vsel %vm1462, %v1455, 920167782
    %v1469 = vsel %vm1461, %v1452, %v1468
    %v1470 = vsel %vm1460, %v1467, %v1469
    %v1471 = vsel %vm1459, %v1449, %v1452
    %v1472 = vsel %vm1462, %v1458, 1326507024
    %v1473 = vsel %vm1461, %v1455, %v1472
    %v1474 = vsel %vm1460, %v1471, %v1473
    %v1475 = vshll.u32 %v1435, 8
    %v1476 = vand.u32 %v1475, 65535
    %v1477 = vshrl.u32 %v1475, 16
    %v1478 = vand.u32 %v1474, 65535
    %v1479 = vshrl.u32 %v1474, 16
    %v1480 = vmul.u32 %v1476, %v1478
    %v1481 = vmul.u32 %v1476, %v1479
    %v1482 = vmul.u32 %v1477, %v1478
    %v1483 = vmul.u32 %v1477, %v1479
    %v1484 = vshll.u32 %v1481, 16
    %v1485 = vshrl.u32 %v1481, 16
    %v1486 = vshll.u32 %v1482, 16
    %v1487 = vshrl.u32 %v1482, 16
    %vm1488 = vc.u32 %v1480, %v1484
    %v1489 = vsel %vm1488, 1, 0
    %v1490 = vadd.s32 %v1480, %v1484
    %v1491 = vadd.s32 %v1483, %v1489
    %vm1492 = vc.u32 %v1490, %v1486
    %v1493 = vsel %vm1492, 1, 0
    %v1494 = vadd.s32 %v1490, %v1486
    %v1495 = vadd.s32 %v1491, %v1493
    %v1496 = vadd.s32 %v1495, %v1485
    %v1497 = vadd.s32 %v1496, %v1487
    %v1498 = vand.u32 %v1475, 65535
    %v1499 = vshrl.u32 %v1475, 16
    %v1500 = vand.u32 %v1470, 65535
    %v1501 = vshrl.u32 %v1470, 16
    %v1502 = vmul.u32 %v1498, %v1500
    %v1503 = vmul.u32 %v1498, %v1501
    %v1504 = vmul.u32 %v1499, %v1500
    %v1505 = vmul.u32 %v1499, %v1501
    %v1506 = vshll.u32 %v1503, 16
    %v1507 = vshrl.u32 %v1503, 16
    %v1508 = vshll.u32 %v1504, 16
    %v1509 = vshrl.u32 %v1504, 16
    %vm1510 = vc.u32 %v1502, %v1506
    %v1511 = vsel %vm1510, 1, 0
    %v1512 = vadd.s32 %v1502, %v1506
    %v1513 = vadd.s32 %v1505, %v1511
    %vm1514 = vc.u32 %v1512, %v1508
    %v1515 = vsel %vm1514, 1, 0
    %v1516 = vadd.s32 %v1512, %v1508
    %v1517 = vadd.s32 %v1513, %v1515
    %v1518 = vadd.s32 %v1517, %v1507
    %v1519 = vadd.s32 %v1518, %v1509
    %v1520 = vmul.u32 %v1475, %v1466
    %v1521 = vadd.s32 %v1497, %v1516
    %vm1522 = vc.u32 %v1497, %v1516
    %v1523 = vadd.s32 %v1519, 1
    %v1524 = vsel %vm1522, %v1523, %v1519
    %v1525 = vadd.s32 %v1520, %v1524
    %v1526 = vadd.s32 %v1525, 536870912
    %v1527 = vshrl.u32 %v1526, 30
    %v1528 = vshll.u32 %v1527, 30
    %v1529 = vsub.s32 %v1525, %v1528
    %vm1530 = vcmp.lt.s32.totalorder %v1529, 0
    %v1531 = vsub.s32 0, %v1529
    %v1532 = vsel %vm1530, %v1531, %v1529
    %v1533 = vclz %v1532
    %v1534 = vsub.s32 %v1533, 2
    %vm1535 = vcmp.gt.s32.totalorder 0, %v1534
    %v1536 = vsel %vm1535, 0, %v1534
    %v1537 = vsub.s32 32, %v1536
    %v1538 = vshll.u32 %v1529, %v1536
    %v1539 = vshrl.u32 %v1521, %v1537
    %v1540 = vor.u32 %v1538, %v1539
    %v1541 = vsub.s32 4294967266, %v1536
    %v1542 = vadd.s32 %v1541, 127
    %v1543 = vshll.u32 %v1542, 23
    %v1544 = vor.u32 4788187, %v1543
    %v1545 = vand.u32 2147483647, %v1544
    %v1547 = vcvt.s32.f32 %v1540
    %v1548 = vmul.f32 %v1547, %v1545
    %v1549 = vxor.u32 %v1548, 2147483648
    %v1550 = vsel %vm1429, %v1549, %v1548
    %v1551 = vsub.s32 4, %v1527
    %v1552 = vsel %vm1429, %v1551, %v1527
    %v1553 = vsel %vm1428, %v1269, %v1550
    %v1554 = vsel %vm1428, 0, %v1552
    %v1555 = vmul.f32 %v1553, %v1553
    %v1556 = vmul.f32 %v1555, -0.001358992
    %v1557 = vadd.f32 %v1556, 0.041655596
    %v1558 = vmul.f32 %v1555, %v1557
    %v1559 = vadd.f32 %v1558, -0.4999988
    %v1560 = vmul.f32 %v1555, %v1559
    %v1561 = vadd.f32 1.0, %v1560
    %v1562 = vmul.f32 %v1553, %v1553
    %v1563 = vmul.f32 %v1562, -0.00019511016
    %v1564 = vadd.f32 %v1563, 0.008332121
    %v1565 = vmul.f32 %v1562, %v1564
    %v1566 = vadd.f32 %v1565, -0.16666654
    %v1567 = vmul.f32 %v1562, %v1566
    %v1568 = vadd.f32 %v1567, 1.0
    %v1569 = vmul.f32 %v1568, %v1553
    %vm1570 = vweird.f32 %v1269
    %v1571 = vadd.s32 %v1554, 3
    %v1572 = vand.u32 %v1571, 3
    %vm1573 = vcmp.lt.s32.totalorder %v1572, 2
    %vm1574 = vcmp.eq.s32.totalorder %v1572, 0
    %v1575 = vxor.u32 %v1569, 2147483648
    %v1576 = vsel %vm1574, %v1561, %v1575
    %vm1577 = vcmp.eq.s32.totalorder %v1572, 2
    %v1578 = vxor.u32 %v1561, 2147483648
    %v1579 = vsel %vm1577, %v1578, %v1569
    %v1580 = vsel %vm1573, %v1576, %v1579
    %v1581 = vsel %vm1570, nan, %v1580
    %v1582 = vand.u32 2147483647, %v1270
    %vm1583 = vcmp.le.f32.partialorder %v1582, 0.7853982
    %vm1584 = vcmp.lt.s32.totalorder %v1270, 0
    %v1585 = vand.u32 %v1270, 2139095040
    %v1586 = vshrl.u32 %v1585, 23
    %v1587 = vsub.s32 %v1586, 127
    %v1588 = vand.u32 2147483647, %v1270
    %v1589 = vand.u32 %v1588, 8388607
    %v1590 = vor.u32 %v1589, 8388608
    %v1591 = vsub.s32 0, %v1590
    %v1592 = vadd.s32 %v1587, 1
    %vm1593 = vcmp.gt.s32.totalorder %v1592, 0
    %v1594 = vsel %vm1593, %v1592, 0
    %v1595 = vshrl.u32 %v1594, 5
    %v1596 = vand.u32 %v1594, 31
    %v1597 = vsub.s32 32, %v1596
    %v1598 = vshrl.u32 683565275, %v1597
    %v1599 = vshll.u32 683565275, %v1596
    %v1600 = vshrl.u32 2475754826, %v1597
    %v1601 = vor.u32 %v1599, %v1600
    %v1602 = vshll.u32 2475754826, %v1596
    %v1603 = vshrl.u32 2131351028, %v1597
    %v1604 = vor.u32 %v1602, %v1603
    %v1605 = vshll.u32 2131351028, %v1596
    %v1606 = vshrl.u32 2102212464, %v1597
    %v1607 = vor.u32 %v1605, %v1606
    %v1608 = vshll.u32 2102212464, %v1596
    %v1609 = vshrl.u32 920167782, %v1597
    %v1610 = vor.u32 %v1608, %v1609
    %v1611 = vshll.u32 920167782, %v1596
    %v1612 = vshrl.u32 1326507024, %v1597
    %v1613 = vor.u32 %v1611, %v1612
    %vm1614 = vcmp.lt.s32.totalorder %v1595, 1
    %vm1615 = vcmp.lt.s32.totalorder %v1595, 2
    %vm1616 = vcmp.lt.s32.totalorder %v1595, 3
    %vm1617 = vcmp.lt.s32.totalorder %v1595, 4
    %v1618 = vsel %vm1614, %v1598, %v1601
    %v1619 = vsel %vm1617, %v1607, 2102212464
    %v1620 = vsel %vm1616, %v1604, %v1619
    %v1621 = vsel %vm1615, %v1618, %v1620
    %v1622 = vsel %vm1614, %v1601, %v1604
    %v1623 = vsel %vm1617, %v1610, 920167782
    %v1624 = vsel %vm1616, %v1607, %v1623
    %v1625 = vsel %vm1615, %v1622, %v1624
    %v1626 = vsel %vm1614, %v1604, %v1607
    %v1627 = vsel %vm1617, %v1613, 1326507024
    %v1628 = vsel %vm1616, %v1610, %v1627
    %v1629 = vsel %vm1615, %v1626, %v1628
    %v1630 = vshll.u32 %v1590, 8
    %v1631 = vand.u32 %v1630, 65535
    %v1632 = vshrl.u32 %v1630, 16
    %v1633 = vand.u32 %v1629, 65535
    %v1634 = vshrl.u32 %v1629, 16
    %v1635 = vmul.u32 %v1631, %v1633
    %v1636 = vmul.u32 %v1631, %v1634
    %v1637 = vmul.u32 %v1632, %v1633
    %v1638 = vmul.u32 %v1632, %v1634
    %v1639 = vshll.u32 %v1636, 16
    %v1640 = vshrl.u32 %v1636, 16
    %v1641 = vshll.u32 %v1637, 16
    %v1642 = vshrl.u32 %v1637, 16
    %vm1643 = vc.u32 %v1635, %v1639
    %v1644 = vsel %vm1643, 1, 0
    %v1645 = vadd.s32 %v1635, %v1639
    %v1646 = vadd.s32 %v1638, %v1644
    %vm1647 = vc.u32 %v1645, %v1641
    %v1648 = vsel %vm1647, 1, 0
    %v1649 = vadd.s32 %v1645, %v1641
    %v1650 = vadd.s32 %v1646, %v1648
    %v1651 = vadd.s32 %v1650, %v1640
    %v1652 = vadd.s32 %v1651, %v1642
    %v1653 = vand.u32 %v1630, 65535
    %v1654 = vshrl.u32 %v1630, 16
    %v1655 = vand.u32 %v1625, 65535
    %v1656 = vshrl.u32 %v1625, 16
    %v1657 = vmul.u32 %v1653, %v1655
    %v1658 = vmul.u32 %v1653, %v1656
    %v1659 = vmul.u32 %v1654, %v1655
    %v1660 = vmul.u32 %v1654, %v1656
    %v1661 = vshll.u32 %v1658, 16
    %v1662 = vshrl.u32 %v1658, 16
    %v1663 = vshll.u32 %v1659, 16
    %v1664 = vshrl.u32 %v1659, 16
    %vm1665 = vc.u32 %v1657, %v1661
    %v1666 = vsel %vm1665, 1, 0
    %v1667 = vadd.s32 %v1657, %v1661
    %v1668 = vadd.s32 %v1660, %v1666
    %vm1669 = vc.u32 %v1667, %v1663
    %v1670 = vsel %vm1669, 1, 0
    %v1671 = vadd.s32 %v1667, %v1663
    %v1672 = vadd.s32 %v1668, %v1670
    %v1673 = vadd.s32 %v1672, %v1662
    %v1674 = vadd.s32 %v1673, %v1664
    %v1675 = vmul.u32 %v1630, %v1621
    %v1676 = vadd.s32 %v1652, %v1671
    %vm1677 = vc.u32 %v1652, %v1671
    %v1678 = vadd.s32 %v1674, 1
    %v1679 = vsel %vm1677, %v1678, %v1674
    %v1680 = vadd.s32 %v1675, %v1679
    %v1681 = vadd.s32 %v1680, 536870912
    %v1682 = vshrl.u32 %v1681, 30
    %v1683 = vshll.u32 %v1682, 30
    %v1684 = vsub.s32 %v1680, %v1683
    %vm1685 = vcmp.lt.s32.totalorder %v1684, 0
    %v1686 = vsub.s32 0, %v1684
    %v1687 = vsel %vm1685, %v1686, %v1684
    %v1688 = vclz %v1687
    %v1689 = vsub.s32 %v1688, 2
    %vm1690 = vcmp.gt.s32.totalorder 0, %v1689
    %v1691 = vsel %vm1690, 0, %v1689
    %v1692 = vsub.s32 32, %v1691
    %v1693 = vshll.u32 %v1684, %v1691
    %v1694 = vshrl.u32 %v1676, %v1692
    %v1695 = vor.u32 %v1693, %v1694
    %v1696 = vsub.s32 4294967266, %v1691
    %v1697 = vadd.s32 %v1696, 127
    %v1698 = vshll.u32 %v1697, 23
    %v1699 = vor.u32 4788187, %v1698
    %v1700 = vand.u32 2147483647, %v1699
    %v1702 = vcvt.s32.f32 %v1695
    %v1703 = vmul.f32 %v1702, %v1700
    %v1704 = vxor.u32 %v1703, 2147483648
    %v1705 = vsel %vm1584, %v1704, %v1703
    %v1706 = vsub.s32 4, %v1682
    %v1707 = vsel %vm1584, %v1706, %v1682
    %v1708 = vsel %vm1583, %v1270, %v1705
    %v1709 = vsel %vm1583, 0, %v1707
    %v1710 = vmul.f32 %v1708, %v1708
    %v1711 = vmul.f32 %v1710, -0.001358992
    %v1712 = vadd.f32 %v1711, 0.041655596
    %v1713 = vmul.f32 %v1710, %v1712
    %v1714 = vadd.f32 %v1713, -0.4999988
    %v1715 = vmul.f32 %v1710, %v1714
    %v1716 = vadd.f32 1.0, %v1715
    %v1717 = vmul.f32 %v1708, %v1708
    %v1718 = vmul.f32 %v1717, -0.00019511016
    %v1719 = vadd.f32 %v1718, 0.008332121
    %v1720 = vmul.f32 %v1717, %v1719
    %v1721 = vadd.f32 %v1720, -0.16666654
    %v1722 = vmul.f32 %v1717, %v1721
    %v1723 = vadd.f32 %v1722, 1.0
    %v1724 = vmul.f32 %v1723, %v1708
    %vm1725 = vweird.f32 %v1270
    %v1726 = vadd.s32 %v1709, 3
    %v1727 = vand.u32 %v1726, 3
    %vm1728 = vcmp.lt.s32.totalorder %v1727, 2
    %vm1729 = vcmp.eq.s32.totalorder %v1727, 0
    %v1730 = vxor.u32 %v1724, 2147483648
    %v1731 = vsel %vm1729, %v1716, %v1730
    %vm1732 = vcmp.eq.s32.totalorder %v1727, 2
    %v1733 = vxor.u32 %v1716, 2147483648
    %v1734 = vsel %vm1732, %v1733, %v1724
    %v1735 = vsel %vm1728, %v1731, %v1734
    %v1736 = vsel %vm1725, nan, %v1735
    %v1737 = vand.u32 2147483647, %v1271
    %vm1738 = vcmp.le.f32.partialorder %v1737, 0.7853982
    %vm1739 = vcmp.lt.s32.totalorder %v1271, 0
    %v1740 = vand.u32 %v1271, 2139095040
    %v1741 = vshrl.u32 %v1740, 23
    %v1742 = vsub.s32 %v1741, 127
    %v1743 = vand.u32 2147483647, %v1271
    %v1744 = vand.u32 %v1743, 8388607
    %v1745 = vor.u32 %v1744, 8388608
    %v1746 = vsub.s32 0, %v1745
    %v1747 = vadd.s32 %v1742, 1
    %vm1748 = vcmp.gt.s32.totalorder %v1747, 0
    %v1749 = vsel %vm1748, %v1747, 0
    %v1750 = vshrl.u32 %v1749, 5
    %v1751 = vand.u32 %v1749, 31
    %v1752 = vsub.s32 32, %v1751
    %v1753 = vshrl.u32 683565275, %v1752
    %v1754 = vshll.u32 683565275, %v1751
    %v1755 = vshrl.u32 2475754826, %v1752
    %v1756 = vor.u32 %v1754, %v1755
    %v1757 = vshll.u32 2475754826, %v1751
    %v1758 = vshrl.u32 2131351028, %v1752
    %v1759 = vor.u32 %v1757, %v1758
    %v1760 = vshll.u32 2131351028, %v1751
    %v1761 = vshrl.u32 2102212464, %v1752
    %v1762 = vor.u32 %v1760, %v1761
    %v1763 = vshll.u32 2102212464, %v1751
    %v1764 = vshrl.u32 920167782, %v1752
    %v1765 = vor.u32 %v1763, %v1764
    %v1766 = vshll.u32 920167782, %v1751
    %v1767 = vshrl.u32 1326507024, %v1752
    %v1768 = vor.u32 %v1766, %v1767
    %vm1769 = vcmp.lt.s32.totalorder %v1750, 1
    %vm1770 = vcmp.lt.s32.totalorder %v1750, 2
    %vm1771 = vcmp.lt.s32.totalorder %v1750, 3
    %vm1772 = vcmp.lt.s32.totalorder %v1750, 4
    %v1773 = vsel %vm1769, %v1753, %v1756
    %v1774 = vsel %vm1772, %v1762, 2102212464
    %v1775 = vsel %vm1771, %v1759, %v1774
    %v1776 = vsel %vm1770, %v1773, %v1775
    %v1777 = vsel %vm1769, %v1756, %v1759
    %v1778 = vsel %vm1772, %v1765, 920167782
    %v1779 = vsel %vm1771, %v1762, %v1778
    %v1780 = vsel %vm1770, %v1777, %v1779
    %v1781 = vsel %vm1769, %v1759, %v1762
    %v1782 = vsel %vm1772, %v1768, 1326507024
    %v1783 = vsel %vm1771, %v1765, %v1782
    %v1784 = vsel %vm1770, %v1781, %v1783
    %v1785 = vshll.u32 %v1745, 8
    %v1786 = vand.u32 %v1785, 65535
    %v1787 = vshrl.u32 %v1785, 16
    %v1788 = vand.u32 %v1784, 65535
    %v1789 = vshrl.u32 %v1784, 16
    %v1790 = vmul.u32 %v1786, %v1788
    %v1791 = vmul.u32 %v1786, %v1789
    %v1792 = vmul.u32 %v1787, %v1788
    %v1793 = vmul.u32 %v1787, %v1789
    %v1794 = vshll.u32 %v1791, 16
    %v1795 = vshrl.u32 %v1791, 16
    %v1796 = vshll.u32 %v1792, 16
    %v1797 = vshrl.u32 %v1792, 16
    %vm1798 = vc.u32 %v1790, %v1794
    %v1799 = vsel %vm1798, 1, 0
    %v1800 = vadd.s32 %v1790, %v1794
    %v1801 = vadd.s32 %v1793, %v1799
    %vm1802 = vc.u32 %v1800, %v1796
    %v1803 = vsel %vm1802, 1, 0
    %v1804 = vadd.s32 %v1800, %v1796
    %v1805 = vadd.s32 %v1801, %v1803
    %v1806 = vadd.s32 %v1805, %v1795
    %v1807 = vadd.s32 %v1806, %v1797
    %v1808 = vand.u32 %v1785, 65535
    %v1809 = vshrl.u32 %v1785, 16
    %v1810 = vand.u32 %v1780, 65535
    %v1811 = vshrl.u32 %v1780, 16
    %v1812 = vmul.u32 %v1808, %v1810
    %v1813 = vmul.u32 %v1808, %v1811
    %v1814 = vmul.u32 %v1809, %v1810
    %v1815 = vmul.u32 %v1809, %v1811
    %v1816 = vshll.u32 %v1813, 16
    %v1817 = vshrl.u32 %v1813, 16
    %v1818 = vshll.u32 %v1814, 16
    %v1819 = vshrl.u32 %v1814, 16
    %vm1820 = vc.u32 %v1812, %v1816
    %v1821 = vsel %vm1820, 1, 0
    %v1822 = vadd.s32 %v1812, %v1816
    %v1823 = vadd.s32 %v1815, %v1821
    %vm1824 = vc.u32 %v1822, %v1818
    %v1825 = vsel %vm1824, 1, 0
    %v1826 = vadd.s32 %v1822, %v1818
    %v1827 = vadd.s32 %v1823, %v1825
    %v1828 = vadd.s32 %v1827, %v1817
    %v1829 = vadd.s32 %v1828, %v1819
    %v1830 = vmul.u32 %v1785, %v1776
    %v1831 = vadd.s32 %v1807, %v1826
    %vm1832 = vc.u32 %v1807, %v1826
    %v1833 = vadd.s32 %v1829, 1
    %v1834 = vsel %vm1832, %v1833, %v1829
    %v1835 = vadd.s32 %v1830, %v1834
    %v1836 = vadd.s32 %v1835, 536870912
    %v1837 = vshrl.u32 %v1836, 30
    %v1838 = vshll.u32 %v1837, 30
    %v1839 = vsub.s32 %v1835, %v1838
    %vm1840 = vcmp.lt.s32.totalorder %v1839, 0
    %v1841 = vsub.s32 0, %v1839
    %v1842 = vsel %vm1840, %v1841, %v1839
    %v1843 = vclz %v1842
    %v1844 = vsub.s32 %v1843, 2
    %vm1845 = vcmp.gt.s32.totalorder 0, %v1844
    %v1846 = vsel %vm1845, 0, %v1844
    %v1847 = vsub.s32 32, %v1846
    %v1848 = vshll.u32 %v1839, %v1846
    %v1849 = vshrl.u32 %v1831, %v1847
    %v1850 = vor.u32 %v1848, %v1849
    %v1851 = vsub.s32 4294967266, %v1846
    %v1852 = vadd.s32 %v1851, 127
    %v1853 = vshll.u32 %v1852, 23
    %v1854 = vor.u32 4788187, %v1853
    %v1855 = vand.u32 2147483647, %v1854
    %v1857 = vcvt.s32.f32 %v1850
    %v1858 = vmul.f32 %v1857, %v1855
    %v1859 = vxor.u32 %v1858, 2147483648
    %v1860 = vsel %vm1739, %v1859, %v1858
    %v1861 = vsub.s32 4, %v1837
    %v1862 = vsel %vm1739, %v1861, %v1837
    %v1863 = vsel %vm1738, %v1271, %v1860
    %v1864 = vsel %vm1738, 0, %v1862
    %v1865 = vmul.f32 %v1863, %v1863
    %v1866 = vmul.f32 %v1865, -0.001358992
    %v1867 = vadd.f32 %v1866, 0.041655596
    %v1868 = vmul.f32 %v1865, %v1867
    %v1869 = vadd.f32 %v1868, -0.4999988
    %v1870 = vmul.f32 %v1865, %v1869
    %v1871 = vadd.f32 1.0, %v1870
    %v1872 = vmul.f32 %v1863, %v1863
    %v1873 = vmul.f32 %v1872, -0.00019511016
    %v1874 = vadd.f32 %v1873, 0.008332121
    %v1875 = vmul.f32 %v1872, %v1874
    %v1876 = vadd.f32 %v1875, -0.16666654
    %v1877 = vmul.f32 %v1872, %v1876
    %v1878 = vadd.f32 %v1877, 1.0
    %v1879 = vmul.f32 %v1878, %v1863
    %vm1880 = vweird.f32 %v1271
    %v1881 = vadd.s32 %v1864, 3
    %v1882 = vand.u32 %v1881, 3
    %vm1883 = vcmp.lt.s32.totalorder %v1882, 2
    %vm1884 = vcmp.eq.s32.totalorder %v1882, 0
    %v1885 = vxor.u32 %v1879, 2147483648
    %v1886 = vsel %vm1884, %v1871, %v1885
    %vm1887 = vcmp.eq.s32.totalorder %v1882, 2
    %v1888 = vxor.u32 %v1871, 2147483648
    %v1889 = vsel %vm1887, %v1888, %v1879
    %v1890 = vsel %vm1883, %v1886, %v1889
    %v1891 = vsel %vm1880, nan, %v1890
    %v1892 = vand.u32 2147483647, %v1268
    %vm1893 = vcmp.le.f32.partialorder %v1892, 0.7853982
    %vm1894 = vcmp.lt.s32.totalorder %v1268, 0
    %v1895 = vand.u32 %v1268, 2139095040
    %v1896 = vshrl.u32 %v1895, 23
    %v1897 = vsub.s32 %v1896, 127
    %v1898 = vand.u32 2147483647, %v1268
    %v1899 = vand.u32 %v1898, 8388607
    %v1900 = vor.u32 %v1899, 8388608
    %v1901 = vsub.s32 0, %v1900
    %v1902 = vadd.s32 %v1897, 1
    %vm1903 = vcmp.gt.s32.totalorder %v1902, 0
    %v1904 = vsel %vm1903, %v1902, 0
    %v1905 = vshrl.u32 %v1904, 5
    %v1906 = vand.u32 %v1904, 31
    %v1907 = vsub.s32 32, %v1906
    %v1908 = vshrl.u32 683565275, %v1907
    %v1909 = vshll.u32 683565275, %v1906
    %v1910 = vshrl.u32 2475754826, %v1907
    %v1911 = vor.u32 %v1909, %v1910
    %v1912 = vshll.u32 2475754826, %v1906
    %v1913 = vshrl.u32 2131351028, %v1907
    %v1914 = vor.u32 %v1912, %v1913
    %v1915 = vshll.u32 2131351028, %v1906
    %v1916 = vshrl.u32 2102212464, %v1907
    %v1917 = vor.u32 %v1915, %v1916
    %v1918 = vshll.u32 2102212464, %v1906
    %v1919 = vshrl.u32 920167782, %v1907
    %v1920 = vor.u32 %v1918, %v1919
    %v1921 = vshll.u32 920167782, %v1906
    %v1922 = vshrl.u32 1326507024, %v1907
    %v1923 = vor.u32 %v1921, %v1922
    %vm1924 = vcmp.lt.s32.totalorder %v1905, 1
    %vm1925 = vcmp.lt.s32.totalorder %v1905, 2
    %vm1926 = vcmp.lt.s32.totalorder %v1905, 3
    %vm1927 = vcmp.lt.s32.totalorder %v1905, 4
    %v1928 = vsel %vm1924, %v1908, %v1911
    %v1929 = vsel %vm1927, %v1917, 2102212464
    %v1930 = vsel %vm1926, %v1914, %v1929
    %v1931 = vsel %vm1925, %v1928, %v1930
    %v1932 = vsel %vm1924, %v1911, %v1914
    %v1933 = vsel %vm1927, %v1920, 920167782
    %v1934 = vsel %vm1926, %v1917, %v1933
    %v1935 = vsel %vm1925, %v1932, %v1934
    %v1936 = vsel %vm1924, %v1914, %v1917
    %v1937 = vsel %vm1927, %v1923, 1326507024
    %v1938 = vsel %vm1926, %v1920, %v1937
    %v1939 = vsel %vm1925, %v1936, %v1938
    %v1940 = vshll.u32 %v1900, 8
    %v1941 = vand.u32 %v1940, 65535
    %v1942 = vshrl.u32 %v1940, 16
    %v1943 = vand.u32 %v1939, 65535
    %v1944 = vshrl.u32 %v1939, 16
    %v1945 = vmul.u32 %v1941, %v1943
    %v1946 = vmul.u32 %v1941, %v1944
    %v1947 = vmul.u32 %v1942, %v1943
    %v1948 = vmul.u32 %v1942, %v1944
    %v1949 = vshll.u32 %v1946, 16
    %v1950 = vshrl.u32 %v1946, 16
    %v1951 = vshll.u32 %v1947, 16
    %v1952 = vshrl.u32 %v1947, 16
    %vm1953 = vc.u32 %v1945, %v1949
    %v1954 = vsel %vm1953, 1, 0
    %v1955 = vadd.s32 %v1945, %v1949
    %v1956 = vadd.s32 %v1948, %v1954
    %vm1957 = vc.u32 %v1955, %v1951
    %v1958 = vsel %vm1957, 1, 0
    %v1959 = vadd.s32 %v1955, %v1951
    %v1960 = vadd.s32 %v1956, %v1958
    %v1961 = vadd.s32 %v1960, %v1950
    %v1962 = vadd.s32 %v1961, %v1952
    %v1963 = vand.u32 %v1940, 65535
    %v1964 = vshrl.u32 %v1940, 16
    %v1965 = vand.u32 %v1935, 65535
    %v1966 = vshrl.u32 %v1935, 16
    %v1967 = vmul.u32 %v1963, %v1965
    %v1968 = vmul.u32 %v1963, %v1966
    %v1969 = vmul.u32 %v1964, %v1965
    %v1970 = vmul.u32 %v1964, %v1966
    %v1971 = vshll.u32 %v1968, 16
    %v1972 = vshrl.u32 %v1968, 16
    %v1973 = vshll.u32 %v1969, 16
    %v1974 = vshrl.u32 %v1969, 16
    %vm1975 = vc.u32 %v1967, %v1971
    %v1976 = vsel %vm1975, 1, 0
    %v1977 = vadd.s32 %v1967, %v1971
    %v1978 = vadd.s32 %v1970, %v1976
    %vm1979 = vc.u32 %v1977, %v1973
    %v1980 = vsel %vm1979, 1, 0
    %v1981 = vadd.s32 %v1977, %v1973
    %v1982 = vadd.s32 %v1978, %v1980
    %v1983 = vadd.s32 %v1982, %v1972
    %v1984 = vadd.s32 %v1983, %v1974
    %v1985 = vmul.u32 %v1940, %v1931
    %v1986 = vadd.s32 %v1962, %v1981
    %vm1987 = vc.u32 %v1962, %v1981
    %v1988 = vadd.s32 %v1984, 1
    %v1989 = vsel %vm1987, %v1988, %v1984
    %v1990 = vadd.s32 %v1985, %v1989
    %v1991 = vadd.s32 %v1990, 536870912
    %v1992 = vshrl.u32 %v1991, 30
    %v1993 = vshll.u32 %v1992, 30
    %v1994 = vsub.s32 %v1990, %v1993
    %vm1995 = vcmp.lt.s32.totalorder %v1994, 0
    %v1996 = vsub.s32 0, %v1994
    %v1997 = vsel %vm1995, %v1996, %v1994
    %v1998 = vclz %v1997
    %v1999 = vsub.s32 %v1998, 2
    %vm2000 = vcmp.gt.s32.totalorder 0, %v1999
    %v2001 = vsel %vm2000, 0, %v1999
    %v2002 = vsub.s32 32, %v2001
    %v2003 = vshll.u32 %v1994, %v2001
    %v2004 = vshrl.u32 %v1986, %v2002
    %v2005 = vor.u32 %v2003, %v2004
    %v2006 = vsub.s32 4294967266, %v2001
    %v2007 = vadd.s32 %v2006, 127
    %v2008 = vshll.u32 %v2007, 23
    %v2009 = vor.u32 4788187, %v2008
    %v2010 = vand.u32 2147483647, %v2009
    %v2012 = vcvt.s32.f32 %v2005
    %v2013 = vmul.f32 %v2012, %v2010
    %v2014 = vxor.u32 %v2013, 2147483648
    %v2015 = vsel %vm1894, %v2014, %v2013
    %v2016 = vsub.s32 4, %v1992
    %v2017 = vsel %vm1894, %v2016, %v1992
    %v2018 = vsel %vm1893, %v1268, %v2015
    %v2019 = vsel %vm1893, 0, %v2017
    %v2020 = vmul.f32 %v2018, %v2018
    %v2021 = vmul.f32 %v2020, -0.001358992
    %v2022 = vadd.f32 %v2021, 0.041655596
    %v2023 = vmul.f32 %v2020, %v2022
    %v2024 = vadd.f32 %v2023, -0.4999988
    %v2025 = vmul.f32 %v2020, %v2024
    %v2026 = vadd.f32 1.0, %v2025
    %v2027 = vmul.f32 %v2018, %v2018
    %v2028 = vmul.f32 %v2027, -0.00019511016
    %v2029 = vadd.f32 %v2028, 0.008332121
    %v2030 = vmul.f32 %v2027, %v2029
    %v2031 = vadd.f32 %v2030, -0.16666654
    %v2032 = vmul.f32 %v2027, %v2031
    %v2033 = vadd.f32 %v2032, 1.0
    %v2034 = vmul.f32 %v2033, %v2018
    %vm2035 = vweird.f32 %v1268
    %v2036 = vand.u32 %v2019, 3
    %vm2037 = vcmp.lt.s32.totalorder %v2036, 2
    %vm2038 = vcmp.eq.s32.totalorder %v2036, 0
    %v2039 = vxor.u32 %v2034, 2147483648
    %v2040 = vsel %vm2038, %v2026, %v2039
    %vm2041 = vcmp.eq.s32.totalorder %v2036, 2
    %v2042 = vxor.u32 %v2026, 2147483648
    %v2043 = vsel %vm2041, %v2042, %v2034
    %v2044 = vsel %vm2037, %v2040, %v2043
    %v2045 = vsel %vm2035, nan, %v2044
    %v2046 = vand.u32 2147483647, %v1269
    %vm2047 = vcmp.le.f32.partialorder %v2046, 0.7853982
    %vm2048 = vcmp.lt.s32.totalorder %v1269, 0
    %v2049 = vand.u32 %v1269, 2139095040
    %v2050 = vshrl.u32 %v2049, 23
    %v2051 = vsub.s32 %v2050, 127
    %v2052 = vand.u32 2147483647, %v1269
    %v2053 = vand.u32 %v2052, 8388607
    %v2054 = vor.u32 %v2053, 8388608
    %v2055 = vsub.s32 0, %v2054
    %v2056 = vadd.s32 %v2051, 1
    %vm2057 = vcmp.gt.s32.totalorder %v2056, 0
    %v2058 = vsel %vm2057, %v2056, 0
    %v2059 = vshrl.u32 %v2058, 5
    %v2060 = vand.u32 %v2058, 31
    %v2061 = vsub.s32 32, %v2060
    %v2062 = vshrl.u32 683565275, %v2061
    %v2063 = vshll.u32 683565275, %v2060
    %v2064 = vshrl.u32 2475754826, %v2061
    %v2065 = vor.u32 %v2063, %v2064
    %v2066 = vshll.u32 2475754826, %v2060
    %v2067 = vshrl.u32 2131351028, %v2061
    %v2068 = vor.u32 %v2066, %v2067
    %v2069 = vshll.u32 2131351028, %v2060
    %v2070 = vshrl.u32 2102212464, %v2061
    %v2071 = vor.u32 %v2069, %v2070
    %v2072 = vshll.u32 2102212464, %v2060
    %v2073 = vshrl.u32 920167782, %v2061
    %v2074 = vor.u32 %v2072, %v2073
    %v2075 = vshll.u32 920167782, %v2060
    %v2076 = vshrl.u32 1326507024, %v2061
    %v2077 = vor.u32 %v2075, %v2076
    %vm2078 = vcmp.lt.s32.totalorder %v2059, 1
    %vm2079 = vcmp.lt.s32.totalorder %v2059, 2
    %vm2080 = vcmp.lt.s32.totalorder %v2059, 3
    %vm2081 = vcmp.lt.s32.totalorder %v2059, 4
    %v2082 = vsel %vm2078, %v2062, %v2065
    %v2083 = vsel %vm2081, %v2071, 2102212464
    %v2084 = vsel %vm2080, %v2068, %v2083
    %v2085 = vsel %vm2079, %v2082, %v2084
    %v2086 = vsel %vm2078, %v2065, %v2068
    %v2087 = vsel %vm2081, %v2074, 920167782
    %v2088 = vsel %vm2080, %v2071, %v2087
    %v2089 = vsel %vm2079, %v2086, %v2088
    %v2090 = vsel %vm2078, %v2068, %v2071
    %v2091 = vsel %vm2081, %v2077, 1326507024
    %v2092 = vsel %vm2080, %v2074, %v2091
    %v2093 = vsel %vm2079, %v2090, %v2092
    %v2094 = vshll.u32 %v2054, 8
    %v2095 = vand.u32 %v2094, 65535
    %v2096 = vshrl.u32 %v2094, 16
    %v2097 = vand.u32 %v2093, 65535
    %v2098 = vshrl.u32 %v2093, 16
    %v2099 = vmul.u32 %v2095, %v2097
    %v2100 = vmul.u32 %v2095, %v2098
    %v2101 = vmul.u32 %v2096, %v2097
    %v2102 = vmul.u32 %v2096, %v2098
    %v2103 = vshll.u32 %v2100, 16
    %v2104 = vshrl.u32 %v2100, 16
    %v2105 = vshll.u32 %v2101, 16
    %v2106 = vshrl.u32 %v2101, 16
    %vm2107 = vc.u32 %v2099, %v2103
    %v2108 = vsel %vm2107, 1, 0
    %v2109 = vadd.s32 %v2099, %v2103
    %v2110 = vadd.s32 %v2102, %v2108
    %vm2111 = vc.u32 %v2109, %v2105
    %v2112 = vsel %vm2111, 1, 0
    %v2113 = vadd.s32 %v2109, %v2105
    %v2114 = vadd.s32 %v2110, %v2112
    %v2115 = vadd.s32 %v2114, %v2104
    %v2116 = vadd.s32 %v2115, %v2106
    %v2117 = vand.u32 %v2094, 65535
    %v2118 = vshrl.u32 %v2094, 16
    %v2119 = vand.u32 %v2089, 65535
    %v2120 = vshrl.u32 %v2089, 16
    %v2121 = vmul.u32 %v2117, %v2119
    %v2122 = vmul.u32 %v2117, %v2120
    %v2123 = vmul.u32 %v2118, %v2119
    %v2124 = vmul.u32 %v2118, %v2120
    %v2125 = vshll.u32 %v2122, 16
    %v2126 = vshrl.u32 %v2122, 16
    %v2127 = vshll.u32 %v2123, 16
    %v2128 = vshrl.u32 %v2123, 16
    %vm2129 = vc.u32 %v2121, %v2125
    %v2130 = vsel %vm2129, 1, 0
    %v2131 = vadd.s32 %v2121, %v2125
    %v2132 = vadd.s32 %v2124, %v2130
    %vm2133 = vc.u32 %v2131, %v2127
    %v2134 = vsel %vm2133, 1, 0
    %v2135 = vadd.s32 %v2131, %v2127
    %v2136 = vadd.s32 %v2132, %v2134
    %v2137 = vadd.s32 %v2136, %v2126
    %v2138 = vadd.s32 %v2137, %v2128
    %v2139 = vmul.u32 %v2094, %v2085
    %v2140 = vadd.s32 %v2116, %v2135
    %vm2141 = vc.u32 %v2116, %v2135
    %v2142 = vadd.s32 %v2138, 1
    %v2143 = vsel %vm2141, %v2142, %v2138
    %v2144 = vadd.s32 %v2139, %v2143
    %v2145 = vadd.s32 %v2144, 536870912
    %v2146 = vshrl.u32 %v2145, 30
    %v2147 = vshll.u32 %v2146, 30
    %v2148 = vsub.s32 %v2144, %v2147
    %vm2149 = vcmp.lt.s32.totalorder %v2148, 0
    %v2150 = vsub.s32 0, %v2148
    %v2151 = vsel %vm2149, %v2150, %v2148
    %v2152 = vclz %v2151
    %v2153 = vsub.s32 %v2152, 2
    %vm2154 = vcmp.gt.s32.totalorder 0, %v2153
    %v2155 = vsel %vm2154, 0, %v2153
    %v2156 = vsub.s32 32, %v2155
    %v2157 = vshll.u32 %v2148, %v2155
    %v2158 = vshrl.u32 %v2140, %v2156
    %v2159 = vor.u32 %v2157, %v2158
    %v2160 = vsub.s32 4294967266, %v2155
    %v2161 = vadd.s32 %v2160, 127
    %v2162 = vshll.u32 %v2161, 23
    %v2163 = vor.u32 4788187, %v2162
    %v2164 = vand.u32 2147483647, %v2163
    %v2166 = vcvt.s32.f32 %v2159
    %v2167 = vmul.f32 %v2166, %v2164
    %v2168 = vxor.u32 %v2167, 2147483648
    %v2169 = vsel %vm2048, %v2168, %v2167
    %v2170 = vsub.s32 4, %v2146
    %v2171 = vsel %vm2048, %v2170, %v2146
    %v2172 = vsel %vm2047, %v1269, %v2169
    %v2173 = vsel %vm2047, 0, %v2171
    %v2174 = vmul.f32 %v2172, %v2172
    %v2175 = vmul.f32 %v2174, -0.001358992
    %v2176 = vadd.f32 %v2175, 0.041655596
    %v2177 = vmul.f32 %v2174, %v2176
    %v2178 = vadd.f32 %v2177, -0.4999988
    %v2179 = vmul.f32 %v2174, %v2178
    %v2180 = vadd.f32 1.0, %v2179
    %v2181 = vmul.f32 %v2172, %v2172
    %v2182 = vmul.f32 %v2181, -0.00019511016
    %v2183 = vadd.f32 %v2182, 0.008332121
    %v2184 = vmul.f32 %v2181, %v2183
    %v2185 = vadd.f32 %v2184, -0.16666654
    %v2186 = vmul.f32 %v2181, %v2185
    %v2187 = vadd.f32 %v2186, 1.0
    %v2188 = vmul.f32 %v2187, %v2172
    %vm2189 = vweird.f32 %v1269
    %v2190 = vand.u32 %v2173, 3
    %vm2191 = vcmp.lt.s32.totalorder %v2190, 2
    %vm2192 = vcmp.eq.s32.totalorder %v2190, 0
    %v2193 = vxor.u32 %v2188, 2147483648
    %v2194 = vsel %vm2192, %v2180, %v2193
    %vm2195 = vcmp.eq.s32.totalorder %v2190, 2
    %v2196 = vxor.u32 %v2180, 2147483648
    %v2197 = vsel %vm2195, %v2196, %v2188
    %v2198 = vsel %vm2191, %v2194, %v2197
    %v2199 = vsel %vm2189, nan, %v2198
    %v2200 = vand.u32 2147483647, %v1270
    %vm2201 = vcmp.le.f32.partialorder %v2200, 0.7853982
    %vm2202 = vcmp.lt.s32.totalorder %v1270, 0
    %v2203 = vand.u32 %v1270, 2139095040
    %v2204 = vshrl.u32 %v2203, 23
    %v2205 = vsub.s32 %v2204, 127
    %v2206 = vand.u32 2147483647, %v1270
    %v2207 = vand.u32 %v2206, 8388607
    %v2208 = vor.u32 %v2207, 8388608
    %v2209 = vsub.s32 0, %v2208
    %v2210 = vadd.s32 %v2205, 1
    %vm2211 = vcmp.gt.s32.totalorder %v2210, 0
    %v2212 = vsel %vm2211, %v2210, 0
    %v2213 = vshrl.u32 %v2212, 5
    %v2214 = vand.u32 %v2212, 31
    %v2215 = vsub.s32 32, %v2214
    %v2216 = vshrl.u32 683565275, %v2215
    %v2217 = vshll.u32 683565275, %v2214
    %v2218 = vshrl.u32 2475754826, %v2215
    %v2219 = vor.u32 %v2217, %v2218
    %v2220 = vshll.u32 2475754826, %v2214
    %v2221 = vshrl.u32 2131351028, %v2215
    %v2222 = vor.u32 %v2220, %v2221
    %v2223 = vshll.u32 2131351028, %v2214
    %v2224 = vshrl.u32 2102212464, %v2215
    %v2225 = vor.u32 %v2223, %v2224
    %v2226 = vshll.u32 2102212464, %v2214
    %v2227 = vshrl.u32 920167782, %v2215
    %v2228 = vor.u32 %v2226, %v2227
    %v2229 = vshll.u32 920167782, %v2214
    %v2230 = vshrl.u32 1326507024, %v2215
    %v2231 = vor.u32 %v2229, %v2230
    %vm2232 = vcmp.lt.s32.totalorder %v2213, 1
    %vm2233 = vcmp.lt.s32.totalorder %v2213, 2
    %vm2234 = vcmp.lt.s32.totalorder %v2213, 3
    %vm2235 = vcmp.lt.s32.totalorder %v2213, 4
    %v2236 = vsel %vm2232, %v2216, %v2219
    %v2237 = vsel %vm2235, %v2225, 2102212464
    %v2238 = vsel %vm2234, %v2222, %v2237
    %v2239 = vsel %vm2233, %v2236, %v2238
    %v2240 = vsel %vm2232, %v2219, %v2222
    %v2241 = vsel %vm2235, %v2228, 920167782
    %v2242 = vsel %vm2234, %v2225, %v2241
    %v2243 = vsel %vm2233, %v2240, %v2242
    %v2244 = vsel %vm2232, %v2222, %v2225
    %v2245 = vsel %vm2235, %v2231, 1326507024
    %v2246 = vsel %vm2234, %v2228, %v2245
    %v2247 = vsel %vm2233, %v2244, %v2246
    %v2248 = vshll.u32 %v2208, 8
    %v2249 = vand.u32 %v2248, 65535
    %v2250 = vshrl.u32 %v2248, 16
    %v2251 = vand.u32 %v2247, 65535
    %v2252 = vshrl.u32 %v2247, 16
    %v2253 = vmul.u32 %v2249, %v2251
    %v2254 = vmul.u32 %v2249, %v2252
    %v2255 = vmul.u32 %v2250, %v2251
    %v2256 = vmul.u32 %v2250, %v2252
    %v2257 = vshll.u32 %v2254, 16
    %v2258 = vshrl.u32 %v2254, 16
    %v2259 = vshll.u32 %v2255, 16
    %v2260 = vshrl.u32 %v2255, 16
    %vm2261 = vc.u32 %v2253, %v2257
    %v2262 = vsel %vm2261, 1, 0
    %v2263 = vadd.s32 %v2253, %v2257
    %v2264 = vadd.s32 %v2256, %v2262
    %vm2265 = vc.u32 %v2263, %v2259
    %v2266 = vsel %vm2265, 1, 0
    %v2267 = vadd.s32 %v2263, %v2259
    %v2268 = vadd.s32 %v2264, %v2266
    %v2269 = vadd.s32 %v2268, %v2258
    %v2270 = vadd.s32 %v2269, %v2260
    %v2271 = vand.u32 %v2248, 65535
    %v2272 = vshrl.u32 %v2248, 16
    %v2273 = vand.u32 %v2243, 65535
    %v2274 = vshrl.u32 %v2243, 16
    %v2275 = vmul.u32 %v2271, %v2273
    %v2276 = vmul.u32 %v2271, %v2274
    %v2277 = vmul.u32 %v2272, %v2273
    %v2278 = vmul.u32 %v2272, %v2274
    %v2279 = vshll.u32 %v2276, 16
    %v2280 = vshrl.u32 %v2276, 16
    %v2281 = vshll.u32 %v2277, 16
    %v2282 = vshrl.u32 %v2277, 16
    %vm2283 = vc.u32 %v2275, %v2279
    %v2284 = vsel %vm2283, 1, 0
    %v2285 = vadd.s32 %v2275, %v2279
    %v2286 = vadd.s32 %v2278, %v2284
    %vm2287 = vc.u32 %v2285, %v2281
    %v2288 = vsel %vm2287, 1, 0
    %v2289 = vadd.s32 %v2285, %v2281
    %v2290 = vadd.s32 %v2286, %v2288
    %v2291 = vadd.s32 %v2290, %v2280
    %v2292 = vadd.s32 %v2291, %v2282
    %v2293 = vmul.u32 %v2248, %v2239
    %v2294 = vadd.s32 %v2270, %v2289
    %vm2295 = vc.u32 %v2270, %v2289
    %v2296 = vadd.s32 %v2292, 1
    %v2297 = vsel %vm2295, %v2296, %v2292
    %v2298 = vadd.s32 %v2293, %v2297
    %v2299 = vadd.s32 %v2298, 536870912
    %v2300 = vshrl.u32 %v2299, 30
    %v2301 = vshll.u32 %v2300, 30
    %v2302 = vsub.s32 %v2298, %v2301
    %vm2303 = vcmp.lt.s32.totalorder %v2302, 0
    %v2304 = vsub.s32 0, %v2302
    %v2305 = vsel %vm2303, %v2304, %v2302
    %v2306 = vclz %v2305
    %v2307 = vsub.s32 %v2306, 2
    %vm2308 = vcmp.gt.s32.totalorder 0, %v2307
    %v2309 = vsel %vm2308, 0, %v2307
    %v2310 = vsub.s32 32, %v2309
    %v2311 = vshll.u32 %v2302, %v2309
    %v2312 = vshrl.u32 %v2294, %v2310
    %v2313 = vor.u32 %v2311, %v2312
    %v2314 = vsub.s32 4294967266, %v2309
    %v2315 = vadd.s32 %v2314, 127
    %v2316 = vshll.u32 %v2315, 23
    %v2317 = vor.u32 4788187, %v2316
    %v2318 = vand.u32 2147483647, %v2317
    %v2320 = vcvt.s32.f32 %v2313
    %v2321 = vmul.f32 %v2320, %v2318
    %v2322 = vxor.u32 %v2321, 2147483648
    %v2323 = vsel %vm2202, %v2322, %v2321
    %v2324 = vsub.s32 4, %v2300
    %v2325 = vsel %vm2202, %v2324, %v2300
    %v2326 = vsel %vm2201, %v1270, %v2323
    %v2327 = vsel %vm2201, 0, %v2325
    %v2328 = vmul.f32 %v2326, %v2326
    %v2329 = vmul.f32 %v2328, -0.001358992
    %v2330 = vadd.f32 %v2329, 0.041655596
    %v2331 = vmul.f32 %v2328, %v2330
    %v2332 = vadd.f32 %v2331, -0.4999988
    %v2333 = vmul.f32 %v2328, %v2332
    %v2334 = vadd.f32 1.0, %v2333
    %v2335 = vmul.f32 %v2326, %v2326
    %v2336 = vmul.f32 %v2335, -0.00019511016
    %v2337 = vadd.f32 %v2336, 0.008332121
    %v2338 = vmul.f32 %v2335, %v2337
    %v2339 = vadd.f32 %v2338, -0.16666654
    %v2340 = vmul.f32 %v2335, %v2339
    %v2341 = vadd.f32 %v2340, 1.0
    %v2342 = vmul.f32 %v2341, %v2326
    %vm2343 = vweird.f32 %v1270
    %v2344 = vand.u32 %v2327, 3
    %vm2345 = vcmp.lt.s32.totalorder %v2344, 2
    %vm2346 = vcmp.eq.s32.totalorder %v2344, 0
    %v2347 = vxor.u32 %v2342, 2147483648
    %v2348 = vsel %vm2346, %v2334, %v2347
    %vm2349 = vcmp.eq.s32.totalorder %v2344, 2
    %v2350 = vxor.u32 %v2334, 2147483648
    %v2351 = vsel %vm2349, %v2350, %v2342
    %v2352 = vsel %vm2345, %v2348, %v2351
    %v2353 = vsel %vm2343, nan, %v2352
    %v2354 = vand.u32 2147483647, %v1271
    %vm2355 = vcmp.le.f32.partialorder %v2354, 0.7853982
    %vm2356 = vcmp.lt.s32.totalorder %v1271, 0
    %v2357 = vand.u32 %v1271, 2139095040
    %v2358 = vshrl.u32 %v2357, 23
    %v2359 = vsub.s32 %v2358, 127
    %v2360 = vand.u32 2147483647, %v1271
    %v2361 = vand.u32 %v2360, 8388607
    %v2362 = vor.u32 %v2361, 8388608
    %v2363 = vsub.s32 0, %v2362
    %v2364 = vadd.s32 %v2359, 1
    %vm2365 = vcmp.gt.s32.totalorder %v2364, 0
    %v2366 = vsel %vm2365, %v2364, 0
    %v2367 = vshrl.u32 %v2366, 5
    %v2368 = vand.u32 %v2366, 31
    %v2369 = vsub.s32 32, %v2368
    %v2370 = vshrl.u32 683565275, %v2369
    %v2371 = vshll.u32 683565275, %v2368
    %v2372 = vshrl.u32 2475754826, %v2369
    %v2373 = vor.u32 %v2371, %v2372
    %v2374 = vshll.u32 2475754826, %v2368
    %v2375 = vshrl.u32 2131351028, %v2369
    %v2376 = vor.u32 %v2374, %v2375
    %v2377 = vshll.u32 2131351028, %v2368
    %v2378 = vshrl.u32 2102212464, %v2369
    %v2379 = vor.u32 %v2377, %v2378
    %v2380 = vshll.u32 2102212464, %v2368
    %v2381 = vshrl.u32 920167782, %v2369
    %v2382 = vor.u32 %v2380, %v2381
    %v2383 = vshll.u32 920167782, %v2368
    %v2384 = vshrl.u32 1326507024, %v2369
    %v2385 = vor.u32 %v2383, %v2384
    %vm2386 = vcmp.lt.s32.totalorder %v2367, 1
    %vm2387 = vcmp.lt.s32.totalorder %v2367, 2
    %vm2388 = vcmp.lt.s32.totalorder %v2367, 3
    %vm2389 = vcmp.lt.s32.totalorder %v2367, 4
    %v2390 = vsel %vm2386, %v2370, %v2373
    %v2391 = vsel %vm2389, %v2379, 2102212464
    %v2392 = vsel %vm2388, %v2376, %v2391
    %v2393 = vsel %vm2387, %v2390, %v2392
    %v2394 = vsel %vm2386, %v2373, %v2376
    %v2395 = vsel %vm2389, %v2382, 920167782
    %v2396 = vsel %vm2388, %v2379, %v2395
    %v2397 = vsel %vm2387, %v2394, %v2396
    %v2398 = vsel %vm2386, %v2376, %v2379
    %v2399 = vsel %vm2389, %v2385, 1326507024
    %v2400 = vsel %vm2388, %v2382, %v2399
    %v2401 = vsel %vm2387, %v2398, %v2400
    %v2402 = vshll.u32 %v2362, 8
    %v2403 = vand.u32 %v2402, 65535
    %v2404 = vshrl.u32 %v2402, 16
    %v2405 = vand.u32 %v2401, 65535
    %v2406 = vshrl.u32 %v2401, 16
    %v2407 = vmul.u32 %v2403, %v2405
    %v2408 = vmul.u32 %v2403, %v2406
    %v2409 = vmul.u32 %v2404, %v2405
    %v2410 = vmul.u32 %v2404, %v2406
    %v2411 = vshll.u32 %v2408, 16
    %v2412 = vshrl.u32 %v2408, 16
    %v2413 = vshll.u32 %v2409, 16
    %v2414 = vshrl.u32 %v2409, 16
    %vm2415 = vc.u32 %v2407, %v2411
    %v2416 = vsel %vm2415, 1, 0
    %v2417 = vadd.s32 %v2407, %v2411
    %v2418 = vadd.s32 %v2410, %v2416
    %vm2419 = vc.u32 %v2417, %v2413
    %v2420 = vsel %vm2419, 1, 0
    %v2421 = vadd.s32 %v2417, %v2413
    %v2422 = vadd.s32 %v2418, %v2420
    %v2423 = vadd.s32 %v2422, %v2412
    %v2424 = vadd.s32 %v2423, %v2414
    %v2425 = vand.u32 %v2402, 65535
    %v2426 = vshrl.u32 %v2402, 16
    %v2427 = vand.u32 %v2397, 65535
    %v2428 = vshrl.u32 %v2397, 16
    %v2429 = vmul.u32 %v2425, %v2427
    %v2430 = vmul.u32 %v2425, %v2428
    %v2431 = vmul.u32 %v2426, %v2427
    %v2432 = vmul.u32 %v2426, %v2428
    %v2433 = vshll.u32 %v2430, 16
    %v2434 = vshrl.u32 %v2430, 16
    %v2435 = vshll.u32 %v2431, 16
    %v2436 = vshrl.u32 %v2431, 16
    %vm2437 = vc.u32 %v2429, %v2433
    %v2438 = vsel %vm2437, 1, 0
    %v2439 = vadd.s32 %v2429, %v2433
    %v2440 = vadd.s32 %v2432, %v2438
    %vm2441 = vc.u32 %v2439, %v2435
    %v2442 = vsel %vm2441, 1, 0
    %v2443 = vadd.s32 %v2439, %v2435
    %v2444 = vadd.s32 %v2440, %v2442
    %v2445 = vadd.s32 %v2444, %v2434
    %v2446 = vadd.s32 %v2445, %v2436
    %v2447 = vmul.u32 %v2402, %v2393
    %v2448 = vadd.s32 %v2424, %v2443
    %vm2449 = vc.u32 %v2424, %v2443
    %v2450 = vadd.s32 %v2446, 1
    %v2451 = vsel %vm2449, %v2450, %v2446
    %v2452 = vadd.s32 %v2447, %v2451
    %v2453 = vadd.s32 %v2452, 536870912
    %v2454 = vshrl.u32 %v2453, 30
    %v2455 = vshll.u32 %v2454, 30
    %v2456 = vsub.s32 %v2452, %v2455
    %vm2457 = vcmp.lt.s32.totalorder %v2456, 0
    %v2458 = vsub.s32 0, %v2456
    %v2459 = vsel %vm2457, %v2458, %v2456
    %v2460 = vclz %v2459
    %v2461 = vsub.s32 %v2460, 2
    %vm2462 = vcmp.gt.s32.totalorder 0, %v2461
    %v2463 = vsel %vm2462, 0, %v2461
    %v2464 = vsub.s32 32, %v2463
    %v2465 = vshll.u32 %v2456, %v2463
    %v2466 = vshrl.u32 %v2448, %v2464
    %v2467 = vor.u32 %v2465, %v2466
    %v2468 = vsub.s32 4294967266, %v2463
    %v2469 = vadd.s32 %v2468, 127
    %v2470 = vshll.u32 %v2469, 23
    %v2471 = vor.u32 4788187, %v2470
    %v2472 = vand.u32 2147483647, %v2471
    %v2474 = vcvt.s32.f32 %v2467
    %v2475 = vmul.f32 %v2474, %v2472
    %v2476 = vxor.u32 %v2475, 2147483648
    %v2477 = vsel %vm2356, %v2476, %v2475
    %v2478 = vsub.s32 4, %v2454
    %v2479 = vsel %vm2356, %v2478, %v2454
    %v2480 = vsel %vm2355, %v1271, %v2477
    %v2481 = vsel %vm2355, 0, %v2479
    %v2482 = vmul.f32 %v2480, %v2480
    %v2483 = vmul.f32 %v2482, -0.001358992
    %v2484 = vadd.f32 %v2483, 0.041655596
    %v2485 = vmul.f32 %v2482, %v2484
    %v2486 = vadd.f32 %v2485, -0.4999988
    %v2487 = vmul.f32 %v2482, %v2486
    %v2488 = vadd.f32 1.0, %v2487
    %v2489 = vmul.f32 %v2480, %v2480
    %v2490 = vmul.f32 %v2489, -0.00019511016
    %v2491 = vadd.f32 %v2490, 0.008332121
    %v2492 = vmul.f32 %v2489, %v2491
    %v2493 = vadd.f32 %v2492, -0.16666654
    %v2494 = vmul.f32 %v2489, %v2493
    %v2495 = vadd.f32 %v2494, 1.0
    %v2496 = vmul.f32 %v2495, %v2480
    %vm2497 = vweird.f32 %v1271
    %v2498 = vand.u32 %v2481, 3
    %vm2499 = vcmp.lt.s32.totalorder %v2498, 2
    %vm2500 = vcmp.eq.s32.totalorder %v2498, 0
    %v2501 = vxor.u32 %v2496, 2147483648
    %v2502 = vsel %vm2500, %v2488, %v2501
    %vm2503 = vcmp.eq.s32.totalorder %v2498, 2
    %v2504 = vxor.u32 %v2488, 2147483648
    %v2505 = vsel %vm2503, %v2504, %v2496
    %v2506 = vsel %vm2499, %v2502, %v2505
    %v2507 = vsel %vm2497, nan, %v2506
    %v2508 = vld [vmem:[%s1] sm:$0xf]
    %v2509 = vld [vmem:[%s1 + $0x4] sm:$0xf]
    %v2510 = vld [vmem:[%s1 + $0x8] sm:$0xf]
    %v2511 = vld [vmem:[%s1 + $0xc] sm:$0xf]
    %v2512 = vld [vmem:[%s1 + $0x10] sm:$0xf]
    %v2513 = vld [vmem:[%s1 + $0x14] sm:$0xf]
    %v2514 = vld [vmem:[%s1 + $0x18] sm:$0xf]
    %v2515 = vld [vmem:[%s1 + $0x1c] sm:$0xf]
    %v2516 = vld [vmem:[%s1 + $0x20] sm:$0xf]
    %v2517 = vld [vmem:[%s1 + $0x24] sm:$0xf]
    %v2518 = vld [vmem:[%s1 + $0x28] sm:$0xf]
    %v2519 = vld [vmem:[%s1 + $0x2c] sm:$0xf]
    %v2520 = vld [vmem:[%s1 + $0x30] sm:$0xf]
    %v2521 = vld [vmem:[%s1 + $0x34] sm:$0xf]
    %v2522 = vld [vmem:[%s1 + $0x38] sm:$0xf]
    %v2523 = vld [vmem:[%s1 + $0x3c] sm:$0xf]
    %2528 = vst [vmem:[#allocation1] ss:$2 sm:$0xff] %v28
    %s2529 = scalar_lea.vmem [#allocation1], 16
    %2530 = vst [vmem:[%s2529] ss:$2 sm:$0xff] %v29
    %s2531 = scalar_lea.vmem [#allocation1], 32
    %2532 = vst [vmem:[%s2531] ss:$2 sm:$0xff] %v30
    %s2533 = scalar_lea.vmem [#allocation1], 48
    %2534 = vst [vmem:[%s2533] ss:$2 sm:$0xff] %v31
    %v2535 = vld.sshfl [vmem:[#allocation1] sm:$0xff pattern:$0x75316420]
    %v2536 = vld.sshfl [vmem:[#allocation1 + $0x8] sm:$0xff pattern:$0x75316420]
    %v2537 = vld.sshfl [vmem:[#allocation1 + $0x10] sm:$0xff pattern:$0x75316420]
    %v2538 = vld.sshfl [vmem:[#allocation1 + $0x18] sm:$0xff pattern:$0x75316420]
    %v2539 = vld.sshfl [vmem:[#allocation1 + $0x20] sm:$0xff pattern:$0x75316420]
    %v2540 = vld.sshfl [vmem:[#allocation1 + $0x28] sm:$0xff pattern:$0x75316420]
    %v2541 = vld.sshfl [vmem:[#allocation1 + $0x30] sm:$0xff pattern:$0x75316420]
    %v2542 = vld.sshfl [vmem:[#allocation1 + $0x38] sm:$0xff pattern:$0x75316420]
    %v2551 = vpack.c.bf16 %v2535, %v2535
    %v2552 = vpack.c.bf16 %v2536, %v2536
    %v2553 = vpack.c.bf16 %v2537, %v2537
    %v2554 = vpack.c.bf16 %v2538, %v2538
    %v2555 = vpack.c.bf16 %v2539, %v2539
    %v2556 = vpack.c.bf16 %v2540, %v2540
    %v2557 = vpack.c.bf16 %v2541, %v2541
    %v2558 = vpack.c.bf16 %v2542, %v2542
    %s2559 = scalar_lea.vmem %s1, 64
    %v2560 = vld [vmem:[%s2559] sm:$0xf]
    %v2561 = vld [vmem:[%s2559 + $0x4] sm:$0xf]
    %v2562 = vld [vmem:[%s2559 + $0x8] sm:$0xf]
    %v2563 = vld [vmem:[%s2559 + $0xc] sm:$0xf]
    %v2564 = vld [vmem:[%s2559 + $0x10] sm:$0xf]
    %v2565 = vld [vmem:[%s2559 + $0x14] sm:$0xf]
    %v2566 = vld [vmem:[%s2559 + $0x18] sm:$0xf]
    %v2567 = vld [vmem:[%s2559 + $0x1c] sm:$0xf]
    %v2568 = vld [vmem:[%s2559 + $0x20] sm:$0xf]
    %v2569 = vld [vmem:[%s2559 + $0x24] sm:$0xf]
    %v2570 = vld [vmem:[%s2559 + $0x28] sm:$0xf]
    %v2571 = vld [vmem:[%s2559 + $0x2c] sm:$0xf]
    %v2572 = vld [vmem:[%s2559 + $0x30] sm:$0xf]
    %v2573 = vld [vmem:[%s2559 + $0x34] sm:$0xf]
    %v2574 = vld [vmem:[%s2559 + $0x38] sm:$0xf]
    %v2575 = vld [vmem:[%s2559 + $0x3c] sm:$0xf]
    %2580 = vst [vmem:[#allocation1] ss:$2 sm:$0xff] %v186
    %s2581 = scalar_lea.vmem [#allocation1], 16
    %2582 = vst [vmem:[%s2581] ss:$2 sm:$0xff] %v341
    %s2583 = scalar_lea.vmem [#allocation1], 32
    %2584 = vst [vmem:[%s2583] ss:$2 sm:$0xff] %v496
    %s2585 = scalar_lea.vmem [#allocation1], 48
    %2586 = vst [vmem:[%s2585] ss:$2 sm:$0xff] %v651
    %v2587 = vld.sshfl [vmem:[#allocation1] sm:$0xff pattern:$0x75316420]
    %v2588 = vld.sshfl [vmem:[#allocation1 + $0x8] sm:$0xff pattern:$0x75316420]
    %v2589 = vld.sshfl [vmem:[#allocation1 + $0x10] sm:$0xff pattern:$0x75316420]
    %v2590 = vld.sshfl [vmem:[#allocation1 + $0x18] sm:$0xff pattern:$0x75316420]
    %v2591 = vld.sshfl [vmem:[#allocation1 + $0x20] sm:$0xff pattern:$0x75316420]
    %v2592 = vld.sshfl [vmem:[#allocation1 + $0x28] sm:$0xff pattern:$0x75316420]
    %v2593 = vld.sshfl [vmem:[#allocation1 + $0x30] sm:$0xff pattern:$0x75316420]
    %v2594 = vld.sshfl [vmem:[#allocation1 + $0x38] sm:$0xff pattern:$0x75316420]
    %v2603 = vpack.c.bf16 %v2587, %v2587
    %v2604 = vpack.c.bf16 %v2588, %v2588
    %v2605 = vpack.c.bf16 %v2589, %v2589
    %v2606 = vpack.c.bf16 %v2590, %v2590
    %v2607 = vpack.c.bf16 %v2591, %v2591
    %v2608 = vpack.c.bf16 %v2592, %v2592
    %v2609 = vpack.c.bf16 %v2593, %v2593
    %v2610 = vpack.c.bf16 %v2594, %v2594
    %v2627 = vunpack.c.l.b16 %v2560
    %v2628 = vunpack.c.l.b16 %v2561
    %v2629 = vunpack.c.l.b16 %v2562
    %v2630 = vunpack.c.l.b16 %v2563
    %v2631 = vunpack.c.l.b16 %v2564
    %v2632 = vunpack.c.l.b16 %v2565
    %v2633 = vunpack.c.l.b16 %v2566
    %v2634 = vunpack.c.l.b16 %v2567
    %v2635 = vunpack.c.l.b16 %v2568
    %v2636 = vunpack.c.l.b16 %v2569
    %v2637 = vunpack.c.l.b16 %v2570
    %v2638 = vunpack.c.l.b16 %v2571
    %v2639 = vunpack.c.l.b16 %v2572
    %v2640 = vunpack.c.l.b16 %v2573
    %v2641 = vunpack.c.l.b16 %v2574
    %v2642 = vunpack.c.l.b16 %v2575
    %v2643 = vpack.c.b16 %v2628, %v2627
    %v2644 = vpack.c.b16 %v2630, %v2629
    %v2645 = vpack.c.b16 %v2632, %v2631
    %v2646 = vpack.c.b16 %v2634, %v2633
    %v2647 = vpack.c.b16 %v2636, %v2635
    %v2648 = vpack.c.b16 %v2638, %v2637
    %v2649 = vpack.c.b16 %v2640, %v2639
    %v2650 = vpack.c.b16 %v2642, %v2641
    %vm2651 = vcmask 23552
    %v2653 = vsel %vm2651, %v2643, 0
    %v2656 = vsel %vm2651, %v2644, 0
    %v2659 = vsel %vm2651, %v2645, 0
    %v2662 = vsel %vm2651, %v2646, 0
    %v2665 = vsel %vm2651, %v2647, 0
    %v2668 = vsel %vm2651, %v2648, 0
    %v2671 = vsel %vm2651, %v2649, 0
    %v2674 = vsel %vm2651, %v2650, 0
    %vm2676 = vcmask 1040384
    %vm2677 = vcmask 1041408
    %v2678 = vsel %vm2676, 4294967295, 65535
    %v2679 = vsel %vm2677, %v2678, 0
    %v2681 = vand.u32 %v2603, %v2679
    %v2684 = vand.u32 %v2604, %v2679
    %v2687 = vand.u32 %v2605, %v2679
    %v2690 = vand.u32 %v2606, %v2679
    %v2693 = vand.u32 %v2607, %v2679
    %v2696 = vand.u32 %v2608, %v2679
    %v2699 = vand.u32 %v2609, %v2679
    %v2702 = vand.u32 %v2610, %v2679
    %2704 = vmatpush.bf16.msra.mxu0 0
    %2705 = vmatpush.bf16.msra.mxu0 0
    %2706 = vmatpush.bf16.msra.mxu0 0
    %2707 = vmatpush.bf16.msra.mxu0 0
    %2708 = vmatpush.bf16.msra.mxu0 0
    %2709 = vmatpush.bf16.msra.mxu0 0
    %2710 = vmatpush.bf16.msra.mxu0 0
    %2711 = vmatpush.bf16.msra.mxu0 %v2681
    %2712 = vmatmul.bf16.gmra.mxu0 %v2653
    %v2713 = vpop.f32.mrf.mxu0
    %v2714 = vadd.f32 0.0, %v2713
    %v2715 = vpop.f32.mrf.mxu0
    %v2716 = vadd.f32 0.0, %v2715
    %2717 = vmatmul.bf16.gmra.mxu0 %v2656
    %v2718 = vpop.f32.mrf.mxu0
    %v2719 = vadd.f32 0.0, %v2718
    %v2720 = vpop.f32.mrf.mxu0
    %v2721 = vadd.f32 0.0, %v2720
    %2722 = vmatmul.bf16.gmra.mxu0 %v2659
    %v2723 = vpop.f32.mrf.mxu0
    %v2724 = vadd.f32 0.0, %v2723
    %v2725 = vpop.f32.mrf.mxu0
    %v2726 = vadd.f32 0.0, %v2725
    %2727 = vmatmul.bf16.gmra.mxu0 %v2662
    %v2728 = vpop.f32.mrf.mxu0
    %v2729 = vadd.f32 0.0, %v2728
    %v2730 = vpop.f32.mrf.mxu0
    %v2731 = vadd.f32 0.0, %v2730
    %2732 = vmatmul.bf16.gmra.mxu0 %v2665
    %v2733 = vpop.f32.mrf.mxu0
    %v2734 = vadd.f32 0.0, %v2733
    %v2735 = vpop.f32.mrf.mxu0
    %v2736 = vadd.f32 0.0, %v2735
    %2737 = vmatmul.bf16.gmra.mxu0 %v2668
    %v2738 = vpop.f32.mrf.mxu0
    %v2739 = vadd.f32 0.0, %v2738
    %v2740 = vpop.f32.mrf.mxu0
    %v2741 = vadd.f32 0.0, %v2740
    %2742 = vmatmul.bf16.gmra.mxu0 %v2671
    %v2743 = vpop.f32.mrf.mxu0
    %v2744 = vadd.f32 0.0, %v2743
    %v2745 = vpop.f32.mrf.mxu0
    %v2746 = vadd.f32 0.0, %v2745
    %2747 = vmatmul.bf16.gmra.mxu0 %v2674
    %v2748 = vpop.f32.mrf.mxu0
    %v2749 = vadd.f32 0.0, %v2748
    %v2750 = vpop.f32.mrf.mxu0
    %v2751 = vadd.f32 0.0, %v2750
    %2752 = vdwg.mxu0
    %2753 = vmatpush.bf16.msra.mxu0 0
    %2754 = vmatpush.bf16.msra.mxu0 0
    %2755 = vmatpush.bf16.msra.mxu0 0
    %2756 = vmatpush.bf16.msra.mxu0 0
    %2757 = vmatpush.bf16.msra.mxu0 0
    %2758 = vmatpush.bf16.msra.mxu0 0
    %2759 = vmatpush.bf16.msra.mxu0 0
    %2760 = vmatpush.bf16.msra.mxu0 %v2684
    %2761 = vmatmul.bf16.gmra.mxu0 %v2653
    %v2762 = vpop.f32.mrf.mxu0
    %v2763 = vadd.f32 0.0, %v2762
    %v2764 = vpop.f32.mrf.mxu0
    %v2765 = vadd.f32 0.0, %v2764
    %2766 = vmatmul.bf16.gmra.mxu0 %v2656
    %v2767 = vpop.f32.mrf.mxu0
    %v2768 = vadd.f32 0.0, %v2767
    %v2769 = vpop.f32.mrf.mxu0
    %v2770 = vadd.f32 0.0, %v2769
    %2771 = vmatmul.bf16.gmra.mxu0 %v2659
    %v2772 = vpop.f32.mrf.mxu0
    %v2773 = vadd.f32 0.0, %v2772
    %v2774 = vpop.f32.mrf.mxu0
    %v2775 = vadd.f32 0.0, %v2774
    %2776 = vmatmul.bf16.gmra.mxu0 %v2662
    %v2777 = vpop.f32.mrf.mxu0
    %v2778 = vadd.f32 0.0, %v2777
    %v2779 = vpop.f32.mrf.mxu0
    %v2780 = vadd.f32 0.0, %v2779
    %2781 = vmatmul.bf16.gmra.mxu0 %v2665
    %v2782 = vpop.f32.mrf.mxu0
    %v2783 = vadd.f32 0.0, %v2782
    %v2784 = vpop.f32.mrf.mxu0
    %v2785 = vadd.f32 0.0, %v2784
    %2786 = vmatmul.bf16.gmra.mxu0 %v2668
    %v2787 = vpop.f32.mrf.mxu0
    %v2788 = vadd.f32 0.0, %v2787
    %v2789 = vpop.f32.mrf.mxu0
    %v2790 = vadd.f32 0.0, %v2789
    %2791 = vmatmul.bf16.gmra.mxu0 %v2671
    %v2792 = vpop.f32.mrf.mxu0
    %v2793 = vadd.f32 0.0, %v2792
    %v2794 = vpop.f32.mrf.mxu0
    %v2795 = vadd.f32 0.0, %v2794
    %2796 = vmatmul.bf16.gmra.mxu0 %v2674
    %v2797 = vpop.f32.mrf.mxu0
    %v2798 = vadd.f32 0.0, %v2797
    %v2799 = vpop.f32.mrf.mxu0
    %v2800 = vadd.f32 0.0, %v2799
    %2801 = vdwg.mxu0
    %2802 = vmatpush.bf16.msra.mxu0 0
    %2803 = vmatpush.bf16.msra.mxu0 0
    %2804 = vmatpush.bf16.msra.mxu0 0
    %2805 = vmatpush.bf16.msra.mxu0 0
    %2806 = vmatpush.bf16.msra.mxu0 0
    %2807 = vmatpush.bf16.msra.mxu0 0
    %2808 = vmatpush.bf16.msra.mxu0 0
    %2809 = vmatpush.bf16.msra.mxu0 %v2687
    %2810 = vmatmul.bf16.gmra.mxu0 %v2653
    %v2811 = vpop.f32.mrf.mxu0
    %v2812 = vadd.f32 0.0, %v2811
    %v2813 = vpop.f32.mrf.mxu0
    %v2814 = vadd.f32 0.0, %v2813
    %2815 = vmatmul.bf16.gmra.mxu0 %v2656
    %v2816 = vpop.f32.mrf.mxu0
    %v2817 = vadd.f32 0.0, %v2816
    %v2818 = vpop.f32.mrf.mxu0
    %v2819 = vadd.f32 0.0, %v2818
    %2820 = vmatmul.bf16.gmra.mxu0 %v2659
    %v2821 = vpop.f32.mrf.mxu0
    %v2822 = vadd.f32 0.0, %v2821
    %v2823 = vpop.f32.mrf.mxu0
    %v2824 = vadd.f32 0.0, %v2823
    %2825 = vmatmul.bf16.gmra.mxu0 %v2662
    %v2826 = vpop.f32.mrf.mxu0
    %v2827 = vadd.f32 0.0, %v2826
    %v2828 = vpop.f32.mrf.mxu0
    %v2829 = vadd.f32 0.0, %v2828
    %2830 = vmatmul.bf16.gmra.mxu0 %v2665
    %v2831 = vpop.f32.mrf.mxu0
    %v2832 = vadd.f32 0.0, %v2831
    %v2833 = vpop.f32.mrf.mxu0
    %v2834 = vadd.f32 0.0, %v2833
    %2835 = vmatmul.bf16.gmra.mxu0 %v2668
    %v2836 = vpop.f32.mrf.mxu0
    %v2837 = vadd.f32 0.0, %v2836
    %v2838 = vpop.f32.mrf.mxu0
    %v2839 = vadd.f32 0.0, %v2838
    %2840 = vmatmul.bf16.gmra.mxu0 %v2671
    %v2841 = vpop.f32.mrf.mxu0
    %v2842 = vadd.f32 0.0, %v2841
    %v2843 = vpop.f32.mrf.mxu0
    %v2844 = vadd.f32 0.0, %v2843
    %2845 = vmatmul.bf16.gmra.mxu0 %v2674
    %v2846 = vpop.f32.mrf.mxu0
    %v2847 = vadd.f32 0.0, %v2846
    %v2848 = vpop.f32.mrf.mxu0
    %v2849 = vadd.f32 0.0, %v2848
    %2850 = vdwg.mxu0
    %2851 = vmatpush.bf16.msra.mxu0 0
    %2852 = vmatpush.bf16.msra.mxu0 0
    %2853 = vmatpush.bf16.msra.mxu0 0
    %2854 = vmatpush.bf16.msra.mxu0 0
    %2855 = vmatpush.bf16.msra.mxu0 0
    %2856 = vmatpush.bf16.msra.mxu0 0
    %2857 = vmatpush.bf16.msra.mxu0 0
    %2858 = vmatpush.bf16.msra.mxu0 %v2690
    %2859 = vmatmul.bf16.gmra.mxu0 %v2653
    %v2860 = vpop.f32.mrf.mxu0
    %v2861 = vadd.f32 0.0, %v2860
    %v2862 = vpop.f32.mrf.mxu0
    %v2863 = vadd.f32 0.0, %v2862
    %2864 = vmatmul.bf16.gmra.mxu0 %v2656
    %v2865 = vpop.f32.mrf.mxu0
    %v2866 = vadd.f32 0.0, %v2865
    %v2867 = vpop.f32.mrf.mxu0
    %v2868 = vadd.f32 0.0, %v2867
    %2869 = vmatmul.bf16.gmra.mxu0 %v2659
    %v2870 = vpop.f32.mrf.mxu0
    %v2871 = vadd.f32 0.0, %v2870
    %v2872 = vpop.f32.mrf.mxu0
    %v2873 = vadd.f32 0.0, %v2872
    %2874 = vmatmul.bf16.gmra.mxu0 %v2662
    %v2875 = vpop.f32.mrf.mxu0
    %v2876 = vadd.f32 0.0, %v2875
    %v2877 = vpop.f32.mrf.mxu0
    %v2878 = vadd.f32 0.0, %v2877
    %2879 = vmatmul.bf16.gmra.mxu0 %v2665
    %v2880 = vpop.f32.mrf.mxu0
    %v2881 = vadd.f32 0.0, %v2880
    %v2882 = vpop.f32.mrf.mxu0
    %v2883 = vadd.f32 0.0, %v2882
    %2884 = vmatmul.bf16.gmra.mxu0 %v2668
    %v2885 = vpop.f32.mrf.mxu0
    %v2886 = vadd.f32 0.0, %v2885
    %v2887 = vpop.f32.mrf.mxu0
    %v2888 = vadd.f32 0.0, %v2887
    %2889 = vmatmul.bf16.gmra.mxu0 %v2671
    %v2890 = vpop.f32.mrf.mxu0
    %v2891 = vadd.f32 0.0, %v2890
    %v2892 = vpop.f32.mrf.mxu0
    %v2893 = vadd.f32 0.0, %v2892
    %2894 = vmatmul.bf16.gmra.mxu0 %v2674
    %v2895 = vpop.f32.mrf.mxu0
    %v2896 = vadd.f32 0.0, %v2895
    %v2897 = vpop.f32.mrf.mxu0
    %v2898 = vadd.f32 0.0, %v2897
    %2899 = vdwg.mxu0
    %2900 = vmatpush.bf16.msra.mxu0 0
    %2901 = vmatpush.bf16.msra.mxu0 0
    %2902 = vmatpush.bf16.msra.mxu0 0
    %2903 = vmatpush.bf16.msra.mxu0 0
    %2904 = vmatpush.bf16.msra.mxu0 0
    %2905 = vmatpush.bf16.msra.mxu0 0
    %2906 = vmatpush.bf16.msra.mxu0 0
    %2907 = vmatpush.bf16.msra.mxu0 %v2693
    %2908 = vmatmul.bf16.gmra.mxu0 %v2653
    %v2909 = vpop.f32.mrf.mxu0
    %v2910 = vadd.f32 0.0, %v2909
    %v2911 = vpop.f32.mrf.mxu0
    %v2912 = vadd.f32 0.0, %v2911
    %2913 = vmatmul.bf16.gmra.mxu0 %v2656
    %v2914 = vpop.f32.mrf.mxu0
    %v2915 = vadd.f32 0.0, %v2914
    %v2916 = vpop.f32.mrf.mxu0
    %v2917 = vadd.f32 0.0, %v2916
    %2918 = vmatmul.bf16.gmra.mxu0 %v2659
    %v2919 = vpop.f32.mrf.mxu0
    %v2920 = vadd.f32 0.0, %v2919
    %v2921 = vpop.f32.mrf.mxu0
    %v2922 = vadd.f32 0.0, %v2921
    %2923 = vmatmul.bf16.gmra.mxu0 %v2662
    %v2924 = vpop.f32.mrf.mxu0
    %v2925 = vadd.f32 0.0, %v2924
    %v2926 = vpop.f32.mrf.mxu0
    %v2927 = vadd.f32 0.0, %v2926
    %2928 = vmatmul.bf16.gmra.mxu0 %v2665
    %v2929 = vpop.f32.mrf.mxu0
    %v2930 = vadd.f32 0.0, %v2929
    %v2931 = vpop.f32.mrf.mxu0
    %v2932 = vadd.f32 0.0, %v2931
    %2933 = vmatmul.bf16.gmra.mxu0 %v2668
    %v2934 = vpop.f32.mrf.mxu0
    %v2935 = vadd.f32 0.0, %v2934
    %v2936 = vpop.f32.mrf.mxu0
    %v2937 = vadd.f32 0.0, %v2936
    %2938 = vmatmul.bf16.gmra.mxu0 %v2671
    %v2939 = vpop.f32.mrf.mxu0
    %v2940 = vadd.f32 0.0, %v2939
    %v2941 = vpop.f32.mrf.mxu0
    %v2942 = vadd.f32 0.0, %v2941
    %2943 = vmatmul.bf16.gmra.mxu0 %v2674
    %v2944 = vpop.f32.mrf.mxu0
    %v2945 = vadd.f32 0.0, %v2944
    %v2946 = vpop.f32.mrf.mxu0
    %v2947 = vadd.f32 0.0, %v2946
    %2948 = vdwg.mxu0
    %2949 = vmatpush.bf16.msra.mxu0 0
    %2950 = vmatpush.bf16.msra.mxu0 0
    %2951 = vmatpush.bf16.msra.mxu0 0
    %2952 = vmatpush.bf16.msra.mxu0 0
    %2953 = vmatpush.bf16.msra.mxu0 0
    %2954 = vmatpush.bf16.msra.mxu0 0
    %2955 = vmatpush.bf16.msra.mxu0 0
    %2956 = vmatpush.bf16.msra.mxu0 %v2696
    %2957 = vmatmul.bf16.gmra.mxu0 %v2653
    %v2958 = vpop.f32.mrf.mxu0
    %v2959 = vadd.f32 0.0, %v2958
    %v2960 = vpop.f32.mrf.mxu0
    %v2961 = vadd.f32 0.0, %v2960
    %2962 = vmatmul.bf16.gmra.mxu0 %v2656
    %v2963 = vpop.f32.mrf.mxu0
    %v2964 = vadd.f32 0.0, %v2963
    %v2965 = vpop.f32.mrf.mxu0
    %v2966 = vadd.f32 0.0, %v2965
    %2967 = vmatmul.bf16.gmra.mxu0 %v2659
    %v2968 = vpop.f32.mrf.mxu0
    %v2969 = vadd.f32 0.0, %v2968
    %v2970 = vpop.f32.mrf.mxu0
    %v2971 = vadd.f32 0.0, %v2970
    %2972 = vmatmul.bf16.gmra.mxu0 %v2662
    %v2973 = vpop.f32.mrf.mxu0
    %v2974 = vadd.f32 0.0, %v2973
    %v2975 = vpop.f32.mrf.mxu0
    %v2976 = vadd.f32 0.0, %v2975
    %2977 = vmatmul.bf16.gmra.mxu0 %v2665
    %v2978 = vpop.f32.mrf.mxu0
    %v2979 = vadd.f32 0.0, %v2978
    %v2980 = vpop.f32.mrf.mxu0
    %v2981 = vadd.f32 0.0, %v2980
    %2982 = vmatmul.bf16.gmra.mxu0 %v2668
    %v2983 = vpop.f32.mrf.mxu0
    %v2984 = vadd.f32 0.0, %v2983
    %v2985 = vpop.f32.mrf.mxu0
    %v2986 = vadd.f32 0.0, %v2985
    %2987 = vmatmul.bf16.gmra.mxu0 %v2671
    %v2988 = vpop.f32.mrf.mxu0
    %v2989 = vadd.f32 0.0, %v2988
    %v2990 = vpop.f32.mrf.mxu0
    %v2991 = vadd.f32 0.0, %v2990
    %2992 = vmatmul.bf16.gmra.mxu0 %v2674
    %v2993 = vpop.f32.mrf.mxu0
    %v2994 = vadd.f32 0.0, %v2993
    %v2995 = vpop.f32.mrf.mxu0
    %v2996 = vadd.f32 0.0, %v2995
    %2997 = vdwg.mxu0
    %2998 = vmatpush.bf16.msra.mxu0 0
    %2999 = vmatpush.bf16.msra.mxu0 0
    %3000 = vmatpush.bf16.msra.mxu0 0
    %3001 = vmatpush.bf16.msra.mxu0 0
    %3002 = vmatpush.bf16.msra.mxu0 0
    %3003 = vmatpush.bf16.msra.mxu0 0
    %3004 = vmatpush.bf16.msra.mxu0 0
    %3005 = vmatpush.bf16.msra.mxu0 %v2699
    %3006 = vmatmul.bf16.gmra.mxu0 %v2653
    %v3007 = vpop.f32.mrf.mxu0
    %v3008 = vadd.f32 0.0, %v3007
    %v3009 = vpop.f32.mrf.mxu0
    %v3010 = vadd.f32 0.0, %v3009
    %3011 = vmatmul.bf16.gmra.mxu0 %v2656
    %v3012 = vpop.f32.mrf.mxu0
    %v3013 = vadd.f32 0.0, %v3012
    %v3014 = vpop.f32.mrf.mxu0
    %v3015 = vadd.f32 0.0, %v3014
    %3016 = vmatmul.bf16.gmra.mxu0 %v2659
    %v3017 = vpop.f32.mrf.mxu0
    %v3018 = vadd.f32 0.0, %v3017
    %v3019 = vpop.f32.mrf.mxu0
    %v3020 = vadd.f32 0.0, %v3019
    %3021 = vmatmul.bf16.gmra.mxu0 %v2662
    %v3022 = vpop.f32.mrf.mxu0
    %v3023 = vadd.f32 0.0, %v3022
    %v3024 = vpop.f32.mrf.mxu0
    %v3025 = vadd.f32 0.0, %v3024
    %3026 = vmatmul.bf16.gmra.mxu0 %v2665
    %v3027 = vpop.f32.mrf.mxu0
    %v3028 = vadd.f32 0.0, %v3027
    %v3029 = vpop.f32.mrf.mxu0
    %v3030 = vadd.f32 0.0, %v3029
    %3031 = vmatmul.bf16.gmra.mxu0 %v2668
    %v3032 = vpop.f32.mrf.mxu0
    %v3033 = vadd.f32 0.0, %v3032
    %v3034 = vpop.f32.mrf.mxu0
    %v3035 = vadd.f32 0.0, %v3034
    %3036 = vmatmul.bf16.gmra.mxu0 %v2671
    %v3037 = vpop.f32.mrf.mxu0
    %v3038 = vadd.f32 0.0, %v3037
    %v3039 = vpop.f32.mrf.mxu0
    %v3040 = vadd.f32 0.0, %v3039
    %3041 = vmatmul.bf16.gmra.mxu0 %v2674
    %v3042 = vpop.f32.mrf.mxu0
    %v3043 = vadd.f32 0.0, %v3042
    %v3044 = vpop.f32.mrf.mxu0
    %v3045 = vadd.f32 0.0, %v3044
    %3046 = vdwg.mxu0
    %3047 = vmatpush.bf16.msra.mxu0 0
    %3048 = vmatpush.bf16.msra.mxu0 0
    %3049 = vmatpush.bf16.msra.mxu0 0
    %3050 = vmatpush.bf16.msra.mxu0 0
    %3051 = vmatpush.bf16.msra.mxu0 0
    %3052 = vmatpush.bf16.msra.mxu0 0
    %3053 = vmatpush.bf16.msra.mxu0 0
    %3054 = vmatpush.bf16.msra.mxu0 %v2702
    %3055 = vmatmul.bf16.gmra.mxu0 %v2653
    %v3056 = vpop.f32.mrf.mxu0
    %v3057 = vadd.f32 0.0, %v3056
    %v3058 = vpop.f32.mrf.mxu0
    %v3059 = vadd.f32 0.0, %v3058
    %3060 = vmatmul.bf16.gmra.mxu0 %v2656
    %v3061 = vpop.f32.mrf.mxu0
    %v3062 = vadd.f32 0.0, %v3061
    %v3063 = vpop.f32.mrf.mxu0
    %v3064 = vadd.f32 0.0, %v3063
    %3065 = vmatmul.bf16.gmra.mxu0 %v2659
    %v3066 = vpop.f32.mrf.mxu0
    %v3067 = vadd.f32 0.0, %v3066
    %v3068 = vpop.f32.mrf.mxu0
    %v3069 = vadd.f32 0.0, %v3068
    %3070 = vmatmul.bf16.gmra.mxu0 %v2662
    %v3071 = vpop.f32.mrf.mxu0
    %v3072 = vadd.f32 0.0, %v3071
    %v3073 = vpop.f32.mrf.mxu0
    %v3074 = vadd.f32 0.0, %v3073
    %3075 = vmatmul.bf16.gmra.mxu0 %v2665
    %v3076 = vpop.f32.mrf.mxu0
    %v3077 = vadd.f32 0.0, %v3076
    %v3078 = vpop.f32.mrf.mxu0
    %v3079 = vadd.f32 0.0, %v3078
    %3080 = vmatmul.bf16.gmra.mxu0 %v2668
    %v3081 = vpop.f32.mrf.mxu0
    %v3082 = vadd.f32 0.0, %v3081
    %v3083 = vpop.f32.mrf.mxu0
    %v3084 = vadd.f32 0.0, %v3083
    %3085 = vmatmul.bf16.gmra.mxu0 %v2671
    %v3086 = vpop.f32.mrf.mxu0
    %v3087 = vadd.f32 0.0, %v3086
    %v3088 = vpop.f32.mrf.mxu0
    %v3089 = vadd.f32 0.0, %v3088
    %3090 = vmatmul.bf16.gmra.mxu0 %v2674
    %v3091 = vpop.f32.mrf.mxu0
    %v3092 = vadd.f32 0.0, %v3091
    %v3093 = vpop.f32.mrf.mxu0
    %v3094 = vadd.f32 0.0, %v3093
    %3095 = vdwg.mxu0
    %v3112 = vunpack.c.l.b16 %v2508
    %v3113 = vunpack.c.l.b16 %v2509
    %v3114 = vunpack.c.l.b16 %v2510
    %v3115 = vunpack.c.l.b16 %v2511
    %v3116 = vunpack.c.l.b16 %v2512
    %v3117 = vunpack.c.l.b16 %v2513
    %v3118 = vunpack.c.l.b16 %v2514
    %v3119 = vunpack.c.l.b16 %v2515
    %v3120 = vunpack.c.l.b16 %v2516
    %v3121 = vunpack.c.l.b16 %v2517
    %v3122 = vunpack.c.l.b16 %v2518
    %v3123 = vunpack.c.l.b16 %v2519
    %v3124 = vunpack.c.l.b16 %v2520
    %v3125 = vunpack.c.l.b16 %v2521
    %v3126 = vunpack.c.l.b16 %v2522
    %v3127 = vunpack.c.l.b16 %v2523
    %v3128 = vpack.c.b16 %v3113, %v3112
    %v3129 = vpack.c.b16 %v3115, %v3114
    %v3130 = vpack.c.b16 %v3117, %v3116
    %v3131 = vpack.c.b16 %v3119, %v3118
    %v3132 = vpack.c.b16 %v3121, %v3120
    %v3133 = vpack.c.b16 %v3123, %v3122
    %v3134 = vpack.c.b16 %v3125, %v3124
    %v3135 = vpack.c.b16 %v3127, %v3126
    %v3137 = vsel %vm2651, %v3128, 0
    %v3140 = vsel %vm2651, %v3129, 0
    %v3143 = vsel %vm2651, %v3130, 0
    %v3146 = vsel %vm2651, %v3131, 0
    %v3149 = vsel %vm2651, %v3132, 0
    %v3152 = vsel %vm2651, %v3133, 0
    %v3155 = vsel %vm2651, %v3134, 0
    %v3158 = vsel %vm2651, %v3135, 0
    %v3161 = vand.u32 %v2551, %v2679
    %v3164 = vand.u32 %v2552, %v2679
    %v3167 = vand.u32 %v2553, %v2679
    %v3170 = vand.u32 %v2554, %v2679
    %v3173 = vand.u32 %v2555, %v2679
    %v3176 = vand.u32 %v2556, %v2679
    %v3179 = vand.u32 %v2557, %v2679
    %v3182 = vand.u32 %v2558, %v2679
    %3184 = vmatpush.bf16.msra.mxu0 0
    %3185 = vmatpush.bf16.msra.mxu0 0
    %3186 = vmatpush.bf16.msra.mxu0 0
    %3187 = vmatpush.bf16.msra.mxu0 0
    %3188 = vmatpush.bf16.msra.mxu0 0
    %3189 = vmatpush.bf16.msra.mxu0 0
    %3190 = vmatpush.bf16.msra.mxu0 0
    %3191 = vmatpush.bf16.msra.mxu0 %v3161
    %3192 = vmatmul.bf16.gmra.mxu0 %v3137
    %v3193 = vpop.f32.mrf.mxu0
    %v3194 = vadd.f32 %v2714, %v3193
    %v3195 = vpop.f32.mrf.mxu0
    %v3196 = vadd.f32 %v2716, %v3195
    %3197 = vmatmul.bf16.gmra.mxu0 %v3140
    %v3198 = vpop.f32.mrf.mxu0
    %v3199 = vadd.f32 %v2719, %v3198
    %v3200 = vpop.f32.mrf.mxu0
    %v3201 = vadd.f32 %v2721, %v3200
    %3202 = vmatmul.bf16.gmra.mxu0 %v3143
    %v3203 = vpop.f32.mrf.mxu0
    %v3204 = vadd.f32 %v2724, %v3203
    %v3205 = vpop.f32.mrf.mxu0
    %v3206 = vadd.f32 %v2726, %v3205
    %3207 = vmatmul.bf16.gmra.mxu0 %v3146
    %v3208 = vpop.f32.mrf.mxu0
    %v3209 = vadd.f32 %v2729, %v3208
    %v3210 = vpop.f32.mrf.mxu0
    %v3211 = vadd.f32 %v2731, %v3210
    %3212 = vmatmul.bf16.gmra.mxu0 %v3149
    %v3213 = vpop.f32.mrf.mxu0
    %v3214 = vadd.f32 %v2734, %v3213
    %v3215 = vpop.f32.mrf.mxu0
    %v3216 = vadd.f32 %v2736, %v3215
    %3217 = vmatmul.bf16.gmra.mxu0 %v3152
    %v3218 = vpop.f32.mrf.mxu0
    %v3219 = vadd.f32 %v2739, %v3218
    %v3220 = vpop.f32.mrf.mxu0
    %v3221 = vadd.f32 %v2741, %v3220
    %3222 = vmatmul.bf16.gmra.mxu0 %v3155
    %v3223 = vpop.f32.mrf.mxu0
    %v3224 = vadd.f32 %v2744, %v3223
    %v3225 = vpop.f32.mrf.mxu0
    %v3226 = vadd.f32 %v2746, %v3225
    %3227 = vmatmul.bf16.gmra.mxu0 %v3158
    %v3228 = vpop.f32.mrf.mxu0
    %v3229 = vadd.f32 %v2749, %v3228
    %v3230 = vpop.f32.mrf.mxu0
    %v3231 = vadd.f32 %v2751, %v3230
    %3232 = vdwg.mxu0
    %3233 = vmatpush.bf16.msra.mxu0 0
    %3234 = vmatpush.bf16.msra.mxu0 0
    %3235 = vmatpush.bf16.msra.mxu0 0
    %3236 = vmatpush.bf16.msra.mxu0 0
    %3237 = vmatpush.bf16.msra.mxu0 0
    %3238 = vmatpush.bf16.msra.mxu0 0
    %3239 = vmatpush.bf16.msra.mxu0 0
    %3240 = vmatpush.bf16.msra.mxu0 %v3164
    %3241 = vmatmul.bf16.gmra.mxu0 %v3137
    %v3242 = vpop.f32.mrf.mxu0
    %v3243 = vadd.f32 %v2763, %v3242
    %v3244 = vpop.f32.mrf.mxu0
    %v3245 = vadd.f32 %v2765, %v3244
    %3246 = vmatmul.bf16.gmra.mxu0 %v3140
    %v3247 = vpop.f32.mrf.mxu0
    %v3248 = vadd.f32 %v2768, %v3247
    %v3249 = vpop.f32.mrf.mxu0
    %v3250 = vadd.f32 %v2770, %v3249
    %3251 = vmatmul.bf16.gmra.mxu0 %v3143
    %v3252 = vpop.f32.mrf.mxu0
    %v3253 = vadd.f32 %v2773, %v3252
    %v3254 = vpop.f32.mrf.mxu0
    %v3255 = vadd.f32 %v2775, %v3254
    %3256 = vmatmul.bf16.gmra.mxu0 %v3146
    %v3257 = vpop.f32.mrf.mxu0
    %v3258 = vadd.f32 %v2778, %v3257
    %v3259 = vpop.f32.mrf.mxu0
    %v3260 = vadd.f32 %v2780, %v3259
    %3261 = vmatmul.bf16.gmra.mxu0 %v3149
    %v3262 = vpop.f32.mrf.mxu0
    %v3263 = vadd.f32 %v2783, %v3262
    %v3264 = vpop.f32.mrf.mxu0
    %v3265 = vadd.f32 %v2785, %v3264
    %3266 = vmatmul.bf16.gmra.mxu0 %v3152
    %v3267 = vpop.f32.mrf.mxu0
    %v3268 = vadd.f32 %v2788, %v3267
    %v3269 = vpop.f32.mrf.mxu0
    %v3270 = vadd.f32 %v2790, %v3269
    %3271 = vmatmul.bf16.gmra.mxu0 %v3155
    %v3272 = vpop.f32.mrf.mxu0
    %v3273 = vadd.f32 %v2793, %v3272
    %v3274 = vpop.f32.mrf.mxu0
    %v3275 = vadd.f32 %v2795, %v3274
    %3276 = vmatmul.bf16.gmra.mxu0 %v3158
    %v3277 = vpop.f32.mrf.mxu0
    %v3278 = vadd.f32 %v2798, %v3277
    %v3279 = vpop.f32.mrf.mxu0
    %v3280 = vadd.f32 %v2800, %v3279
    %3281 = vdwg.mxu0
    %3282 = vmatpush.bf16.msra.mxu0 0
    %3283 = vmatpush.bf16.msra.mxu0 0
    %3284 = vmatpush.bf16.msra.mxu0 0
    %3285 = vmatpush.bf16.msra.mxu0 0
    %3286 = vmatpush.bf16.msra.mxu0 0
    %3287 = vmatpush.bf16.msra.mxu0 0
    %3288 = vmatpush.bf16.msra.mxu0 0
    %3289 = vmatpush.bf16.msra.mxu0 %v3167
    %3290 = vmatmul.bf16.gmra.mxu0 %v3137
    %v3291 = vpop.f32.mrf.mxu0
    %v3292 = vadd.f32 %v2812, %v3291
    %v3293 = vpop.f32.mrf.mxu0
    %v3294 = vadd.f32 %v2814, %v3293
    %3295 = vmatmul.bf16.gmra.mxu0 %v3140
    %v3296 = vpop.f32.mrf.mxu0
    %v3297 = vadd.f32 %v2817, %v3296
    %v3298 = vpop.f32.mrf.mxu0
    %v3299 = vadd.f32 %v2819, %v3298
    %3300 = vmatmul.bf16.gmra.mxu0 %v3143
    %v3301 = vpop.f32.mrf.mxu0
    %v3302 = vadd.f32 %v2822, %v3301
    %v3303 = vpop.f32.mrf.mxu0
    %v3304 = vadd.f32 %v2824, %v3303
    %3305 = vmatmul.bf16.gmra.mxu0 %v3146
    %v3306 = vpop.f32.mrf.mxu0
    %v3307 = vadd.f32 %v2827, %v3306
    %v3308 = vpop.f32.mrf.mxu0
    %v3309 = vadd.f32 %v2829, %v3308
    %3310 = vmatmul.bf16.gmra.mxu0 %v3149
    %v3311 = vpop.f32.mrf.mxu0
    %v3312 = vadd.f32 %v2832, %v3311
    %v3313 = vpop.f32.mrf.mxu0
    %v3314 = vadd.f32 %v2834, %v3313
    %3315 = vmatmul.bf16.gmra.mxu0 %v3152
    %v3316 = vpop.f32.mrf.mxu0
    %v3317 = vadd.f32 %v2837, %v3316
    %v3318 = vpop.f32.mrf.mxu0
    %v3319 = vadd.f32 %v2839, %v3318
    %3320 = vmatmul.bf16.gmra.mxu0 %v3155
    %v3321 = vpop.f32.mrf.mxu0
    %v3322 = vadd.f32 %v2842, %v3321
    %v3323 = vpop.f32.mrf.mxu0
    %v3324 = vadd.f32 %v2844, %v3323
    %3325 = vmatmul.bf16.gmra.mxu0 %v3158
    %v3326 = vpop.f32.mrf.mxu0
    %v3327 = vadd.f32 %v2847, %v3326
    %v3328 = vpop.f32.mrf.mxu0
    %v3329 = vadd.f32 %v2849, %v3328
    %3330 = vdwg.mxu0
    %3331 = vmatpush.bf16.msra.mxu0 0
    %3332 = vmatpush.bf16.msra.mxu0 0
    %3333 = vmatpush.bf16.msra.mxu0 0
    %3334 = vmatpush.bf16.msra.mxu0 0
    %3335 = vmatpush.bf16.msra.mxu0 0
    %3336 = vmatpush.bf16.msra.mxu0 0
    %3337 = vmatpush.bf16.msra.mxu0 0
    %3338 = vmatpush.bf16.msra.mxu0 %v3170
    %3339 = vmatmul.bf16.gmra.mxu0 %v3137
    %v3340 = vpop.f32.mrf.mxu0
    %v3341 = vadd.f32 %v2861, %v3340
    %v3342 = vpop.f32.mrf.mxu0
    %v3343 = vadd.f32 %v2863, %v3342
    %3344 = vmatmul.bf16.gmra.mxu0 %v3140
    %v3345 = vpop.f32.mrf.mxu0
    %v3346 = vadd.f32 %v2866, %v3345
    %v3347 = vpop.f32.mrf.mxu0
    %v3348 = vadd.f32 %v2868, %v3347
    %3349 = vmatmul.bf16.gmra.mxu0 %v3143
    %v3350 = vpop.f32.mrf.mxu0
    %v3351 = vadd.f32 %v2871, %v3350
    %v3352 = vpop.f32.mrf.mxu0
    %v3353 = vadd.f32 %v2873, %v3352
    %3354 = vmatmul.bf16.gmra.mxu0 %v3146
    %v3355 = vpop.f32.mrf.mxu0
    %v3356 = vadd.f32 %v2876, %v3355
    %v3357 = vpop.f32.mrf.mxu0
    %v3358 = vadd.f32 %v2878, %v3357
    %3359 = vmatmul.bf16.gmra.mxu0 %v3149
    %v3360 = vpop.f32.mrf.mxu0
    %v3361 = vadd.f32 %v2881, %v3360
    %v3362 = vpop.f32.mrf.mxu0
    %v3363 = vadd.f32 %v2883, %v3362
    %3364 = vmatmul.bf16.gmra.mxu0 %v3152
    %v3365 = vpop.f32.mrf.mxu0
    %v3366 = vadd.f32 %v2886, %v3365
    %v3367 = vpop.f32.mrf.mxu0
    %v3368 = vadd.f32 %v2888, %v3367
    %3369 = vmatmul.bf16.gmra.mxu0 %v3155
    %v3370 = vpop.f32.mrf.mxu0
    %v3371 = vadd.f32 %v2891, %v3370
    %v3372 = vpop.f32.mrf.mxu0
    %v3373 = vadd.f32 %v2893, %v3372
    %3374 = vmatmul.bf16.gmra.mxu0 %v3158
    %v3375 = vpop.f32.mrf.mxu0
    %v3376 = vadd.f32 %v2896, %v3375
    %v3377 = vpop.f32.mrf.mxu0
    %v3378 = vadd.f32 %v2898, %v3377
    %3379 = vdwg.mxu0
    %3380 = vmatpush.bf16.msra.mxu0 0
    %3381 = vmatpush.bf16.msra.mxu0 0
    %3382 = vmatpush.bf16.msra.mxu0 0
    %3383 = vmatpush.bf16.msra.mxu0 0
    %3384 = vmatpush.bf16.msra.mxu0 0
    %3385 = vmatpush.bf16.msra.mxu0 0
    %3386 = vmatpush.bf16.msra.mxu0 0
    %3387 = vmatpush.bf16.msra.mxu0 %v3173
    %3388 = vmatmul.bf16.gmra.mxu0 %v3137
    %v3389 = vpop.f32.mrf.mxu0
    %v3390 = vadd.f32 %v2910, %v3389
    %v3391 = vpop.f32.mrf.mxu0
    %v3392 = vadd.f32 %v2912, %v3391
    %3393 = vmatmul.bf16.gmra.mxu0 %v3140
    %v3394 = vpop.f32.mrf.mxu0
    %v3395 = vadd.f32 %v2915, %v3394
    %v3396 = vpop.f32.mrf.mxu0
    %v3397 = vadd.f32 %v2917, %v3396
    %3398 = vmatmul.bf16.gmra.mxu0 %v3143
    %v3399 = vpop.f32.mrf.mxu0
    %v3400 = vadd.f32 %v2920, %v3399
    %v3401 = vpop.f32.mrf.mxu0
    %v3402 = vadd.f32 %v2922, %v3401
    %3403 = vmatmul.bf16.gmra.mxu0 %v3146
    %v3404 = vpop.f32.mrf.mxu0
    %v3405 = vadd.f32 %v2925, %v3404
    %v3406 = vpop.f32.mrf.mxu0
    %v3407 = vadd.f32 %v2927, %v3406
    %3408 = vmatmul.bf16.gmra.mxu0 %v3149
    %v3409 = vpop.f32.mrf.mxu0
    %v3410 = vadd.f32 %v2930, %v3409
    %v3411 = vpop.f32.mrf.mxu0
    %v3412 = vadd.f32 %v2932, %v3411
    %3413 = vmatmul.bf16.gmra.mxu0 %v3152
    %v3414 = vpop.f32.mrf.mxu0
    %v3415 = vadd.f32 %v2935, %v3414
    %v3416 = vpop.f32.mrf.mxu0
    %v3417 = vadd.f32 %v2937, %v3416
    %3418 = vmatmul.bf16.gmra.mxu0 %v3155
    %v3419 = vpop.f32.mrf.mxu0
    %v3420 = vadd.f32 %v2940, %v3419
    %v3421 = vpop.f32.mrf.mxu0
    %v3422 = vadd.f32 %v2942, %v3421
    %3423 = vmatmul.bf16.gmra.mxu0 %v3158
    %v3424 = vpop.f32.mrf.mxu0
    %v3425 = vadd.f32 %v2945, %v3424
    %v3426 = vpop.f32.mrf.mxu0
    %v3427 = vadd.f32 %v2947, %v3426
    %3428 = vdwg.mxu0
    %3429 = vmatpush.bf16.msra.mxu0 0
    %3430 = vmatpush.bf16.msra.mxu0 0
    %3431 = vmatpush.bf16.msra.mxu0 0
    %3432 = vmatpush.bf16.msra.mxu0 0
    %3433 = vmatpush.bf16.msra.mxu0 0
    %3434 = vmatpush.bf16.msra.mxu0 0
    %3435 = vmatpush.bf16.msra.mxu0 0
    %3436 = vmatpush.bf16.msra.mxu0 %v3176
    %3437 = vmatmul.bf16.gmra.mxu0 %v3137
    %v3438 = vpop.f32.mrf.mxu0
    %v3439 = vadd.f32 %v2959, %v3438
    %v3440 = vpop.f32.mrf.mxu0
    %v3441 = vadd.f32 %v2961, %v3440
    %3442 = vmatmul.bf16.gmra.mxu0 %v3140
    %v3443 = vpop.f32.mrf.mxu0
    %v3444 = vadd.f32 %v2964, %v3443
    %v3445 = vpop.f32.mrf.mxu0
    %v3446 = vadd.f32 %v2966, %v3445
    %3447 = vmatmul.bf16.gmra.mxu0 %v3143
    %v3448 = vpop.f32.mrf.mxu0
    %v3449 = vadd.f32 %v2969, %v3448
    %v3450 = vpop.f32.mrf.mxu0
    %v3451 = vadd.f32 %v2971, %v3450
    %3452 = vmatmul.bf16.gmra.mxu0 %v3146
    %v3453 = vpop.f32.mrf.mxu0
    %v3454 = vadd.f32 %v2974, %v3453
    %v3455 = vpop.f32.mrf.mxu0
    %v3456 = vadd.f32 %v2976, %v3455
    %3457 = vmatmul.bf16.gmra.mxu0 %v3149
    %v3458 = vpop.f32.mrf.mxu0
    %v3459 = vadd.f32 %v2979, %v3458
    %v3460 = vpop.f32.mrf.mxu0
    %v3461 = vadd.f32 %v2981, %v3460
    %3462 = vmatmul.bf16.gmra.mxu0 %v3152
    %v3463 = vpop.f32.mrf.mxu0
    %v3464 = vadd.f32 %v2984, %v3463
    %v3465 = vpop.f32.mrf.mxu0
    %v3466 = vadd.f32 %v2986, %v3465
    %3467 = vmatmul.bf16.gmra.mxu0 %v3155
    %v3468 = vpop.f32.mrf.mxu0
    %v3469 = vadd.f32 %v2989, %v3468
    %v3470 = vpop.f32.mrf.mxu0
    %v3471 = vadd.f32 %v2991, %v3470
    %3472 = vmatmul.bf16.gmra.mxu0 %v3158
    %v3473 = vpop.f32.mrf.mxu0
    %v3474 = vadd.f32 %v2994, %v3473
    %v3475 = vpop.f32.mrf.mxu0
    %v3476 = vadd.f32 %v2996, %v3475
    %3477 = vdwg.mxu0
    %3478 = vmatpush.bf16.msra.mxu0 0
    %3479 = vmatpush.bf16.msra.mxu0 0
    %3480 = vmatpush.bf16.msra.mxu0 0
    %3481 = vmatpush.bf16.msra.mxu0 0
    %3482 = vmatpush.bf16.msra.mxu0 0
    %3483 = vmatpush.bf16.msra.mxu0 0
    %3484 = vmatpush.bf16.msra.mxu0 0
    %3485 = vmatpush.bf16.msra.mxu0 %v3179
    %3486 = vmatmul.bf16.gmra.mxu0 %v3137
    %v3487 = vpop.f32.mrf.mxu0
    %v3488 = vadd.f32 %v3008, %v3487
    %v3489 = vpop.f32.mrf.mxu0
    %v3490 = vadd.f32 %v3010, %v3489
    %3491 = vmatmul.bf16.gmra.mxu0 %v3140
    %v3492 = vpop.f32.mrf.mxu0
    %v3493 = vadd.f32 %v3013, %v3492
    %v3494 = vpop.f32.mrf.mxu0
    %v3495 = vadd.f32 %v3015, %v3494
    %3496 = vmatmul.bf16.gmra.mxu0 %v3143
    %v3497 = vpop.f32.mrf.mxu0
    %v3498 = vadd.f32 %v3018, %v3497
    %v3499 = vpop.f32.mrf.mxu0
    %v3500 = vadd.f32 %v3020, %v3499
    %3501 = vmatmul.bf16.gmra.mxu0 %v3146
    %v3502 = vpop.f32.mrf.mxu0
    %v3503 = vadd.f32 %v3023, %v3502
    %v3504 = vpop.f32.mrf.mxu0
    %v3505 = vadd.f32 %v3025, %v3504
    %3506 = vmatmul.bf16.gmra.mxu0 %v3149
    %v3507 = vpop.f32.mrf.mxu0
    %v3508 = vadd.f32 %v3028, %v3507
    %v3509 = vpop.f32.mrf.mxu0
    %v3510 = vadd.f32 %v3030, %v3509
    %3511 = vmatmul.bf16.gmra.mxu0 %v3152
    %v3512 = vpop.f32.mrf.mxu0
    %v3513 = vadd.f32 %v3033, %v3512
    %v3514 = vpop.f32.mrf.mxu0
    %v3515 = vadd.f32 %v3035, %v3514
    %3516 = vmatmul.bf16.gmra.mxu0 %v3155
    %v3517 = vpop.f32.mrf.mxu0
    %v3518 = vadd.f32 %v3038, %v3517
    %v3519 = vpop.f32.mrf.mxu0
    %v3520 = vadd.f32 %v3040, %v3519
    %3521 = vmatmul.bf16.gmra.mxu0 %v3158
    %v3522 = vpop.f32.mrf.mxu0
    %v3523 = vadd.f32 %v3043, %v3522
    %v3524 = vpop.f32.mrf.mxu0
    %v3525 = vadd.f32 %v3045, %v3524
    %3526 = vdwg.mxu0
    %3527 = vmatpush.bf16.msra.mxu0 0
    %3528 = vmatpush.bf16.msra.mxu0 0
    %3529 = vmatpush.bf16.msra.mxu0 0
    %3530 = vmatpush.bf16.msra.mxu0 0
    %3531 = vmatpush.bf16.msra.mxu0 0
    %3532 = vmatpush.bf16.msra.mxu0 0
    %3533 = vmatpush.bf16.msra.mxu0 0
    %3534 = vmatpush.bf16.msra.mxu0 %v3182
    %3535 = vmatmul.bf16.gmra.mxu0 %v3137
    %v3536 = vpop.f32.mrf.mxu0
    %v3537 = vadd.f32 %v3057, %v3536
    %v3538 = vpop.f32.mrf.mxu0
    %v3539 = vadd.f32 %v3059, %v3538
    %3540 = vmatmul.bf16.gmra.mxu0 %v3140
    %v3541 = vpop.f32.mrf.mxu0
    %v3542 = vadd.f32 %v3062, %v3541
    %v3543 = vpop.f32.mrf.mxu0
    %v3544 = vadd.f32 %v3064, %v3543
    %3545 = vmatmul.bf16.gmra.mxu0 %v3143
    %v3546 = vpop.f32.mrf.mxu0
    %v3547 = vadd.f32 %v3067, %v3546
    %v3548 = vpop.f32.mrf.mxu0
    %v3549 = vadd.f32 %v3069, %v3548
    %3550 = vmatmul.bf16.gmra.mxu0 %v3146
    %v3551 = vpop.f32.mrf.mxu0
    %v3552 = vadd.f32 %v3072, %v3551
    %v3553 = vpop.f32.mrf.mxu0
    %v3554 = vadd.f32 %v3074, %v3553
    %3555 = vmatmul.bf16.gmra.mxu0 %v3149
    %v3556 = vpop.f32.mrf.mxu0
    %v3557 = vadd.f32 %v3077, %v3556
    %v3558 = vpop.f32.mrf.mxu0
    %v3559 = vadd.f32 %v3079, %v3558
    %3560 = vmatmul.bf16.gmra.mxu0 %v3152
    %v3561 = vpop.f32.mrf.mxu0
    %v3562 = vadd.f32 %v3082, %v3561
    %v3563 = vpop.f32.mrf.mxu0
    %v3564 = vadd.f32 %v3084, %v3563
    %3565 = vmatmul.bf16.gmra.mxu0 %v3155
    %v3566 = vpop.f32.mrf.mxu0
    %v3567 = vadd.f32 %v3087, %v3566
    %v3568 = vpop.f32.mrf.mxu0
    %v3569 = vadd.f32 %v3089, %v3568
    %3570 = vmatmul.bf16.gmra.mxu0 %v3158
    %v3571 = vpop.f32.mrf.mxu0
    %v3572 = vadd.f32 %v3092, %v3571
    %v3573 = vpop.f32.mrf.mxu0
    %v3574 = vadd.f32 %v3094, %v3573
    %3575 = vdwg.mxu0
    %s3576 = scalar_lea.vmem %s1, 128
    %v3577 = vld [vmem:[%s3576] sm:$0xf]
    %v3578 = vld [vmem:[%s3576 + $0x4] sm:$0xf]
    %v3579 = vld [vmem:[%s3576 + $0x8] sm:$0xf]
    %v3580 = vld [vmem:[%s3576 + $0xc] sm:$0xf]
    %v3581 = vld [vmem:[%s3576 + $0x10] sm:$0xf]
    %v3582 = vld [vmem:[%s3576 + $0x14] sm:$0xf]
    %v3583 = vld [vmem:[%s3576 + $0x18] sm:$0xf]
    %v3584 = vld [vmem:[%s3576 + $0x1c] sm:$0xf]
    %v3585 = vld [vmem:[%s3576 + $0x20] sm:$0xf]
    %v3586 = vld [vmem:[%s3576 + $0x24] sm:$0xf]
    %v3587 = vld [vmem:[%s3576 + $0x28] sm:$0xf]
    %v3588 = vld [vmem:[%s3576 + $0x2c] sm:$0xf]
    %v3589 = vld [vmem:[%s3576 + $0x30] sm:$0xf]
    %v3590 = vld [vmem:[%s3576 + $0x34] sm:$0xf]
    %v3591 = vld [vmem:[%s3576 + $0x38] sm:$0xf]
    %v3592 = vld [vmem:[%s3576 + $0x3c] sm:$0xf]
    %3597 = vst [vmem:[#allocation1] ss:$2 sm:$0xff] %v805
    %s3598 = scalar_lea.vmem [#allocation1], 16
    %3599 = vst [vmem:[%s3598] ss:$2 sm:$0xff] %v959
    %s3600 = scalar_lea.vmem [#allocation1], 32
    %3601 = vst [vmem:[%s3600] ss:$2 sm:$0xff] %v1113
    %s3602 = scalar_lea.vmem [#allocation1], 48
    %3603 = vst [vmem:[%s3602] ss:$2 sm:$0xff] %v1267
    %v3604 = vld.sshfl [vmem:[#allocation1] sm:$0xff pattern:$0x75316420]
    %v3605 = vld.sshfl [vmem:[#allocation1 + $0x8] sm:$0xff pattern:$0x75316420]
    %v3606 = vld.sshfl [vmem:[#allocation1 + $0x10] sm:$0xff pattern:$0x75316420]
    %v3607 = vld.sshfl [vmem:[#allocation1 + $0x18] sm:$0xff pattern:$0x75316420]
    %v3608 = vld.sshfl [vmem:[#allocation1 + $0x20] sm:$0xff pattern:$0x75316420]
    %v3609 = vld.sshfl [vmem:[#allocation1 + $0x28] sm:$0xff pattern:$0x75316420]
    %v3610 = vld.sshfl [vmem:[#allocation1 + $0x30] sm:$0xff pattern:$0x75316420]
    %v3611 = vld.sshfl [vmem:[#allocation1 + $0x38] sm:$0xff pattern:$0x75316420]
    %v3620 = vpack.c.bf16 %v3604, %v3604
    %v3621 = vpack.c.bf16 %v3605, %v3605
    %v3622 = vpack.c.bf16 %v3606, %v3606
    %v3623 = vpack.c.bf16 %v3607, %v3607
    %v3624 = vpack.c.bf16 %v3608, %v3608
    %v3625 = vpack.c.bf16 %v3609, %v3609
    %v3626 = vpack.c.bf16 %v3610, %v3610
    %v3627 = vpack.c.bf16 %v3611, %v3611
    %v3644 = vunpack.c.l.b16 %v3577
    %v3645 = vunpack.c.l.b16 %v3578
    %v3646 = vunpack.c.l.b16 %v3579
    %v3647 = vunpack.c.l.b16 %v3580
    %v3648 = vunpack.c.l.b16 %v3581
    %v3649 = vunpack.c.l.b16 %v3582
    %v3650 = vunpack.c.l.b16 %v3583
    %v3651 = vunpack.c.l.b16 %v3584
    %v3652 = vunpack.c.l.b16 %v3585
    %v3653 = vunpack.c.l.b16 %v3586
    %v3654 = vunpack.c.l.b16 %v3587
    %v3655 = vunpack.c.l.b16 %v3588
    %v3656 = vunpack.c.l.b16 %v3589
    %v3657 = vunpack.c.l.b16 %v3590
    %v3658 = vunpack.c.l.b16 %v3591
    %v3659 = vunpack.c.l.b16 %v3592
    %v3660 = vpack.c.b16 %v3645, %v3644
    %v3661 = vpack.c.b16 %v3647, %v3646
    %v3662 = vpack.c.b16 %v3649, %v3648
    %v3663 = vpack.c.b16 %v3651, %v3650
    %v3664 = vpack.c.b16 %v3653, %v3652
    %v3665 = vpack.c.b16 %v3655, %v3654
    %v3666 = vpack.c.b16 %v3657, %v3656
    %v3667 = vpack.c.b16 %v3659, %v3658
    %v3669 = vsel %vm2651, %v3660, 0
    %v3672 = vsel %vm2651, %v3661, 0
    %v3675 = vsel %vm2651, %v3662, 0
    %v3678 = vsel %vm2651, %v3663, 0
    %v3681 = vsel %vm2651, %v3664, 0
    %v3684 = vsel %vm2651, %v3665, 0
    %v3687 = vsel %vm2651, %v3666, 0
    %v3690 = vsel %vm2651, %v3667, 0
    %v3693 = vand.u32 %v3620, %v2679
    %v3696 = vand.u32 %v3621, %v2679
    %v3699 = vand.u32 %v3622, %v2679
    %v3702 = vand.u32 %v3623, %v2679
    %v3705 = vand.u32 %v3624, %v2679
    %v3708 = vand.u32 %v3625, %v2679
    %v3711 = vand.u32 %v3626, %v2679
    %v3714 = vand.u32 %v3627, %v2679
    %3716 = vmatpush.bf16.msra.mxu0 0
    %3717 = vmatpush.bf16.msra.mxu0 0
    %3718 = vmatpush.bf16.msra.mxu0 0
    %3719 = vmatpush.bf16.msra.mxu0 0
    %3720 = vmatpush.bf16.msra.mxu0 0
    %3721 = vmatpush.bf16.msra.mxu0 0
    %3722 = vmatpush.bf16.msra.mxu0 0
    %3723 = vmatpush.bf16.msra.mxu0 %v3693
    %3724 = vmatmul.bf16.gmra.mxu0 %v3669
    %v3725 = vpop.f32.mrf.mxu0
    %v3726 = vadd.f32 0.0, %v3725
    %v3727 = vpop.f32.mrf.mxu0
    %v3728 = vadd.f32 0.0, %v3727
    %3729 = vmatmul.bf16.gmra.mxu0 %v3672
    %v3730 = vpop.f32.mrf.mxu0
    %v3731 = vadd.f32 0.0, %v3730
    %v3732 = vpop.f32.mrf.mxu0
    %v3733 = vadd.f32 0.0, %v3732
    %3734 = vmatmul.bf16.gmra.mxu0 %v3675
    %v3735 = vpop.f32.mrf.mxu0
    %v3736 = vadd.f32 0.0, %v3735
    %v3737 = vpop.f32.mrf.mxu0
    %v3738 = vadd.f32 0.0, %v3737
    %3739 = vmatmul.bf16.gmra.mxu0 %v3678
    %v3740 = vpop.f32.mrf.mxu0
    %v3741 = vadd.f32 0.0, %v3740
    %v3742 = vpop.f32.mrf.mxu0
    %v3743 = vadd.f32 0.0, %v3742
    %3744 = vmatmul.bf16.gmra.mxu0 %v3681
    %v3745 = vpop.f32.mrf.mxu0
    %v3746 = vadd.f32 0.0, %v3745
    %v3747 = vpop.f32.mrf.mxu0
    %v3748 = vadd.f32 0.0, %v3747
    %3749 = vmatmul.bf16.gmra.mxu0 %v3684
    %v3750 = vpop.f32.mrf.mxu0
    %v3751 = vadd.f32 0.0, %v3750
    %v3752 = vpop.f32.mrf.mxu0
    %v3753 = vadd.f32 0.0, %v3752
    %3754 = vmatmul.bf16.gmra.mxu0 %v3687
    %v3755 = vpop.f32.mrf.mxu0
    %v3756 = vadd.f32 0.0, %v3755
    %v3757 = vpop.f32.mrf.mxu0
    %v3758 = vadd.f32 0.0, %v3757
    %3759 = vmatmul.bf16.gmra.mxu0 %v3690
    %v3760 = vpop.f32.mrf.mxu0
    %v3761 = vadd.f32 0.0, %v3760
    %v3762 = vpop.f32.mrf.mxu0
    %v3763 = vadd.f32 0.0, %v3762
    %3764 = vdwg.mxu0
    %3765 = vmatpush.bf16.msra.mxu0 0
    %3766 = vmatpush.bf16.msra.mxu0 0
    %3767 = vmatpush.bf16.msra.mxu0 0
    %3768 = vmatpush.bf16.msra.mxu0 0
    %3769 = vmatpush.bf16.msra.mxu0 0
    %3770 = vmatpush.bf16.msra.mxu0 0
    %3771 = vmatpush.bf16.msra.mxu0 0
    %3772 = vmatpush.bf16.msra.mxu0 %v3696
    %3773 = vmatmul.bf16.gmra.mxu0 %v3669
    %v3774 = vpop.f32.mrf.mxu0
    %v3775 = vadd.f32 0.0, %v3774
    %v3776 = vpop.f32.mrf.mxu0
    %v3777 = vadd.f32 0.0, %v3776
    %3778 = vmatmul.bf16.gmra.mxu0 %v3672
    %v3779 = vpop.f32.mrf.mxu0
    %v3780 = vadd.f32 0.0, %v3779
    %v3781 = vpop.f32.mrf.mxu0
    %v3782 = vadd.f32 0.0, %v3781
    %3783 = vmatmul.bf16.gmra.mxu0 %v3675
    %v3784 = vpop.f32.mrf.mxu0
    %v3785 = vadd.f32 0.0, %v3784
    %v3786 = vpop.f32.mrf.mxu0
    %v3787 = vadd.f32 0.0, %v3786
    %3788 = vmatmul.bf16.gmra.mxu0 %v3678
    %v3789 = vpop.f32.mrf.mxu0
    %v3790 = vadd.f32 0.0, %v3789
    %v3791 = vpop.f32.mrf.mxu0
    %v3792 = vadd.f32 0.0, %v3791
    %3793 = vmatmul.bf16.gmra.mxu0 %v3681
    %v3794 = vpop.f32.mrf.mxu0
    %v3795 = vadd.f32 0.0, %v3794
    %v3796 = vpop.f32.mrf.mxu0
    %v3797 = vadd.f32 0.0, %v3796
    %3798 = vmatmul.bf16.gmra.mxu0 %v3684
    %v3799 = vpop.f32.mrf.mxu0
    %v3800 = vadd.f32 0.0, %v3799
    %v3801 = vpop.f32.mrf.mxu0
    %v3802 = vadd.f32 0.0, %v3801
    %3803 = vmatmul.bf16.gmra.mxu0 %v3687
    %v3804 = vpop.f32.mrf.mxu0
    %v3805 = vadd.f32 0.0, %v3804
    %v3806 = vpop.f32.mrf.mxu0
    %v3807 = vadd.f32 0.0, %v3806
    %3808 = vmatmul.bf16.gmra.mxu0 %v3690
    %v3809 = vpop.f32.mrf.mxu0
    %v3810 = vadd.f32 0.0, %v3809
    %v3811 = vpop.f32.mrf.mxu0
    %v3812 = vadd.f32 0.0, %v3811
    %3813 = vdwg.mxu0
    %3814 = vmatpush.bf16.msra.mxu0 0
    %3815 = vmatpush.bf16.msra.mxu0 0
    %3816 = vmatpush.bf16.msra.mxu0 0
    %3817 = vmatpush.bf16.msra.mxu0 0
    %3818 = vmatpush.bf16.msra.mxu0 0
    %3819 = vmatpush.bf16.msra.mxu0 0
    %3820 = vmatpush.bf16.msra.mxu0 0
    %3821 = vmatpush.bf16.msra.mxu0 %v3699
    %3822 = vmatmul.bf16.gmra.mxu0 %v3669
    %v3823 = vpop.f32.mrf.mxu0
    %v3824 = vadd.f32 0.0, %v3823
    %v3825 = vpop.f32.mrf.mxu0
    %v3826 = vadd.f32 0.0, %v3825
    %3827 = vmatmul.bf16.gmra.mxu0 %v3672
    %v3828 = vpop.f32.mrf.mxu0
    %v3829 = vadd.f32 0.0, %v3828
    %v3830 = vpop.f32.mrf.mxu0
    %v3831 = vadd.f32 0.0, %v3830
    %3832 = vmatmul.bf16.gmra.mxu0 %v3675
    %v3833 = vpop.f32.mrf.mxu0
    %v3834 = vadd.f32 0.0, %v3833
    %v3835 = vpop.f32.mrf.mxu0
    %v3836 = vadd.f32 0.0, %v3835
    %3837 = vmatmul.bf16.gmra.mxu0 %v3678
    %v3838 = vpop.f32.mrf.mxu0
    %v3839 = vadd.f32 0.0, %v3838
    %v3840 = vpop.f32.mrf.mxu0
    %v3841 = vadd.f32 0.0, %v3840
    %3842 = vmatmul.bf16.gmra.mxu0 %v3681
    %v3843 = vpop.f32.mrf.mxu0
    %v3844 = vadd.f32 0.0, %v3843
    %v3845 = vpop.f32.mrf.mxu0
    %v3846 = vadd.f32 0.0, %v3845
    %3847 = vmatmul.bf16.gmra.mxu0 %v3684
    %v3848 = vpop.f32.mrf.mxu0
    %v3849 = vadd.f32 0.0, %v3848
    %v3850 = vpop.f32.mrf.mxu0
    %v3851 = vadd.f32 0.0, %v3850
    %3852 = vmatmul.bf16.gmra.mxu0 %v3687
    %v3853 = vpop.f32.mrf.mxu0
    %v3854 = vadd.f32 0.0, %v3853
    %v3855 = vpop.f32.mrf.mxu0
    %v3856 = vadd.f32 0.0, %v3855
    %3857 = vmatmul.bf16.gmra.mxu0 %v3690
    %v3858 = vpop.f32.mrf.mxu0
    %v3859 = vadd.f32 0.0, %v3858
    %v3860 = vpop.f32.mrf.mxu0
    %v3861 = vadd.f32 0.0, %v3860
    %3862 = vdwg.mxu0
    %3863 = vmatpush.bf16.msra.mxu0 0
    %3864 = vmatpush.bf16.msra.mxu0 0
    %3865 = vmatpush.bf16.msra.mxu0 0
    %3866 = vmatpush.bf16.msra.mxu0 0
    %3867 = vmatpush.bf16.msra.mxu0 0
    %3868 = vmatpush.bf16.msra.mxu0 0
    %3869 = vmatpush.bf16.msra.mxu0 0
    %3870 = vmatpush.bf16.msra.mxu0 %v3702
    %3871 = vmatmul.bf16.gmra.mxu0 %v3669
    %v3872 = vpop.f32.mrf.mxu0
    %v3873 = vadd.f32 0.0, %v3872
    %v3874 = vpop.f32.mrf.mxu0
    %v3875 = vadd.f32 0.0, %v3874
    %3876 = vmatmul.bf16.gmra.mxu0 %v3672
    %v3877 = vpop.f32.mrf.mxu0
    %v3878 = vadd.f32 0.0, %v3877
    %v3879 = vpop.f32.mrf.mxu0
    %v3880 = vadd.f32 0.0, %v3879
    %3881 = vmatmul.bf16.gmra.mxu0 %v3675
    %v3882 = vpop.f32.mrf.mxu0
    %v3883 = vadd.f32 0.0, %v3882
    %v3884 = vpop.f32.mrf.mxu0
    %v3885 = vadd.f32 0.0, %v3884
    %3886 = vmatmul.bf16.gmra.mxu0 %v3678
    %v3887 = vpop.f32.mrf.mxu0
    %v3888 = vadd.f32 0.0, %v3887
    %v3889 = vpop.f32.mrf.mxu0
    %v3890 = vadd.f32 0.0, %v3889
    %3891 = vmatmul.bf16.gmra.mxu0 %v3681
    %v3892 = vpop.f32.mrf.mxu0
    %v3893 = vadd.f32 0.0, %v3892
    %v3894 = vpop.f32.mrf.mxu0
    %v3895 = vadd.f32 0.0, %v3894
    %3896 = vmatmul.bf16.gmra.mxu0 %v3684
    %v3897 = vpop.f32.mrf.mxu0
    %v3898 = vadd.f32 0.0, %v3897
    %v3899 = vpop.f32.mrf.mxu0
    %v3900 = vadd.f32 0.0, %v3899
    %3901 = vmatmul.bf16.gmra.mxu0 %v3687
    %v3902 = vpop.f32.mrf.mxu0
    %v3903 = vadd.f32 0.0, %v3902
    %v3904 = vpop.f32.mrf.mxu0
    %v3905 = vadd.f32 0.0, %v3904
    %3906 = vmatmul.bf16.gmra.mxu0 %v3690
    %v3907 = vpop.f32.mrf.mxu0
    %v3908 = vadd.f32 0.0, %v3907
    %v3909 = vpop.f32.mrf.mxu0
    %v3910 = vadd.f32 0.0, %v3909
    %3911 = vdwg.mxu0
    %3912 = vmatpush.bf16.msra.mxu0 0
    %3913 = vmatpush.bf16.msra.mxu0 0
    %3914 = vmatpush.bf16.msra.mxu0 0
    %3915 = vmatpush.bf16.msra.mxu0 0
    %3916 = vmatpush.bf16.msra.mxu0 0
    %3917 = vmatpush.bf16.msra.mxu0 0
    %3918 = vmatpush.bf16.msra.mxu0 0
    %3919 = vmatpush.bf16.msra.mxu0 %v3705
    %3920 = vmatmul.bf16.gmra.mxu0 %v3669
    %v3921 = vpop.f32.mrf.mxu0
    %v3922 = vadd.f32 0.0, %v3921
    %v3923 = vpop.f32.mrf.mxu0
    %v3924 = vadd.f32 0.0, %v3923
    %3925 = vmatmul.bf16.gmra.mxu0 %v3672
    %v3926 = vpop.f32.mrf.mxu0
    %v3927 = vadd.f32 0.0, %v3926
    %v3928 = vpop.f32.mrf.mxu0
    %v3929 = vadd.f32 0.0, %v3928
    %3930 = vmatmul.bf16.gmra.mxu0 %v3675
    %v3931 = vpop.f32.mrf.mxu0
    %v3932 = vadd.f32 0.0, %v3931
    %v3933 = vpop.f32.mrf.mxu0
    %v3934 = vadd.f32 0.0, %v3933
    %3935 = vmatmul.bf16.gmra.mxu0 %v3678
    %v3936 = vpop.f32.mrf.mxu0
    %v3937 = vadd.f32 0.0, %v3936
    %v3938 = vpop.f32.mrf.mxu0
    %v3939 = vadd.f32 0.0, %v3938
    %3940 = vmatmul.bf16.gmra.mxu0 %v3681
    %v3941 = vpop.f32.mrf.mxu0
    %v3942 = vadd.f32 0.0, %v3941
    %v3943 = vpop.f32.mrf.mxu0
    %v3944 = vadd.f32 0.0, %v3943
    %3945 = vmatmul.bf16.gmra.mxu0 %v3684
    %v3946 = vpop.f32.mrf.mxu0
    %v3947 = vadd.f32 0.0, %v3946
    %v3948 = vpop.f32.mrf.mxu0
    %v3949 = vadd.f32 0.0, %v3948
    %3950 = vmatmul.bf16.gmra.mxu0 %v3687
    %v3951 = vpop.f32.mrf.mxu0
    %v3952 = vadd.f32 0.0, %v3951
    %v3953 = vpop.f32.mrf.mxu0
    %v3954 = vadd.f32 0.0, %v3953
    %3955 = vmatmul.bf16.gmra.mxu0 %v3690
    %v3956 = vpop.f32.mrf.mxu0
    %v3957 = vadd.f32 0.0, %v3956
    %v3958 = vpop.f32.mrf.mxu0
    %v3959 = vadd.f32 0.0, %v3958
    %3960 = vdwg.mxu0
    %3961 = vmatpush.bf16.msra.mxu0 0
    %3962 = vmatpush.bf16.msra.mxu0 0
    %3963 = vmatpush.bf16.msra.mxu0 0
    %3964 = vmatpush.bf16.msra.mxu0 0
    %3965 = vmatpush.bf16.msra.mxu0 0
    %3966 = vmatpush.bf16.msra.mxu0 0
    %3967 = vmatpush.bf16.msra.mxu0 0
    %3968 = vmatpush.bf16.msra.mxu0 %v3708
    %3969 = vmatmul.bf16.gmra.mxu0 %v3669
    %v3970 = vpop.f32.mrf.mxu0
    %v3971 = vadd.f32 0.0, %v3970
    %v3972 = vpop.f32.mrf.mxu0
    %v3973 = vadd.f32 0.0, %v3972
    %3974 = vmatmul.bf16.gmra.mxu0 %v3672
    %v3975 = vpop.f32.mrf.mxu0
    %v3976 = vadd.f32 0.0, %v3975
    %v3977 = vpop.f32.mrf.mxu0
    %v3978 = vadd.f32 0.0, %v3977
    %3979 = vmatmul.bf16.gmra.mxu0 %v3675
    %v3980 = vpop.f32.mrf.mxu0
    %v3981 = vadd.f32 0.0, %v3980
    %v3982 = vpop.f32.mrf.mxu0
    %v3983 = vadd.f32 0.0, %v3982
    %3984 = vmatmul.bf16.gmra.mxu0 %v3678
    %v3985 = vpop.f32.mrf.mxu0
    %v3986 = vadd.f32 0.0, %v3985
    %v3987 = vpop.f32.mrf.mxu0
    %v3988 = vadd.f32 0.0, %v3987
    %3989 = vmatmul.bf16.gmra.mxu0 %v3681
    %v3990 = vpop.f32.mrf.mxu0
    %v3991 = vadd.f32 0.0, %v3990
    %v3992 = vpop.f32.mrf.mxu0
    %v3993 = vadd.f32 0.0, %v3992
    %3994 = vmatmul.bf16.gmra.mxu0 %v3684
    %v3995 = vpop.f32.mrf.mxu0
    %v3996 = vadd.f32 0.0, %v3995
    %v3997 = vpop.f32.mrf.mxu0
    %v3998 = vadd.f32 0.0, %v3997
    %3999 = vmatmul.bf16.gmra.mxu0 %v3687
    %v4000 = vpop.f32.mrf.mxu0
    %v4001 = vadd.f32 0.0, %v4000
    %v4002 = vpop.f32.mrf.mxu0
    %v4003 = vadd.f32 0.0, %v4002
    %4004 = vmatmul.bf16.gmra.mxu0 %v3690
    %v4005 = vpop.f32.mrf.mxu0
    %v4006 = vadd.f32 0.0, %v4005
    %v4007 = vpop.f32.mrf.mxu0
    %v4008 = vadd.f32 0.0, %v4007
    %4009 = vdwg.mxu0
    %4010 = vmatpush.bf16.msra.mxu0 0
    %4011 = vmatpush.bf16.msra.mxu0 0
    %4012 = vmatpush.bf16.msra.mxu0 0
    %4013 = vmatpush.bf16.msra.mxu0 0
    %4014 = vmatpush.bf16.msra.mxu0 0
    %4015 = vmatpush.bf16.msra.mxu0 0
    %4016 = vmatpush.bf16.msra.mxu0 0
    %4017 = vmatpush.bf16.msra.mxu0 %v3711
    %4018 = vmatmul.bf16.gmra.mxu0 %v3669
    %v4019 = vpop.f32.mrf.mxu0
    %v4020 = vadd.f32 0.0, %v4019
    %v4021 = vpop.f32.mrf.mxu0
    %v4022 = vadd.f32 0.0, %v4021
    %4023 = vmatmul.bf16.gmra.mxu0 %v3672
    %v4024 = vpop.f32.mrf.mxu0
    %v4025 = vadd.f32 0.0, %v4024
    %v4026 = vpop.f32.mrf.mxu0
    %v4027 = vadd.f32 0.0, %v4026
    %4028 = vmatmul.bf16.gmra.mxu0 %v3675
    %v4029 = vpop.f32.mrf.mxu0
    %v4030 = vadd.f32 0.0, %v4029
    %v4031 = vpop.f32.mrf.mxu0
    %v4032 = vadd.f32 0.0, %v4031
    %4033 = vmatmul.bf16.gmra.mxu0 %v3678
    %v4034 = vpop.f32.mrf.mxu0
    %v4035 = vadd.f32 0.0, %v4034
    %v4036 = vpop.f32.mrf.mxu0
    %v4037 = vadd.f32 0.0, %v4036
    %4038 = vmatmul.bf16.gmra.mxu0 %v3681
    %v4039 = vpop.f32.mrf.mxu0
    %v4040 = vadd.f32 0.0, %v4039
    %v4041 = vpop.f32.mrf.mxu0
    %v4042 = vadd.f32 0.0, %v4041
    %4043 = vmatmul.bf16.gmra.mxu0 %v3684
    %v4044 = vpop.f32.mrf.mxu0
    %v4045 = vadd.f32 0.0, %v4044
    %v4046 = vpop.f32.mrf.mxu0
    %v4047 = vadd.f32 0.0, %v4046
    %4048 = vmatmul.bf16.gmra.mxu0 %v3687
    %v4049 = vpop.f32.mrf.mxu0
    %v4050 = vadd.f32 0.0, %v4049
    %v4051 = vpop.f32.mrf.mxu0
    %v4052 = vadd.f32 0.0, %v4051
    %4053 = vmatmul.bf16.gmra.mxu0 %v3690
    %v4054 = vpop.f32.mrf.mxu0
    %v4055 = vadd.f32 0.0, %v4054
    %v4056 = vpop.f32.mrf.mxu0
    %v4057 = vadd.f32 0.0, %v4056
    %4058 = vdwg.mxu0
    %4059 = vmatpush.bf16.msra.mxu0 0
    %4060 = vmatpush.bf16.msra.mxu0 0
    %4061 = vmatpush.bf16.msra.mxu0 0
    %4062 = vmatpush.bf16.msra.mxu0 0
    %4063 = vmatpush.bf16.msra.mxu0 0
    %4064 = vmatpush.bf16.msra.mxu0 0
    %4065 = vmatpush.bf16.msra.mxu0 0
    %4066 = vmatpush.bf16.msra.mxu0 %v3714
    %4067 = vmatmul.bf16.gmra.mxu0 %v3669
    %v4068 = vpop.f32.mrf.mxu0
    %v4069 = vadd.f32 0.0, %v4068
    %v4070 = vpop.f32.mrf.mxu0
    %v4071 = vadd.f32 0.0, %v4070
    %4072 = vmatmul.bf16.gmra.mxu0 %v3672
    %v4073 = vpop.f32.mrf.mxu0
    %v4074 = vadd.f32 0.0, %v4073
    %v4075 = vpop.f32.mrf.mxu0
    %v4076 = vadd.f32 0.0, %v4075
    %4077 = vmatmul.bf16.gmra.mxu0 %v3675
    %v4078 = vpop.f32.mrf.mxu0
    %v4079 = vadd.f32 0.0, %v4078
    %v4080 = vpop.f32.mrf.mxu0
    %v4081 = vadd.f32 0.0, %v4080
    %4082 = vmatmul.bf16.gmra.mxu0 %v3678
    %v4083 = vpop.f32.mrf.mxu0
    %v4084 = vadd.f32 0.0, %v4083
    %v4085 = vpop.f32.mrf.mxu0
    %v4086 = vadd.f32 0.0, %v4085
    %4087 = vmatmul.bf16.gmra.mxu0 %v3681
    %v4088 = vpop.f32.mrf.mxu0
    %v4089 = vadd.f32 0.0, %v4088
    %v4090 = vpop.f32.mrf.mxu0
    %v4091 = vadd.f32 0.0, %v4090
    %4092 = vmatmul.bf16.gmra.mxu0 %v3684
    %v4093 = vpop.f32.mrf.mxu0
    %v4094 = vadd.f32 0.0, %v4093
    %v4095 = vpop.f32.mrf.mxu0
    %v4096 = vadd.f32 0.0, %v4095
    %4097 = vmatmul.bf16.gmra.mxu0 %v3687
    %v4098 = vpop.f32.mrf.mxu0
    %v4099 = vadd.f32 0.0, %v4098
    %v4100 = vpop.f32.mrf.mxu0
    %v4101 = vadd.f32 0.0, %v4100
    %4102 = vmatmul.bf16.gmra.mxu0 %v3690
    %v4103 = vpop.f32.mrf.mxu0
    %v4104 = vadd.f32 0.0, %v4103
    %v4105 = vpop.f32.mrf.mxu0
    %v4106 = vadd.f32 0.0, %v4105
    %4107 = vdwg.mxu0
    %v4108 = vadd.f32 %v3194, %v3726
    %v4109 = vadd.f32 %v3243, %v3775
    %v4110 = vadd.f32 %v3292, %v3824
    %v4111 = vadd.f32 %v3341, %v3873
    %v4112 = vadd.f32 %v3390, %v3922
    %v4113 = vadd.f32 %v3439, %v3971
    %v4114 = vadd.f32 %v3488, %v4020
    %v4115 = vadd.f32 %v3537, %v4069
    %v4116 = vadd.f32 %v3196, %v3728
    %v4117 = vadd.f32 %v3245, %v3777
    %v4118 = vadd.f32 %v3294, %v3826
    %v4119 = vadd.f32 %v3343, %v3875
    %v4120 = vadd.f32 %v3392, %v3924
    %v4121 = vadd.f32 %v3441, %v3973
    %v4122 = vadd.f32 %v3490, %v4022
    %v4123 = vadd.f32 %v3539, %v4071
    %v4124 = vadd.f32 %v3199, %v3731
    %v4125 = vadd.f32 %v3248, %v3780
    %v4126 = vadd.f32 %v3297, %v3829
    %v4127 = vadd.f32 %v3346, %v3878
    %v4128 = vadd.f32 %v3395, %v3927
    %v4129 = vadd.f32 %v3444, %v3976
    %v4130 = vadd.f32 %v3493, %v4025
    %v4131 = vadd.f32 %v3542, %v4074
    %v4132 = vadd.f32 %v3201, %v3733
    %v4133 = vadd.f32 %v3250, %v3782
    %v4134 = vadd.f32 %v3299, %v3831
    %v4135 = vadd.f32 %v3348, %v3880
    %v4136 = vadd.f32 %v3397, %v3929
    %v4137 = vadd.f32 %v3446, %v3978
    %v4138 = vadd.f32 %v3495, %v4027
    %v4139 = vadd.f32 %v3544, %v4076
    %v4140 = vadd.f32 %v3204, %v3736
    %v4141 = vadd.f32 %v3253, %v3785
    %v4142 = vadd.f32 %v3302, %v3834
    %v4143 = vadd.f32 %v3351, %v3883
    %v4144 = vadd.f32 %v3400, %v3932
    %v4145 = vadd.f32 %v3449, %v3981
    %v4146 = vadd.f32 %v3498, %v4030
    %v4147 = vadd.f32 %v3547, %v4079
    %v4148 = vadd.f32 %v3206, %v3738
    %v4149 = vadd.f32 %v3255, %v3787
    %v4150 = vadd.f32 %v3304, %v3836
    %v4151 = vadd.f32 %v3353, %v3885
    %v4152 = vadd.f32 %v3402, %v3934
    %v4153 = vadd.f32 %v3451, %v3983
    %v4154 = vadd.f32 %v3500, %v4032
    %v4155 = vadd.f32 %v3549, %v4081
    %v4156 = vadd.f32 %v3209, %v3741
    %v4157 = vadd.f32 %v3258, %v3790
    %v4158 = vadd.f32 %v3307, %v3839
    %v4159 = vadd.f32 %v3356, %v3888
    %v4160 = vadd.f32 %v3405, %v3937
    %v4161 = vadd.f32 %v3454, %v3986
    %v4162 = vadd.f32 %v3503, %v4035
    %v4163 = vadd.f32 %v3552, %v4084
    %v4164 = vadd.f32 %v3211, %v3743
    %v4165 = vadd.f32 %v3260, %v3792
    %v4166 = vadd.f32 %v3309, %v3841
    %v4167 = vadd.f32 %v3358, %v3890
    %v4168 = vadd.f32 %v3407, %v3939
    %v4169 = vadd.f32 %v3456, %v3988
    %v4170 = vadd.f32 %v3505, %v4037
    %v4171 = vadd.f32 %v3554, %v4086
    %v4172 = vadd.f32 %v3214, %v3746
    %v4173 = vadd.f32 %v3263, %v3795
    %v4174 = vadd.f32 %v3312, %v3844
    %v4175 = vadd.f32 %v3361, %v3893
    %v4176 = vadd.f32 %v3410, %v3942
    %v4177 = vadd.f32 %v3459, %v3991
    %v4178 = vadd.f32 %v3508, %v4040
    %v4179 = vadd.f32 %v3557, %v4089
    %v4180 = vadd.f32 %v3216, %v3748
    %v4181 = vadd.f32 %v3265, %v3797
    %v4182 = vadd.f32 %v3314, %v3846
    %v4183 = vadd.f32 %v3363, %v3895
    %v4184 = vadd.f32 %v3412, %v3944
    %v4185 = vadd.f32 %v3461, %v3993
    %v4186 = vadd.f32 %v3510, %v4042
    %v4187 = vadd.f32 %v3559, %v4091
    %v4188 = vadd.f32 %v3219, %v3751
    %v4189 = vadd.f32 %v3268, %v3800
    %v4190 = vadd.f32 %v3317, %v3849
    %v4191 = vadd.f32 %v3366, %v3898
    %v4192 = vadd.f32 %v3415, %v3947
    %v4193 = vadd.f32 %v3464, %v3996
    %v4194 = vadd.f32 %v3513, %v4045
    %v4195 = vadd.f32 %v3562, %v4094
    %v4196 = vadd.f32 %v3221, %v3753
    %v4197 = vadd.f32 %v3270, %v3802
    %v4198 = vadd.f32 %v3319, %v3851
    %v4199 = vadd.f32 %v3368, %v3900
    %v4200 = vadd.f32 %v3417, %v3949
    %v4201 = vadd.f32 %v3466, %v3998
    %v4202 = vadd.f32 %v3515, %v4047
    %v4203 = vadd.f32 %v3564, %v4096
    %v4204 = vadd.f32 %v3224, %v3756
    %v4205 = vadd.f32 %v3273, %v3805
    %v4206 = vadd.f32 %v3322, %v3854
    %v4207 = vadd.f32 %v3371, %v3903
    %v4208 = vadd.f32 %v3420, %v3952
    %v4209 = vadd.f32 %v3469, %v4001
    %v4210 = vadd.f32 %v3518, %v4050
    %v4211 = vadd.f32 %v3567, %v4099
    %v4212 = vadd.f32 %v3226, %v3758
    %v4213 = vadd.f32 %v3275, %v3807
    %v4214 = vadd.f32 %v3324, %v3856
    %v4215 = vadd.f32 %v3373, %v3905
    %v4216 = vadd.f32 %v3422, %v3954
    %v4217 = vadd.f32 %v3471, %v4003
    %v4218 = vadd.f32 %v3520, %v4052
    %v4219 = vadd.f32 %v3569, %v4101
    %v4220 = vadd.f32 %v3229, %v3761
    %v4221 = vadd.f32 %v3278, %v3810
    %v4222 = vadd.f32 %v3327, %v3859
    %v4223 = vadd.f32 %v3376, %v3908
    %v4224 = vadd.f32 %v3425, %v3957
    %v4225 = vadd.f32 %v3474, %v4006
    %v4226 = vadd.f32 %v3523, %v4055
    %v4227 = vadd.f32 %v3572, %v4104
    %v4228 = vadd.f32 %v3231, %v3763
    %v4229 = vadd.f32 %v3280, %v3812
    %v4230 = vadd.f32 %v3329, %v3861
    %v4231 = vadd.f32 %v3378, %v3910
    %v4232 = vadd.f32 %v3427, %v3959
    %v4233 = vadd.f32 %v3476, %v4008
    %v4234 = vadd.f32 %v3525, %v4057
    %v4235 = vadd.f32 %v3574, %v4106
    %s4236 = scalar_lea.vmem %s1, 192
    %v4237 = vld [vmem:[%s4236] sm:$0xf]
    %v4238 = vld [vmem:[%s4236 + $0x4] sm:$0xf]
    %v4239 = vld [vmem:[%s4236 + $0x8] sm:$0xf]
    %v4240 = vld [vmem:[%s4236 + $0xc] sm:$0xf]
    %v4241 = vld [vmem:[%s4236 + $0x10] sm:$0xf]
    %v4242 = vld [vmem:[%s4236 + $0x14] sm:$0xf]
    %v4243 = vld [vmem:[%s4236 + $0x18] sm:$0xf]
    %v4244 = vld [vmem:[%s4236 + $0x1c] sm:$0xf]
    %v4245 = vld [vmem:[%s4236 + $0x20] sm:$0xf]
    %v4246 = vld [vmem:[%s4236 + $0x24] sm:$0xf]
    %v4247 = vld [vmem:[%s4236 + $0x28] sm:$0xf]
    %v4248 = vld [vmem:[%s4236 + $0x2c] sm:$0xf]
    %v4249 = vld [vmem:[%s4236 + $0x30] sm:$0xf]
    %v4250 = vld [vmem:[%s4236 + $0x34] sm:$0xf]
    %v4251 = vld [vmem:[%s4236 + $0x38] sm:$0xf]
    %v4252 = vld [vmem:[%s4236 + $0x3c] sm:$0xf]
    %4257 = vst [vmem:[#allocation1] ss:$2 sm:$0xff] %v1426
    %s4258 = scalar_lea.vmem [#allocation1], 16
    %4259 = vst [vmem:[%s4258] ss:$2 sm:$0xff] %v1581
    %s4260 = scalar_lea.vmem [#allocation1], 32
    %4261 = vst [vmem:[%s4260] ss:$2 sm:$0xff] %v1736
    %s4262 = scalar_lea.vmem [#allocation1], 48
    %4263 = vst [vmem:[%s4262] ss:$2 sm:$0xff] %v1891
    %v4264 = vld.sshfl [vmem:[#allocation1] sm:$0xff pattern:$0x75316420]
    %v4265 = vld.sshfl [vmem:[#allocation1 + $0x8] sm:$0xff pattern:$0x75316420]
    %v4266 = vld.sshfl [vmem:[#allocation1 + $0x10] sm:$0xff pattern:$0x75316420]
    %v4267 = vld.sshfl [vmem:[#allocation1 + $0x18] sm:$0xff pattern:$0x75316420]
    %v4268 = vld.sshfl [vmem:[#allocation1 + $0x20] sm:$0xff pattern:$0x75316420]
    %v4269 = vld.sshfl [vmem:[#allocation1 + $0x28] sm:$0xff pattern:$0x75316420]
    %v4270 = vld.sshfl [vmem:[#allocation1 + $0x30] sm:$0xff pattern:$0x75316420]
    %v4271 = vld.sshfl [vmem:[#allocation1 + $0x38] sm:$0xff pattern:$0x75316420]
    %v4280 = vpack.c.bf16 %v4264, %v4264
    %v4281 = vpack.c.bf16 %v4265, %v4265
    %v4282 = vpack.c.bf16 %v4266, %v4266
    %v4283 = vpack.c.bf16 %v4267, %v4267
    %v4284 = vpack.c.bf16 %v4268, %v4268
    %v4285 = vpack.c.bf16 %v4269, %v4269
    %v4286 = vpack.c.bf16 %v4270, %v4270
    %v4287 = vpack.c.bf16 %v4271, %v4271
    %v4304 = vunpack.c.l.b16 %v4237
    %v4305 = vunpack.c.l.b16 %v4238
    %v4306 = vunpack.c.l.b16 %v4239
    %v4307 = vunpack.c.l.b16 %v4240
    %v4308 = vunpack.c.l.b16 %v4241
    %v4309 = vunpack.c.l.b16 %v4242
    %v4310 = vunpack.c.l.b16 %v4243
    %v4311 = vunpack.c.l.b16 %v4244
    %v4312 = vunpack.c.l.b16 %v4245
    %v4313 = vunpack.c.l.b16 %v4246
    %v4314 = vunpack.c.l.b16 %v4247
    %v4315 = vunpack.c.l.b16 %v4248
    %v4316 = vunpack.c.l.b16 %v4249
    %v4317 = vunpack.c.l.b16 %v4250
    %v4318 = vunpack.c.l.b16 %v4251
    %v4319 = vunpack.c.l.b16 %v4252
    %v4320 = vpack.c.b16 %v4305, %v4304
    %v4321 = vpack.c.b16 %v4307, %v4306
    %v4322 = vpack.c.b16 %v4309, %v4308
    %v4323 = vpack.c.b16 %v4311, %v4310
    %v4324 = vpack.c.b16 %v4313, %v4312
    %v4325 = vpack.c.b16 %v4315, %v4314
    %v4326 = vpack.c.b16 %v4317, %v4316
    %v4327 = vpack.c.b16 %v4319, %v4318
    %v4329 = vsel %vm2651, %v4320, 0
    %v4332 = vsel %vm2651, %v4321, 0
    %v4335 = vsel %vm2651, %v4322, 0
    %v4338 = vsel %vm2651, %v4323, 0
    %v4341 = vsel %vm2651, %v4324, 0
    %v4344 = vsel %vm2651, %v4325, 0
    %v4347 = vsel %vm2651, %v4326, 0
    %v4350 = vsel %vm2651, %v4327, 0
    %v4353 = vand.u32 %v4280, %v2679
    %v4356 = vand.u32 %v4281, %v2679
    %v4359 = vand.u32 %v4282, %v2679
    %v4362 = vand.u32 %v4283, %v2679
    %v4365 = vand.u32 %v4284, %v2679
    %v4368 = vand.u32 %v4285, %v2679
    %v4371 = vand.u32 %v4286, %v2679
    %v4374 = vand.u32 %v4287, %v2679
    %4376 = vmatpush.bf16.msra.mxu0 0
    %4377 = vmatpush.bf16.msra.mxu0 0
    %4378 = vmatpush.bf16.msra.mxu0 0
    %4379 = vmatpush.bf16.msra.mxu0 0
    %4380 = vmatpush.bf16.msra.mxu0 0
    %4381 = vmatpush.bf16.msra.mxu0 0
    %4382 = vmatpush.bf16.msra.mxu0 0
    %4383 = vmatpush.bf16.msra.mxu0 %v4353
    %4384 = vmatmul.bf16.gmra.mxu0 %v4329
    %v4385 = vpop.f32.mrf.mxu0
    %v4386 = vadd.f32 0.0, %v4385
    %v4387 = vpop.f32.mrf.mxu0
    %v4388 = vadd.f32 0.0, %v4387
    %4389 = vmatmul.bf16.gmra.mxu0 %v4332
    %v4390 = vpop.f32.mrf.mxu0
    %v4391 = vadd.f32 0.0, %v4390
    %v4392 = vpop.f32.mrf.mxu0
    %v4393 = vadd.f32 0.0, %v4392
    %4394 = vmatmul.bf16.gmra.mxu0 %v4335
    %v4395 = vpop.f32.mrf.mxu0
    %v4396 = vadd.f32 0.0, %v4395
    %v4397 = vpop.f32.mrf.mxu0
    %v4398 = vadd.f32 0.0, %v4397
    %4399 = vmatmul.bf16.gmra.mxu0 %v4338
    %v4400 = vpop.f32.mrf.mxu0
    %v4401 = vadd.f32 0.0, %v4400
    %v4402 = vpop.f32.mrf.mxu0
    %v4403 = vadd.f32 0.0, %v4402
    %4404 = vmatmul.bf16.gmra.mxu0 %v4341
    %v4405 = vpop.f32.mrf.mxu0
    %v4406 = vadd.f32 0.0, %v4405
    %v4407 = vpop.f32.mrf.mxu0
    %v4408 = vadd.f32 0.0, %v4407
    %4409 = vmatmul.bf16.gmra.mxu0 %v4344
    %v4410 = vpop.f32.mrf.mxu0
    %v4411 = vadd.f32 0.0, %v4410
    %v4412 = vpop.f32.mrf.mxu0
    %v4413 = vadd.f32 0.0, %v4412
    %4414 = vmatmul.bf16.gmra.mxu0 %v4347
    %v4415 = vpop.f32.mrf.mxu0
    %v4416 = vadd.f32 0.0, %v4415
    %v4417 = vpop.f32.mrf.mxu0
    %v4418 = vadd.f32 0.0, %v4417
    %4419 = vmatmul.bf16.gmra.mxu0 %v4350
    %v4420 = vpop.f32.mrf.mxu0
    %v4421 = vadd.f32 0.0, %v4420
    %v4422 = vpop.f32.mrf.mxu0
    %v4423 = vadd.f32 0.0, %v4422
    %4424 = vdwg.mxu0
    %4425 = vmatpush.bf16.msra.mxu0 0
    %4426 = vmatpush.bf16.msra.mxu0 0
    %4427 = vmatpush.bf16.msra.mxu0 0
    %4428 = vmatpush.bf16.msra.mxu0 0
    %4429 = vmatpush.bf16.msra.mxu0 0
    %4430 = vmatpush.bf16.msra.mxu0 0
    %4431 = vmatpush.bf16.msra.mxu0 0
    %4432 = vmatpush.bf16.msra.mxu0 %v4356
    %4433 = vmatmul.bf16.gmra.mxu0 %v4329
    %v4434 = vpop.f32.mrf.mxu0
    %v4435 = vadd.f32 0.0, %v4434
    %v4436 = vpop.f32.mrf.mxu0
    %v4437 = vadd.f32 0.0, %v4436
    %4438 = vmatmul.bf16.gmra.mxu0 %v4332
    %v4439 = vpop.f32.mrf.mxu0
    %v4440 = vadd.f32 0.0, %v4439
    %v4441 = vpop.f32.mrf.mxu0
    %v4442 = vadd.f32 0.0, %v4441
    %4443 = vmatmul.bf16.gmra.mxu0 %v4335
    %v4444 = vpop.f32.mrf.mxu0
    %v4445 = vadd.f32 0.0, %v4444
    %v4446 = vpop.f32.mrf.mxu0
    %v4447 = vadd.f32 0.0, %v4446
    %4448 = vmatmul.bf16.gmra.mxu0 %v4338
    %v4449 = vpop.f32.mrf.mxu0
    %v4450 = vadd.f32 0.0, %v4449
    %v4451 = vpop.f32.mrf.mxu0
    %v4452 = vadd.f32 0.0, %v4451
    %4453 = vmatmul.bf16.gmra.mxu0 %v4341
    %v4454 = vpop.f32.mrf.mxu0
    %v4455 = vadd.f32 0.0, %v4454
    %v4456 = vpop.f32.mrf.mxu0
    %v4457 = vadd.f32 0.0, %v4456
    %4458 = vmatmul.bf16.gmra.mxu0 %v4344
    %v4459 = vpop.f32.mrf.mxu0
    %v4460 = vadd.f32 0.0, %v4459
    %v4461 = vpop.f32.mrf.mxu0
    %v4462 = vadd.f32 0.0, %v4461
    %4463 = vmatmul.bf16.gmra.mxu0 %v4347
    %v4464 = vpop.f32.mrf.mxu0
    %v4465 = vadd.f32 0.0, %v4464
    %v4466 = vpop.f32.mrf.mxu0
    %v4467 = vadd.f32 0.0, %v4466
    %4468 = vmatmul.bf16.gmra.mxu0 %v4350
    %v4469 = vpop.f32.mrf.mxu0
    %v4470 = vadd.f32 0.0, %v4469
    %v4471 = vpop.f32.mrf.mxu0
    %v4472 = vadd.f32 0.0, %v4471
    %4473 = vdwg.mxu0
    %4474 = vmatpush.bf16.msra.mxu0 0
    %4475 = vmatpush.bf16.msra.mxu0 0
    %4476 = vmatpush.bf16.msra.mxu0 0
    %4477 = vmatpush.bf16.msra.mxu0 0
    %4478 = vmatpush.bf16.msra.mxu0 0
    %4479 = vmatpush.bf16.msra.mxu0 0
    %4480 = vmatpush.bf16.msra.mxu0 0
    %4481 = vmatpush.bf16.msra.mxu0 %v4359
    %4482 = vmatmul.bf16.gmra.mxu0 %v4329
    %v4483 = vpop.f32.mrf.mxu0
    %v4484 = vadd.f32 0.0, %v4483
    %v4485 = vpop.f32.mrf.mxu0
    %v4486 = vadd.f32 0.0, %v4485
    %4487 = vmatmul.bf16.gmra.mxu0 %v4332
    %v4488 = vpop.f32.mrf.mxu0
    %v4489 = vadd.f32 0.0, %v4488
    %v4490 = vpop.f32.mrf.mxu0
    %v4491 = vadd.f32 0.0, %v4490
    %4492 = vmatmul.bf16.gmra.mxu0 %v4335
    %v4493 = vpop.f32.mrf.mxu0
    %v4494 = vadd.f32 0.0, %v4493
    %v4495 = vpop.f32.mrf.mxu0
    %v4496 = vadd.f32 0.0, %v4495
    %4497 = vmatmul.bf16.gmra.mxu0 %v4338
    %v4498 = vpop.f32.mrf.mxu0
    %v4499 = vadd.f32 0.0, %v4498
    %v4500 = vpop.f32.mrf.mxu0
    %v4501 = vadd.f32 0.0, %v4500
    %4502 = vmatmul.bf16.gmra.mxu0 %v4341
    %v4503 = vpop.f32.mrf.mxu0
    %v4504 = vadd.f32 0.0, %v4503
    %v4505 = vpop.f32.mrf.mxu0
    %v4506 = vadd.f32 0.0, %v4505
    %4507 = vmatmul.bf16.gmra.mxu0 %v4344
    %v4508 = vpop.f32.mrf.mxu0
    %v4509 = vadd.f32 0.0, %v4508
    %v4510 = vpop.f32.mrf.mxu0
    %v4511 = vadd.f32 0.0, %v4510
    %4512 = vmatmul.bf16.gmra.mxu0 %v4347
    %v4513 = vpop.f32.mrf.mxu0
    %v4514 = vadd.f32 0.0, %v4513
    %v4515 = vpop.f32.mrf.mxu0
    %v4516 = vadd.f32 0.0, %v4515
    %4517 = vmatmul.bf16.gmra.mxu0 %v4350
    %v4518 = vpop.f32.mrf.mxu0
    %v4519 = vadd.f32 0.0, %v4518
    %v4520 = vpop.f32.mrf.mxu0
    %v4521 = vadd.f32 0.0, %v4520
    %4522 = vdwg.mxu0
    %4523 = vmatpush.bf16.msra.mxu0 0
    %4524 = vmatpush.bf16.msra.mxu0 0
    %4525 = vmatpush.bf16.msra.mxu0 0
    %4526 = vmatpush.bf16.msra.mxu0 0
    %4527 = vmatpush.bf16.msra.mxu0 0
    %4528 = vmatpush.bf16.msra.mxu0 0
    %4529 = vmatpush.bf16.msra.mxu0 0
    %4530 = vmatpush.bf16.msra.mxu0 %v4362
    %4531 = vmatmul.bf16.gmra.mxu0 %v4329
    %v4532 = vpop.f32.mrf.mxu0
    %v4533 = vadd.f32 0.0, %v4532
    %v4534 = vpop.f32.mrf.mxu0
    %v4535 = vadd.f32 0.0, %v4534
    %4536 = vmatmul.bf16.gmra.mxu0 %v4332
    %v4537 = vpop.f32.mrf.mxu0
    %v4538 = vadd.f32 0.0, %v4537
    %v4539 = vpop.f32.mrf.mxu0
    %v4540 = vadd.f32 0.0, %v4539
    %4541 = vmatmul.bf16.gmra.mxu0 %v4335
    %v4542 = vpop.f32.mrf.mxu0
    %v4543 = vadd.f32 0.0, %v4542
    %v4544 = vpop.f32.mrf.mxu0
    %v4545 = vadd.f32 0.0, %v4544
    %4546 = vmatmul.bf16.gmra.mxu0 %v4338
    %v4547 = vpop.f32.mrf.mxu0
    %v4548 = vadd.f32 0.0, %v4547
    %v4549 = vpop.f32.mrf.mxu0
    %v4550 = vadd.f32 0.0, %v4549
    %4551 = vmatmul.bf16.gmra.mxu0 %v4341
    %v4552 = vpop.f32.mrf.mxu0
    %v4553 = vadd.f32 0.0, %v4552
    %v4554 = vpop.f32.mrf.mxu0
    %v4555 = vadd.f32 0.0, %v4554
    %4556 = vmatmul.bf16.gmra.mxu0 %v4344
    %v4557 = vpop.f32.mrf.mxu0
    %v4558 = vadd.f32 0.0, %v4557
    %v4559 = vpop.f32.mrf.mxu0
    %v4560 = vadd.f32 0.0, %v4559
    %4561 = vmatmul.bf16.gmra.mxu0 %v4347
    %v4562 = vpop.f32.mrf.mxu0
    %v4563 = vadd.f32 0.0, %v4562
    %v4564 = vpop.f32.mrf.mxu0
    %v4565 = vadd.f32 0.0, %v4564
    %4566 = vmatmul.bf16.gmra.mxu0 %v4350
    %v4567 = vpop.f32.mrf.mxu0
    %v4568 = vadd.f32 0.0, %v4567
    %v4569 = vpop.f32.mrf.mxu0
    %v4570 = vadd.f32 0.0, %v4569
    %4571 = vdwg.mxu0
    %4572 = vmatpush.bf16.msra.mxu0 0
    %4573 = vmatpush.bf16.msra.mxu0 0
    %4574 = vmatpush.bf16.msra.mxu0 0
    %4575 = vmatpush.bf16.msra.mxu0 0
    %4576 = vmatpush.bf16.msra.mxu0 0
    %4577 = vmatpush.bf16.msra.mxu0 0
    %4578 = vmatpush.bf16.msra.mxu0 0
    %4579 = vmatpush.bf16.msra.mxu0 %v4365
    %4580 = vmatmul.bf16.gmra.mxu0 %v4329
    %v4581 = vpop.f32.mrf.mxu0
    %v4582 = vadd.f32 0.0, %v4581
    %v4583 = vpop.f32.mrf.mxu0
    %v4584 = vadd.f32 0.0, %v4583
    %4585 = vmatmul.bf16.gmra.mxu0 %v4332
    %v4586 = vpop.f32.mrf.mxu0
    %v4587 = vadd.f32 0.0, %v4586
    %v4588 = vpop.f32.mrf.mxu0
    %v4589 = vadd.f32 0.0, %v4588
    %4590 = vmatmul.bf16.gmra.mxu0 %v4335
    %v4591 = vpop.f32.mrf.mxu0
    %v4592 = vadd.f32 0.0, %v4591
    %v4593 = vpop.f32.mrf.mxu0
    %v4594 = vadd.f32 0.0, %v4593
    %4595 = vmatmul.bf16.gmra.mxu0 %v4338
    %v4596 = vpop.f32.mrf.mxu0
    %v4597 = vadd.f32 0.0, %v4596
    %v4598 = vpop.f32.mrf.mxu0
    %v4599 = vadd.f32 0.0, %v4598
    %4600 = vmatmul.bf16.gmra.mxu0 %v4341
    %v4601 = vpop.f32.mrf.mxu0
    %v4602 = vadd.f32 0.0, %v4601
    %v4603 = vpop.f32.mrf.mxu0
    %v4604 = vadd.f32 0.0, %v4603
    %4605 = vmatmul.bf16.gmra.mxu0 %v4344
    %v4606 = vpop.f32.mrf.mxu0
    %v4607 = vadd.f32 0.0, %v4606
    %v4608 = vpop.f32.mrf.mxu0
    %v4609 = vadd.f32 0.0, %v4608
    %4610 = vmatmul.bf16.gmra.mxu0 %v4347
    %v4611 = vpop.f32.mrf.mxu0
    %v4612 = vadd.f32 0.0, %v4611
    %v4613 = vpop.f32.mrf.mxu0
    %v4614 = vadd.f32 0.0, %v4613
    %4615 = vmatmul.bf16.gmra.mxu0 %v4350
    %v4616 = vpop.f32.mrf.mxu0
    %v4617 = vadd.f32 0.0, %v4616
    %v4618 = vpop.f32.mrf.mxu0
    %v4619 = vadd.f32 0.0, %v4618
    %4620 = vdwg.mxu0
    %4621 = vmatpush.bf16.msra.mxu0 0
    %4622 = vmatpush.bf16.msra.mxu0 0
    %4623 = vmatpush.bf16.msra.mxu0 0
    %4624 = vmatpush.bf16.msra.mxu0 0
    %4625 = vmatpush.bf16.msra.mxu0 0
    %4626 = vmatpush.bf16.msra.mxu0 0
    %4627 = vmatpush.bf16.msra.mxu0 0
    %4628 = vmatpush.bf16.msra.mxu0 %v4368
    %4629 = vmatmul.bf16.gmra.mxu0 %v4329
    %v4630 = vpop.f32.mrf.mxu0
    %v4631 = vadd.f32 0.0, %v4630
    %v4632 = vpop.f32.mrf.mxu0
    %v4633 = vadd.f32 0.0, %v4632
    %4634 = vmatmul.bf16.gmra.mxu0 %v4332
    %v4635 = vpop.f32.mrf.mxu0
    %v4636 = vadd.f32 0.0, %v4635
    %v4637 = vpop.f32.mrf.mxu0
    %v4638 = vadd.f32 0.0, %v4637
    %4639 = vmatmul.bf16.gmra.mxu0 %v4335
    %v4640 = vpop.f32.mrf.mxu0
    %v4641 = vadd.f32 0.0, %v4640
    %v4642 = vpop.f32.mrf.mxu0
    %v4643 = vadd.f32 0.0, %v4642
    %4644 = vmatmul.bf16.gmra.mxu0 %v4338
    %v4645 = vpop.f32.mrf.mxu0
    %v4646 = vadd.f32 0.0, %v4645
    %v4647 = vpop.f32.mrf.mxu0
    %v4648 = vadd.f32 0.0, %v4647
    %4649 = vmatmul.bf16.gmra.mxu0 %v4341
    %v4650 = vpop.f32.mrf.mxu0
    %v4651 = vadd.f32 0.0, %v4650
    %v4652 = vpop.f32.mrf.mxu0
    %v4653 = vadd.f32 0.0, %v4652
    %4654 = vmatmul.bf16.gmra.mxu0 %v4344
    %v4655 = vpop.f32.mrf.mxu0
    %v4656 = vadd.f32 0.0, %v4655
    %v4657 = vpop.f32.mrf.mxu0
    %v4658 = vadd.f32 0.0, %v4657
    %4659 = vmatmul.bf16.gmra.mxu0 %v4347
    %v4660 = vpop.f32.mrf.mxu0
    %v4661 = vadd.f32 0.0, %v4660
    %v4662 = vpop.f32.mrf.mxu0
    %v4663 = vadd.f32 0.0, %v4662
    %4664 = vmatmul.bf16.gmra.mxu0 %v4350
    %v4665 = vpop.f32.mrf.mxu0
    %v4666 = vadd.f32 0.0, %v4665
    %v4667 = vpop.f32.mrf.mxu0
    %v4668 = vadd.f32 0.0, %v4667
    %4669 = vdwg.mxu0
    %4670 = vmatpush.bf16.msra.mxu0 0
    %4671 = vmatpush.bf16.msra.mxu0 0
    %4672 = vmatpush.bf16.msra.mxu0 0
    %4673 = vmatpush.bf16.msra.mxu0 0
    %4674 = vmatpush.bf16.msra.mxu0 0
    %4675 = vmatpush.bf16.msra.mxu0 0
    %4676 = vmatpush.bf16.msra.mxu0 0
    %4677 = vmatpush.bf16.msra.mxu0 %v4371
    %4678 = vmatmul.bf16.gmra.mxu0 %v4329
    %v4679 = vpop.f32.mrf.mxu0
    %v4680 = vadd.f32 0.0, %v4679
    %v4681 = vpop.f32.mrf.mxu0
    %v4682 = vadd.f32 0.0, %v4681
    %4683 = vmatmul.bf16.gmra.mxu0 %v4332
    %v4684 = vpop.f32.mrf.mxu0
    %v4685 = vadd.f32 0.0, %v4684
    %v4686 = vpop.f32.mrf.mxu0
    %v4687 = vadd.f32 0.0, %v4686
    %4688 = vmatmul.bf16.gmra.mxu0 %v4335
    %v4689 = vpop.f32.mrf.mxu0
    %v4690 = vadd.f32 0.0, %v4689
    %v4691 = vpop.f32.mrf.mxu0
    %v4692 = vadd.f32 0.0, %v4691
    %4693 = vmatmul.bf16.gmra.mxu0 %v4338
    %v4694 = vpop.f32.mrf.mxu0
    %v4695 = vadd.f32 0.0, %v4694
    %v4696 = vpop.f32.mrf.mxu0
    %v4697 = vadd.f32 0.0, %v4696
    %4698 = vmatmul.bf16.gmra.mxu0 %v4341
    %v4699 = vpop.f32.mrf.mxu0
    %v4700 = vadd.f32 0.0, %v4699
    %v4701 = vpop.f32.mrf.mxu0
    %v4702 = vadd.f32 0.0, %v4701
    %4703 = vmatmul.bf16.gmra.mxu0 %v4344
    %v4704 = vpop.f32.mrf.mxu0
    %v4705 = vadd.f32 0.0, %v4704
    %v4706 = vpop.f32.mrf.mxu0
    %v4707 = vadd.f32 0.0, %v4706
    %4708 = vmatmul.bf16.gmra.mxu0 %v4347
    %v4709 = vpop.f32.mrf.mxu0
    %v4710 = vadd.f32 0.0, %v4709
    %v4711 = vpop.f32.mrf.mxu0
    %v4712 = vadd.f32 0.0, %v4711
    %4713 = vmatmul.bf16.gmra.mxu0 %v4350
    %v4714 = vpop.f32.mrf.mxu0
    %v4715 = vadd.f32 0.0, %v4714
    %v4716 = vpop.f32.mrf.mxu0
    %v4717 = vadd.f32 0.0, %v4716
    %4718 = vdwg.mxu0
    %4719 = vmatpush.bf16.msra.mxu0 0
    %4720 = vmatpush.bf16.msra.mxu0 0
    %4721 = vmatpush.bf16.msra.mxu0 0
    %4722 = vmatpush.bf16.msra.mxu0 0
    %4723 = vmatpush.bf16.msra.mxu0 0
    %4724 = vmatpush.bf16.msra.mxu0 0
    %4725 = vmatpush.bf16.msra.mxu0 0
    %4726 = vmatpush.bf16.msra.mxu0 %v4374
    %4727 = vmatmul.bf16.gmra.mxu0 %v4329
    %v4728 = vpop.f32.mrf.mxu0
    %v4729 = vadd.f32 0.0, %v4728
    %v4730 = vpop.f32.mrf.mxu0
    %v4731 = vadd.f32 0.0, %v4730
    %4732 = vmatmul.bf16.gmra.mxu0 %v4332
    %v4733 = vpop.f32.mrf.mxu0
    %v4734 = vadd.f32 0.0, %v4733
    %v4735 = vpop.f32.mrf.mxu0
    %v4736 = vadd.f32 0.0, %v4735
    %4737 = vmatmul.bf16.gmra.mxu0 %v4335
    %v4738 = vpop.f32.mrf.mxu0
    %v4739 = vadd.f32 0.0, %v4738
    %v4740 = vpop.f32.mrf.mxu0
    %v4741 = vadd.f32 0.0, %v4740
    %4742 = vmatmul.bf16.gmra.mxu0 %v4338
    %v4743 = vpop.f32.mrf.mxu0
    %v4744 = vadd.f32 0.0, %v4743
    %v4745 = vpop.f32.mrf.mxu0
    %v4746 = vadd.f32 0.0, %v4745
    %4747 = vmatmul.bf16.gmra.mxu0 %v4341
    %v4748 = vpop.f32.mrf.mxu0
    %v4749 = vadd.f32 0.0, %v4748
    %v4750 = vpop.f32.mrf.mxu0
    %v4751 = vadd.f32 0.0, %v4750
    %4752 = vmatmul.bf16.gmra.mxu0 %v4344
    %v4753 = vpop.f32.mrf.mxu0
    %v4754 = vadd.f32 0.0, %v4753
    %v4755 = vpop.f32.mrf.mxu0
    %v4756 = vadd.f32 0.0, %v4755
    %4757 = vmatmul.bf16.gmra.mxu0 %v4347
    %v4758 = vpop.f32.mrf.mxu0
    %v4759 = vadd.f32 0.0, %v4758
    %v4760 = vpop.f32.mrf.mxu0
    %v4761 = vadd.f32 0.0, %v4760
    %4762 = vmatmul.bf16.gmra.mxu0 %v4350
    %v4763 = vpop.f32.mrf.mxu0
    %v4764 = vadd.f32 0.0, %v4763
    %v4765 = vpop.f32.mrf.mxu0
    %v4766 = vadd.f32 0.0, %v4765
    %4767 = vdwg.mxu0
    %v4768 = vadd.f32 %v4108, %v4386
    %v4769 = vadd.f32 %v4109, %v4435
    %v4770 = vadd.f32 %v4110, %v4484
    %v4771 = vadd.f32 %v4111, %v4533
    %v4772 = vadd.f32 %v4112, %v4582
    %v4773 = vadd.f32 %v4113, %v4631
    %v4774 = vadd.f32 %v4114, %v4680
    %v4775 = vadd.f32 %v4115, %v4729
    %v4776 = vadd.f32 %v4116, %v4388
    %v4777 = vadd.f32 %v4117, %v4437
    %v4778 = vadd.f32 %v4118, %v4486
    %v4779 = vadd.f32 %v4119, %v4535
    %v4780 = vadd.f32 %v4120, %v4584
    %v4781 = vadd.f32 %v4121, %v4633
    %v4782 = vadd.f32 %v4122, %v4682
    %v4783 = vadd.f32 %v4123, %v4731
    %v4784 = vadd.f32 %v4124, %v4391
    %v4785 = vadd.f32 %v4125, %v4440
    %v4786 = vadd.f32 %v4126, %v4489
    %v4787 = vadd.f32 %v4127, %v4538
    %v4788 = vadd.f32 %v4128, %v4587
    %v4789 = vadd.f32 %v4129, %v4636
    %v4790 = vadd.f32 %v4130, %v4685
    %v4791 = vadd.f32 %v4131, %v4734
    %v4792 = vadd.f32 %v4132, %v4393
    %v4793 = vadd.f32 %v4133, %v4442
    %v4794 = vadd.f32 %v4134, %v4491
    %v4795 = vadd.f32 %v4135, %v4540
    %v4796 = vadd.f32 %v4136, %v4589
    %v4797 = vadd.f32 %v4137, %v4638
    %v4798 = vadd.f32 %v4138, %v4687
    %v4799 = vadd.f32 %v4139, %v4736
    %v4800 = vadd.f32 %v4140, %v4396
    %v4801 = vadd.f32 %v4141, %v4445
    %v4802 = vadd.f32 %v4142, %v4494
    %v4803 = vadd.f32 %v4143, %v4543
    %v4804 = vadd.f32 %v4144, %v4592
    %v4805 = vadd.f32 %v4145, %v4641
    %v4806 = vadd.f32 %v4146, %v4690
    %v4807 = vadd.f32 %v4147, %v4739
    %v4808 = vadd.f32 %v4148, %v4398
    %v4809 = vadd.f32 %v4149, %v4447
    %v4810 = vadd.f32 %v4150, %v4496
    %v4811 = vadd.f32 %v4151, %v4545
    %v4812 = vadd.f32 %v4152, %v4594
    %v4813 = vadd.f32 %v4153, %v4643
    %v4814 = vadd.f32 %v4154, %v4692
    %v4815 = vadd.f32 %v4155, %v4741
    %v4816 = vadd.f32 %v4156, %v4401
    %v4817 = vadd.f32 %v4157, %v4450
    %v4818 = vadd.f32 %v4158, %v4499
    %v4819 = vadd.f32 %v4159, %v4548
    %v4820 = vadd.f32 %v4160, %v4597
    %v4821 = vadd.f32 %v4161, %v4646
    %v4822 = vadd.f32 %v4162, %v4695
    %v4823 = vadd.f32 %v4163, %v4744
    %v4824 = vadd.f32 %v4164, %v4403
    %v4825 = vadd.f32 %v4165, %v4452
    %v4826 = vadd.f32 %v4166, %v4501
    %v4827 = vadd.f32 %v4167, %v4550
    %v4828 = vadd.f32 %v4168, %v4599
    %v4829 = vadd.f32 %v4169, %v4648
    %v4830 = vadd.f32 %v4170, %v4697
    %v4831 = vadd.f32 %v4171, %v4746
    %v4832 = vadd.f32 %v4172, %v4406
    %v4833 = vadd.f32 %v4173, %v4455
    %v4834 = vadd.f32 %v4174, %v4504
    %v4835 = vadd.f32 %v4175, %v4553
    %v4836 = vadd.f32 %v4176, %v4602
    %v4837 = vadd.f32 %v4177, %v4651
    %v4838 = vadd.f32 %v4178, %v4700
    %v4839 = vadd.f32 %v4179, %v4749
    %v4840 = vadd.f32 %v4180, %v4408
    %v4841 = vadd.f32 %v4181, %v4457
    %v4842 = vadd.f32 %v4182, %v4506
    %v4843 = vadd.f32 %v4183, %v4555
    %v4844 = vadd.f32 %v4184, %v4604
    %v4845 = vadd.f32 %v4185, %v4653
    %v4846 = vadd.f32 %v4186, %v4702
    %v4847 = vadd.f32 %v4187, %v4751
    %v4848 = vadd.f32 %v4188, %v4411
    %v4849 = vadd.f32 %v4189, %v4460
    %v4850 = vadd.f32 %v4190, %v4509
    %v4851 = vadd.f32 %v4191, %v4558
    %v4852 = vadd.f32 %v4192, %v4607
    %v4853 = vadd.f32 %v4193, %v4656
    %v4854 = vadd.f32 %v4194, %v4705
    %v4855 = vadd.f32 %v4195, %v4754
    %v4856 = vadd.f32 %v4196, %v4413
    %v4857 = vadd.f32 %v4197, %v4462
    %v4858 = vadd.f32 %v4198, %v4511
    %v4859 = vadd.f32 %v4199, %v4560
    %v4860 = vadd.f32 %v4200, %v4609
    %v4861 = vadd.f32 %v4201, %v4658
    %v4862 = vadd.f32 %v4202, %v4707
    %v4863 = vadd.f32 %v4203, %v4756
    %v4864 = vadd.f32 %v4204, %v4416
    %v4865 = vadd.f32 %v4205, %v4465
    %v4866 = vadd.f32 %v4206, %v4514
    %v4867 = vadd.f32 %v4207, %v4563
    %v4868 = vadd.f32 %v4208, %v4612
    %v4869 = vadd.f32 %v4209, %v4661
    %v4870 = vadd.f32 %v4210, %v4710
    %v4871 = vadd.f32 %v4211, %v4759
    %v4872 = vadd.f32 %v4212, %v4418
    %v4873 = vadd.f32 %v4213, %v4467
    %v4874 = vadd.f32 %v4214, %v4516
    %v4875 = vadd.f32 %v4215, %v4565
    %v4876 = vadd.f32 %v4216, %v4614
    %v4877 = vadd.f32 %v4217, %v4663
    %v4878 = vadd.f32 %v4218, %v4712
    %v4879 = vadd.f32 %v4219, %v4761
    %v4880 = vadd.f32 %v4220, %v4421
    %v4881 = vadd.f32 %v4221, %v4470
    %v4882 = vadd.f32 %v4222, %v4519
    %v4883 = vadd.f32 %v4223, %v4568
    %v4884 = vadd.f32 %v4224, %v4617
    %v4885 = vadd.f32 %v4225, %v4666
    %v4886 = vadd.f32 %v4226, %v4715
    %v4887 = vadd.f32 %v4227, %v4764
    %v4888 = vadd.f32 %v4228, %v4423
    %v4889 = vadd.f32 %v4229, %v4472
    %v4890 = vadd.f32 %v4230, %v4521
    %v4891 = vadd.f32 %v4231, %v4570
    %v4892 = vadd.f32 %v4232, %v4619
    %v4893 = vadd.f32 %v4233, %v4668
    %v4894 = vadd.f32 %v4234, %v4717
    %v4895 = vadd.f32 %v4235, %v4766
    %s4896 = scalar_lea.vmem %s1, 256
    %v4897 = vld [vmem:[%s4896] sm:$0xf]
    %v4898 = vld [vmem:[%s4896 + $0x4] sm:$0xf]
    %v4899 = vld [vmem:[%s4896 + $0x8] sm:$0xf]
    %v4900 = vld [vmem:[%s4896 + $0xc] sm:$0xf]
    %v4901 = vld [vmem:[%s4896 + $0x10] sm:$0xf]
    %v4902 = vld [vmem:[%s4896 + $0x14] sm:$0xf]
    %v4903 = vld [vmem:[%s4896 + $0x18] sm:$0xf]
    %v4904 = vld [vmem:[%s4896 + $0x1c] sm:$0xf]
    %v4905 = vld [vmem:[%s4896 + $0x20] sm:$0xf]
    %v4906 = vld [vmem:[%s4896 + $0x24] sm:$0xf]
    %v4907 = vld [vmem:[%s4896 + $0x28] sm:$0xf]
    %v4908 = vld [vmem:[%s4896 + $0x2c] sm:$0xf]
    %v4909 = vld [vmem:[%s4896 + $0x30] sm:$0xf]
    %v4910 = vld [vmem:[%s4896 + $0x34] sm:$0xf]
    %v4911 = vld [vmem:[%s4896 + $0x38] sm:$0xf]
    %v4912 = vld [vmem:[%s4896 + $0x3c] sm:$0xf]
    %4917 = vst [vmem:[#allocation1] ss:$2 sm:$0xff] %v2045
    %s4918 = scalar_lea.vmem [#allocation1], 16
    %4919 = vst [vmem:[%s4918] ss:$2 sm:$0xff] %v2199
    %s4920 = scalar_lea.vmem [#allocation1], 32
    %4921 = vst [vmem:[%s4920] ss:$2 sm:$0xff] %v2353
    %s4922 = scalar_lea.vmem [#allocation1], 48
    %4923 = vst [vmem:[%s4922] ss:$2 sm:$0xff] %v2507
    %v4924 = vld.sshfl [vmem:[#allocation1] sm:$0xff pattern:$0x75316420]
    %v4925 = vld.sshfl [vmem:[#allocation1 + $0x8] sm:$0xff pattern:$0x75316420]
    %v4926 = vld.sshfl [vmem:[#allocation1 + $0x10] sm:$0xff pattern:$0x75316420]
    %v4927 = vld.sshfl [vmem:[#allocation1 + $0x18] sm:$0xff pattern:$0x75316420]
    %v4928 = vld.sshfl [vmem:[#allocation1 + $0x20] sm:$0xff pattern:$0x75316420]
    %v4929 = vld.sshfl [vmem:[#allocation1 + $0x28] sm:$0xff pattern:$0x75316420]
    %v4930 = vld.sshfl [vmem:[#allocation1 + $0x30] sm:$0xff pattern:$0x75316420]
    %v4931 = vld.sshfl [vmem:[#allocation1 + $0x38] sm:$0xff pattern:$0x75316420]
    %v4940 = vpack.c.bf16 %v4924, %v4924
    %v4941 = vpack.c.bf16 %v4925, %v4925
    %v4942 = vpack.c.bf16 %v4926, %v4926
    %v4943 = vpack.c.bf16 %v4927, %v4927
    %v4944 = vpack.c.bf16 %v4928, %v4928
    %v4945 = vpack.c.bf16 %v4929, %v4929
    %v4946 = vpack.c.bf16 %v4930, %v4930
    %v4947 = vpack.c.bf16 %v4931, %v4931
    %v4964 = vunpack.c.l.b16 %v4897
    %v4965 = vunpack.c.l.b16 %v4898
    %v4966 = vunpack.c.l.b16 %v4899
    %v4967 = vunpack.c.l.b16 %v4900
    %v4968 = vunpack.c.l.b16 %v4901
    %v4969 = vunpack.c.l.b16 %v4902
    %v4970 = vunpack.c.l.b16 %v4903
    %v4971 = vunpack.c.l.b16 %v4904
    %v4972 = vunpack.c.l.b16 %v4905
    %v4973 = vunpack.c.l.b16 %v4906
    %v4974 = vunpack.c.l.b16 %v4907
    %v4975 = vunpack.c.l.b16 %v4908
    %v4976 = vunpack.c.l.b16 %v4909
    %v4977 = vunpack.c.l.b16 %v4910
    %v4978 = vunpack.c.l.b16 %v4911
    %v4979 = vunpack.c.l.b16 %v4912
    %v4980 = vpack.c.b16 %v4965, %v4964
    %v4981 = vpack.c.b16 %v4967, %v4966
    %v4982 = vpack.c.b16 %v4969, %v4968
    %v4983 = vpack.c.b16 %v4971, %v4970
    %v4984 = vpack.c.b16 %v4973, %v4972
    %v4985 = vpack.c.b16 %v4975, %v4974
    %v4986 = vpack.c.b16 %v4977, %v4976
    %v4987 = vpack.c.b16 %v4979, %v4978
    %v4989 = vsel %vm2651, %v4980, 0
    %v4992 = vsel %vm2651, %v4981, 0
    %v4995 = vsel %vm2651, %v4982, 0
    %v4998 = vsel %vm2651, %v4983, 0
    %v5001 = vsel %vm2651, %v4984, 0
    %v5004 = vsel %vm2651, %v4985, 0
    %v5007 = vsel %vm2651, %v4986, 0
    %v5010 = vsel %vm2651, %v4987, 0
    %v5013 = vand.u32 %v4940, %v2679
    %v5016 = vand.u32 %v4941, %v2679
    %v5019 = vand.u32 %v4942, %v2679
    %v5022 = vand.u32 %v4943, %v2679
    %v5025 = vand.u32 %v4944, %v2679
    %v5028 = vand.u32 %v4945, %v2679
    %v5031 = vand.u32 %v4946, %v2679
    %v5034 = vand.u32 %v4947, %v2679
    %5036 = vmatpush.bf16.msra.mxu0 0
    %5037 = vmatpush.bf16.msra.mxu0 0
    %5038 = vmatpush.bf16.msra.mxu0 0
    %5039 = vmatpush.bf16.msra.mxu0 0
    %5040 = vmatpush.bf16.msra.mxu0 0
    %5041 = vmatpush.bf16.msra.mxu0 0
    %5042 = vmatpush.bf16.msra.mxu0 0
    %5043 = vmatpush.bf16.msra.mxu0 %v5013
    %5044 = vmatmul.bf16.gmra.mxu0 %v4989
    %v5045 = vpop.f32.mrf.mxu0
    %v5046 = vadd.f32 0.0, %v5045
    %v5047 = vpop.f32.mrf.mxu0
    %v5048 = vadd.f32 0.0, %v5047
    %5049 = vmatmul.bf16.gmra.mxu0 %v4992
    %v5050 = vpop.f32.mrf.mxu0
    %v5051 = vadd.f32 0.0, %v5050
    %v5052 = vpop.f32.mrf.mxu0
    %v5053 = vadd.f32 0.0, %v5052
    %5054 = vmatmul.bf16.gmra.mxu0 %v4995
    %v5055 = vpop.f32.mrf.mxu0
    %v5056 = vadd.f32 0.0, %v5055
    %v5057 = vpop.f32.mrf.mxu0
    %v5058 = vadd.f32 0.0, %v5057
    %5059 = vmatmul.bf16.gmra.mxu0 %v4998
    %v5060 = vpop.f32.mrf.mxu0
    %v5061 = vadd.f32 0.0, %v5060
    %v5062 = vpop.f32.mrf.mxu0
    %v5063 = vadd.f32 0.0, %v5062
    %5064 = vmatmul.bf16.gmra.mxu0 %v5001
    %v5065 = vpop.f32.mrf.mxu0
    %v5066 = vadd.f32 0.0, %v5065
    %v5067 = vpop.f32.mrf.mxu0
    %v5068 = vadd.f32 0.0, %v5067
    %5069 = vmatmul.bf16.gmra.mxu0 %v5004
    %v5070 = vpop.f32.mrf.mxu0
    %v5071 = vadd.f32 0.0, %v5070
    %v5072 = vpop.f32.mrf.mxu0
    %v5073 = vadd.f32 0.0, %v5072
    %5074 = vmatmul.bf16.gmra.mxu0 %v5007
    %v5075 = vpop.f32.mrf.mxu0
    %v5076 = vadd.f32 0.0, %v5075
    %v5077 = vpop.f32.mrf.mxu0
    %v5078 = vadd.f32 0.0, %v5077
    %5079 = vmatmul.bf16.gmra.mxu0 %v5010
    %v5080 = vpop.f32.mrf.mxu0
    %v5081 = vadd.f32 0.0, %v5080
    %v5082 = vpop.f32.mrf.mxu0
    %v5083 = vadd.f32 0.0, %v5082
    %5084 = vdwg.mxu0
    %5085 = vmatpush.bf16.msra.mxu0 0
    %5086 = vmatpush.bf16.msra.mxu0 0
    %5087 = vmatpush.bf16.msra.mxu0 0
    %5088 = vmatpush.bf16.msra.mxu0 0
    %5089 = vmatpush.bf16.msra.mxu0 0
    %5090 = vmatpush.bf16.msra.mxu0 0
    %5091 = vmatpush.bf16.msra.mxu0 0
    %5092 = vmatpush.bf16.msra.mxu0 %v5016
    %5093 = vmatmul.bf16.gmra.mxu0 %v4989
    %v5094 = vpop.f32.mrf.mxu0
    %v5095 = vadd.f32 0.0, %v5094
    %v5096 = vpop.f32.mrf.mxu0
    %v5097 = vadd.f32 0.0, %v5096
    %5098 = vmatmul.bf16.gmra.mxu0 %v4992
    %v5099 = vpop.f32.mrf.mxu0
    %v5100 = vadd.f32 0.0, %v5099
    %v5101 = vpop.f32.mrf.mxu0
    %v5102 = vadd.f32 0.0, %v5101
    %5103 = vmatmul.bf16.gmra.mxu0 %v4995
    %v5104 = vpop.f32.mrf.mxu0
    %v5105 = vadd.f32 0.0, %v5104
    %v5106 = vpop.f32.mrf.mxu0
    %v5107 = vadd.f32 0.0, %v5106
    %5108 = vmatmul.bf16.gmra.mxu0 %v4998
    %v5109 = vpop.f32.mrf.mxu0
    %v5110 = vadd.f32 0.0, %v5109
    %v5111 = vpop.f32.mrf.mxu0
    %v5112 = vadd.f32 0.0, %v5111
    %5113 = vmatmul.bf16.gmra.mxu0 %v5001
    %v5114 = vpop.f32.mrf.mxu0
    %v5115 = vadd.f32 0.0, %v5114
    %v5116 = vpop.f32.mrf.mxu0
    %v5117 = vadd.f32 0.0, %v5116
    %5118 = vmatmul.bf16.gmra.mxu0 %v5004
    %v5119 = vpop.f32.mrf.mxu0
    %v5120 = vadd.f32 0.0, %v5119
    %v5121 = vpop.f32.mrf.mxu0
    %v5122 = vadd.f32 0.0, %v5121
    %5123 = vmatmul.bf16.gmra.mxu0 %v5007
    %v5124 = vpop.f32.mrf.mxu0
    %v5125 = vadd.f32 0.0, %v5124
    %v5126 = vpop.f32.mrf.mxu0
    %v5127 = vadd.f32 0.0, %v5126
    %5128 = vmatmul.bf16.gmra.mxu0 %v5010
    %v5129 = vpop.f32.mrf.mxu0
    %v5130 = vadd.f32 0.0, %v5129
    %v5131 = vpop.f32.mrf.mxu0
    %v5132 = vadd.f32 0.0, %v5131
    %5133 = vdwg.mxu0
    %5134 = vmatpush.bf16.msra.mxu0 0
    %5135 = vmatpush.bf16.msra.mxu0 0
    %5136 = vmatpush.bf16.msra.mxu0 0
    %5137 = vmatpush.bf16.msra.mxu0 0
    %5138 = vmatpush.bf16.msra.mxu0 0
    %5139 = vmatpush.bf16.msra.mxu0 0
    %5140 = vmatpush.bf16.msra.mxu0 0
    %5141 = vmatpush.bf16.msra.mxu0 %v5019
    %5142 = vmatmul.bf16.gmra.mxu0 %v4989
    %v5143 = vpop.f32.mrf.mxu0
    %v5144 = vadd.f32 0.0, %v5143
    %v5145 = vpop.f32.mrf.mxu0
    %v5146 = vadd.f32 0.0, %v5145
    %5147 = vmatmul.bf16.gmra.mxu0 %v4992
    %v5148 = vpop.f32.mrf.mxu0
    %v5149 = vadd.f32 0.0, %v5148
    %v5150 = vpop.f32.mrf.mxu0
    %v5151 = vadd.f32 0.0, %v5150
    %5152 = vmatmul.bf16.gmra.mxu0 %v4995
    %v5153 = vpop.f32.mrf.mxu0
    %v5154 = vadd.f32 0.0, %v5153
    %v5155 = vpop.f32.mrf.mxu0
    %v5156 = vadd.f32 0.0, %v5155
    %5157 = vmatmul.bf16.gmra.mxu0 %v4998
    %v5158 = vpop.f32.mrf.mxu0
    %v5159 = vadd.f32 0.0, %v5158
    %v5160 = vpop.f32.mrf.mxu0
    %v5161 = vadd.f32 0.0, %v5160
    %5162 = vmatmul.bf16.gmra.mxu0 %v5001
    %v5163 = vpop.f32.mrf.mxu0
    %v5164 = vadd.f32 0.0, %v5163
    %v5165 = vpop.f32.mrf.mxu0
    %v5166 = vadd.f32 0.0, %v5165
    %5167 = vmatmul.bf16.gmra.mxu0 %v5004
    %v5168 = vpop.f32.mrf.mxu0
    %v5169 = vadd.f32 0.0, %v5168
    %v5170 = vpop.f32.mrf.mxu0
    %v5171 = vadd.f32 0.0, %v5170
    %5172 = vmatmul.bf16.gmra.mxu0 %v5007
    %v5173 = vpop.f32.mrf.mxu0
    %v5174 = vadd.f32 0.0, %v5173
    %v5175 = vpop.f32.mrf.mxu0
    %v5176 = vadd.f32 0.0, %v5175
    %5177 = vmatmul.bf16.gmra.mxu0 %v5010
    %v5178 = vpop.f32.mrf.mxu0
    %v5179 = vadd.f32 0.0, %v5178
    %v5180 = vpop.f32.mrf.mxu0
    %v5181 = vadd.f32 0.0, %v5180
    %5182 = vdwg.mxu0
    %5183 = vmatpush.bf16.msra.mxu0 0
    %5184 = vmatpush.bf16.msra.mxu0 0
    %5185 = vmatpush.bf16.msra.mxu0 0
    %5186 = vmatpush.bf16.msra.mxu0 0
    %5187 = vmatpush.bf16.msra.mxu0 0
    %5188 = vmatpush.bf16.msra.mxu0 0
    %5189 = vmatpush.bf16.msra.mxu0 0
    %5190 = vmatpush.bf16.msra.mxu0 %v5022
    %5191 = vmatmul.bf16.gmra.mxu0 %v4989
    %v5192 = vpop.f32.mrf.mxu0
    %v5193 = vadd.f32 0.0, %v5192
    %v5194 = vpop.f32.mrf.mxu0
    %v5195 = vadd.f32 0.0, %v5194
    %5196 = vmatmul.bf16.gmra.mxu0 %v4992
    %v5197 = vpop.f32.mrf.mxu0
    %v5198 = vadd.f32 0.0, %v5197
    %v5199 = vpop.f32.mrf.mxu0
    %v5200 = vadd.f32 0.0, %v5199
    %5201 = vmatmul.bf16.gmra.mxu0 %v4995
    %v5202 = vpop.f32.mrf.mxu0
    %v5203 = vadd.f32 0.0, %v5202
    %v5204 = vpop.f32.mrf.mxu0
    %v5205 = vadd.f32 0.0, %v5204
    %5206 = vmatmul.bf16.gmra.mxu0 %v4998
    %v5207 = vpop.f32.mrf.mxu0
    %v5208 = vadd.f32 0.0, %v5207
    %v5209 = vpop.f32.mrf.mxu0
    %v5210 = vadd.f32 0.0, %v5209
    %5211 = vmatmul.bf16.gmra.mxu0 %v5001
    %v5212 = vpop.f32.mrf.mxu0
    %v5213 = vadd.f32 0.0, %v5212
    %v5214 = vpop.f32.mrf.mxu0
    %v5215 = vadd.f32 0.0, %v5214
    %5216 = vmatmul.bf16.gmra.mxu0 %v5004
    %v5217 = vpop.f32.mrf.mxu0
    %v5218 = vadd.f32 0.0, %v5217
    %v5219 = vpop.f32.mrf.mxu0
    %v5220 = vadd.f32 0.0, %v5219
    %5221 = vmatmul.bf16.gmra.mxu0 %v5007
    %v5222 = vpop.f32.mrf.mxu0
    %v5223 = vadd.f32 0.0, %v5222
    %v5224 = vpop.f32.mrf.mxu0
    %v5225 = vadd.f32 0.0, %v5224
    %5226 = vmatmul.bf16.gmra.mxu0 %v5010
    %v5227 = vpop.f32.mrf.mxu0
    %v5228 = vadd.f32 0.0, %v5227
    %v5229 = vpop.f32.mrf.mxu0
    %v5230 = vadd.f32 0.0, %v5229
    %5231 = vdwg.mxu0
    %5232 = vmatpush.bf16.msra.mxu0 0
    %5233 = vmatpush.bf16.msra.mxu0 0
    %5234 = vmatpush.bf16.msra.mxu0 0
    %5235 = vmatpush.bf16.msra.mxu0 0
    %5236 = vmatpush.bf16.msra.mxu0 0
    %5237 = vmatpush.bf16.msra.mxu0 0
    %5238 = vmatpush.bf16.msra.mxu0 0
    %5239 = vmatpush.bf16.msra.mxu0 %v5025
    %5240 = vmatmul.bf16.gmra.mxu0 %v4989
    %v5241 = vpop.f32.mrf.mxu0
    %v5242 = vadd.f32 0.0, %v5241
    %v5243 = vpop.f32.mrf.mxu0
    %v5244 = vadd.f32 0.0, %v5243
    %5245 = vmatmul.bf16.gmra.mxu0 %v4992
    %v5246 = vpop.f32.mrf.mxu0
    %v5247 = vadd.f32 0.0, %v5246
    %v5248 = vpop.f32.mrf.mxu0
    %v5249 = vadd.f32 0.0, %v5248
    %5250 = vmatmul.bf16.gmra.mxu0 %v4995
    %v5251 = vpop.f32.mrf.mxu0
    %v5252 = vadd.f32 0.0, %v5251
    %v5253 = vpop.f32.mrf.mxu0
    %v5254 = vadd.f32 0.0, %v5253
    %5255 = vmatmul.bf16.gmra.mxu0 %v4998
    %v5256 = vpop.f32.mrf.mxu0
    %v5257 = vadd.f32 0.0, %v5256
    %v5258 = vpop.f32.mrf.mxu0
    %v5259 = vadd.f32 0.0, %v5258
    %5260 = vmatmul.bf16.gmra.mxu0 %v5001
    %v5261 = vpop.f32.mrf.mxu0
    %v5262 = vadd.f32 0.0, %v5261
    %v5263 = vpop.f32.mrf.mxu0
    %v5264 = vadd.f32 0.0, %v5263
    %5265 = vmatmul.bf16.gmra.mxu0 %v5004
    %v5266 = vpop.f32.mrf.mxu0
    %v5267 = vadd.f32 0.0, %v5266
    %v5268 = vpop.f32.mrf.mxu0
    %v5269 = vadd.f32 0.0, %v5268
    %5270 = vmatmul.bf16.gmra.mxu0 %v5007
    %v5271 = vpop.f32.mrf.mxu0
    %v5272 = vadd.f32 0.0, %v5271
    %v5273 = vpop.f32.mrf.mxu0
    %v5274 = vadd.f32 0.0, %v5273
    %5275 = vmatmul.bf16.gmra.mxu0 %v5010
    %v5276 = vpop.f32.mrf.mxu0
    %v5277 = vadd.f32 0.0, %v5276
    %v5278 = vpop.f32.mrf.mxu0
    %v5279 = vadd.f32 0.0, %v5278
    %5280 = vdwg.mxu0
    %5281 = vmatpush.bf16.msra.mxu0 0
    %5282 = vmatpush.bf16.msra.mxu0 0
    %5283 = vmatpush.bf16.msra.mxu0 0
    %5284 = vmatpush.bf16.msra.mxu0 0
    %5285 = vmatpush.bf16.msra.mxu0 0
    %5286 = vmatpush.bf16.msra.mxu0 0
    %5287 = vmatpush.bf16.msra.mxu0 0
    %5288 = vmatpush.bf16.msra.mxu0 %v5028
    %5289 = vmatmul.bf16.gmra.mxu0 %v4989
    %v5290 = vpop.f32.mrf.mxu0
    %v5291 = vadd.f32 0.0, %v5290
    %v5292 = vpop.f32.mrf.mxu0
    %v5293 = vadd.f32 0.0, %v5292
    %5294 = vmatmul.bf16.gmra.mxu0 %v4992
    %v5295 = vpop.f32.mrf.mxu0
    %v5296 = vadd.f32 0.0, %v5295
    %v5297 = vpop.f32.mrf.mxu0
    %v5298 = vadd.f32 0.0, %v5297
    %5299 = vmatmul.bf16.gmra.mxu0 %v4995
    %v5300 = vpop.f32.mrf.mxu0
    %v5301 = vadd.f32 0.0, %v5300
    %v5302 = vpop.f32.mrf.mxu0
    %v5303 = vadd.f32 0.0, %v5302
    %5304 = vmatmul.bf16.gmra.mxu0 %v4998
    %v5305 = vpop.f32.mrf.mxu0
    %v5306 = vadd.f32 0.0, %v5305
    %v5307 = vpop.f32.mrf.mxu0
    %v5308 = vadd.f32 0.0, %v5307
    %5309 = vmatmul.bf16.gmra.mxu0 %v5001
    %v5310 = vpop.f32.mrf.mxu0
    %v5311 = vadd.f32 0.0, %v5310
    %v5312 = vpop.f32.mrf.mxu0
    %v5313 = vadd.f32 0.0, %v5312
    %5314 = vmatmul.bf16.gmra.mxu0 %v5004
    %v5315 = vpop.f32.mrf.mxu0
    %v5316 = vadd.f32 0.0, %v5315
    %v5317 = vpop.f32.mrf.mxu0
    %v5318 = vadd.f32 0.0, %v5317
    %5319 = vmatmul.bf16.gmra.mxu0 %v5007
    %v5320 = vpop.f32.mrf.mxu0
    %v5321 = vadd.f32 0.0, %v5320
    %v5322 = vpop.f32.mrf.mxu0
    %v5323 = vadd.f32 0.0, %v5322
    %5324 = vmatmul.bf16.gmra.mxu0 %v5010
    %v5325 = vpop.f32.mrf.mxu0
    %v5326 = vadd.f32 0.0, %v5325
    %v5327 = vpop.f32.mrf.mxu0
    %v5328 = vadd.f32 0.0, %v5327
    %5329 = vdwg.mxu0
    %5330 = vmatpush.bf16.msra.mxu0 0
    %5331 = vmatpush.bf16.msra.mxu0 0
    %5332 = vmatpush.bf16.msra.mxu0 0
    %5333 = vmatpush.bf16.msra.mxu0 0
    %5334 = vmatpush.bf16.msra.mxu0 0
    %5335 = vmatpush.bf16.msra.mxu0 0
    %5336 = vmatpush.bf16.msra.mxu0 0
    %5337 = vmatpush.bf16.msra.mxu0 %v5031
    %5338 = vmatmul.bf16.gmra.mxu0 %v4989
    %v5339 = vpop.f32.mrf.mxu0
    %v5340 = vadd.f32 0.0, %v5339
    %v5341 = vpop.f32.mrf.mxu0
    %v5342 = vadd.f32 0.0, %v5341
    %5343 = vmatmul.bf16.gmra.mxu0 %v4992
    %v5344 = vpop.f32.mrf.mxu0
    %v5345 = vadd.f32 0.0, %v5344
    %v5346 = vpop.f32.mrf.mxu0
    %v5347 = vadd.f32 0.0, %v5346
    %5348 = vmatmul.bf16.gmra.mxu0 %v4995
    %v5349 = vpop.f32.mrf.mxu0
    %v5350 = vadd.f32 0.0, %v5349
    %v5351 = vpop.f32.mrf.mxu0
    %v5352 = vadd.f32 0.0, %v5351
    %5353 = vmatmul.bf16.gmra.mxu0 %v4998
    %v5354 = vpop.f32.mrf.mxu0
    %v5355 = vadd.f32 0.0, %v5354
    %v5356 = vpop.f32.mrf.mxu0
    %v5357 = vadd.f32 0.0, %v5356
    %5358 = vmatmul.bf16.gmra.mxu0 %v5001
    %v5359 = vpop.f32.mrf.mxu0
    %v5360 = vadd.f32 0.0, %v5359
    %v5361 = vpop.f32.mrf.mxu0
    %v5362 = vadd.f32 0.0, %v5361
    %5363 = vmatmul.bf16.gmra.mxu0 %v5004
    %v5364 = vpop.f32.mrf.mxu0
    %v5365 = vadd.f32 0.0, %v5364
    %v5366 = vpop.f32.mrf.mxu0
    %v5367 = vadd.f32 0.0, %v5366
    %5368 = vmatmul.bf16.gmra.mxu0 %v5007
    %v5369 = vpop.f32.mrf.mxu0
    %v5370 = vadd.f32 0.0, %v5369
    %v5371 = vpop.f32.mrf.mxu0
    %v5372 = vadd.f32 0.0, %v5371
    %5373 = vmatmul.bf16.gmra.mxu0 %v5010
    %v5374 = vpop.f32.mrf.mxu0
    %v5375 = vadd.f32 0.0, %v5374
    %v5376 = vpop.f32.mrf.mxu0
    %v5377 = vadd.f32 0.0, %v5376
    %5378 = vdwg.mxu0
    %5379 = vmatpush.bf16.msra.mxu0 0
    %5380 = vmatpush.bf16.msra.mxu0 0
    %5381 = vmatpush.bf16.msra.mxu0 0
    %5382 = vmatpush.bf16.msra.mxu0 0
    %5383 = vmatpush.bf16.msra.mxu0 0
    %5384 = vmatpush.bf16.msra.mxu0 0
    %5385 = vmatpush.bf16.msra.mxu0 0
    %5386 = vmatpush.bf16.msra.mxu0 %v5034
    %5387 = vmatmul.bf16.gmra.mxu0 %v4989
    %v5388 = vpop.f32.mrf.mxu0
    %v5389 = vadd.f32 0.0, %v5388
    %v5390 = vpop.f32.mrf.mxu0
    %v5391 = vadd.f32 0.0, %v5390
    %5392 = vmatmul.bf16.gmra.mxu0 %v4992
    %v5393 = vpop.f32.mrf.mxu0
    %v5394 = vadd.f32 0.0, %v5393
    %v5395 = vpop.f32.mrf.mxu0
    %v5396 = vadd.f32 0.0, %v5395
    %5397 = vmatmul.bf16.gmra.mxu0 %v4995
    %v5398 = vpop.f32.mrf.mxu0
    %v5399 = vadd.f32 0.0, %v5398
    %v5400 = vpop.f32.mrf.mxu0
    %v5401 = vadd.f32 0.0, %v5400
    %5402 = vmatmul.bf16.gmra.mxu0 %v4998
    %v5403 = vpop.f32.mrf.mxu0
    %v5404 = vadd.f32 0.0, %v5403
    %v5405 = vpop.f32.mrf.mxu0
    %v5406 = vadd.f32 0.0, %v5405
    %5407 = vmatmul.bf16.gmra.mxu0 %v5001
    %v5408 = vpop.f32.mrf.mxu0
    %v5409 = vadd.f32 0.0, %v5408
    %v5410 = vpop.f32.mrf.mxu0
    %v5411 = vadd.f32 0.0, %v5410
    %5412 = vmatmul.bf16.gmra.mxu0 %v5004
    %v5413 = vpop.f32.mrf.mxu0
    %v5414 = vadd.f32 0.0, %v5413
    %v5415 = vpop.f32.mrf.mxu0
    %v5416 = vadd.f32 0.0, %v5415
    %5417 = vmatmul.bf16.gmra.mxu0 %v5007
    %v5418 = vpop.f32.mrf.mxu0
    %v5419 = vadd.f32 0.0, %v5418
    %v5420 = vpop.f32.mrf.mxu0
    %v5421 = vadd.f32 0.0, %v5420
    %5422 = vmatmul.bf16.gmra.mxu0 %v5010
    %v5423 = vpop.f32.mrf.mxu0
    %v5424 = vadd.f32 0.0, %v5423
    %v5425 = vpop.f32.mrf.mxu0
    %v5426 = vadd.f32 0.0, %v5425
    %5427 = vdwg.mxu0
    %v5428 = vadd.f32 %v4768, %v5046
    %v5429 = vadd.f32 %v4769, %v5095
    %v5430 = vadd.f32 %v4770, %v5144
    %v5431 = vadd.f32 %v4771, %v5193
    %v5432 = vadd.f32 %v4772, %v5242
    %v5433 = vadd.f32 %v4773, %v5291
    %v5434 = vadd.f32 %v4774, %v5340
    %v5435 = vadd.f32 %v4775, %v5389
    %v5436 = vadd.f32 %v4776, %v5048
    %v5437 = vadd.f32 %v4777, %v5097
    %v5438 = vadd.f32 %v4778, %v5146
    %v5439 = vadd.f32 %v4779, %v5195
    %v5440 = vadd.f32 %v4780, %v5244
    %v5441 = vadd.f32 %v4781, %v5293
    %v5442 = vadd.f32 %v4782, %v5342
    %v5443 = vadd.f32 %v4783, %v5391
    %v5444 = vadd.f32 %v4784, %v5051
    %v5445 = vadd.f32 %v4785, %v5100
    %v5446 = vadd.f32 %v4786, %v5149
    %v5447 = vadd.f32 %v4787, %v5198
    %v5448 = vadd.f32 %v4788, %v5247
    %v5449 = vadd.f32 %v4789, %v5296
    %v5450 = vadd.f32 %v4790, %v5345
    %v5451 = vadd.f32 %v4791, %v5394
    %v5452 = vadd.f32 %v4792, %v5053
    %v5453 = vadd.f32 %v4793, %v5102
    %v5454 = vadd.f32 %v4794, %v5151
    %v5455 = vadd.f32 %v4795, %v5200
    %v5456 = vadd.f32 %v4796, %v5249
    %v5457 = vadd.f32 %v4797, %v5298
    %v5458 = vadd.f32 %v4798, %v5347
    %v5459 = vadd.f32 %v4799, %v5396
    %v5460 = vadd.f32 %v4800, %v5056
    %v5461 = vadd.f32 %v4801, %v5105
    %v5462 = vadd.f32 %v4802, %v5154
    %v5463 = vadd.f32 %v4803, %v5203
    %v5464 = vadd.f32 %v4804, %v5252
    %v5465 = vadd.f32 %v4805, %v5301
    %v5466 = vadd.f32 %v4806, %v5350
    %v5467 = vadd.f32 %v4807, %v5399
    %v5468 = vadd.f32 %v4808, %v5058
    %v5469 = vadd.f32 %v4809, %v5107
    %v5470 = vadd.f32 %v4810, %v5156
    %v5471 = vadd.f32 %v4811, %v5205
    %v5472 = vadd.f32 %v4812, %v5254
    %v5473 = vadd.f32 %v4813, %v5303
    %v5474 = vadd.f32 %v4814, %v5352
    %v5475 = vadd.f32 %v4815, %v5401
    %v5476 = vadd.f32 %v4816, %v5061
    %v5477 = vadd.f32 %v4817, %v5110
    %v5478 = vadd.f32 %v4818, %v5159
    %v5479 = vadd.f32 %v4819, %v5208
    %v5480 = vadd.f32 %v4820, %v5257
    %v5481 = vadd.f32 %v4821, %v5306
    %v5482 = vadd.f32 %v4822, %v5355
    %v5483 = vadd.f32 %v4823, %v5404
    %v5484 = vadd.f32 %v4824, %v5063
    %v5485 = vadd.f32 %v4825, %v5112
    %v5486 = vadd.f32 %v4826, %v5161
    %v5487 = vadd.f32 %v4827, %v5210
    %v5488 = vadd.f32 %v4828, %v5259
    %v5489 = vadd.f32 %v4829, %v5308
    %v5490 = vadd.f32 %v4830, %v5357
    %v5491 = vadd.f32 %v4831, %v5406
    %v5492 = vadd.f32 %v4832, %v5066
    %v5493 = vadd.f32 %v4833, %v5115
    %v5494 = vadd.f32 %v4834, %v5164
    %v5495 = vadd.f32 %v4835, %v5213
    %v5496 = vadd.f32 %v4836, %v5262
    %v5497 = vadd.f32 %v4837, %v5311
    %v5498 = vadd.f32 %v4838, %v5360
    %v5499 = vadd.f32 %v4839, %v5409
    %v5500 = vadd.f32 %v4840, %v5068
    %v5501 = vadd.f32 %v4841, %v5117
    %v5502 = vadd.f32 %v4842, %v5166
    %v5503 = vadd.f32 %v4843, %v5215
    %v5504 = vadd.f32 %v4844, %v5264
    %v5505 = vadd.f32 %v4845, %v5313
    %v5506 = vadd.f32 %v4846, %v5362
    %v5507 = vadd.f32 %v4847, %v5411
    %v5508 = vadd.f32 %v4848, %v5071
    %v5509 = vadd.f32 %v4849, %v5120
    %v5510 = vadd.f32 %v4850, %v5169
    %v5511 = vadd.f32 %v4851, %v5218
    %v5512 = vadd.f32 %v4852, %v5267
    %v5513 = vadd.f32 %v4853, %v5316
    %v5514 = vadd.f32 %v4854, %v5365
    %v5515 = vadd.f32 %v4855, %v5414
    %v5516 = vadd.f32 %v4856, %v5073
    %v5517 = vadd.f32 %v4857, %v5122
    %v5518 = vadd.f32 %v4858, %v5171
    %v5519 = vadd.f32 %v4859, %v5220
    %v5520 = vadd.f32 %v4860, %v5269
    %v5521 = vadd.f32 %v4861, %v5318
    %v5522 = vadd.f32 %v4862, %v5367
    %v5523 = vadd.f32 %v4863, %v5416
    %v5524 = vadd.f32 %v4864, %v5076
    %v5525 = vadd.f32 %v4865, %v5125
    %v5526 = vadd.f32 %v4866, %v5174
    %v5527 = vadd.f32 %v4867, %v5223
    %v5528 = vadd.f32 %v4868, %v5272
    %v5529 = vadd.f32 %v4869, %v5321
    %v5530 = vadd.f32 %v4870, %v5370
    %v5531 = vadd.f32 %v4871, %v5419
    %v5532 = vadd.f32 %v4872, %v5078
    %v5533 = vadd.f32 %v4873, %v5127
    %v5534 = vadd.f32 %v4874, %v5176
    %v5535 = vadd.f32 %v4875, %v5225
    %v5536 = vadd.f32 %v4876, %v5274
    %v5537 = vadd.f32 %v4877, %v5323
    %v5538 = vadd.f32 %v4878, %v5372
    %v5539 = vadd.f32 %v4879, %v5421
    %v5540 = vadd.f32 %v4880, %v5081
    %v5541 = vadd.f32 %v4881, %v5130
    %v5542 = vadd.f32 %v4882, %v5179
    %v5543 = vadd.f32 %v4883, %v5228
    %v5544 = vadd.f32 %v4884, %v5277
    %v5545 = vadd.f32 %v4885, %v5326
    %v5546 = vadd.f32 %v4886, %v5375
    %v5547 = vadd.f32 %v4887, %v5424
    %v5548 = vadd.f32 %v4888, %v5083
    %v5549 = vadd.f32 %v4889, %v5132
    %v5550 = vadd.f32 %v4890, %v5181
    %v5551 = vadd.f32 %v4891, %v5230
    %v5552 = vadd.f32 %v4892, %v5279
    %v5553 = vadd.f32 %v4893, %v5328
    %v5554 = vadd.f32 %v4894, %v5377
    %v5555 = vadd.f32 %v4895, %v5426
    %v5556 = vld [vmem:[%s2] sm:$0xff]
    %v5557 = vld [vmem:[%s2 + $0x8] sm:$0xff]
    %v5558 = vld [vmem:[%s2 + $0x10] sm:$0xff]
    %v5559 = vld [vmem:[%s2 + $0x18] sm:$0xff]
    %v5560 = vld [vmem:[%s2 + $0x20] sm:$0xff]
    %v5561 = vld [vmem:[%s2 + $0x28] sm:$0xff]
    %v5562 = vld [vmem:[%s2 + $0x30] sm:$0xff]
    %v5563 = vld [vmem:[%s2 + $0x38] sm:$0xff]
    %v5564 = vld [vmem:[%s2 + $0x40] sm:$0xff]
    %v5565 = vld [vmem:[%s2 + $0x48] sm:$0xff]
    %v5566 = vld [vmem:[%s2 + $0x50] sm:$0xff]
    %v5567 = vld [vmem:[%s2 + $0x58] sm:$0xff]
    %v5568 = vld [vmem:[%s2 + $0x60] sm:$0xff]
    %v5569 = vld [vmem:[%s2 + $0x68] sm:$0xff]
    %v5570 = vld [vmem:[%s2 + $0x70] sm:$0xff]
    %v5571 = vld [vmem:[%s2 + $0x78] sm:$0xff]
    %5573 = vset.pattern.permute.xlu0 0
    %5574 = vperm.xlu0 %5573, %v5556
    %v5575 = vpop.permute.xlu0 %5574
    %5578 = vset.pattern.permute.xlu0 0
    %5579 = vperm.xlu0 %5578, %v5557
    %v5580 = vpop.permute.xlu0 %5579
    %5583 = vset.pattern.permute.xlu0 0
    %5584 = vperm.xlu0 %5583, %v5558
    %v5585 = vpop.permute.xlu0 %5584
    %5588 = vset.pattern.permute.xlu0 0
    %5589 = vperm.xlu0 %5588, %v5559
    %v5590 = vpop.permute.xlu0 %5589
    %5593 = vset.pattern.permute.xlu0 0
    %5594 = vperm.xlu0 %5593, %v5560
    %v5595 = vpop.permute.xlu0 %5594
    %5598 = vset.pattern.permute.xlu0 0
    %5599 = vperm.xlu0 %5598, %v5561
    %v5600 = vpop.permute.xlu0 %5599
    %5603 = vset.pattern.permute.xlu0 0
    %5604 = vperm.xlu0 %5603, %v5562
    %v5605 = vpop.permute.xlu0 %5604
    %5608 = vset.pattern.permute.xlu0 0
    %5609 = vperm.xlu0 %5608, %v5563
    %v5610 = vpop.permute.xlu0 %5609
    %5613 = vset.pattern.permute.xlu0 0
    %5614 = vperm.xlu0 %5613, %v5564
    %v5615 = vpop.permute.xlu0 %5614
    %5618 = vset.pattern.permute.xlu0 0
    %5619 = vperm.xlu0 %5618, %v5565
    %v5620 = vpop.permute.xlu0 %5619
    %5623 = vset.pattern.permute.xlu0 0
    %5624 = vperm.xlu0 %5623, %v5566
    %v5625 = vpop.permute.xlu0 %5624
    %5628 = vset.pattern.permute.xlu0 0
    %5629 = vperm.xlu0 %5628, %v5567
    %v5630 = vpop.permute.xlu0 %5629
    %5633 = vset.pattern.permute.xlu0 0
    %5634 = vperm.xlu0 %5633, %v5568
    %v5635 = vpop.permute.xlu0 %5634
    %5638 = vset.pattern.permute.xlu0 0
    %5639 = vperm.xlu0 %5638, %v5569
    %v5640 = vpop.permute.xlu0 %5639
    %5643 = vset.pattern.permute.xlu0 0
    %5644 = vperm.xlu0 %5643, %v5570
    %v5645 = vpop.permute.xlu0 %5644
    %5648 = vset.pattern.permute.xlu0 0
    %5649 = vperm.xlu0 %5648, %v5571
    %v5650 = vpop.permute.xlu0 %5649
    %v5652 = vadd.f32 %v5428, %v5575
    %v5653 = vadd.f32 %v5429, %v5575
    %v5654 = vadd.f32 %v5430, %v5575
    %v5655 = vadd.f32 %v5431, %v5575
    %v5656 = vadd.f32 %v5432, %v5575
    %v5657 = vadd.f32 %v5433, %v5575
    %v5658 = vadd.f32 %v5434, %v5575
    %v5659 = vadd.f32 %v5435, %v5575
    %v5660 = vadd.f32 %v5436, %v5580
    %v5661 = vadd.f32 %v5437, %v5580
    %v5662 = vadd.f32 %v5438, %v5580
    %v5663 = vadd.f32 %v5439, %v5580
    %v5664 = vadd.f32 %v5440, %v5580
    %v5665 = vadd.f32 %v5441, %v5580
    %v5666 = vadd.f32 %v5442, %v5580
    %v5667 = vadd.f32 %v5443, %v5580
    %v5668 = vadd.f32 %v5444, %v5585
    %v5669 = vadd.f32 %v5445, %v5585
    %v5670 = vadd.f32 %v5446, %v5585
    %v5671 = vadd.f32 %v5447, %v5585
    %v5672 = vadd.f32 %v5448, %v5585
    %v5673 = vadd.f32 %v5449, %v5585
    %v5674 = vadd.f32 %v5450, %v5585
    %v5675 = vadd.f32 %v5451, %v5585
    %v5676 = vadd.f32 %v5452, %v5590
    %v5677 = vadd.f32 %v5453, %v5590
    %v5678 = vadd.f32 %v5454, %v5590
    %v5679 = vadd.f32 %v5455, %v5590
    %v5680 = vadd.f32 %v5456, %v5590
    %v5681 = vadd.f32 %v5457, %v5590
    %v5682 = vadd.f32 %v5458, %v5590
    %v5683 = vadd.f32 %v5459, %v5590
    %v5684 = vadd.f32 %v5460, %v5595
    %v5685 = vadd.f32 %v5461, %v5595
    %v5686 = vadd.f32 %v5462, %v5595
    %v5687 = vadd.f32 %v5463, %v5595
    %v5688 = vadd.f32 %v5464, %v5595
    %v5689 = vadd.f32 %v5465, %v5595
    %v5690 = vadd.f32 %v5466, %v5595
    %v5691 = vadd.f32 %v5467, %v5595
    %v5692 = vadd.f32 %v5468, %v5600
    %v5693 = vadd.f32 %v5469, %v5600
    %v5694 = vadd.f32 %v5470, %v5600
    %v5695 = vadd.f32 %v5471, %v5600
    %v5696 = vadd.f32 %v5472, %v5600
    %v5697 = vadd.f32 %v5473, %v5600
    %v5698 = vadd.f32 %v5474, %v5600
    %v5699 = vadd.f32 %v5475, %v5600
    %v5700 = vadd.f32 %v5476, %v5605
    %v5701 = vadd.f32 %v5477, %v5605
    %v5702 = vadd.f32 %v5478, %v5605
    %v5703 = vadd.f32 %v5479, %v5605
    %v5704 = vadd.f32 %v5480, %v5605
    %v5705 = vadd.f32 %v5481, %v5605
    %v5706 = vadd.f32 %v5482, %v5605
    %v5707 = vadd.f32 %v5483, %v5605
    %v5708 = vadd.f32 %v5484, %v5610
    %v5709 = vadd.f32 %v5485, %v5610
    %v5710 = vadd.f32 %v5486, %v5610
    %v5711 = vadd.f32 %v5487, %v5610
    %v5712 = vadd.f32 %v5488, %v5610
    %v5713 = vadd.f32 %v5489, %v5610
    %v5714 = vadd.f32 %v5490, %v5610
    %v5715 = vadd.f32 %v5491, %v5610
    %v5716 = vadd.f32 %v5492, %v5615
    %v5717 = vadd.f32 %v5493, %v5615
    %v5718 = vadd.f32 %v5494, %v5615
    %v5719 = vadd.f32 %v5495, %v5615
    %v5720 = vadd.f32 %v5496, %v5615
    %v5721 = vadd.f32 %v5497, %v5615
    %v5722 = vadd.f32 %v5498, %v5615
    %v5723 = vadd.f32 %v5499, %v5615
    %v5724 = vadd.f32 %v5500, %v5620
    %v5725 = vadd.f32 %v5501, %v5620
    %v5726 = vadd.f32 %v5502, %v5620
    %v5727 = vadd.f32 %v5503, %v5620
    %v5728 = vadd.f32 %v5504, %v5620
    %v5729 = vadd.f32 %v5505, %v5620
    %v5730 = vadd.f32 %v5506, %v5620
    %v5731 = vadd.f32 %v5507, %v5620
    %v5732 = vadd.f32 %v5508, %v5625
    %v5733 = vadd.f32 %v5509, %v5625
    %v5734 = vadd.f32 %v5510, %v5625
    %v5735 = vadd.f32 %v5511, %v5625
    %v5736 = vadd.f32 %v5512, %v5625
    %v5737 = vadd.f32 %v5513, %v5625
    %v5738 = vadd.f32 %v5514, %v5625
    %v5739 = vadd.f32 %v5515, %v5625
    %v5740 = vadd.f32 %v5516, %v5630
    %v5741 = vadd.f32 %v5517, %v5630
    %v5742 = vadd.f32 %v5518, %v5630
    %v5743 = vadd.f32 %v5519, %v5630
    %v5744 = vadd.f32 %v5520, %v5630
    %v5745 = vadd.f32 %v5521, %v5630
    %v5746 = vadd.f32 %v5522, %v5630
    %v5747 = vadd.f32 %v5523, %v5630
    %v5748 = vadd.f32 %v5524, %v5635
    %v5749 = vadd.f32 %v5525, %v5635
    %v5750 = vadd.f32 %v5526, %v5635
    %v5751 = vadd.f32 %v5527, %v5635
    %v5752 = vadd.f32 %v5528, %v5635
    %v5753 = vadd.f32 %v5529, %v5635
    %v5754 = vadd.f32 %v5530, %v5635
    %v5755 = vadd.f32 %v5531, %v5635
    %v5756 = vadd.f32 %v5532, %v5640
    %v5757 = vadd.f32 %v5533, %v5640
    %v5758 = vadd.f32 %v5534, %v5640
    %v5759 = vadd.f32 %v5535, %v5640
    %v5760 = vadd.f32 %v5536, %v5640
    %v5761 = vadd.f32 %v5537, %v5640
    %v5762 = vadd.f32 %v5538, %v5640
    %v5763 = vadd.f32 %v5539, %v5640
    %v5764 = vadd.f32 %v5540, %v5645
    %v5765 = vadd.f32 %v5541, %v5645
    %v5766 = vadd.f32 %v5542, %v5645
    %v5767 = vadd.f32 %v5543, %v5645
    %v5768 = vadd.f32 %v5544, %v5645
    %v5769 = vadd.f32 %v5545, %v5645
    %v5770 = vadd.f32 %v5546, %v5645
    %v5771 = vadd.f32 %v5547, %v5645
    %v5772 = vadd.f32 %v5548, %v5650
    %v5773 = vadd.f32 %v5549, %v5650
    %v5774 = vadd.f32 %v5550, %v5650
    %v5775 = vadd.f32 %v5551, %v5650
    %v5776 = vadd.f32 %v5552, %v5650
    %v5777 = vadd.f32 %v5553, %v5650
    %v5778 = vadd.f32 %v5554, %v5650
    %v5779 = vadd.f32 %v5555, %v5650
    %v5780 = vmul.f32 %v5652, 50.0
    %v5781 = vmul.f32 %v5653, 50.0
    %v5782 = vmul.f32 %v5654, 50.0
    %v5783 = vmul.f32 %v5655, 50.0
    %v5784 = vmul.f32 %v5656, 50.0
    %v5785 = vmul.f32 %v5657, 50.0
    %v5786 = vmul.f32 %v5658, 50.0
    %v5787 = vmul.f32 %v5659, 50.0
    %v5788 = vmul.f32 %v5660, 50.0
    %v5789 = vmul.f32 %v5661, 50.0
    %v5790 = vmul.f32 %v5662, 50.0
    %v5791 = vmul.f32 %v5663, 50.0
    %v5792 = vmul.f32 %v5664, 50.0
    %v5793 = vmul.f32 %v5665, 50.0
    %v5794 = vmul.f32 %v5666, 50.0
    %v5795 = vmul.f32 %v5667, 50.0
    %v5796 = vmul.f32 %v5668, 50.0
    %v5797 = vmul.f32 %v5669, 50.0
    %v5798 = vmul.f32 %v5670, 50.0
    %v5799 = vmul.f32 %v5671, 50.0
    %v5800 = vmul.f32 %v5672, 50.0
    %v5801 = vmul.f32 %v5673, 50.0
    %v5802 = vmul.f32 %v5674, 50.0
    %v5803 = vmul.f32 %v5675, 50.0
    %v5804 = vmul.f32 %v5676, 50.0
    %v5805 = vmul.f32 %v5677, 50.0
    %v5806 = vmul.f32 %v5678, 50.0
    %v5807 = vmul.f32 %v5679, 50.0
    %v5808 = vmul.f32 %v5680, 50.0
    %v5809 = vmul.f32 %v5681, 50.0
    %v5810 = vmul.f32 %v5682, 50.0
    %v5811 = vmul.f32 %v5683, 50.0
    %v5812 = vmul.f32 %v5684, 50.0
    %v5813 = vmul.f32 %v5685, 50.0
    %v5814 = vmul.f32 %v5686, 50.0
    %v5815 = vmul.f32 %v5687, 50.0
    %v5816 = vmul.f32 %v5688, 50.0
    %v5817 = vmul.f32 %v5689, 50.0
    %v5818 = vmul.f32 %v5690, 50.0
    %v5819 = vmul.f32 %v5691, 50.0
    %v5820 = vmul.f32 %v5692, 50.0
    %v5821 = vmul.f32 %v5693, 50.0
    %v5822 = vmul.f32 %v5694, 50.0
    %v5823 = vmul.f32 %v5695, 50.0
    %v5824 = vmul.f32 %v5696, 50.0
    %v5825 = vmul.f32 %v5697, 50.0
    %v5826 = vmul.f32 %v5698, 50.0
    %v5827 = vmul.f32 %v5699, 50.0
    %v5828 = vmul.f32 %v5700, 50.0
    %v5829 = vmul.f32 %v5701, 50.0
    %v5830 = vmul.f32 %v5702, 50.0
    %v5831 = vmul.f32 %v5703, 50.0
    %v5832 = vmul.f32 %v5704, 50.0
    %v5833 = vmul.f32 %v5705, 50.0
    %v5834 = vmul.f32 %v5706, 50.0
    %v5835 = vmul.f32 %v5707, 50.0
    %v5836 = vmul.f32 %v5708, 50.0
    %v5837 = vmul.f32 %v5709, 50.0
    %v5838 = vmul.f32 %v5710, 50.0
    %v5839 = vmul.f32 %v5711, 50.0
    %v5840 = vmul.f32 %v5712, 50.0
    %v5841 = vmul.f32 %v5713, 50.0
    %v5842 = vmul.f32 %v5714, 50.0
    %v5843 = vmul.f32 %v5715, 50.0
    %v5844 = vmul.f32 %v5716, 50.0
    %v5845 = vmul.f32 %v5717, 50.0
    %v5846 = vmul.f32 %v5718, 50.0
    %v5847 = vmul.f32 %v5719, 50.0
    %v5848 = vmul.f32 %v5720, 50.0
    %v5849 = vmul.f32 %v5721, 50.0
    %v5850 = vmul.f32 %v5722, 50.0
    %v5851 = vmul.f32 %v5723, 50.0
    %v5852 = vmul.f32 %v5724, 50.0
    %v5853 = vmul.f32 %v5725, 50.0
    %v5854 = vmul.f32 %v5726, 50.0
    %v5855 = vmul.f32 %v5727, 50.0
    %v5856 = vmul.f32 %v5728, 50.0
    %v5857 = vmul.f32 %v5729, 50.0
    %v5858 = vmul.f32 %v5730, 50.0
    %v5859 = vmul.f32 %v5731, 50.0
    %v5860 = vmul.f32 %v5732, 50.0
    %v5861 = vmul.f32 %v5733, 50.0
    %v5862 = vmul.f32 %v5734, 50.0
    %v5863 = vmul.f32 %v5735, 50.0
    %v5864 = vmul.f32 %v5736, 50.0
    %v5865 = vmul.f32 %v5737, 50.0
    %v5866 = vmul.f32 %v5738, 50.0
    %v5867 = vmul.f32 %v5739, 50.0
    %v5868 = vmul.f32 %v5740, 50.0
    %v5869 = vmul.f32 %v5741, 50.0
    %v5870 = vmul.f32 %v5742, 50.0
    %v5871 = vmul.f32 %v5743, 50.0
    %v5872 = vmul.f32 %v5744, 50.0
    %v5873 = vmul.f32 %v5745, 50.0
    %v5874 = vmul.f32 %v5746, 50.0
    %v5875 = vmul.f32 %v5747, 50.0
    %v5876 = vmul.f32 %v5748, 50.0
    %v5877 = vmul.f32 %v5749, 50.0
    %v5878 = vmul.f32 %v5750, 50.0
    %v5879 = vmul.f32 %v5751, 50.0
    %v5880 = vmul.f32 %v5752, 50.0
    %v5881 = vmul.f32 %v5753, 50.0
    %v5882 = vmul.f32 %v5754, 50.0
    %v5883 = vmul.f32 %v5755, 50.0
    %v5884 = vmul.f32 %v5756, 50.0
    %v5885 = vmul.f32 %v5757, 50.0
    %v5886 = vmul.f32 %v5758, 50.0
    %v5887 = vmul.f32 %v5759, 50.0
    %v5888 = vmul.f32 %v5760, 50.0
    %v5889 = vmul.f32 %v5761, 50.0
    %v5890 = vmul.f32 %v5762, 50.0
    %v5891 = vmul.f32 %v5763, 50.0
    %v5892 = vmul.f32 %v5764, 50.0
    %v5893 = vmul.f32 %v5765, 50.0
    %v5894 = vmul.f32 %v5766, 50.0
    %v5895 = vmul.f32 %v5767, 50.0
    %v5896 = vmul.f32 %v5768, 50.0
    %v5897 = vmul.f32 %v5769, 50.0
    %v5898 = vmul.f32 %v5770, 50.0
    %v5899 = vmul.f32 %v5771, 50.0
    %v5900 = vmul.f32 %v5772, 50.0
    %v5901 = vmul.f32 %v5773, 50.0
    %v5902 = vmul.f32 %v5774, 50.0
    %v5903 = vmul.f32 %v5775, 50.0
    %v5904 = vmul.f32 %v5776, 50.0
    %v5905 = vmul.f32 %v5777, 50.0
    %v5906 = vmul.f32 %v5778, 50.0
    %v5907 = vmul.f32 %v5779, 50.0
    %v5908 = vmin.f32 %v5780, 20.0
    %v5909 = vmin.f32 %v5781, 20.0
    %v5910 = vmin.f32 %v5782, 20.0
    %v5911 = vmin.f32 %v5783, 20.0
    %v5912 = vmin.f32 %v5784, 20.0
    %v5913 = vmin.f32 %v5785, 20.0
    %v5914 = vmin.f32 %v5786, 20.0
    %v5915 = vmin.f32 %v5787, 20.0
    %v5916 = vmin.f32 %v5788, 20.0
    %v5917 = vmin.f32 %v5789, 20.0
    %v5918 = vmin.f32 %v5790, 20.0
    %v5919 = vmin.f32 %v5791, 20.0
    %v5920 = vmin.f32 %v5792, 20.0
    %v5921 = vmin.f32 %v5793, 20.0
    %v5922 = vmin.f32 %v5794, 20.0
    %v5923 = vmin.f32 %v5795, 20.0
    %v5924 = vmin.f32 %v5796, 20.0
    %v5925 = vmin.f32 %v5797, 20.0
    %v5926 = vmin.f32 %v5798, 20.0
    %v5927 = vmin.f32 %v5799, 20.0
    %v5928 = vmin.f32 %v5800, 20.0
    %v5929 = vmin.f32 %v5801, 20.0
    %v5930 = vmin.f32 %v5802, 20.0
    %v5931 = vmin.f32 %v5803, 20.0
    %v5932 = vmin.f32 %v5804, 20.0
    %v5933 = vmin.f32 %v5805, 20.0
    %v5934 = vmin.f32 %v5806, 20.0
    %v5935 = vmin.f32 %v5807, 20.0
    %v5936 = vmin.f32 %v5808, 20.0
    %v5937 = vmin.f32 %v5809, 20.0
    %v5938 = vmin.f32 %v5810, 20.0
    %v5939 = vmin.f32 %v5811, 20.0
    %v5940 = vmin.f32 %v5812, 20.0
    %v5941 = vmin.f32 %v5813, 20.0
    %v5942 = vmin.f32 %v5814, 20.0
    %v5943 = vmin.f32 %v5815, 20.0
    %v5944 = vmin.f32 %v5816, 20.0
    %v5945 = vmin.f32 %v5817, 20.0
    %v5946 = vmin.f32 %v5818, 20.0
    %v5947 = vmin.f32 %v5819, 20.0
    %v5948 = vmin.f32 %v5820, 20.0
    %v5949 = vmin.f32 %v5821, 20.0
    %v5950 = vmin.f32 %v5822, 20.0
    %v5951 = vmin.f32 %v5823, 20.0
    %v5952 = vmin.f32 %v5824, 20.0
    %v5953 = vmin.f32 %v5825, 20.0
    %v5954 = vmin.f32 %v5826, 20.0
    %v5955 = vmin.f32 %v5827, 20.0
    %v5956 = vmin.f32 %v5828, 20.0
    %v5957 = vmin.f32 %v5829, 20.0
    %v5958 = vmin.f32 %v5830, 20.0
    %v5959 = vmin.f32 %v5831, 20.0
    %v5960 = vmin.f32 %v5832, 20.0
    %v5961 = vmin.f32 %v5833, 20.0
    %v5962 = vmin.f32 %v5834, 20.0
    %v5963 = vmin.f32 %v5835, 20.0
    %v5964 = vmin.f32 %v5836, 20.0
    %v5965 = vmin.f32 %v5837, 20.0
    %v5966 = vmin.f32 %v5838, 20.0
    %v5967 = vmin.f32 %v5839, 20.0
    %v5968 = vmin.f32 %v5840, 20.0
    %v5969 = vmin.f32 %v5841, 20.0
    %v5970 = vmin.f32 %v5842, 20.0
    %v5971 = vmin.f32 %v5843, 20.0
    %v5972 = vmin.f32 %v5844, 20.0
    %v5973 = vmin.f32 %v5845, 20.0
    %v5974 = vmin.f32 %v5846, 20.0
    %v5975 = vmin.f32 %v5847, 20.0
    %v5976 = vmin.f32 %v5848, 20.0
    %v5977 = vmin.f32 %v5849, 20.0
    %v5978 = vmin.f32 %v5850, 20.0
    %v5979 = vmin.f32 %v5851, 20.0
    %v5980 = vmin.f32 %v5852, 20.0
    %v5981 = vmin.f32 %v5853, 20.0
    %v5982 = vmin.f32 %v5854, 20.0
    %v5983 = vmin.f32 %v5855, 20.0
    %v5984 = vmin.f32 %v5856, 20.0
    %v5985 = vmin.f32 %v5857, 20.0
    %v5986 = vmin.f32 %v5858, 20.0
    %v5987 = vmin.f32 %v5859, 20.0
    %v5988 = vmin.f32 %v5860, 20.0
    %v5989 = vmin.f32 %v5861, 20.0
    %v5990 = vmin.f32 %v5862, 20.0
    %v5991 = vmin.f32 %v5863, 20.0
    %v5992 = vmin.f32 %v5864, 20.0
    %v5993 = vmin.f32 %v5865, 20.0
    %v5994 = vmin.f32 %v5866, 20.0
    %v5995 = vmin.f32 %v5867, 20.0
    %v5996 = vmin.f32 %v5868, 20.0
    %v5997 = vmin.f32 %v5869, 20.0
    %v5998 = vmin.f32 %v5870, 20.0
    %v5999 = vmin.f32 %v5871, 20.0
    %v6000 = vmin.f32 %v5872, 20.0
    %v6001 = vmin.f32 %v5873, 20.0
    %v6002 = vmin.f32 %v5874, 20.0
    %v6003 = vmin.f32 %v5875, 20.0
    %v6004 = vmin.f32 %v5876, 20.0
    %v6005 = vmin.f32 %v5877, 20.0
    %v6006 = vmin.f32 %v5878, 20.0
    %v6007 = vmin.f32 %v5879, 20.0
    %v6008 = vmin.f32 %v5880, 20.0
    %v6009 = vmin.f32 %v5881, 20.0
    %v6010 = vmin.f32 %v5882, 20.0
    %v6011 = vmin.f32 %v5883, 20.0
    %v6012 = vmin.f32 %v5884, 20.0
    %v6013 = vmin.f32 %v5885, 20.0
    %v6014 = vmin.f32 %v5886, 20.0
    %v6015 = vmin.f32 %v5887, 20.0
    %v6016 = vmin.f32 %v5888, 20.0
    %v6017 = vmin.f32 %v5889, 20.0
    %v6018 = vmin.f32 %v5890, 20.0
    %v6019 = vmin.f32 %v5891, 20.0
    %v6020 = vmin.f32 %v5892, 20.0
    %v6021 = vmin.f32 %v5893, 20.0
    %v6022 = vmin.f32 %v5894, 20.0
    %v6023 = vmin.f32 %v5895, 20.0
    %v6024 = vmin.f32 %v5896, 20.0
    %v6025 = vmin.f32 %v5897, 20.0
    %v6026 = vmin.f32 %v5898, 20.0
    %v6027 = vmin.f32 %v5899, 20.0
    %v6028 = vmin.f32 %v5900, 20.0
    %v6029 = vmin.f32 %v5901, 20.0
    %v6030 = vmin.f32 %v5902, 20.0
    %v6031 = vmin.f32 %v5903, 20.0
    %v6032 = vmin.f32 %v5904, 20.0
    %v6033 = vmin.f32 %v5905, 20.0
    %v6034 = vmin.f32 %v5906, 20.0
    %v6035 = vmin.f32 %v5907, 20.0
    %vm6036 = vcmp.gt.f32.partialorder %v5780, 20.0
    %vm6037 = vcmp.gt.f32.partialorder %v5781, 20.0
    %vm6038 = vcmp.gt.f32.partialorder %v5782, 20.0
    %vm6039 = vcmp.gt.f32.partialorder %v5783, 20.0
    %vm6040 = vcmp.gt.f32.partialorder %v5784, 20.0
    %vm6041 = vcmp.gt.f32.partialorder %v5785, 20.0
    %vm6042 = vcmp.gt.f32.partialorder %v5786, 20.0
    %vm6043 = vcmp.gt.f32.partialorder %v5787, 20.0
    %vm6044 = vcmp.gt.f32.partialorder %v5788, 20.0
    %vm6045 = vcmp.gt.f32.partialorder %v5789, 20.0
    %vm6046 = vcmp.gt.f32.partialorder %v5790, 20.0
    %vm6047 = vcmp.gt.f32.partialorder %v5791, 20.0
    %vm6048 = vcmp.gt.f32.partialorder %v5792, 20.0
    %vm6049 = vcmp.gt.f32.partialorder %v5793, 20.0
    %vm6050 = vcmp.gt.f32.partialorder %v5794, 20.0
    %vm6051 = vcmp.gt.f32.partialorder %v5795, 20.0
    %vm6052 = vcmp.gt.f32.partialorder %v5796, 20.0
    %vm6053 = vcmp.gt.f32.partialorder %v5797, 20.0
    %vm6054 = vcmp.gt.f32.partialorder %v5798, 20.0
    %vm6055 = vcmp.gt.f32.partialorder %v5799, 20.0
    %vm6056 = vcmp.gt.f32.partialorder %v5800, 20.0
    %vm6057 = vcmp.gt.f32.partialorder %v5801, 20.0
    %vm6058 = vcmp.gt.f32.partialorder %v5802, 20.0
    %vm6059 = vcmp.gt.f32.partialorder %v5803, 20.0
    %vm6060 = vcmp.gt.f32.partialorder %v5804, 20.0
    %vm6061 = vcmp.gt.f32.partialorder %v5805, 20.0
    %vm6062 = vcmp.gt.f32.partialorder %v5806, 20.0
    %vm6063 = vcmp.gt.f32.partialorder %v5807, 20.0
    %vm6064 = vcmp.gt.f32.partialorder %v5808, 20.0
    %vm6065 = vcmp.gt.f32.partialorder %v5809, 20.0
    %vm6066 = vcmp.gt.f32.partialorder %v5810, 20.0
    %vm6067 = vcmp.gt.f32.partialorder %v5811, 20.0
    %vm6068 = vcmp.gt.f32.partialorder %v5812, 20.0
    %vm6069 = vcmp.gt.f32.partialorder %v5813, 20.0
    %vm6070 = vcmp.gt.f32.partialorder %v5814, 20.0
    %vm6071 = vcmp.gt.f32.partialorder %v5815, 20.0
    %vm6072 = vcmp.gt.f32.partialorder %v5816, 20.0
    %vm6073 = vcmp.gt.f32.partialorder %v5817, 20.0
    %vm6074 = vcmp.gt.f32.partialorder %v5818, 20.0
    %vm6075 = vcmp.gt.f32.partialorder %v5819, 20.0
    %vm6076 = vcmp.gt.f32.partialorder %v5820, 20.0
    %vm6077 = vcmp.gt.f32.partialorder %v5821, 20.0
    %vm6078 = vcmp.gt.f32.partialorder %v5822, 20.0
    %vm6079 = vcmp.gt.f32.partialorder %v5823, 20.0
    %vm6080 = vcmp.gt.f32.partialorder %v5824, 20.0
    %vm6081 = vcmp.gt.f32.partialorder %v5825, 20.0
    %vm6082 = vcmp.gt.f32.partialorder %v5826, 20.0
    %vm6083 = vcmp.gt.f32.partialorder %v5827, 20.0
    %vm6084 = vcmp.gt.f32.partialorder %v5828, 20.0
    %vm6085 = vcmp.gt.f32.partialorder %v5829, 20.0
    %vm6086 = vcmp.gt.f32.partialorder %v5830, 20.0
    %vm6087 = vcmp.gt.f32.partialorder %v5831, 20.0
    %vm6088 = vcmp.gt.f32.partialorder %v5832, 20.0
    %vm6089 = vcmp.gt.f32.partialorder %v5833, 20.0
    %vm6090 = vcmp.gt.f32.partialorder %v5834, 20.0
    %vm6091 = vcmp.gt.f32.partialorder %v5835, 20.0
    %vm6092 = vcmp.gt.f32.partialorder %v5836, 20.0
    %vm6093 = vcmp.gt.f32.partialorder %v5837, 20.0
    %vm6094 = vcmp.gt.f32.partialorder %v5838, 20.0
    %vm6095 = vcmp.gt.f32.partialorder %v5839, 20.0
    %vm6096 = vcmp.gt.f32.partialorder %v5840, 20.0
    %vm6097 = vcmp.gt.f32.partialorder %v5841, 20.0
    %vm6098 = vcmp.gt.f32.partialorder %v5842, 20.0
    %vm6099 = vcmp.gt.f32.partialorder %v5843, 20.0
    %vm6100 = vcmp.gt.f32.partialorder %v5844, 20.0
    %vm6101 = vcmp.gt.f32.partialorder %v5845, 20.0
    %vm6102 = vcmp.gt.f32.partialorder %v5846, 20.0
    %vm6103 = vcmp.gt.f32.partialorder %v5847, 20.0
    %vm6104 = vcmp.gt.f32.partialorder %v5848, 20.0
    %vm6105 = vcmp.gt.f32.partialorder %v5849, 20.0
    %vm6106 = vcmp.gt.f32.partialorder %v5850, 20.0
    %vm6107 = vcmp.gt.f32.partialorder %v5851, 20.0
    %vm6108 = vcmp.gt.f32.partialorder %v5852, 20.0
    %vm6109 = vcmp.gt.f32.partialorder %v5853, 20.0
    %vm6110 = vcmp.gt.f32.partialorder %v5854, 20.0
    %vm6111 = vcmp.gt.f32.partialorder %v5855, 20.0
    %vm6112 = vcmp.gt.f32.partialorder %v5856, 20.0
    %vm6113 = vcmp.gt.f32.partialorder %v5857, 20.0
    %vm6114 = vcmp.gt.f32.partialorder %v5858, 20.0
    %vm6115 = vcmp.gt.f32.partialorder %v5859, 20.0
    %vm6116 = vcmp.gt.f32.partialorder %v5860, 20.0
    %vm6117 = vcmp.gt.f32.partialorder %v5861, 20.0
    %vm6118 = vcmp.gt.f32.partialorder %v5862, 20.0
    %vm6119 = vcmp.gt.f32.partialorder %v5863, 20.0
    %vm6120 = vcmp.gt.f32.partialorder %v5864, 20.0
    %vm6121 = vcmp.gt.f32.partialorder %v5865, 20.0
    %vm6122 = vcmp.gt.f32.partialorder %v5866, 20.0
    %vm6123 = vcmp.gt.f32.partialorder %v5867, 20.0
    %vm6124 = vcmp.gt.f32.partialorder %v5868, 20.0
    %vm6125 = vcmp.gt.f32.partialorder %v5869, 20.0
    %vm6126 = vcmp.gt.f32.partialorder %v5870, 20.0
    %vm6127 = vcmp.gt.f32.partialorder %v5871, 20.0
    %vm6128 = vcmp.gt.f32.partialorder %v5872, 20.0
    %vm6129 = vcmp.gt.f32.partialorder %v5873, 20.0
    %vm6130 = vcmp.gt.f32.partialorder %v5874, 20.0
    %vm6131 = vcmp.gt.f32.partialorder %v5875, 20.0
    %vm6132 = vcmp.gt.f32.partialorder %v5876, 20.0
    %vm6133 = vcmp.gt.f32.partialorder %v5877, 20.0
    %vm6134 = vcmp.gt.f32.partialorder %v5878, 20.0
    %vm6135 = vcmp.gt.f32.partialorder %v5879, 20.0
    %vm6136 = vcmp.gt.f32.partialorder %v5880, 20.0
    %vm6137 = vcmp.gt.f32.partialorder %v5881, 20.0
    %vm6138 = vcmp.gt.f32.partialorder %v5882, 20.0
    %vm6139 = vcmp.gt.f32.partialorder %v5883, 20.0
    %vm6140 = vcmp.gt.f32.partialorder %v5884, 20.0
    %vm6141 = vcmp.gt.f32.partialorder %v5885, 20.0
    %vm6142 = vcmp.gt.f32.partialorder %v5886, 20.0
    %vm6143 = vcmp.gt.f32.partialorder %v5887, 20.0
    %vm6144 = vcmp.gt.f32.partialorder %v5888, 20.0
    %vm6145 = vcmp.gt.f32.partialorder %v5889, 20.0
    %vm6146 = vcmp.gt.f32.partialorder %v5890, 20.0
    %vm6147 = vcmp.gt.f32.partialorder %v5891, 20.0
    %vm6148 = vcmp.gt.f32.partialorder %v5892, 20.0
    %vm6149 = vcmp.gt.f32.partialorder %v5893, 20.0
    %vm6150 = vcmp.gt.f32.partialorder %v5894, 20.0
    %vm6151 = vcmp.gt.f32.partialorder %v5895, 20.0
    %vm6152 = vcmp.gt.f32.partialorder %v5896, 20.0
    %vm6153 = vcmp.gt.f32.partialorder %v5897, 20.0
    %vm6154 = vcmp.gt.f32.partialorder %v5898, 20.0
    %vm6155 = vcmp.gt.f32.partialorder %v5899, 20.0
    %vm6156 = vcmp.gt.f32.partialorder %v5900, 20.0
    %vm6157 = vcmp.gt.f32.partialorder %v5901, 20.0
    %vm6158 = vcmp.gt.f32.partialorder %v5902, 20.0
    %vm6159 = vcmp.gt.f32.partialorder %v5903, 20.0
    %vm6160 = vcmp.gt.f32.partialorder %v5904, 20.0
    %vm6161 = vcmp.gt.f32.partialorder %v5905, 20.0
    %vm6162 = vcmp.gt.f32.partialorder %v5906, 20.0
    %vm6163 = vcmp.gt.f32.partialorder %v5907, 20.0
    %v6164 = vmul.f32 %v5908, 1.442695
    %v6165 = vpow.pop %v6164
    %v6166 = vmul.f32 %v5909, 1.442695
    %v6167 = vpow.pop %v6166
    %v6168 = vmul.f32 %v5910, 1.442695
    %v6169 = vpow.pop %v6168
    %v6170 = vmul.f32 %v5911, 1.442695
    %v6171 = vpow.pop %v6170
    %v6172 = vmul.f32 %v5912, 1.442695
    %v6173 = vpow.pop %v6172
    %v6174 = vmul.f32 %v5913, 1.442695
    %v6175 = vpow.pop %v6174
    %v6176 = vmul.f32 %v5914, 1.442695
    %v6177 = vpow.pop %v6176
    %v6178 = vmul.f32 %v5915, 1.442695
    %v6179 = vpow.pop %v6178
    %v6180 = vmul.f32 %v5916, 1.442695
    %v6181 = vpow.pop %v6180
    %v6182 = vmul.f32 %v5917, 1.442695
    %v6183 = vpow.pop %v6182
    %v6184 = vmul.f32 %v5918, 1.442695
    %v6185 = vpow.pop %v6184
    %v6186 = vmul.f32 %v5919, 1.442695
    %v6187 = vpow.pop %v6186
    %v6188 = vmul.f32 %v5920, 1.442695
    %v6189 = vpow.pop %v6188
    %v6190 = vmul.f32 %v5921, 1.442695
    %v6191 = vpow.pop %v6190
    %v6192 = vmul.f32 %v5922, 1.442695
    %v6193 = vpow.pop %v6192
    %v6194 = vmul.f32 %v5923, 1.442695
    %v6195 = vpow.pop %v6194
    %v6196 = vmul.f32 %v5924, 1.442695
    %v6197 = vpow.pop %v6196
    %v6198 = vmul.f32 %v5925, 1.442695
    %v6199 = vpow.pop %v6198
    %v6200 = vmul.f32 %v5926, 1.442695
    %v6201 = vpow.pop %v6200
    %v6202 = vmul.f32 %v5927, 1.442695
    %v6203 = vpow.pop %v6202
    %v6204 = vmul.f32 %v5928, 1.442695
    %v6205 = vpow.pop %v6204
    %v6206 = vmul.f32 %v5929, 1.442695
    %v6207 = vpow.pop %v6206
    %v6208 = vmul.f32 %v5930, 1.442695
    %v6209 = vpow.pop %v6208
    %v6210 = vmul.f32 %v5931, 1.442695
    %v6211 = vpow.pop %v6210
    %v6212 = vmul.f32 %v5932, 1.442695
    %v6213 = vpow.pop %v6212
    %v6214 = vmul.f32 %v5933, 1.442695
    %v6215 = vpow.pop %v6214
    %v6216 = vmul.f32 %v5934, 1.442695
    %v6217 = vpow.pop %v6216
    %v6218 = vmul.f32 %v5935, 1.442695
    %v6219 = vpow.pop %v6218
    %v6220 = vmul.f32 %v5936, 1.442695
    %v6221 = vpow.pop %v6220
    %v6222 = vmul.f32 %v5937, 1.442695
    %v6223 = vpow.pop %v6222
    %v6224 = vmul.f32 %v5938, 1.442695
    %v6225 = vpow.pop %v6224
    %v6226 = vmul.f32 %v5939, 1.442695
    %v6227 = vpow.pop %v6226
    %v6228 = vmul.f32 %v5940, 1.442695
    %v6229 = vpow.pop %v6228
    %v6230 = vmul.f32 %v5941, 1.442695
    %v6231 = vpow.pop %v6230
    %v6232 = vmul.f32 %v5942, 1.442695
    %v6233 = vpow.pop %v6232
    %v6234 = vmul.f32 %v5943, 1.442695
    %v6235 = vpow.pop %v6234
    %v6236 = vmul.f32 %v5944, 1.442695
    %v6237 = vpow.pop %v6236
    %v6238 = vmul.f32 %v5945, 1.442695
    %v6239 = vpow.pop %v6238
    %v6240 = vmul.f32 %v5946, 1.442695
    %v6241 = vpow.pop %v6240
    %v6242 = vmul.f32 %v5947, 1.442695
    %v6243 = vpow.pop %v6242
    %v6244 = vmul.f32 %v5948, 1.442695
    %v6245 = vpow.pop %v6244
    %v6246 = vmul.f32 %v5949, 1.442695
    %v6247 = vpow.pop %v6246
    %v6248 = vmul.f32 %v5950, 1.442695
    %v6249 = vpow.pop %v6248
    %v6250 = vmul.f32 %v5951, 1.442695
    %v6251 = vpow.pop %v6250
    %v6252 = vmul.f32 %v5952, 1.442695
    %v6253 = vpow.pop %v6252
    %v6254 = vmul.f32 %v5953, 1.442695
    %v6255 = vpow.pop %v6254
    %v6256 = vmul.f32 %v5954, 1.442695
    %v6257 = vpow.pop %v6256
    %v6258 = vmul.f32 %v5955, 1.442695
    %v6259 = vpow.pop %v6258
    %v6260 = vmul.f32 %v5956, 1.442695
    %v6261 = vpow.pop %v6260
    %v6262 = vmul.f32 %v5957, 1.442695
    %v6263 = vpow.pop %v6262
    %v6264 = vmul.f32 %v5958, 1.442695
    %v6265 = vpow.pop %v6264
    %v6266 = vmul.f32 %v5959, 1.442695
    %v6267 = vpow.pop %v6266
    %v6268 = vmul.f32 %v5960, 1.442695
    %v6269 = vpow.pop %v6268
    %v6270 = vmul.f32 %v5961, 1.442695
    %v6271 = vpow.pop %v6270
    %v6272 = vmul.f32 %v5962, 1.442695
    %v6273 = vpow.pop %v6272
    %v6274 = vmul.f32 %v5963, 1.442695
    %v6275 = vpow.pop %v6274
    %v6276 = vmul.f32 %v5964, 1.442695
    %v6277 = vpow.pop %v6276
    %v6278 = vmul.f32 %v5965, 1.442695
    %v6279 = vpow.pop %v6278
    %v6280 = vmul.f32 %v5966, 1.442695
    %v6281 = vpow.pop %v6280
    %v6282 = vmul.f32 %v5967, 1.442695
    %v6283 = vpow.pop %v6282
    %v6284 = vmul.f32 %v5968, 1.442695
    %v6285 = vpow.pop %v6284
    %v6286 = vmul.f32 %v5969, 1.442695
    %v6287 = vpow.pop %v6286
    %v6288 = vmul.f32 %v5970, 1.442695
    %v6289 = vpow.pop %v6288
    %v6290 = vmul.f32 %v5971, 1.442695
    %v6291 = vpow.pop %v6290
    %v6292 = vmul.f32 %v5972, 1.442695
    %v6293 = vpow.pop %v6292
    %v6294 = vmul.f32 %v5973, 1.442695
    %v6295 = vpow.pop %v6294
    %v6296 = vmul.f32 %v5974, 1.442695
    %v6297 = vpow.pop %v6296
    %v6298 = vmul.f32 %v5975, 1.442695
    %v6299 = vpow.pop %v6298
    %v6300 = vmul.f32 %v5976, 1.442695
    %v6301 = vpow.pop %v6300
    %v6302 = vmul.f32 %v5977, 1.442695
    %v6303 = vpow.pop %v6302
    %v6304 = vmul.f32 %v5978, 1.442695
    %v6305 = vpow.pop %v6304
    %v6306 = vmul.f32 %v5979, 1.442695
    %v6307 = vpow.pop %v6306
    %v6308 = vmul.f32 %v5980, 1.442695
    %v6309 = vpow.pop %v6308
    %v6310 = vmul.f32 %v5981, 1.442695
    %v6311 = vpow.pop %v6310
    %v6312 = vmul.f32 %v5982, 1.442695
    %v6313 = vpow.pop %v6312
    %v6314 = vmul.f32 %v5983, 1.442695
    %v6315 = vpow.pop %v6314
    %v6316 = vmul.f32 %v5984, 1.442695
    %v6317 = vpow.pop %v6316
    %v6318 = vmul.f32 %v5985, 1.442695
    %v6319 = vpow.pop %v6318
    %v6320 = vmul.f32 %v5986, 1.442695
    %v6321 = vpow.pop %v6320
    %v6322 = vmul.f32 %v5987, 1.442695
    %v6323 = vpow.pop %v6322
    %v6324 = vmul.f32 %v5988, 1.442695
    %v6325 = vpow.pop %v6324
    %v6326 = vmul.f32 %v5989, 1.442695
    %v6327 = vpow.pop %v6326
    %v6328 = vmul.f32 %v5990, 1.442695
    %v6329 = vpow.pop %v6328
    %v6330 = vmul.f32 %v5991, 1.442695
    %v6331 = vpow.pop %v6330
    %v6332 = vmul.f32 %v5992, 1.442695
    %v6333 = vpow.pop %v6332
    %v6334 = vmul.f32 %v5993, 1.442695
    %v6335 = vpow.pop %v6334
    %v6336 = vmul.f32 %v5994, 1.442695
    %v6337 = vpow.pop %v6336
    %v6338 = vmul.f32 %v5995, 1.442695
    %v6339 = vpow.pop %v6338
    %v6340 = vmul.f32 %v5996, 1.442695
    %v6341 = vpow.pop %v6340
    %v6342 = vmul.f32 %v5997, 1.442695
    %v6343 = vpow.pop %v6342
    %v6344 = vmul.f32 %v5998, 1.442695
    %v6345 = vpow.pop %v6344
    %v6346 = vmul.f32 %v5999, 1.442695
    %v6347 = vpow.pop %v6346
    %v6348 = vmul.f32 %v6000, 1.442695
    %v6349 = vpow.pop %v6348
    %v6350 = vmul.f32 %v6001, 1.442695
    %v6351 = vpow.pop %v6350
    %v6352 = vmul.f32 %v6002, 1.442695
    %v6353 = vpow.pop %v6352
    %v6354 = vmul.f32 %v6003, 1.442695
    %v6355 = vpow.pop %v6354
    %v6356 = vmul.f32 %v6004, 1.442695
    %v6357 = vpow.pop %v6356
    %v6358 = vmul.f32 %v6005, 1.442695
    %v6359 = vpow.pop %v6358
    %v6360 = vmul.f32 %v6006, 1.442695
    %v6361 = vpow.pop %v6360
    %v6362 = vmul.f32 %v6007, 1.442695
    %v6363 = vpow.pop %v6362
    %v6364 = vmul.f32 %v6008, 1.442695
    %v6365 = vpow.pop %v6364
    %v6366 = vmul.f32 %v6009, 1.442695
    %v6367 = vpow.pop %v6366
    %v6368 = vmul.f32 %v6010, 1.442695
    %v6369 = vpow.pop %v6368
    %v6370 = vmul.f32 %v6011, 1.442695
    %v6371 = vpow.pop %v6370
    %v6372 = vmul.f32 %v6012, 1.442695
    %v6373 = vpow.pop %v6372
    %v6374 = vmul.f32 %v6013, 1.442695
    %v6375 = vpow.pop %v6374
    %v6376 = vmul.f32 %v6014, 1.442695
    %v6377 = vpow.pop %v6376
    %v6378 = vmul.f32 %v6015, 1.442695
    %v6379 = vpow.pop %v6378
    %v6380 = vmul.f32 %v6016, 1.442695
    %v6381 = vpow.pop %v6380
    %v6382 = vmul.f32 %v6017, 1.442695
    %v6383 = vpow.pop %v6382
    %v6384 = vmul.f32 %v6018, 1.442695
    %v6385 = vpow.pop %v6384
    %v6386 = vmul.f32 %v6019, 1.442695
    %v6387 = vpow.pop %v6386
    %v6388 = vmul.f32 %v6020, 1.442695
    %v6389 = vpow.pop %v6388
    %v6390 = vmul.f32 %v6021, 1.442695
    %v6391 = vpow.pop %v6390
    %v6392 = vmul.f32 %v6022, 1.442695
    %v6393 = vpow.pop %v6392
    %v6394 = vmul.f32 %v6023, 1.442695
    %v6395 = vpow.pop %v6394
    %v6396 = vmul.f32 %v6024, 1.442695
    %v6397 = vpow.pop %v6396
    %v6398 = vmul.f32 %v6025, 1.442695
    %v6399 = vpow.pop %v6398
    %v6400 = vmul.f32 %v6026, 1.442695
    %v6401 = vpow.pop %v6400
    %v6402 = vmul.f32 %v6027, 1.442695
    %v6403 = vpow.pop %v6402
    %v6404 = vmul.f32 %v6028, 1.442695
    %v6405 = vpow.pop %v6404
    %v6406 = vmul.f32 %v6029, 1.442695
    %v6407 = vpow.pop %v6406
    %v6408 = vmul.f32 %v6030, 1.442695
    %v6409 = vpow.pop %v6408
    %v6410 = vmul.f32 %v6031, 1.442695
    %v6411 = vpow.pop %v6410
    %v6412 = vmul.f32 %v6032, 1.442695
    %v6413 = vpow.pop %v6412
    %v6414 = vmul.f32 %v6033, 1.442695
    %v6415 = vpow.pop %v6414
    %v6416 = vmul.f32 %v6034, 1.442695
    %v6417 = vpow.pop %v6416
    %v6418 = vmul.f32 %v6035, 1.442695
    %v6419 = vpow.pop %v6418
    %v6420 = vadd.f32 %v6165, 1.0
    %v6421 = vlog2.pop %v6420
    %v6422 = vmul.f32 %v6421, 0.6931472
    %v6423 = vmul.f32 -0.5, %v6165
    %v6424 = vadd.f32 %v6423, 1.0
    %v6425 = vmul.f32 %v6424, %v6165
    %v6426 = vand.u32 2147483647, %v6165
    %vm6427 = vcmp.lt.f32.partialorder %v6426, 0.0004427343
    %v6428 = vsel %vm6427, %v6425, %v6422
    %v6429 = vadd.f32 %v6167, 1.0
    %v6430 = vlog2.pop %v6429
    %v6431 = vmul.f32 %v6430, 0.6931472
    %v6432 = vmul.f32 -0.5, %v6167
    %v6433 = vadd.f32 %v6432, 1.0
    %v6434 = vmul.f32 %v6433, %v6167
    %v6435 = vand.u32 2147483647, %v6167
    %vm6436 = vcmp.lt.f32.partialorder %v6435, 0.0004427343
    %v6437 = vsel %vm6436, %v6434, %v6431
    %v6438 = vadd.f32 %v6169, 1.0
    %v6439 = vlog2.pop %v6438
    %v6440 = vmul.f32 %v6439, 0.6931472
    %v6441 = vmul.f32 -0.5, %v6169
    %v6442 = vadd.f32 %v6441, 1.0
    %v6443 = vmul.f32 %v6442, %v6169
    %v6444 = vand.u32 2147483647, %v6169
    %vm6445 = vcmp.lt.f32.partialorder %v6444, 0.0004427343
    %v6446 = vsel %vm6445, %v6443, %v6440
    %v6447 = vadd.f32 %v6171, 1.0
    %v6448 = vlog2.pop %v6447
    %v6449 = vmul.f32 %v6448, 0.6931472
    %v6450 = vmul.f32 -0.5, %v6171
    %v6451 = vadd.f32 %v6450, 1.0
    %v6452 = vmul.f32 %v6451, %v6171
    %v6453 = vand.u32 2147483647, %v6171
    %vm6454 = vcmp.lt.f32.partialorder %v6453, 0.0004427343
    %v6455 = vsel %vm6454, %v6452, %v6449
    %v6456 = vadd.f32 %v6173, 1.0
    %v6457 = vlog2.pop %v6456
    %v6458 = vmul.f32 %v6457, 0.6931472
    %v6459 = vmul.f32 -0.5, %v6173
    %v6460 = vadd.f32 %v6459, 1.0
    %v6461 = vmul.f32 %v6460, %v6173
    %v6462 = vand.u32 2147483647, %v6173
    %vm6463 = vcmp.lt.f32.partialorder %v6462, 0.0004427343
    %v6464 = vsel %vm6463, %v6461, %v6458
    %v6465 = vadd.f32 %v6175, 1.0
    %v6466 = vlog2.pop %v6465
    %v6467 = vmul.f32 %v6466, 0.6931472
    %v6468 = vmul.f32 -0.5, %v6175
    %v6469 = vadd.f32 %v6468, 1.0
    %v6470 = vmul.f32 %v6469, %v6175
    %v6471 = vand.u32 2147483647, %v6175
    %vm6472 = vcmp.lt.f32.partialorder %v6471, 0.0004427343
    %v6473 = vsel %vm6472, %v6470, %v6467
    %v6474 = vadd.f32 %v6177, 1.0
    %v6475 = vlog2.pop %v6474
    %v6476 = vmul.f32 %v6475, 0.6931472
    %v6477 = vmul.f32 -0.5, %v6177
    %v6478 = vadd.f32 %v6477, 1.0
    %v6479 = vmul.f32 %v6478, %v6177
    %v6480 = vand.u32 2147483647, %v6177
    %vm6481 = vcmp.lt.f32.partialorder %v6480, 0.0004427343
    %v6482 = vsel %vm6481, %v6479, %v6476
    %v6483 = vadd.f32 %v6179, 1.0
    %v6484 = vlog2.pop %v6483
    %v6485 = vmul.f32 %v6484, 0.6931472
    %v6486 = vmul.f32 -0.5, %v6179
    %v6487 = vadd.f32 %v6486, 1.0
    %v6488 = vmul.f32 %v6487, %v6179
    %v6489 = vand.u32 2147483647, %v6179
    %vm6490 = vcmp.lt.f32.partialorder %v6489, 0.0004427343
    %v6491 = vsel %vm6490, %v6488, %v6485
    %v6492 = vadd.f32 %v6181, 1.0
    %v6493 = vlog2.pop %v6492
    %v6494 = vmul.f32 %v6493, 0.6931472
    %v6495 = vmul.f32 -0.5, %v6181
    %v6496 = vadd.f32 %v6495, 1.0
    %v6497 = vmul.f32 %v6496, %v6181
    %v6498 = vand.u32 2147483647, %v6181
    %vm6499 = vcmp.lt.f32.partialorder %v6498, 0.0004427343
    %v6500 = vsel %vm6499, %v6497, %v6494
    %v6501 = vadd.f32 %v6183, 1.0
    %v6502 = vlog2.pop %v6501
    %v6503 = vmul.f32 %v6502, 0.6931472
    %v6504 = vmul.f32 -0.5, %v6183
    %v6505 = vadd.f32 %v6504, 1.0
    %v6506 = vmul.f32 %v6505, %v6183
    %v6507 = vand.u32 2147483647, %v6183
    %vm6508 = vcmp.lt.f32.partialorder %v6507, 0.0004427343
    %v6509 = vsel %vm6508, %v6506, %v6503
    %v6510 = vadd.f32 %v6185, 1.0
    %v6511 = vlog2.pop %v6510
    %v6512 = vmul.f32 %v6511, 0.6931472
    %v6513 = vmul.f32 -0.5, %v6185
    %v6514 = vadd.f32 %v6513, 1.0
    %v6515 = vmul.f32 %v6514, %v6185
    %v6516 = vand.u32 2147483647, %v6185
    %vm6517 = vcmp.lt.f32.partialorder %v6516, 0.0004427343
    %v6518 = vsel %vm6517, %v6515, %v6512
    %v6519 = vadd.f32 %v6187, 1.0
    %v6520 = vlog2.pop %v6519
    %v6521 = vmul.f32 %v6520, 0.6931472
    %v6522 = vmul.f32 -0.5, %v6187
    %v6523 = vadd.f32 %v6522, 1.0
    %v6524 = vmul.f32 %v6523, %v6187
    %v6525 = vand.u32 2147483647, %v6187
    %vm6526 = vcmp.lt.f32.partialorder %v6525, 0.0004427343
    %v6527 = vsel %vm6526, %v6524, %v6521
    %v6528 = vadd.f32 %v6189, 1.0
    %v6529 = vlog2.pop %v6528
    %v6530 = vmul.f32 %v6529, 0.6931472
    %v6531 = vmul.f32 -0.5, %v6189
    %v6532 = vadd.f32 %v6531, 1.0
    %v6533 = vmul.f32 %v6532, %v6189
    %v6534 = vand.u32 2147483647, %v6189
    %vm6535 = vcmp.lt.f32.partialorder %v6534, 0.0004427343
    %v6536 = vsel %vm6535, %v6533, %v6530
    %v6537 = vadd.f32 %v6191, 1.0
    %v6538 = vlog2.pop %v6537
    %v6539 = vmul.f32 %v6538, 0.6931472
    %v6540 = vmul.f32 -0.5, %v6191
    %v6541 = vadd.f32 %v6540, 1.0
    %v6542 = vmul.f32 %v6541, %v6191
    %v6543 = vand.u32 2147483647, %v6191
    %vm6544 = vcmp.lt.f32.partialorder %v6543, 0.0004427343
    %v6545 = vsel %vm6544, %v6542, %v6539
    %v6546 = vadd.f32 %v6193, 1.0
    %v6547 = vlog2.pop %v6546
    %v6548 = vmul.f32 %v6547, 0.6931472
    %v6549 = vmul.f32 -0.5, %v6193
    %v6550 = vadd.f32 %v6549, 1.0
    %v6551 = vmul.f32 %v6550, %v6193
    %v6552 = vand.u32 2147483647, %v6193
    %vm6553 = vcmp.lt.f32.partialorder %v6552, 0.0004427343
    %v6554 = vsel %vm6553, %v6551, %v6548
    %v6555 = vadd.f32 %v6195, 1.0
    %v6556 = vlog2.pop %v6555
    %v6557 = vmul.f32 %v6556, 0.6931472
    %v6558 = vmul.f32 -0.5, %v6195
    %v6559 = vadd.f32 %v6558, 1.0
    %v6560 = vmul.f32 %v6559, %v6195
    %v6561 = vand.u32 2147483647, %v6195
    %vm6562 = vcmp.lt.f32.partialorder %v6561, 0.0004427343
    %v6563 = vsel %vm6562, %v6560, %v6557
    %v6564 = vadd.f32 %v6197, 1.0
    %v6565 = vlog2.pop %v6564
    %v6566 = vmul.f32 %v6565, 0.6931472
    %v6567 = vmul.f32 -0.5, %v6197
    %v6568 = vadd.f32 %v6567, 1.0
    %v6569 = vmul.f32 %v6568, %v6197
    %v6570 = vand.u32 2147483647, %v6197
    %vm6571 = vcmp.lt.f32.partialorder %v6570, 0.0004427343
    %v6572 = vsel %vm6571, %v6569, %v6566
    %v6573 = vadd.f32 %v6199, 1.0
    %v6574 = vlog2.pop %v6573
    %v6575 = vmul.f32 %v6574, 0.6931472
    %v6576 = vmul.f32 -0.5, %v6199
    %v6577 = vadd.f32 %v6576, 1.0
    %v6578 = vmul.f32 %v6577, %v6199
    %v6579 = vand.u32 2147483647, %v6199
    %vm6580 = vcmp.lt.f32.partialorder %v6579, 0.0004427343
    %v6581 = vsel %vm6580, %v6578, %v6575
    %v6582 = vadd.f32 %v6201, 1.0
    %v6583 = vlog2.pop %v6582
    %v6584 = vmul.f32 %v6583, 0.6931472
    %v6585 = vmul.f32 -0.5, %v6201
    %v6586 = vadd.f32 %v6585, 1.0
    %v6587 = vmul.f32 %v6586, %v6201
    %v6588 = vand.u32 2147483647, %v6201
    %vm6589 = vcmp.lt.f32.partialorder %v6588, 0.0004427343
    %v6590 = vsel %vm6589, %v6587, %v6584
    %v6591 = vadd.f32 %v6203, 1.0
    %v6592 = vlog2.pop %v6591
    %v6593 = vmul.f32 %v6592, 0.6931472
    %v6594 = vmul.f32 -0.5, %v6203
    %v6595 = vadd.f32 %v6594, 1.0
    %v6596 = vmul.f32 %v6595, %v6203
    %v6597 = vand.u32 2147483647, %v6203
    %vm6598 = vcmp.lt.f32.partialorder %v6597, 0.0004427343
    %v6599 = vsel %vm6598, %v6596, %v6593
    %v6600 = vadd.f32 %v6205, 1.0
    %v6601 = vlog2.pop %v6600
    %v6602 = vmul.f32 %v6601, 0.6931472
    %v6603 = vmul.f32 -0.5, %v6205
    %v6604 = vadd.f32 %v6603, 1.0
    %v6605 = vmul.f32 %v6604, %v6205
    %v6606 = vand.u32 2147483647, %v6205
    %vm6607 = vcmp.lt.f32.partialorder %v6606, 0.0004427343
    %v6608 = vsel %vm6607, %v6605, %v6602
    %v6609 = vadd.f32 %v6207, 1.0
    %v6610 = vlog2.pop %v6609
    %v6611 = vmul.f32 %v6610, 0.6931472
    %v6612 = vmul.f32 -0.5, %v6207
    %v6613 = vadd.f32 %v6612, 1.0
    %v6614 = vmul.f32 %v6613, %v6207
    %v6615 = vand.u32 2147483647, %v6207
    %vm6616 = vcmp.lt.f32.partialorder %v6615, 0.0004427343
    %v6617 = vsel %vm6616, %v6614, %v6611
    %v6618 = vadd.f32 %v6209, 1.0
    %v6619 = vlog2.pop %v6618
    %v6620 = vmul.f32 %v6619, 0.6931472
    %v6621 = vmul.f32 -0.5, %v6209
    %v6622 = vadd.f32 %v6621, 1.0
    %v6623 = vmul.f32 %v6622, %v6209
    %v6624 = vand.u32 2147483647, %v6209
    %vm6625 = vcmp.lt.f32.partialorder %v6624, 0.0004427343
    %v6626 = vsel %vm6625, %v6623, %v6620
    %v6627 = vadd.f32 %v6211, 1.0
    %v6628 = vlog2.pop %v6627
    %v6629 = vmul.f32 %v6628, 0.6931472
    %v6630 = vmul.f32 -0.5, %v6211
    %v6631 = vadd.f32 %v6630, 1.0
    %v6632 = vmul.f32 %v6631, %v6211
    %v6633 = vand.u32 2147483647, %v6211
    %vm6634 = vcmp.lt.f32.partialorder %v6633, 0.0004427343
    %v6635 = vsel %vm6634, %v6632, %v6629
    %v6636 = vadd.f32 %v6213, 1.0
    %v6637 = vlog2.pop %v6636
    %v6638 = vmul.f32 %v6637, 0.6931472
    %v6639 = vmul.f32 -0.5, %v6213
    %v6640 = vadd.f32 %v6639, 1.0
    %v6641 = vmul.f32 %v6640, %v6213
    %v6642 = vand.u32 2147483647, %v6213
    %vm6643 = vcmp.lt.f32.partialorder %v6642, 0.0004427343
    %v6644 = vsel %vm6643, %v6641, %v6638
    %v6645 = vadd.f32 %v6215, 1.0
    %v6646 = vlog2.pop %v6645
    %v6647 = vmul.f32 %v6646, 0.6931472
    %v6648 = vmul.f32 -0.5, %v6215
    %v6649 = vadd.f32 %v6648, 1.0
    %v6650 = vmul.f32 %v6649, %v6215
    %v6651 = vand.u32 2147483647, %v6215
    %vm6652 = vcmp.lt.f32.partialorder %v6651, 0.0004427343
    %v6653 = vsel %vm6652, %v6650, %v6647
    %v6654 = vadd.f32 %v6217, 1.0
    %v6655 = vlog2.pop %v6654
    %v6656 = vmul.f32 %v6655, 0.6931472
    %v6657 = vmul.f32 -0.5, %v6217
    %v6658 = vadd.f32 %v6657, 1.0
    %v6659 = vmul.f32 %v6658, %v6217
    %v6660 = vand.u32 2147483647, %v6217
    %vm6661 = vcmp.lt.f32.partialorder %v6660, 0.0004427343
    %v6662 = vsel %vm6661, %v6659, %v6656
    %v6663 = vadd.f32 %v6219, 1.0
    %v6664 = vlog2.pop %v6663
    %v6665 = vmul.f32 %v6664, 0.6931472
    %v6666 = vmul.f32 -0.5, %v6219
    %v6667 = vadd.f32 %v6666, 1.0
    %v6668 = vmul.f32 %v6667, %v6219
    %v6669 = vand.u32 2147483647, %v6219
    %vm6670 = vcmp.lt.f32.partialorder %v6669, 0.0004427343
    %v6671 = vsel %vm6670, %v6668, %v6665
    %v6672 = vadd.f32 %v6221, 1.0
    %v6673 = vlog2.pop %v6672
    %v6674 = vmul.f32 %v6673, 0.6931472
    %v6675 = vmul.f32 -0.5, %v6221
    %v6676 = vadd.f32 %v6675, 1.0
    %v6677 = vmul.f32 %v6676, %v6221
    %v6678 = vand.u32 2147483647, %v6221
    %vm6679 = vcmp.lt.f32.partialorder %v6678, 0.0004427343
    %v6680 = vsel %vm6679, %v6677, %v6674
    %v6681 = vadd.f32 %v6223, 1.0
    %v6682 = vlog2.pop %v6681
    %v6683 = vmul.f32 %v6682, 0.6931472
    %v6684 = vmul.f32 -0.5, %v6223
    %v6685 = vadd.f32 %v6684, 1.0
    %v6686 = vmul.f32 %v6685, %v6223
    %v6687 = vand.u32 2147483647, %v6223
    %vm6688 = vcmp.lt.f32.partialorder %v6687, 0.0004427343
    %v6689 = vsel %vm6688, %v6686, %v6683
    %v6690 = vadd.f32 %v6225, 1.0
    %v6691 = vlog2.pop %v6690
    %v6692 = vmul.f32 %v6691, 0.6931472
    %v6693 = vmul.f32 -0.5, %v6225
    %v6694 = vadd.f32 %v6693, 1.0
    %v6695 = vmul.f32 %v6694, %v6225
    %v6696 = vand.u32 2147483647, %v6225
    %vm6697 = vcmp.lt.f32.partialorder %v6696, 0.0004427343
    %v6698 = vsel %vm6697, %v6695, %v6692
    %v6699 = vadd.f32 %v6227, 1.0
    %v6700 = vlog2.pop %v6699
    %v6701 = vmul.f32 %v6700, 0.6931472
    %v6702 = vmul.f32 -0.5, %v6227
    %v6703 = vadd.f32 %v6702, 1.0
    %v6704 = vmul.f32 %v6703, %v6227
    %v6705 = vand.u32 2147483647, %v6227
    %vm6706 = vcmp.lt.f32.partialorder %v6705, 0.0004427343
    %v6707 = vsel %vm6706, %v6704, %v6701
    %v6708 = vadd.f32 %v6229, 1.0
    %v6709 = vlog2.pop %v6708
    %v6710 = vmul.f32 %v6709, 0.6931472
    %v6711 = vmul.f32 -0.5, %v6229
    %v6712 = vadd.f32 %v6711, 1.0
    %v6713 = vmul.f32 %v6712, %v6229
    %v6714 = vand.u32 2147483647, %v6229
    %vm6715 = vcmp.lt.f32.partialorder %v6714, 0.0004427343
    %v6716 = vsel %vm6715, %v6713, %v6710
    %v6717 = vadd.f32 %v6231, 1.0
    %v6718 = vlog2.pop %v6717
    %v6719 = vmul.f32 %v6718, 0.6931472
    %v6720 = vmul.f32 -0.5, %v6231
    %v6721 = vadd.f32 %v6720, 1.0
    %v6722 = vmul.f32 %v6721, %v6231
    %v6723 = vand.u32 2147483647, %v6231
    %vm6724 = vcmp.lt.f32.partialorder %v6723, 0.0004427343
    %v6725 = vsel %vm6724, %v6722, %v6719
    %v6726 = vadd.f32 %v6233, 1.0
    %v6727 = vlog2.pop %v6726
    %v6728 = vmul.f32 %v6727, 0.6931472
    %v6729 = vmul.f32 -0.5, %v6233
    %v6730 = vadd.f32 %v6729, 1.0
    %v6731 = vmul.f32 %v6730, %v6233
    %v6732 = vand.u32 2147483647, %v6233
    %vm6733 = vcmp.lt.f32.partialorder %v6732, 0.0004427343
    %v6734 = vsel %vm6733, %v6731, %v6728
    %v6735 = vadd.f32 %v6235, 1.0
    %v6736 = vlog2.pop %v6735
    %v6737 = vmul.f32 %v6736, 0.6931472
    %v6738 = vmul.f32 -0.5, %v6235
    %v6739 = vadd.f32 %v6738, 1.0
    %v6740 = vmul.f32 %v6739, %v6235
    %v6741 = vand.u32 2147483647, %v6235
    %vm6742 = vcmp.lt.f32.partialorder %v6741, 0.0004427343
    %v6743 = vsel %vm6742, %v6740, %v6737
    %v6744 = vadd.f32 %v6237, 1.0
    %v6745 = vlog2.pop %v6744
    %v6746 = vmul.f32 %v6745, 0.6931472
    %v6747 = vmul.f32 -0.5, %v6237
    %v6748 = vadd.f32 %v6747, 1.0
    %v6749 = vmul.f32 %v6748, %v6237
    %v6750 = vand.u32 2147483647, %v6237
    %vm6751 = vcmp.lt.f32.partialorder %v6750, 0.0004427343
    %v6752 = vsel %vm6751, %v6749, %v6746
    %v6753 = vadd.f32 %v6239, 1.0
    %v6754 = vlog2.pop %v6753
    %v6755 = vmul.f32 %v6754, 0.6931472
    %v6756 = vmul.f32 -0.5, %v6239
    %v6757 = vadd.f32 %v6756, 1.0
    %v6758 = vmul.f32 %v6757, %v6239
    %v6759 = vand.u32 2147483647, %v6239
    %vm6760 = vcmp.lt.f32.partialorder %v6759, 0.0004427343
    %v6761 = vsel %vm6760, %v6758, %v6755
    %v6762 = vadd.f32 %v6241, 1.0
    %v6763 = vlog2.pop %v6762
    %v6764 = vmul.f32 %v6763, 0.6931472
    %v6765 = vmul.f32 -0.5, %v6241
    %v6766 = vadd.f32 %v6765, 1.0
    %v6767 = vmul.f32 %v6766, %v6241
    %v6768 = vand.u32 2147483647, %v6241
    %vm6769 = vcmp.lt.f32.partialorder %v6768, 0.0004427343
    %v6770 = vsel %vm6769, %v6767, %v6764
    %v6771 = vadd.f32 %v6243, 1.0
    %v6772 = vlog2.pop %v6771
    %v6773 = vmul.f32 %v6772, 0.6931472
    %v6774 = vmul.f32 -0.5, %v6243
    %v6775 = vadd.f32 %v6774, 1.0
    %v6776 = vmul.f32 %v6775, %v6243
    %v6777 = vand.u32 2147483647, %v6243
    %vm6778 = vcmp.lt.f32.partialorder %v6777, 0.0004427343
    %v6779 = vsel %vm6778, %v6776, %v6773
    %v6780 = vadd.f32 %v6245, 1.0
    %v6781 = vlog2.pop %v6780
    %v6782 = vmul.f32 %v6781, 0.6931472
    %v6783 = vmul.f32 -0.5, %v6245
    %v6784 = vadd.f32 %v6783, 1.0
    %v6785 = vmul.f32 %v6784, %v6245
    %v6786 = vand.u32 2147483647, %v6245
    %vm6787 = vcmp.lt.f32.partialorder %v6786, 0.0004427343
    %v6788 = vsel %vm6787, %v6785, %v6782
    %v6789 = vadd.f32 %v6247, 1.0
    %v6790 = vlog2.pop %v6789
    %v6791 = vmul.f32 %v6790, 0.6931472
    %v6792 = vmul.f32 -0.5, %v6247
    %v6793 = vadd.f32 %v6792, 1.0
    %v6794 = vmul.f32 %v6793, %v6247
    %v6795 = vand.u32 2147483647, %v6247
    %vm6796 = vcmp.lt.f32.partialorder %v6795, 0.0004427343
    %v6797 = vsel %vm6796, %v6794, %v6791
    %v6798 = vadd.f32 %v6249, 1.0
    %v6799 = vlog2.pop %v6798
    %v6800 = vmul.f32 %v6799, 0.6931472
    %v6801 = vmul.f32 -0.5, %v6249
    %v6802 = vadd.f32 %v6801, 1.0
    %v6803 = vmul.f32 %v6802, %v6249
    %v6804 = vand.u32 2147483647, %v6249
    %vm6805 = vcmp.lt.f32.partialorder %v6804, 0.0004427343
    %v6806 = vsel %vm6805, %v6803, %v6800
    %v6807 = vadd.f32 %v6251, 1.0
    %v6808 = vlog2.pop %v6807
    %v6809 = vmul.f32 %v6808, 0.6931472
    %v6810 = vmul.f32 -0.5, %v6251
    %v6811 = vadd.f32 %v6810, 1.0
    %v6812 = vmul.f32 %v6811, %v6251
    %v6813 = vand.u32 2147483647, %v6251
    %vm6814 = vcmp.lt.f32.partialorder %v6813, 0.0004427343
    %v6815 = vsel %vm6814, %v6812, %v6809
    %v6816 = vadd.f32 %v6253, 1.0
    %v6817 = vlog2.pop %v6816
    %v6818 = vmul.f32 %v6817, 0.6931472
    %v6819 = vmul.f32 -0.5, %v6253
    %v6820 = vadd.f32 %v6819, 1.0
    %v6821 = vmul.f32 %v6820, %v6253
    %v6822 = vand.u32 2147483647, %v6253
    %vm6823 = vcmp.lt.f32.partialorder %v6822, 0.0004427343
    %v6824 = vsel %vm6823, %v6821, %v6818
    %v6825 = vadd.f32 %v6255, 1.0
    %v6826 = vlog2.pop %v6825
    %v6827 = vmul.f32 %v6826, 0.6931472
    %v6828 = vmul.f32 -0.5, %v6255
    %v6829 = vadd.f32 %v6828, 1.0
    %v6830 = vmul.f32 %v6829, %v6255
    %v6831 = vand.u32 2147483647, %v6255
    %vm6832 = vcmp.lt.f32.partialorder %v6831, 0.0004427343
    %v6833 = vsel %vm6832, %v6830, %v6827
    %v6834 = vadd.f32 %v6257, 1.0
    %v6835 = vlog2.pop %v6834
    %v6836 = vmul.f32 %v6835, 0.6931472
    %v6837 = vmul.f32 -0.5, %v6257
    %v6838 = vadd.f32 %v6837, 1.0
    %v6839 = vmul.f32 %v6838, %v6257
    %v6840 = vand.u32 2147483647, %v6257
    %vm6841 = vcmp.lt.f32.partialorder %v6840, 0.0004427343
    %v6842 = vsel %vm6841, %v6839, %v6836
    %v6843 = vadd.f32 %v6259, 1.0
    %v6844 = vlog2.pop %v6843
    %v6845 = vmul.f32 %v6844, 0.6931472
    %v6846 = vmul.f32 -0.5, %v6259
    %v6847 = vadd.f32 %v6846, 1.0
    %v6848 = vmul.f32 %v6847, %v6259
    %v6849 = vand.u32 2147483647, %v6259
    %vm6850 = vcmp.lt.f32.partialorder %v6849, 0.0004427343
    %v6851 = vsel %vm6850, %v6848, %v6845
    %v6852 = vadd.f32 %v6261, 1.0
    %v6853 = vlog2.pop %v6852
    %v6854 = vmul.f32 %v6853, 0.6931472
    %v6855 = vmul.f32 -0.5, %v6261
    %v6856 = vadd.f32 %v6855, 1.0
    %v6857 = vmul.f32 %v6856, %v6261
    %v6858 = vand.u32 2147483647, %v6261
    %vm6859 = vcmp.lt.f32.partialorder %v6858, 0.0004427343
    %v6860 = vsel %vm6859, %v6857, %v6854
    %v6861 = vadd.f32 %v6263, 1.0
    %v6862 = vlog2.pop %v6861
    %v6863 = vmul.f32 %v6862, 0.6931472
    %v6864 = vmul.f32 -0.5, %v6263
    %v6865 = vadd.f32 %v6864, 1.0
    %v6866 = vmul.f32 %v6865, %v6263
    %v6867 = vand.u32 2147483647, %v6263
    %vm6868 = vcmp.lt.f32.partialorder %v6867, 0.0004427343
    %v6869 = vsel %vm6868, %v6866, %v6863
    %v6870 = vadd.f32 %v6265, 1.0
    %v6871 = vlog2.pop %v6870
    %v6872 = vmul.f32 %v6871, 0.6931472
    %v6873 = vmul.f32 -0.5, %v6265
    %v6874 = vadd.f32 %v6873, 1.0
    %v6875 = vmul.f32 %v6874, %v6265
    %v6876 = vand.u32 2147483647, %v6265
    %vm6877 = vcmp.lt.f32.partialorder %v6876, 0.0004427343
    %v6878 = vsel %vm6877, %v6875, %v6872
    %v6879 = vadd.f32 %v6267, 1.0
    %v6880 = vlog2.pop %v6879
    %v6881 = vmul.f32 %v6880, 0.6931472
    %v6882 = vmul.f32 -0.5, %v6267
    %v6883 = vadd.f32 %v6882, 1.0
    %v6884 = vmul.f32 %v6883, %v6267
    %v6885 = vand.u32 2147483647, %v6267
    %vm6886 = vcmp.lt.f32.partialorder %v6885, 0.0004427343
    %v6887 = vsel %vm6886, %v6884, %v6881
    %v6888 = vadd.f32 %v6269, 1.0
    %v6889 = vlog2.pop %v6888
    %v6890 = vmul.f32 %v6889, 0.6931472
    %v6891 = vmul.f32 -0.5, %v6269
    %v6892 = vadd.f32 %v6891, 1.0
    %v6893 = vmul.f32 %v6892, %v6269
    %v6894 = vand.u32 2147483647, %v6269
    %vm6895 = vcmp.lt.f32.partialorder %v6894, 0.0004427343
    %v6896 = vsel %vm6895, %v6893, %v6890
    %v6897 = vadd.f32 %v6271, 1.0
    %v6898 = vlog2.pop %v6897
    %v6899 = vmul.f32 %v6898, 0.6931472
    %v6900 = vmul.f32 -0.5, %v6271
    %v6901 = vadd.f32 %v6900, 1.0
    %v6902 = vmul.f32 %v6901, %v6271
    %v6903 = vand.u32 2147483647, %v6271
    %vm6904 = vcmp.lt.f32.partialorder %v6903, 0.0004427343
    %v6905 = vsel %vm6904, %v6902, %v6899
    %v6906 = vadd.f32 %v6273, 1.0
    %v6907 = vlog2.pop %v6906
    %v6908 = vmul.f32 %v6907, 0.6931472
    %v6909 = vmul.f32 -0.5, %v6273
    %v6910 = vadd.f32 %v6909, 1.0
    %v6911 = vmul.f32 %v6910, %v6273
    %v6912 = vand.u32 2147483647, %v6273
    %vm6913 = vcmp.lt.f32.partialorder %v6912, 0.0004427343
    %v6914 = vsel %vm6913, %v6911, %v6908
    %v6915 = vadd.f32 %v6275, 1.0
    %v6916 = vlog2.pop %v6915
    %v6917 = vmul.f32 %v6916, 0.6931472
    %v6918 = vmul.f32 -0.5, %v6275
    %v6919 = vadd.f32 %v6918, 1.0
    %v6920 = vmul.f32 %v6919, %v6275
    %v6921 = vand.u32 2147483647, %v6275
    %vm6922 = vcmp.lt.f32.partialorder %v6921, 0.0004427343
    %v6923 = vsel %vm6922, %v6920, %v6917
    %v6924 = vadd.f32 %v6277, 1.0
    %v6925 = vlog2.pop %v6924
    %v6926 = vmul.f32 %v6925, 0.6931472
    %v6927 = vmul.f32 -0.5, %v6277
    %v6928 = vadd.f32 %v6927, 1.0
    %v6929 = vmul.f32 %v6928, %v6277
    %v6930 = vand.u32 2147483647, %v6277
    %vm6931 = vcmp.lt.f32.partialorder %v6930, 0.0004427343
    %v6932 = vsel %vm6931, %v6929, %v6926
    %v6933 = vadd.f32 %v6279, 1.0
    %v6934 = vlog2.pop %v6933
    %v6935 = vmul.f32 %v6934, 0.6931472
    %v6936 = vmul.f32 -0.5, %v6279
    %v6937 = vadd.f32 %v6936, 1.0
    %v6938 = vmul.f32 %v6937, %v6279
    %v6939 = vand.u32 2147483647, %v6279
    %vm6940 = vcmp.lt.f32.partialorder %v6939, 0.0004427343
    %v6941 = vsel %vm6940, %v6938, %v6935
    %v6942 = vadd.f32 %v6281, 1.0
    %v6943 = vlog2.pop %v6942
    %v6944 = vmul.f32 %v6943, 0.6931472
    %v6945 = vmul.f32 -0.5, %v6281
    %v6946 = vadd.f32 %v6945, 1.0
    %v6947 = vmul.f32 %v6946, %v6281
    %v6948 = vand.u32 2147483647, %v6281
    %vm6949 = vcmp.lt.f32.partialorder %v6948, 0.0004427343
    %v6950 = vsel %vm6949, %v6947, %v6944
    %v6951 = vadd.f32 %v6283, 1.0
    %v6952 = vlog2.pop %v6951
    %v6953 = vmul.f32 %v6952, 0.6931472
    %v6954 = vmul.f32 -0.5, %v6283
    %v6955 = vadd.f32 %v6954, 1.0
    %v6956 = vmul.f32 %v6955, %v6283
    %v6957 = vand.u32 2147483647, %v6283
    %vm6958 = vcmp.lt.f32.partialorder %v6957, 0.0004427343
    %v6959 = vsel %vm6958, %v6956, %v6953
    %v6960 = vadd.f32 %v6285, 1.0
    %v6961 = vlog2.pop %v6960
    %v6962 = vmul.f32 %v6961, 0.6931472
    %v6963 = vmul.f32 -0.5, %v6285
    %v6964 = vadd.f32 %v6963, 1.0
    %v6965 = vmul.f32 %v6964, %v6285
    %v6966 = vand.u32 2147483647, %v6285
    %vm6967 = vcmp.lt.f32.partialorder %v6966, 0.0004427343
    %v6968 = vsel %vm6967, %v6965, %v6962
    %v6969 = vadd.f32 %v6287, 1.0
    %v6970 = vlog2.pop %v6969
    %v6971 = vmul.f32 %v6970, 0.6931472
    %v6972 = vmul.f32 -0.5, %v6287
    %v6973 = vadd.f32 %v6972, 1.0
    %v6974 = vmul.f32 %v6973, %v6287
    %v6975 = vand.u32 2147483647, %v6287
    %vm6976 = vcmp.lt.f32.partialorder %v6975, 0.0004427343
    %v6977 = vsel %vm6976, %v6974, %v6971
    %v6978 = vadd.f32 %v6289, 1.0
    %v6979 = vlog2.pop %v6978
    %v6980 = vmul.f32 %v6979, 0.6931472
    %v6981 = vmul.f32 -0.5, %v6289
    %v6982 = vadd.f32 %v6981, 1.0
    %v6983 = vmul.f32 %v6982, %v6289
    %v6984 = vand.u32 2147483647, %v6289
    %vm6985 = vcmp.lt.f32.partialorder %v6984, 0.0004427343
    %v6986 = vsel %vm6985, %v6983, %v6980
    %v6987 = vadd.f32 %v6291, 1.0
    %v6988 = vlog2.pop %v6987
    %v6989 = vmul.f32 %v6988, 0.6931472
    %v6990 = vmul.f32 -0.5, %v6291
    %v6991 = vadd.f32 %v6990, 1.0
    %v6992 = vmul.f32 %v6991, %v6291
    %v6993 = vand.u32 2147483647, %v6291
    %vm6994 = vcmp.lt.f32.partialorder %v6993, 0.0004427343
    %v6995 = vsel %vm6994, %v6992, %v6989
    %v6996 = vadd.f32 %v6293, 1.0
    %v6997 = vlog2.pop %v6996
    %v6998 = vmul.f32 %v6997, 0.6931472
    %v6999 = vmul.f32 -0.5, %v6293
    %v7000 = vadd.f32 %v6999, 1.0
    %v7001 = vmul.f32 %v7000, %v6293
    %v7002 = vand.u32 2147483647, %v6293
    %vm7003 = vcmp.lt.f32.partialorder %v7002, 0.0004427343
    %v7004 = vsel %vm7003, %v7001, %v6998
    %v7005 = vadd.f32 %v6295, 1.0
    %v7006 = vlog2.pop %v7005
    %v7007 = vmul.f32 %v7006, 0.6931472
    %v7008 = vmul.f32 -0.5, %v6295
    %v7009 = vadd.f32 %v7008, 1.0
    %v7010 = vmul.f32 %v7009, %v6295
    %v7011 = vand.u32 2147483647, %v6295
    %vm7012 = vcmp.lt.f32.partialorder %v7011, 0.0004427343
    %v7013 = vsel %vm7012, %v7010, %v7007
    %v7014 = vadd.f32 %v6297, 1.0
    %v7015 = vlog2.pop %v7014
    %v7016 = vmul.f32 %v7015, 0.6931472
    %v7017 = vmul.f32 -0.5, %v6297
    %v7018 = vadd.f32 %v7017, 1.0
    %v7019 = vmul.f32 %v7018, %v6297
    %v7020 = vand.u32 2147483647, %v6297
    %vm7021 = vcmp.lt.f32.partialorder %v7020, 0.0004427343
    %v7022 = vsel %vm7021, %v7019, %v7016
    %v7023 = vadd.f32 %v6299, 1.0
    %v7024 = vlog2.pop %v7023
    %v7025 = vmul.f32 %v7024, 0.6931472
    %v7026 = vmul.f32 -0.5, %v6299
    %v7027 = vadd.f32 %v7026, 1.0
    %v7028 = vmul.f32 %v7027, %v6299
    %v7029 = vand.u32 2147483647, %v6299
    %vm7030 = vcmp.lt.f32.partialorder %v7029, 0.0004427343
    %v7031 = vsel %vm7030, %v7028, %v7025
    %v7032 = vadd.f32 %v6301, 1.0
    %v7033 = vlog2.pop %v7032
    %v7034 = vmul.f32 %v7033, 0.6931472
    %v7035 = vmul.f32 -0.5, %v6301
    %v7036 = vadd.f32 %v7035, 1.0
    %v7037 = vmul.f32 %v7036, %v6301
    %v7038 = vand.u32 2147483647, %v6301
    %vm7039 = vcmp.lt.f32.partialorder %v7038, 0.0004427343
    %v7040 = vsel %vm7039, %v7037, %v7034
    %v7041 = vadd.f32 %v6303, 1.0
    %v7042 = vlog2.pop %v7041
    %v7043 = vmul.f32 %v7042, 0.6931472
    %v7044 = vmul.f32 -0.5, %v6303
    %v7045 = vadd.f32 %v7044, 1.0
    %v7046 = vmul.f32 %v7045, %v6303
    %v7047 = vand.u32 2147483647, %v6303
    %vm7048 = vcmp.lt.f32.partialorder %v7047, 0.0004427343
    %v7049 = vsel %vm7048, %v7046, %v7043
    %v7050 = vadd.f32 %v6305, 1.0
    %v7051 = vlog2.pop %v7050
    %v7052 = vmul.f32 %v7051, 0.6931472
    %v7053 = vmul.f32 -0.5, %v6305
    %v7054 = vadd.f32 %v7053, 1.0
    %v7055 = vmul.f32 %v7054, %v6305
    %v7056 = vand.u32 2147483647, %v6305
    %vm7057 = vcmp.lt.f32.partialorder %v7056, 0.0004427343
    %v7058 = vsel %vm7057, %v7055, %v7052
    %v7059 = vadd.f32 %v6307, 1.0
    %v7060 = vlog2.pop %v7059
    %v7061 = vmul.f32 %v7060, 0.6931472
    %v7062 = vmul.f32 -0.5, %v6307
    %v7063 = vadd.f32 %v7062, 1.0
    %v7064 = vmul.f32 %v7063, %v6307
    %v7065 = vand.u32 2147483647, %v6307
    %vm7066 = vcmp.lt.f32.partialorder %v7065, 0.0004427343
    %v7067 = vsel %vm7066, %v7064, %v7061
    %v7068 = vadd.f32 %v6309, 1.0
    %v7069 = vlog2.pop %v7068
    %v7070 = vmul.f32 %v7069, 0.6931472
    %v7071 = vmul.f32 -0.5, %v6309
    %v7072 = vadd.f32 %v7071, 1.0
    %v7073 = vmul.f32 %v7072, %v6309
    %v7074 = vand.u32 2147483647, %v6309
    %vm7075 = vcmp.lt.f32.partialorder %v7074, 0.0004427343
    %v7076 = vsel %vm7075, %v7073, %v7070
    %v7077 = vadd.f32 %v6311, 1.0
    %v7078 = vlog2.pop %v7077
    %v7079 = vmul.f32 %v7078, 0.6931472
    %v7080 = vmul.f32 -0.5, %v6311
    %v7081 = vadd.f32 %v7080, 1.0
    %v7082 = vmul.f32 %v7081, %v6311
    %v7083 = vand.u32 2147483647, %v6311
    %vm7084 = vcmp.lt.f32.partialorder %v7083, 0.0004427343
    %v7085 = vsel %vm7084, %v7082, %v7079
    %v7086 = vadd.f32 %v6313, 1.0
    %v7087 = vlog2.pop %v7086
    %v7088 = vmul.f32 %v7087, 0.6931472
    %v7089 = vmul.f32 -0.5, %v6313
    %v7090 = vadd.f32 %v7089, 1.0
    %v7091 = vmul.f32 %v7090, %v6313
    %v7092 = vand.u32 2147483647, %v6313
    %vm7093 = vcmp.lt.f32.partialorder %v7092, 0.0004427343
    %v7094 = vsel %vm7093, %v7091, %v7088
    %v7095 = vadd.f32 %v6315, 1.0
    %v7096 = vlog2.pop %v7095
    %v7097 = vmul.f32 %v7096, 0.6931472
    %v7098 = vmul.f32 -0.5, %v6315
    %v7099 = vadd.f32 %v7098, 1.0
    %v7100 = vmul.f32 %v7099, %v6315
    %v7101 = vand.u32 2147483647, %v6315
    %vm7102 = vcmp.lt.f32.partialorder %v7101, 0.0004427343
    %v7103 = vsel %vm7102, %v7100, %v7097
    %v7104 = vadd.f32 %v6317, 1.0
    %v7105 = vlog2.pop %v7104
    %v7106 = vmul.f32 %v7105, 0.6931472
    %v7107 = vmul.f32 -0.5, %v6317
    %v7108 = vadd.f32 %v7107, 1.0
    %v7109 = vmul.f32 %v7108, %v6317
    %v7110 = vand.u32 2147483647, %v6317
    %vm7111 = vcmp.lt.f32.partialorder %v7110, 0.0004427343
    %v7112 = vsel %vm7111, %v7109, %v7106
    %v7113 = vadd.f32 %v6319, 1.0
    %v7114 = vlog2.pop %v7113
    %v7115 = vmul.f32 %v7114, 0.6931472
    %v7116 = vmul.f32 -0.5, %v6319
    %v7117 = vadd.f32 %v7116, 1.0
    %v7118 = vmul.f32 %v7117, %v6319
    %v7119 = vand.u32 2147483647, %v6319
    %vm7120 = vcmp.lt.f32.partialorder %v7119, 0.0004427343
    %v7121 = vsel %vm7120, %v7118, %v7115
    %v7122 = vadd.f32 %v6321, 1.0
    %v7123 = vlog2.pop %v7122
    %v7124 = vmul.f32 %v7123, 0.6931472
    %v7125 = vmul.f32 -0.5, %v6321
    %v7126 = vadd.f32 %v7125, 1.0
    %v7127 = vmul.f32 %v7126, %v6321
    %v7128 = vand.u32 2147483647, %v6321
    %vm7129 = vcmp.lt.f32.partialorder %v7128, 0.0004427343
    %v7130 = vsel %vm7129, %v7127, %v7124
    %v7131 = vadd.f32 %v6323, 1.0
    %v7132 = vlog2.pop %v7131
    %v7133 = vmul.f32 %v7132, 0.6931472
    %v7134 = vmul.f32 -0.5, %v6323
    %v7135 = vadd.f32 %v7134, 1.0
    %v7136 = vmul.f32 %v7135, %v6323
    %v7137 = vand.u32 2147483647, %v6323
    %vm7138 = vcmp.lt.f32.partialorder %v7137, 0.0004427343
    %v7139 = vsel %vm7138, %v7136, %v7133
    %v7140 = vadd.f32 %v6325, 1.0
    %v7141 = vlog2.pop %v7140
    %v7142 = vmul.f32 %v7141, 0.6931472
    %v7143 = vmul.f32 -0.5, %v6325
    %v7144 = vadd.f32 %v7143, 1.0
    %v7145 = vmul.f32 %v7144, %v6325
    %v7146 = vand.u32 2147483647, %v6325
    %vm7147 = vcmp.lt.f32.partialorder %v7146, 0.0004427343
    %v7148 = vsel %vm7147, %v7145, %v7142
    %v7149 = vadd.f32 %v6327, 1.0
    %v7150 = vlog2.pop %v7149
    %v7151 = vmul.f32 %v7150, 0.6931472
    %v7152 = vmul.f32 -0.5, %v6327
    %v7153 = vadd.f32 %v7152, 1.0
    %v7154 = vmul.f32 %v7153, %v6327
    %v7155 = vand.u32 2147483647, %v6327
    %vm7156 = vcmp.lt.f32.partialorder %v7155, 0.0004427343
    %v7157 = vsel %vm7156, %v7154, %v7151
    %v7158 = vadd.f32 %v6329, 1.0
    %v7159 = vlog2.pop %v7158
    %v7160 = vmul.f32 %v7159, 0.6931472
    %v7161 = vmul.f32 -0.5, %v6329
    %v7162 = vadd.f32 %v7161, 1.0
    %v7163 = vmul.f32 %v7162, %v6329
    %v7164 = vand.u32 2147483647, %v6329
    %vm7165 = vcmp.lt.f32.partialorder %v7164, 0.0004427343
    %v7166 = vsel %vm7165, %v7163, %v7160
    %v7167 = vadd.f32 %v6331, 1.0
    %v7168 = vlog2.pop %v7167
    %v7169 = vmul.f32 %v7168, 0.6931472
    %v7170 = vmul.f32 -0.5, %v6331
    %v7171 = vadd.f32 %v7170, 1.0
    %v7172 = vmul.f32 %v7171, %v6331
    %v7173 = vand.u32 2147483647, %v6331
    %vm7174 = vcmp.lt.f32.partialorder %v7173, 0.0004427343
    %v7175 = vsel %vm7174, %v7172, %v7169
    %v7176 = vadd.f32 %v6333, 1.0
    %v7177 = vlog2.pop %v7176
    %v7178 = vmul.f32 %v7177, 0.6931472
    %v7179 = vmul.f32 -0.5, %v6333
    %v7180 = vadd.f32 %v7179, 1.0
    %v7181 = vmul.f32 %v7180, %v6333
    %v7182 = vand.u32 2147483647, %v6333
    %vm7183 = vcmp.lt.f32.partialorder %v7182, 0.0004427343
    %v7184 = vsel %vm7183, %v7181, %v7178
    %v7185 = vadd.f32 %v6335, 1.0
    %v7186 = vlog2.pop %v7185
    %v7187 = vmul.f32 %v7186, 0.6931472
    %v7188 = vmul.f32 -0.5, %v6335
    %v7189 = vadd.f32 %v7188, 1.0
    %v7190 = vmul.f32 %v7189, %v6335
    %v7191 = vand.u32 2147483647, %v6335
    %vm7192 = vcmp.lt.f32.partialorder %v7191, 0.0004427343
    %v7193 = vsel %vm7192, %v7190, %v7187
    %v7194 = vadd.f32 %v6337, 1.0
    %v7195 = vlog2.pop %v7194
    %v7196 = vmul.f32 %v7195, 0.6931472
    %v7197 = vmul.f32 -0.5, %v6337
    %v7198 = vadd.f32 %v7197, 1.0
    %v7199 = vmul.f32 %v7198, %v6337
    %v7200 = vand.u32 2147483647, %v6337
    %vm7201 = vcmp.lt.f32.partialorder %v7200, 0.0004427343
    %v7202 = vsel %vm7201, %v7199, %v7196
    %v7203 = vadd.f32 %v6339, 1.0
    %v7204 = vlog2.pop %v7203
    %v7205 = vmul.f32 %v7204, 0.6931472
    %v7206 = vmul.f32 -0.5, %v6339
    %v7207 = vadd.f32 %v7206, 1.0
    %v7208 = vmul.f32 %v7207, %v6339
    %v7209 = vand.u32 2147483647, %v6339
    %vm7210 = vcmp.lt.f32.partialorder %v7209, 0.0004427343
    %v7211 = vsel %vm7210, %v7208, %v7205
    %v7212 = vadd.f32 %v6341, 1.0
    %v7213 = vlog2.pop %v7212
    %v7214 = vmul.f32 %v7213, 0.6931472
    %v7215 = vmul.f32 -0.5, %v6341
    %v7216 = vadd.f32 %v7215, 1.0
    %v7217 = vmul.f32 %v7216, %v6341
    %v7218 = vand.u32 2147483647, %v6341
    %vm7219 = vcmp.lt.f32.partialorder %v7218, 0.0004427343
    %v7220 = vsel %vm7219, %v7217, %v7214
    %v7221 = vadd.f32 %v6343, 1.0
    %v7222 = vlog2.pop %v7221
    %v7223 = vmul.f32 %v7222, 0.6931472
    %v7224 = vmul.f32 -0.5, %v6343
    %v7225 = vadd.f32 %v7224, 1.0
    %v7226 = vmul.f32 %v7225, %v6343
    %v7227 = vand.u32 2147483647, %v6343
    %vm7228 = vcmp.lt.f32.partialorder %v7227, 0.0004427343
    %v7229 = vsel %vm7228, %v7226, %v7223
    %v7230 = vadd.f32 %v6345, 1.0
    %v7231 = vlog2.pop %v7230
    %v7232 = vmul.f32 %v7231, 0.6931472
    %v7233 = vmul.f32 -0.5, %v6345
    %v7234 = vadd.f32 %v7233, 1.0
    %v7235 = vmul.f32 %v7234, %v6345
    %v7236 = vand.u32 2147483647, %v6345
    %vm7237 = vcmp.lt.f32.partialorder %v7236, 0.0004427343
    %v7238 = vsel %vm7237, %v7235, %v7232
    %v7239 = vadd.f32 %v6347, 1.0
    %v7240 = vlog2.pop %v7239
    %v7241 = vmul.f32 %v7240, 0.6931472
    %v7242 = vmul.f32 -0.5, %v6347
    %v7243 = vadd.f32 %v7242, 1.0
    %v7244 = vmul.f32 %v7243, %v6347
    %v7245 = vand.u32 2147483647, %v6347
    %vm7246 = vcmp.lt.f32.partialorder %v7245, 0.0004427343
    %v7247 = vsel %vm7246, %v7244, %v7241
    %v7248 = vadd.f32 %v6349, 1.0
    %v7249 = vlog2.pop %v7248
    %v7250 = vmul.f32 %v7249, 0.6931472
    %v7251 = vmul.f32 -0.5, %v6349
    %v7252 = vadd.f32 %v7251, 1.0
    %v7253 = vmul.f32 %v7252, %v6349
    %v7254 = vand.u32 2147483647, %v6349
    %vm7255 = vcmp.lt.f32.partialorder %v7254, 0.0004427343
    %v7256 = vsel %vm7255, %v7253, %v7250
    %v7257 = vadd.f32 %v6351, 1.0
    %v7258 = vlog2.pop %v7257
    %v7259 = vmul.f32 %v7258, 0.6931472
    %v7260 = vmul.f32 -0.5, %v6351
    %v7261 = vadd.f32 %v7260, 1.0
    %v7262 = vmul.f32 %v7261, %v6351
    %v7263 = vand.u32 2147483647, %v6351
    %vm7264 = vcmp.lt.f32.partialorder %v7263, 0.0004427343
    %v7265 = vsel %vm7264, %v7262, %v7259
    %v7266 = vadd.f32 %v6353, 1.0
    %v7267 = vlog2.pop %v7266
    %v7268 = vmul.f32 %v7267, 0.6931472
    %v7269 = vmul.f32 -0.5, %v6353
    %v7270 = vadd.f32 %v7269, 1.0
    %v7271 = vmul.f32 %v7270, %v6353
    %v7272 = vand.u32 2147483647, %v6353
    %vm7273 = vcmp.lt.f32.partialorder %v7272, 0.0004427343
    %v7274 = vsel %vm7273, %v7271, %v7268
    %v7275 = vadd.f32 %v6355, 1.0
    %v7276 = vlog2.pop %v7275
    %v7277 = vmul.f32 %v7276, 0.6931472
    %v7278 = vmul.f32 -0.5, %v6355
    %v7279 = vadd.f32 %v7278, 1.0
    %v7280 = vmul.f32 %v7279, %v6355
    %v7281 = vand.u32 2147483647, %v6355
    %vm7282 = vcmp.lt.f32.partialorder %v7281, 0.0004427343
    %v7283 = vsel %vm7282, %v7280, %v7277
    %v7284 = vadd.f32 %v6357, 1.0
    %v7285 = vlog2.pop %v7284
    %v7286 = vmul.f32 %v7285, 0.6931472
    %v7287 = vmul.f32 -0.5, %v6357
    %v7288 = vadd.f32 %v7287, 1.0
    %v7289 = vmul.f32 %v7288, %v6357
    %v7290 = vand.u32 2147483647, %v6357
    %vm7291 = vcmp.lt.f32.partialorder %v7290, 0.0004427343
    %v7292 = vsel %vm7291, %v7289, %v7286
    %v7293 = vadd.f32 %v6359, 1.0
    %v7294 = vlog2.pop %v7293
    %v7295 = vmul.f32 %v7294, 0.6931472
    %v7296 = vmul.f32 -0.5, %v6359
    %v7297 = vadd.f32 %v7296, 1.0
    %v7298 = vmul.f32 %v7297, %v6359
    %v7299 = vand.u32 2147483647, %v6359
    %vm7300 = vcmp.lt.f32.partialorder %v7299, 0.0004427343
    %v7301 = vsel %vm7300, %v7298, %v7295
    %v7302 = vadd.f32 %v6361, 1.0
    %v7303 = vlog2.pop %v7302
    %v7304 = vmul.f32 %v7303, 0.6931472
    %v7305 = vmul.f32 -0.5, %v6361
    %v7306 = vadd.f32 %v7305, 1.0
    %v7307 = vmul.f32 %v7306, %v6361
    %v7308 = vand.u32 2147483647, %v6361
    %vm7309 = vcmp.lt.f32.partialorder %v7308, 0.0004427343
    %v7310 = vsel %vm7309, %v7307, %v7304
    %v7311 = vadd.f32 %v6363, 1.0
    %v7312 = vlog2.pop %v7311
    %v7313 = vmul.f32 %v7312, 0.6931472
    %v7314 = vmul.f32 -0.5, %v6363
    %v7315 = vadd.f32 %v7314, 1.0
    %v7316 = vmul.f32 %v7315, %v6363
    %v7317 = vand.u32 2147483647, %v6363
    %vm7318 = vcmp.lt.f32.partialorder %v7317, 0.0004427343
    %v7319 = vsel %vm7318, %v7316, %v7313
    %v7320 = vadd.f32 %v6365, 1.0
    %v7321 = vlog2.pop %v7320
    %v7322 = vmul.f32 %v7321, 0.6931472
    %v7323 = vmul.f32 -0.5, %v6365
    %v7324 = vadd.f32 %v7323, 1.0
    %v7325 = vmul.f32 %v7324, %v6365
    %v7326 = vand.u32 2147483647, %v6365
    %vm7327 = vcmp.lt.f32.partialorder %v7326, 0.0004427343
    %v7328 = vsel %vm7327, %v7325, %v7322
    %v7329 = vadd.f32 %v6367, 1.0
    %v7330 = vlog2.pop %v7329
    %v7331 = vmul.f32 %v7330, 0.6931472
    %v7332 = vmul.f32 -0.5, %v6367
    %v7333 = vadd.f32 %v7332, 1.0
    %v7334 = vmul.f32 %v7333, %v6367
    %v7335 = vand.u32 2147483647, %v6367
    %vm7336 = vcmp.lt.f32.partialorder %v7335, 0.0004427343
    %v7337 = vsel %vm7336, %v7334, %v7331
    %v7338 = vadd.f32 %v6369, 1.0
    %v7339 = vlog2.pop %v7338
    %v7340 = vmul.f32 %v7339, 0.6931472
    %v7341 = vmul.f32 -0.5, %v6369
    %v7342 = vadd.f32 %v7341, 1.0
    %v7343 = vmul.f32 %v7342, %v6369
    %v7344 = vand.u32 2147483647, %v6369
    %vm7345 = vcmp.lt.f32.partialorder %v7344, 0.0004427343
    %v7346 = vsel %vm7345, %v7343, %v7340
    %v7347 = vadd.f32 %v6371, 1.0
    %v7348 = vlog2.pop %v7347
    %v7349 = vmul.f32 %v7348, 0.6931472
    %v7350 = vmul.f32 -0.5, %v6371
    %v7351 = vadd.f32 %v7350, 1.0
    %v7352 = vmul.f32 %v7351, %v6371
    %v7353 = vand.u32 2147483647, %v6371
    %vm7354 = vcmp.lt.f32.partialorder %v7353, 0.0004427343
    %v7355 = vsel %vm7354, %v7352, %v7349
    %v7356 = vadd.f32 %v6373, 1.0
    %v7357 = vlog2.pop %v7356
    %v7358 = vmul.f32 %v7357, 0.6931472
    %v7359 = vmul.f32 -0.5, %v6373
    %v7360 = vadd.f32 %v7359, 1.0
    %v7361 = vmul.f32 %v7360, %v6373
    %v7362 = vand.u32 2147483647, %v6373
    %vm7363 = vcmp.lt.f32.partialorder %v7362, 0.0004427343
    %v7364 = vsel %vm7363, %v7361, %v7358
    %v7365 = vadd.f32 %v6375, 1.0
    %v7366 = vlog2.pop %v7365
    %v7367 = vmul.f32 %v7366, 0.6931472
    %v7368 = vmul.f32 -0.5, %v6375
    %v7369 = vadd.f32 %v7368, 1.0
    %v7370 = vmul.f32 %v7369, %v6375
    %v7371 = vand.u32 2147483647, %v6375
    %vm7372 = vcmp.lt.f32.partialorder %v7371, 0.0004427343
    %v7373 = vsel %vm7372, %v7370, %v7367
    %v7374 = vadd.f32 %v6377, 1.0
    %v7375 = vlog2.pop %v7374
    %v7376 = vmul.f32 %v7375, 0.6931472
    %v7377 = vmul.f32 -0.5, %v6377
    %v7378 = vadd.f32 %v7377, 1.0
    %v7379 = vmul.f32 %v7378, %v6377
    %v7380 = vand.u32 2147483647, %v6377
    %vm7381 = vcmp.lt.f32.partialorder %v7380, 0.0004427343
    %v7382 = vsel %vm7381, %v7379, %v7376
    %v7383 = vadd.f32 %v6379, 1.0
    %v7384 = vlog2.pop %v7383
    %v7385 = vmul.f32 %v7384, 0.6931472
    %v7386 = vmul.f32 -0.5, %v6379
    %v7387 = vadd.f32 %v7386, 1.0
    %v7388 = vmul.f32 %v7387, %v6379
    %v7389 = vand.u32 2147483647, %v6379
    %vm7390 = vcmp.lt.f32.partialorder %v7389, 0.0004427343
    %v7391 = vsel %vm7390, %v7388, %v7385
    %v7392 = vadd.f32 %v6381, 1.0
    %v7393 = vlog2.pop %v7392
    %v7394 = vmul.f32 %v7393, 0.6931472
    %v7395 = vmul.f32 -0.5, %v6381
    %v7396 = vadd.f32 %v7395, 1.0
    %v7397 = vmul.f32 %v7396, %v6381
    %v7398 = vand.u32 2147483647, %v6381
    %vm7399 = vcmp.lt.f32.partialorder %v7398, 0.0004427343
    %v7400 = vsel %vm7399, %v7397, %v7394
    %v7401 = vadd.f32 %v6383, 1.0
    %v7402 = vlog2.pop %v7401
    %v7403 = vmul.f32 %v7402, 0.6931472
    %v7404 = vmul.f32 -0.5, %v6383
    %v7405 = vadd.f32 %v7404, 1.0
    %v7406 = vmul.f32 %v7405, %v6383
    %v7407 = vand.u32 2147483647, %v6383
    %vm7408 = vcmp.lt.f32.partialorder %v7407, 0.0004427343
    %v7409 = vsel %vm7408, %v7406, %v7403
    %v7410 = vadd.f32 %v6385, 1.0
    %v7411 = vlog2.pop %v7410
    %v7412 = vmul.f32 %v7411, 0.6931472
    %v7413 = vmul.f32 -0.5, %v6385
    %v7414 = vadd.f32 %v7413, 1.0
    %v7415 = vmul.f32 %v7414, %v6385
    %v7416 = vand.u32 2147483647, %v6385
    %vm7417 = vcmp.lt.f32.partialorder %v7416, 0.0004427343
    %v7418 = vsel %vm7417, %v7415, %v7412
    %v7419 = vadd.f32 %v6387, 1.0
    %v7420 = vlog2.pop %v7419
    %v7421 = vmul.f32 %v7420, 0.6931472
    %v7422 = vmul.f32 -0.5, %v6387
    %v7423 = vadd.f32 %v7422, 1.0
    %v7424 = vmul.f32 %v7423, %v6387
    %v7425 = vand.u32 2147483647, %v6387
    %vm7426 = vcmp.lt.f32.partialorder %v7425, 0.0004427343
    %v7427 = vsel %vm7426, %v7424, %v7421
    %v7428 = vadd.f32 %v6389, 1.0
    %v7429 = vlog2.pop %v7428
    %v7430 = vmul.f32 %v7429, 0.6931472
    %v7431 = vmul.f32 -0.5, %v6389
    %v7432 = vadd.f32 %v7431, 1.0
    %v7433 = vmul.f32 %v7432, %v6389
    %v7434 = vand.u32 2147483647, %v6389
    %vm7435 = vcmp.lt.f32.partialorder %v7434, 0.0004427343
    %v7436 = vsel %vm7435, %v7433, %v7430
    %v7437 = vadd.f32 %v6391, 1.0
    %v7438 = vlog2.pop %v7437
    %v7439 = vmul.f32 %v7438, 0.6931472
    %v7440 = vmul.f32 -0.5, %v6391
    %v7441 = vadd.f32 %v7440, 1.0
    %v7442 = vmul.f32 %v7441, %v6391
    %v7443 = vand.u32 2147483647, %v6391
    %vm7444 = vcmp.lt.f32.partialorder %v7443, 0.0004427343
    %v7445 = vsel %vm7444, %v7442, %v7439
    %v7446 = vadd.f32 %v6393, 1.0
    %v7447 = vlog2.pop %v7446
    %v7448 = vmul.f32 %v7447, 0.6931472
    %v7449 = vmul.f32 -0.5, %v6393
    %v7450 = vadd.f32 %v7449, 1.0
    %v7451 = vmul.f32 %v7450, %v6393
    %v7452 = vand.u32 2147483647, %v6393
    %vm7453 = vcmp.lt.f32.partialorder %v7452, 0.0004427343
    %v7454 = vsel %vm7453, %v7451, %v7448
    %v7455 = vadd.f32 %v6395, 1.0
    %v7456 = vlog2.pop %v7455
    %v7457 = vmul.f32 %v7456, 0.6931472
    %v7458 = vmul.f32 -0.5, %v6395
    %v7459 = vadd.f32 %v7458, 1.0
    %v7460 = vmul.f32 %v7459, %v6395
    %v7461 = vand.u32 2147483647, %v6395
    %vm7462 = vcmp.lt.f32.partialorder %v7461, 0.0004427343
    %v7463 = vsel %vm7462, %v7460, %v7457
    %v7464 = vadd.f32 %v6397, 1.0
    %v7465 = vlog2.pop %v7464
    %v7466 = vmul.f32 %v7465, 0.6931472
    %v7467 = vmul.f32 -0.5, %v6397
    %v7468 = vadd.f32 %v7467, 1.0
    %v7469 = vmul.f32 %v7468, %v6397
    %v7470 = vand.u32 2147483647, %v6397
    %vm7471 = vcmp.lt.f32.partialorder %v7470, 0.0004427343
    %v7472 = vsel %vm7471, %v7469, %v7466
    %v7473 = vadd.f32 %v6399, 1.0
    %v7474 = vlog2.pop %v7473
    %v7475 = vmul.f32 %v7474, 0.6931472
    %v7476 = vmul.f32 -0.5, %v6399
    %v7477 = vadd.f32 %v7476, 1.0
    %v7478 = vmul.f32 %v7477, %v6399
    %v7479 = vand.u32 2147483647, %v6399
    %vm7480 = vcmp.lt.f32.partialorder %v7479, 0.0004427343
    %v7481 = vsel %vm7480, %v7478, %v7475
    %v7482 = vadd.f32 %v6401, 1.0
    %v7483 = vlog2.pop %v7482
    %v7484 = vmul.f32 %v7483, 0.6931472
    %v7485 = vmul.f32 -0.5, %v6401
    %v7486 = vadd.f32 %v7485, 1.0
    %v7487 = vmul.f32 %v7486, %v6401
    %v7488 = vand.u32 2147483647, %v6401
    %vm7489 = vcmp.lt.f32.partialorder %v7488, 0.0004427343
    %v7490 = vsel %vm7489, %v7487, %v7484
    %v7491 = vadd.f32 %v6403, 1.0
    %v7492 = vlog2.pop %v7491
    %v7493 = vmul.f32 %v7492, 0.6931472
    %v7494 = vmul.f32 -0.5, %v6403
    %v7495 = vadd.f32 %v7494, 1.0
    %v7496 = vmul.f32 %v7495, %v6403
    %v7497 = vand.u32 2147483647, %v6403
    %vm7498 = vcmp.lt.f32.partialorder %v7497, 0.0004427343
    %v7499 = vsel %vm7498, %v7496, %v7493
    %v7500 = vadd.f32 %v6405, 1.0
    %v7501 = vlog2.pop %v7500
    %v7502 = vmul.f32 %v7501, 0.6931472
    %v7503 = vmul.f32 -0.5, %v6405
    %v7504 = vadd.f32 %v7503, 1.0
    %v7505 = vmul.f32 %v7504, %v6405
    %v7506 = vand.u32 2147483647, %v6405
    %vm7507 = vcmp.lt.f32.partialorder %v7506, 0.0004427343
    %v7508 = vsel %vm7507, %v7505, %v7502
    %v7509 = vadd.f32 %v6407, 1.0
    %v7510 = vlog2.pop %v7509
    %v7511 = vmul.f32 %v7510, 0.6931472
    %v7512 = vmul.f32 -0.5, %v6407
    %v7513 = vadd.f32 %v7512, 1.0
    %v7514 = vmul.f32 %v7513, %v6407
    %v7515 = vand.u32 2147483647, %v6407
    %vm7516 = vcmp.lt.f32.partialorder %v7515, 0.0004427343
    %v7517 = vsel %vm7516, %v7514, %v7511
    %v7518 = vadd.f32 %v6409, 1.0
    %v7519 = vlog2.pop %v7518
    %v7520 = vmul.f32 %v7519, 0.6931472
    %v7521 = vmul.f32 -0.5, %v6409
    %v7522 = vadd.f32 %v7521, 1.0
    %v7523 = vmul.f32 %v7522, %v6409
    %v7524 = vand.u32 2147483647, %v6409
    %vm7525 = vcmp.lt.f32.partialorder %v7524, 0.0004427343
    %v7526 = vsel %vm7525, %v7523, %v7520
    %v7527 = vadd.f32 %v6411, 1.0
    %v7528 = vlog2.pop %v7527
    %v7529 = vmul.f32 %v7528, 0.6931472
    %v7530 = vmul.f32 -0.5, %v6411
    %v7531 = vadd.f32 %v7530, 1.0
    %v7532 = vmul.f32 %v7531, %v6411
    %v7533 = vand.u32 2147483647, %v6411
    %vm7534 = vcmp.lt.f32.partialorder %v7533, 0.0004427343
    %v7535 = vsel %vm7534, %v7532, %v7529
    %v7536 = vadd.f32 %v6413, 1.0
    %v7537 = vlog2.pop %v7536
    %v7538 = vmul.f32 %v7537, 0.6931472
    %v7539 = vmul.f32 -0.5, %v6413
    %v7540 = vadd.f32 %v7539, 1.0
    %v7541 = vmul.f32 %v7540, %v6413
    %v7542 = vand.u32 2147483647, %v6413
    %vm7543 = vcmp.lt.f32.partialorder %v7542, 0.0004427343
    %v7544 = vsel %vm7543, %v7541, %v7538
    %v7545 = vadd.f32 %v6415, 1.0
    %v7546 = vlog2.pop %v7545
    %v7547 = vmul.f32 %v7546, 0.6931472
    %v7548 = vmul.f32 -0.5, %v6415
    %v7549 = vadd.f32 %v7548, 1.0
    %v7550 = vmul.f32 %v7549, %v6415
    %v7551 = vand.u32 2147483647, %v6415
    %vm7552 = vcmp.lt.f32.partialorder %v7551, 0.0004427343
    %v7553 = vsel %vm7552, %v7550, %v7547
    %v7554 = vadd.f32 %v6417, 1.0
    %v7555 = vlog2.pop %v7554
    %v7556 = vmul.f32 %v7555, 0.6931472
    %v7557 = vmul.f32 -0.5, %v6417
    %v7558 = vadd.f32 %v7557, 1.0
    %v7559 = vmul.f32 %v7558, %v6417
    %v7560 = vand.u32 2147483647, %v6417
    %vm7561 = vcmp.lt.f32.partialorder %v7560, 0.0004427343
    %v7562 = vsel %vm7561, %v7559, %v7556
    %v7563 = vadd.f32 %v6419, 1.0
    %v7564 = vlog2.pop %v7563
    %v7565 = vmul.f32 %v7564, 0.6931472
    %v7566 = vmul.f32 -0.5, %v6419
    %v7567 = vadd.f32 %v7566, 1.0
    %v7568 = vmul.f32 %v7567, %v6419
    %v7569 = vand.u32 2147483647, %v6419
    %vm7570 = vcmp.lt.f32.partialorder %v7569, 0.0004427343
    %v7571 = vsel %vm7570, %v7568, %v7565
    %v7572 = vmul.f32 %v6428, 0.02
    %v7573 = vmul.f32 %v6437, 0.02
    %v7574 = vmul.f32 %v6446, 0.02
    %v7575 = vmul.f32 %v6455, 0.02
    %v7576 = vmul.f32 %v6464, 0.02
    %v7577 = vmul.f32 %v6473, 0.02
    %v7578 = vmul.f32 %v6482, 0.02
    %v7579 = vmul.f32 %v6491, 0.02
    %v7580 = vmul.f32 %v6500, 0.02
    %v7581 = vmul.f32 %v6509, 0.02
    %v7582 = vmul.f32 %v6518, 0.02
    %v7583 = vmul.f32 %v6527, 0.02
    %v7584 = vmul.f32 %v6536, 0.02
    %v7585 = vmul.f32 %v6545, 0.02
    %v7586 = vmul.f32 %v6554, 0.02
    %v7587 = vmul.f32 %v6563, 0.02
    %v7588 = vmul.f32 %v6572, 0.02
    %v7589 = vmul.f32 %v6581, 0.02
    %v7590 = vmul.f32 %v6590, 0.02
    %v7591 = vmul.f32 %v6599, 0.02
    %v7592 = vmul.f32 %v6608, 0.02
    %v7593 = vmul.f32 %v6617, 0.02
    %v7594 = vmul.f32 %v6626, 0.02
    %v7595 = vmul.f32 %v6635, 0.02
    %v7596 = vmul.f32 %v6644, 0.02
    %v7597 = vmul.f32 %v6653, 0.02
    %v7598 = vmul.f32 %v6662, 0.02
    %v7599 = vmul.f32 %v6671, 0.02
    %v7600 = vmul.f32 %v6680, 0.02
    %v7601 = vmul.f32 %v6689, 0.02
    %v7602 = vmul.f32 %v6698, 0.02
    %v7603 = vmul.f32 %v6707, 0.02
    %v7604 = vmul.f32 %v6716, 0.02
    %v7605 = vmul.f32 %v6725, 0.02
    %v7606 = vmul.f32 %v6734, 0.02
    %v7607 = vmul.f32 %v6743, 0.02
    %v7608 = vmul.f32 %v6752, 0.02
    %v7609 = vmul.f32 %v6761, 0.02
    %v7610 = vmul.f32 %v6770, 0.02
    %v7611 = vmul.f32 %v6779, 0.02
    %v7612 = vmul.f32 %v6788, 0.02
    %v7613 = vmul.f32 %v6797, 0.02
    %v7614 = vmul.f32 %v6806, 0.02
    %v7615 = vmul.f32 %v6815, 0.02
    %v7616 = vmul.f32 %v6824, 0.02
    %v7617 = vmul.f32 %v6833, 0.02
    %v7618 = vmul.f32 %v6842, 0.02
    %v7619 = vmul.f32 %v6851, 0.02
    %v7620 = vmul.f32 %v6860, 0.02
    %v7621 = vmul.f32 %v6869, 0.02
    %v7622 = vmul.f32 %v6878, 0.02
    %v7623 = vmul.f32 %v6887, 0.02
    %v7624 = vmul.f32 %v6896, 0.02
    %v7625 = vmul.f32 %v6905, 0.02
    %v7626 = vmul.f32 %v6914, 0.02
    %v7627 = vmul.f32 %v6923, 0.02
    %v7628 = vmul.f32 %v6932, 0.02
    %v7629 = vmul.f32 %v6941, 0.02
    %v7630 = vmul.f32 %v6950, 0.02
    %v7631 = vmul.f32 %v6959, 0.02
    %v7632 = vmul.f32 %v6968, 0.02
    %v7633 = vmul.f32 %v6977, 0.02
    %v7634 = vmul.f32 %v6986, 0.02
    %v7635 = vmul.f32 %v6995, 0.02
    %v7636 = vmul.f32 %v7004, 0.02
    %v7637 = vmul.f32 %v7013, 0.02
    %v7638 = vmul.f32 %v7022, 0.02
    %v7639 = vmul.f32 %v7031, 0.02
    %v7640 = vmul.f32 %v7040, 0.02
    %v7641 = vmul.f32 %v7049, 0.02
    %v7642 = vmul.f32 %v7058, 0.02
    %v7643 = vmul.f32 %v7067, 0.02
    %v7644 = vmul.f32 %v7076, 0.02
    %v7645 = vmul.f32 %v7085, 0.02
    %v7646 = vmul.f32 %v7094, 0.02
    %v7647 = vmul.f32 %v7103, 0.02
    %v7648 = vmul.f32 %v7112, 0.02
    %v7649 = vmul.f32 %v7121, 0.02
    %v7650 = vmul.f32 %v7130, 0.02
    %v7651 = vmul.f32 %v7139, 0.02
    %v7652 = vmul.f32 %v7148, 0.02
    %v7653 = vmul.f32 %v7157, 0.02
    %v7654 = vmul.f32 %v7166, 0.02
    %v7655 = vmul.f32 %v7175, 0.02
    %v7656 = vmul.f32 %v7184, 0.02
    %v7657 = vmul.f32 %v7193, 0.02
    %v7658 = vmul.f32 %v7202, 0.02
    %v7659 = vmul.f32 %v7211, 0.02
    %v7660 = vmul.f32 %v7220, 0.02
    %v7661 = vmul.f32 %v7229, 0.02
    %v7662 = vmul.f32 %v7238, 0.02
    %v7663 = vmul.f32 %v7247, 0.02
    %v7664 = vmul.f32 %v7256, 0.02
    %v7665 = vmul.f32 %v7265, 0.02
    %v7666 = vmul.f32 %v7274, 0.02
    %v7667 = vmul.f32 %v7283, 0.02
    %v7668 = vmul.f32 %v7292, 0.02
    %v7669 = vmul.f32 %v7301, 0.02
    %v7670 = vmul.f32 %v7310, 0.02
    %v7671 = vmul.f32 %v7319, 0.02
    %v7672 = vmul.f32 %v7328, 0.02
    %v7673 = vmul.f32 %v7337, 0.02
    %v7674 = vmul.f32 %v7346, 0.02
    %v7675 = vmul.f32 %v7355, 0.02
    %v7676 = vmul.f32 %v7364, 0.02
    %v7677 = vmul.f32 %v7373, 0.02
    %v7678 = vmul.f32 %v7382, 0.02
    %v7679 = vmul.f32 %v7391, 0.02
    %v7680 = vmul.f32 %v7400, 0.02
    %v7681 = vmul.f32 %v7409, 0.02
    %v7682 = vmul.f32 %v7418, 0.02
    %v7683 = vmul.f32 %v7427, 0.02
    %v7684 = vmul.f32 %v7436, 0.02
    %v7685 = vmul.f32 %v7445, 0.02
    %v7686 = vmul.f32 %v7454, 0.02
    %v7687 = vmul.f32 %v7463, 0.02
    %v7688 = vmul.f32 %v7472, 0.02
    %v7689 = vmul.f32 %v7481, 0.02
    %v7690 = vmul.f32 %v7490, 0.02
    %v7691 = vmul.f32 %v7499, 0.02
    %v7692 = vmul.f32 %v7508, 0.02
    %v7693 = vmul.f32 %v7517, 0.02
    %v7694 = vmul.f32 %v7526, 0.02
    %v7695 = vmul.f32 %v7535, 0.02
    %v7696 = vmul.f32 %v7544, 0.02
    %v7697 = vmul.f32 %v7553, 0.02
    %v7698 = vmul.f32 %v7562, 0.02
    %v7699 = vmul.f32 %v7571, 0.02
    %v7700 = vsel %vm6036, %v5652, %v7572
    %v7701 = vsel %vm6037, %v5653, %v7573
    %v7702 = vsel %vm6038, %v5654, %v7574
    %v7703 = vsel %vm6039, %v5655, %v7575
    %v7704 = vsel %vm6040, %v5656, %v7576
    %v7705 = vsel %vm6041, %v5657, %v7577
    %v7706 = vsel %vm6042, %v5658, %v7578
    %v7707 = vsel %vm6043, %v5659, %v7579
    %v7708 = vsel %vm6044, %v5660, %v7580
    %v7709 = vsel %vm6045, %v5661, %v7581
    %v7710 = vsel %vm6046, %v5662, %v7582
    %v7711 = vsel %vm6047, %v5663, %v7583
    %v7712 = vsel %vm6048, %v5664, %v7584
    %v7713 = vsel %vm6049, %v5665, %v7585
    %v7714 = vsel %vm6050, %v5666, %v7586
    %v7715 = vsel %vm6051, %v5667, %v7587
    %v7716 = vsel %vm6052, %v5668, %v7588
    %v7717 = vsel %vm6053, %v5669, %v7589
    %v7718 = vsel %vm6054, %v5670, %v7590
    %v7719 = vsel %vm6055, %v5671, %v7591
    %v7720 = vsel %vm6056, %v5672, %v7592
    %v7721 = vsel %vm6057, %v5673, %v7593
    %v7722 = vsel %vm6058, %v5674, %v7594
    %v7723 = vsel %vm6059, %v5675, %v7595
    %v7724 = vsel %vm6060, %v5676, %v7596
    %v7725 = vsel %vm6061, %v5677, %v7597
    %v7726 = vsel %vm6062, %v5678, %v7598
    %v7727 = vsel %vm6063, %v5679, %v7599
    %v7728 = vsel %vm6064, %v5680, %v7600
    %v7729 = vsel %vm6065, %v5681, %v7601
    %v7730 = vsel %vm6066, %v5682, %v7602
    %v7731 = vsel %vm6067, %v5683, %v7603
    %v7732 = vsel %vm6068, %v5684, %v7604
    %v7733 = vsel %vm6069, %v5685, %v7605
    %v7734 = vsel %vm6070, %v5686, %v7606
    %v7735 = vsel %vm6071, %v5687, %v7607
    %v7736 = vsel %vm6072, %v5688, %v7608
    %v7737 = vsel %vm6073, %v5689, %v7609
    %v7738 = vsel %vm6074, %v5690, %v7610
    %v7739 = vsel %vm6075, %v5691, %v7611
    %v7740 = vsel %vm6076, %v5692, %v7612
    %v7741 = vsel %vm6077, %v5693, %v7613
    %v7742 = vsel %vm6078, %v5694, %v7614
    %v7743 = vsel %vm6079, %v5695, %v7615
    %v7744 = vsel %vm6080, %v5696, %v7616
    %v7745 = vsel %vm6081, %v5697, %v7617
    %v7746 = vsel %vm6082, %v5698, %v7618
    %v7747 = vsel %vm6083, %v5699, %v7619
    %v7748 = vsel %vm6084, %v5700, %v7620
    %v7749 = vsel %vm6085, %v5701, %v7621
    %v7750 = vsel %vm6086, %v5702, %v7622
    %v7751 = vsel %vm6087, %v5703, %v7623
    %v7752 = vsel %vm6088, %v5704, %v7624
    %v7753 = vsel %vm6089, %v5705, %v7625
    %v7754 = vsel %vm6090, %v5706, %v7626
    %v7755 = vsel %vm6091, %v5707, %v7627
    %v7756 = vsel %vm6092, %v5708, %v7628
    %v7757 = vsel %vm6093, %v5709, %v7629
    %v7758 = vsel %vm6094, %v5710, %v7630
    %v7759 = vsel %vm6095, %v5711, %v7631
    %v7760 = vsel %vm6096, %v5712, %v7632
    %v7761 = vsel %vm6097, %v5713, %v7633
    %v7762 = vsel %vm6098, %v5714, %v7634
    %v7763 = vsel %vm6099, %v5715, %v7635
    %v7764 = vsel %vm6100, %v5716, %v7636
    %v7765 = vsel %vm6101, %v5717, %v7637
    %v7766 = vsel %vm6102, %v5718, %v7638
    %v7767 = vsel %vm6103, %v5719, %v7639
    %v7768 = vsel %vm6104, %v5720, %v7640
    %v7769 = vsel %vm6105, %v5721, %v7641
    %v7770 = vsel %vm6106, %v5722, %v7642
    %v7771 = vsel %vm6107, %v5723, %v7643
    %v7772 = vsel %vm6108, %v5724, %v7644
    %v7773 = vsel %vm6109, %v5725, %v7645
    %v7774 = vsel %vm6110, %v5726, %v7646
    %v7775 = vsel %vm6111, %v5727, %v7647
    %v7776 = vsel %vm6112, %v5728, %v7648
    %v7777 = vsel %vm6113, %v5729, %v7649
    %v7778 = vsel %vm6114, %v5730, %v7650
    %v7779 = vsel %vm6115, %v5731, %v7651
    %v7780 = vsel %vm6116, %v5732, %v7652
    %v7781 = vsel %vm6117, %v5733, %v7653
    %v7782 = vsel %vm6118, %v5734, %v7654
    %v7783 = vsel %vm6119, %v5735, %v7655
    %v7784 = vsel %vm6120, %v5736, %v7656
    %v7785 = vsel %vm6121, %v5737, %v7657
    %v7786 = vsel %vm6122, %v5738, %v7658
    %v7787 = vsel %vm6123, %v5739, %v7659
    %v7788 = vsel %vm6124, %v5740, %v7660
    %v7789 = vsel %vm6125, %v5741, %v7661
    %v7790 = vsel %vm6126, %v5742, %v7662
    %v7791 = vsel %vm6127, %v5743, %v7663
    %v7792 = vsel %vm6128, %v5744, %v7664
    %v7793 = vsel %vm6129, %v5745, %v7665
    %v7794 = vsel %vm6130, %v5746, %v7666
    %v7795 = vsel %vm6131, %v5747, %v7667
    %v7796 = vsel %vm6132, %v5748, %v7668
    %v7797 = vsel %vm6133, %v5749, %v7669
    %v7798 = vsel %vm6134, %v5750, %v7670
    %v7799 = vsel %vm6135, %v5751, %v7671
    %v7800 = vsel %vm6136, %v5752, %v7672
    %v7801 = vsel %vm6137, %v5753, %v7673
    %v7802 = vsel %vm6138, %v5754, %v7674
    %v7803 = vsel %vm6139, %v5755, %v7675
    %v7804 = vsel %vm6140, %v5756, %v7676
    %v7805 = vsel %vm6141, %v5757, %v7677
    %v7806 = vsel %vm6142, %v5758, %v7678
    %v7807 = vsel %vm6143, %v5759, %v7679
    %v7808 = vsel %vm6144, %v5760, %v7680
    %v7809 = vsel %vm6145, %v5761, %v7681
    %v7810 = vsel %vm6146, %v5762, %v7682
    %v7811 = vsel %vm6147, %v5763, %v7683
    %v7812 = vsel %vm6148, %v5764, %v7684
    %v7813 = vsel %vm6149, %v5765, %v7685
    %v7814 = vsel %vm6150, %v5766, %v7686
    %v7815 = vsel %vm6151, %v5767, %v7687
    %v7816 = vsel %vm6152, %v5768, %v7688
    %v7817 = vsel %vm6153, %v5769, %v7689
    %v7818 = vsel %vm6154, %v5770, %v7690
    %v7819 = vsel %vm6155, %v5771, %v7691
    %v7820 = vsel %vm6156, %v5772, %v7692
    %v7821 = vsel %vm6157, %v5773, %v7693
    %v7822 = vsel %vm6158, %v5774, %v7694
    %v7823 = vsel %vm6159, %v5775, %v7695
    %v7824 = vsel %vm6160, %v5776, %v7696
    %v7825 = vsel %vm6161, %v5777, %v7697
    %v7826 = vsel %vm6162, %v5778, %v7698
    %v7827 = vsel %vm6163, %v5779, %v7699
    %v7828 = vld [vmem:[%s3] sm:$0xf]
    %v7829 = vld [vmem:[%s3 + $0x4] sm:$0xf]
    %v7830 = vld [vmem:[%s3 + $0x8] sm:$0xf]
    %v7831 = vld [vmem:[%s3 + $0xc] sm:$0xf]
    %v7832 = vld [vmem:[%s3 + $0x10] sm:$0xf]
    %v7833 = vld [vmem:[%s3 + $0x14] sm:$0xf]
    %v7834 = vld [vmem:[%s3 + $0x18] sm:$0xf]
    %v7835 = vld [vmem:[%s3 + $0x1c] sm:$0xf]
    %v7836 = vld [vmem:[%s3 + $0x20] sm:$0xf]
    %v7837 = vld [vmem:[%s3 + $0x24] sm:$0xf]
    %v7838 = vld [vmem:[%s3 + $0x28] sm:$0xf]
    %v7839 = vld [vmem:[%s3 + $0x2c] sm:$0xf]
    %v7840 = vld [vmem:[%s3 + $0x30] sm:$0xf]
    %v7841 = vld [vmem:[%s3 + $0x34] sm:$0xf]
    %v7842 = vld [vmem:[%s3 + $0x38] sm:$0xf]
    %v7843 = vld [vmem:[%s3 + $0x3c] sm:$0xf]
    %v7844 = vpack.c.bf16 %v7708, %v7700
    %v7845 = vpack.c.bf16 %v7709, %v7701
    %v7846 = vpack.c.bf16 %v7710, %v7702
    %v7847 = vpack.c.bf16 %v7711, %v7703
    %v7848 = vpack.c.bf16 %v7712, %v7704
    %v7849 = vpack.c.bf16 %v7713, %v7705
    %v7850 = vpack.c.bf16 %v7714, %v7706
    %v7851 = vpack.c.bf16 %v7715, %v7707
    %v7852 = vpack.c.bf16 %v7724, %v7716
    %v7853 = vpack.c.bf16 %v7725, %v7717
    %v7854 = vpack.c.bf16 %v7726, %v7718
    %v7855 = vpack.c.bf16 %v7727, %v7719
    %v7856 = vpack.c.bf16 %v7728, %v7720
    %v7857 = vpack.c.bf16 %v7729, %v7721
    %v7858 = vpack.c.bf16 %v7730, %v7722
    %v7859 = vpack.c.bf16 %v7731, %v7723
    %v7860 = vpack.c.bf16 %v7740, %v7732
    %v7861 = vpack.c.bf16 %v7741, %v7733
    %v7862 = vpack.c.bf16 %v7742, %v7734
    %v7863 = vpack.c.bf16 %v7743, %v7735
    %v7864 = vpack.c.bf16 %v7744, %v7736
    %v7865 = vpack.c.bf16 %v7745, %v7737
    %v7866 = vpack.c.bf16 %v7746, %v7738
    %v7867 = vpack.c.bf16 %v7747, %v7739
    %v7868 = vpack.c.bf16 %v7756, %v7748
    %v7869 = vpack.c.bf16 %v7757, %v7749
    %v7870 = vpack.c.bf16 %v7758, %v7750
    %v7871 = vpack.c.bf16 %v7759, %v7751
    %v7872 = vpack.c.bf16 %v7760, %v7752
    %v7873 = vpack.c.bf16 %v7761, %v7753
    %v7874 = vpack.c.bf16 %v7762, %v7754
    %v7875 = vpack.c.bf16 %v7763, %v7755
    %v7876 = vpack.c.bf16 %v7772, %v7764
    %v7877 = vpack.c.bf16 %v7773, %v7765
    %v7878 = vpack.c.bf16 %v7774, %v7766
    %v7879 = vpack.c.bf16 %v7775, %v7767
    %v7880 = vpack.c.bf16 %v7776, %v7768
    %v7881 = vpack.c.bf16 %v7777, %v7769
    %v7882 = vpack.c.bf16 %v7778, %v7770
    %v7883 = vpack.c.bf16 %v7779, %v7771
    %v7884 = vpack.c.bf16 %v7788, %v7780
    %v7885 = vpack.c.bf16 %v7789, %v7781
    %v7886 = vpack.c.bf16 %v7790, %v7782
    %v7887 = vpack.c.bf16 %v7791, %v7783
    %v7888 = vpack.c.bf16 %v7792, %v7784
    %v7889 = vpack.c.bf16 %v7793, %v7785
    %v7890 = vpack.c.bf16 %v7794, %v7786
    %v7891 = vpack.c.bf16 %v7795, %v7787
    %v7892 = vpack.c.bf16 %v7804, %v7796
    %v7893 = vpack.c.bf16 %v7805, %v7797
    %v7894 = vpack.c.bf16 %v7806, %v7798
    %v7895 = vpack.c.bf16 %v7807, %v7799
    %v7896 = vpack.c.bf16 %v7808, %v7800
    %v7897 = vpack.c.bf16 %v7809, %v7801
    %v7898 = vpack.c.bf16 %v7810, %v7802
    %v7899 = vpack.c.bf16 %v7811, %v7803
    %v7900 = vpack.c.bf16 %v7820, %v7812
    %v7901 = vpack.c.bf16 %v7821, %v7813
    %v7902 = vpack.c.bf16 %v7822, %v7814
    %v7903 = vpack.c.bf16 %v7823, %v7815
    %v7904 = vpack.c.bf16 %v7824, %v7816
    %v7905 = vpack.c.bf16 %v7825, %v7817
    %v7906 = vpack.c.bf16 %v7826, %v7818
    %v7907 = vpack.c.bf16 %v7827, %v7819
    %v7908 = vld [vmem:[%s4] sm:$0xff]
    %v7909 = vld [vmem:[%s4 + $0x8] sm:$0xff]
    %v7910 = vld [vmem:[%s4 + $0x10] sm:$0xff]
    %v7911 = vld [vmem:[%s4 + $0x18] sm:$0xff]
    %v7912 = vld [vmem:[%s4 + $0x20] sm:$0xff]
    %v7913 = vld [vmem:[%s4 + $0x28] sm:$0xff]
    %v7914 = vld [vmem:[%s4 + $0x30] sm:$0xff]
    %v7915 = vld [vmem:[%s4 + $0x38] sm:$0xff]
    %v7916 = vld [vmem:[%s4 + $0x40] sm:$0xff]
    %v7917 = vld [vmem:[%s4 + $0x48] sm:$0xff]
    %v7918 = vld [vmem:[%s4 + $0x50] sm:$0xff]
    %v7919 = vld [vmem:[%s4 + $0x58] sm:$0xff]
    %v7920 = vld [vmem:[%s4 + $0x60] sm:$0xff]
    %v7921 = vld [vmem:[%s4 + $0x68] sm:$0xff]
    %v7922 = vld [vmem:[%s4 + $0x70] sm:$0xff]
    %v7923 = vld [vmem:[%s4 + $0x78] sm:$0xff]
    %7925 = vset.pattern.permute.xlu0 0
    %7926 = vperm.xlu0 %7925, %v7908
    %v7927 = vpop.permute.xlu0 %7926
    %7930 = vset.pattern.permute.xlu0 0
    %7931 = vperm.xlu0 %7930, %v7909
    %v7932 = vpop.permute.xlu0 %7931
    %7935 = vset.pattern.permute.xlu0 0
    %7936 = vperm.xlu0 %7935, %v7910
    %v7937 = vpop.permute.xlu0 %7936
    %7940 = vset.pattern.permute.xlu0 0
    %7941 = vperm.xlu0 %7940, %v7911
    %v7942 = vpop.permute.xlu0 %7941
    %7945 = vset.pattern.permute.xlu0 0
    %7946 = vperm.xlu0 %7945, %v7912
    %v7947 = vpop.permute.xlu0 %7946
    %7950 = vset.pattern.permute.xlu0 0
    %7951 = vperm.xlu0 %7950, %v7913
    %v7952 = vpop.permute.xlu0 %7951
    %7955 = vset.pattern.permute.xlu0 0
    %7956 = vperm.xlu0 %7955, %v7914
    %v7957 = vpop.permute.xlu0 %7956
    %7960 = vset.pattern.permute.xlu0 0
    %7961 = vperm.xlu0 %7960, %v7915
    %v7962 = vpop.permute.xlu0 %7961
    %7965 = vset.pattern.permute.xlu0 0
    %7966 = vperm.xlu0 %7965, %v7916
    %v7967 = vpop.permute.xlu0 %7966
    %7970 = vset.pattern.permute.xlu0 0
    %7971 = vperm.xlu0 %7970, %v7917
    %v7972 = vpop.permute.xlu0 %7971
    %7975 = vset.pattern.permute.xlu0 0
    %7976 = vperm.xlu0 %7975, %v7918
    %v7977 = vpop.permute.xlu0 %7976
    %7980 = vset.pattern.permute.xlu0 0
    %7981 = vperm.xlu0 %7980, %v7919
    %v7982 = vpop.permute.xlu0 %7981
    %7985 = vset.pattern.permute.xlu0 0
    %7986 = vperm.xlu0 %7985, %v7920
    %v7987 = vpop.permute.xlu0 %7986
    %7990 = vset.pattern.permute.xlu0 0
    %7991 = vperm.xlu0 %7990, %v7921
    %v7992 = vpop.permute.xlu0 %7991
    %7995 = vset.pattern.permute.xlu0 0
    %7996 = vperm.xlu0 %7995, %v7922
    %v7997 = vpop.permute.xlu0 %7996
    %8000 = vset.pattern.permute.xlu0 0
    %8001 = vperm.xlu0 %8000, %v7923
    %v8002 = vpop.permute.xlu0 %8001
    %v8020 = vunpack.c.l.b16 %v7828
    %v8021 = vunpack.c.l.b16 %v7829
    %v8022 = vunpack.c.l.b16 %v7830
    %v8023 = vunpack.c.l.b16 %v7831
    %v8024 = vunpack.c.l.b16 %v7832
    %v8025 = vunpack.c.l.b16 %v7833
    %v8026 = vunpack.c.l.b16 %v7834
    %v8027 = vunpack.c.l.b16 %v7835
    %v8028 = vunpack.c.l.b16 %v7836
    %v8029 = vunpack.c.l.b16 %v7837
    %v8030 = vunpack.c.l.b16 %v7838
    %v8031 = vunpack.c.l.b16 %v7839
    %v8032 = vunpack.c.l.b16 %v7840
    %v8033 = vunpack.c.l.b16 %v7841
    %v8034 = vunpack.c.l.b16 %v7842
    %v8035 = vunpack.c.l.b16 %v7843
    %v8036 = vpack.c.b16 %v8021, %v8020
    %v8037 = vpack.c.b16 %v8023, %v8022
    %v8038 = vpack.c.b16 %v8025, %v8024
    %v8039 = vpack.c.b16 %v8027, %v8026
    %v8040 = vpack.c.b16 %v8029, %v8028
    %v8041 = vpack.c.b16 %v8031, %v8030
    %v8042 = vpack.c.b16 %v8033, %v8032
    %v8043 = vpack.c.b16 %v8035, %v8034
    %8052 = vmatpush.bf16.msra.mxu0 %v7900
    %8053 = vmatpush.bf16.msra.mxu0 %v7892
    %8054 = vmatpush.bf16.msra.mxu0 %v7884
    %8055 = vmatpush.bf16.msra.mxu0 %v7876
    %8056 = vmatpush.bf16.msra.mxu0 %v7868
    %8057 = vmatpush.bf16.msra.mxu0 %v7860
    %8058 = vmatpush.bf16.msra.mxu0 %v7852
    %8059 = vmatpush.bf16.msra.mxu0 %v7844
    %8060 = vmatmul.bf16.gmra.mxu0 %v8036
    %v8061 = vpop.f32.mrf.mxu0
    %v8062 = vadd.f32 %v7927, %v8061
    %v8063 = vpop.f32.mrf.mxu0
    %v8064 = vadd.f32 %v7932, %v8063
    %8065 = vmatmul.bf16.gmra.mxu0 %v8037
    %v8066 = vpop.f32.mrf.mxu0
    %v8067 = vadd.f32 %v7937, %v8066
    %v8068 = vpop.f32.mrf.mxu0
    %v8069 = vadd.f32 %v7942, %v8068
    %8070 = vmatmul.bf16.gmra.mxu0 %v8038
    %v8071 = vpop.f32.mrf.mxu0
    %v8072 = vadd.f32 %v7947, %v8071
    %v8073 = vpop.f32.mrf.mxu0
    %v8074 = vadd.f32 %v7952, %v8073
    %8075 = vmatmul.bf16.gmra.mxu0 %v8039
    %v8076 = vpop.f32.mrf.mxu0
    %v8077 = vadd.f32 %v7957, %v8076
    %v8078 = vpop.f32.mrf.mxu0
    %v8079 = vadd.f32 %v7962, %v8078
    %8080 = vmatmul.bf16.gmra.mxu0 %v8040
    %v8081 = vpop.f32.mrf.mxu0
    %v8082 = vadd.f32 %v7967, %v8081
    %v8083 = vpop.f32.mrf.mxu0
    %v8084 = vadd.f32 %v7972, %v8083
    %8085 = vmatmul.bf16.gmra.mxu0 %v8041
    %v8086 = vpop.f32.mrf.mxu0
    %v8087 = vadd.f32 %v7977, %v8086
    %v8088 = vpop.f32.mrf.mxu0
    %v8089 = vadd.f32 %v7982, %v8088
    %8090 = vmatmul.bf16.gmra.mxu0 %v8042
    %v8091 = vpop.f32.mrf.mxu0
    %v8092 = vadd.f32 %v7987, %v8091
    %v8093 = vpop.f32.mrf.mxu0
    %v8094 = vadd.f32 %v7992, %v8093
    %8095 = vmatmul.bf16.gmra.mxu0 %v8043
    %v8096 = vpop.f32.mrf.mxu0
    %v8097 = vadd.f32 %v7997, %v8096
    %v8098 = vpop.f32.mrf.mxu0
    %v8099 = vadd.f32 %v8002, %v8098
    %8100 = vdwg.mxu0
    %8101 = vmatpush.bf16.msra.mxu0 %v7901
    %8102 = vmatpush.bf16.msra.mxu0 %v7893
    %8103 = vmatpush.bf16.msra.mxu0 %v7885
    %8104 = vmatpush.bf16.msra.mxu0 %v7877
    %8105 = vmatpush.bf16.msra.mxu0 %v7869
    %8106 = vmatpush.bf16.msra.mxu0 %v7861
    %8107 = vmatpush.bf16.msra.mxu0 %v7853
    %8108 = vmatpush.bf16.msra.mxu0 %v7845
    %8109 = vmatmul.bf16.gmra.mxu0 %v8036
    %v8110 = vpop.f32.mrf.mxu0
    %v8111 = vadd.f32 %v7927, %v8110
    %v8112 = vpop.f32.mrf.mxu0
    %v8113 = vadd.f32 %v7932, %v8112
    %8114 = vmatmul.bf16.gmra.mxu0 %v8037
    %v8115 = vpop.f32.mrf.mxu0
    %v8116 = vadd.f32 %v7937, %v8115
    %v8117 = vpop.f32.mrf.mxu0
    %v8118 = vadd.f32 %v7942, %v8117
    %8119 = vmatmul.bf16.gmra.mxu0 %v8038
    %v8120 = vpop.f32.mrf.mxu0
    %v8121 = vadd.f32 %v7947, %v8120
    %v8122 = vpop.f32.mrf.mxu0
    %v8123 = vadd.f32 %v7952, %v8122
    %8124 = vmatmul.bf16.gmra.mxu0 %v8039
    %v8125 = vpop.f32.mrf.mxu0
    %v8126 = vadd.f32 %v7957, %v8125
    %v8127 = vpop.f32.mrf.mxu0
    %v8128 = vadd.f32 %v7962, %v8127
    %8129 = vmatmul.bf16.gmra.mxu0 %v8040
    %v8130 = vpop.f32.mrf.mxu0
    %v8131 = vadd.f32 %v7967, %v8130
    %v8132 = vpop.f32.mrf.mxu0
    %v8133 = vadd.f32 %v7972, %v8132
    %8134 = vmatmul.bf16.gmra.mxu0 %v8041
    %v8135 = vpop.f32.mrf.mxu0
    %v8136 = vadd.f32 %v7977, %v8135
    %v8137 = vpop.f32.mrf.mxu0
    %v8138 = vadd.f32 %v7982, %v8137
    %8139 = vmatmul.bf16.gmra.mxu0 %v8042
    %v8140 = vpop.f32.mrf.mxu0
    %v8141 = vadd.f32 %v7987, %v8140
    %v8142 = vpop.f32.mrf.mxu0
    %v8143 = vadd.f32 %v7992, %v8142
    %8144 = vmatmul.bf16.gmra.mxu0 %v8043
    %v8145 = vpop.f32.mrf.mxu0
    %v8146 = vadd.f32 %v7997, %v8145
    %v8147 = vpop.f32.mrf.mxu0
    %v8148 = vadd.f32 %v8002, %v8147
    %8149 = vdwg.mxu0
    %8150 = vmatpush.bf16.msra.mxu0 %v7902
    %8151 = vmatpush.bf16.msra.mxu0 %v7894
    %8152 = vmatpush.bf16.msra.mxu0 %v7886
    %8153 = vmatpush.bf16.msra.mxu0 %v7878
    %8154 = vmatpush.bf16.msra.mxu0 %v7870
    %8155 = vmatpush.bf16.msra.mxu0 %v7862
    %8156 = vmatpush.bf16.msra.mxu0 %v7854
    %8157 = vmatpush.bf16.msra.mxu0 %v7846
    %8158 = vmatmul.bf16.gmra.mxu0 %v8036
    %v8159 = vpop.f32.mrf.mxu0
    %v8160 = vadd.f32 %v7927, %v8159
    %v8161 = vpop.f32.mrf.mxu0
    %v8162 = vadd.f32 %v7932, %v8161
    %8163 = vmatmul.bf16.gmra.mxu0 %v8037
    %v8164 = vpop.f32.mrf.mxu0
    %v8165 = vadd.f32 %v7937, %v8164
    %v8166 = vpop.f32.mrf.mxu0
    %v8167 = vadd.f32 %v7942, %v8166
    %8168 = vmatmul.bf16.gmra.mxu0 %v8038
    %v8169 = vpop.f32.mrf.mxu0
    %v8170 = vadd.f32 %v7947, %v8169
    %v8171 = vpop.f32.mrf.mxu0
    %v8172 = vadd.f32 %v7952, %v8171
    %8173 = vmatmul.bf16.gmra.mxu0 %v8039
    %v8174 = vpop.f32.mrf.mxu0
    %v8175 = vadd.f32 %v7957, %v8174
    %v8176 = vpop.f32.mrf.mxu0
    %v8177 = vadd.f32 %v7962, %v8176
    %8178 = vmatmul.bf16.gmra.mxu0 %v8040
    %v8179 = vpop.f32.mrf.mxu0
    %v8180 = vadd.f32 %v7967, %v8179
    %v8181 = vpop.f32.mrf.mxu0
    %v8182 = vadd.f32 %v7972, %v8181
    %8183 = vmatmul.bf16.gmra.mxu0 %v8041
    %v8184 = vpop.f32.mrf.mxu0
    %v8185 = vadd.f32 %v7977, %v8184
    %v8186 = vpop.f32.mrf.mxu0
    %v8187 = vadd.f32 %v7982, %v8186
    %8188 = vmatmul.bf16.gmra.mxu0 %v8042
    %v8189 = vpop.f32.mrf.mxu0
    %v8190 = vadd.f32 %v7987, %v8189
    %v8191 = vpop.f32.mrf.mxu0
    %v8192 = vadd.f32 %v7992, %v8191
    %8193 = vmatmul.bf16.gmra.mxu0 %v8043
    %v8194 = vpop.f32.mrf.mxu0
    %v8195 = vadd.f32 %v7997, %v8194
    %v8196 = vpop.f32.mrf.mxu0
    %v8197 = vadd.f32 %v8002, %v8196
    %8198 = vdwg.mxu0
    %8199 = vmatpush.bf16.msra.mxu0 %v7903
    %8200 = vmatpush.bf16.msra.mxu0 %v7895
    %8201 = vmatpush.bf16.msra.mxu0 %v7887
    %8202 = vmatpush.bf16.msra.mxu0 %v7879
    %8203 = vmatpush.bf16.msra.mxu0 %v7871
    %8204 = vmatpush.bf16.msra.mxu0 %v7863
    %8205 = vmatpush.bf16.msra.mxu0 %v7855
    %8206 = vmatpush.bf16.msra.mxu0 %v7847
    %8207 = vmatmul.bf16.gmra.mxu0 %v8036
    %v8208 = vpop.f32.mrf.mxu0
    %v8209 = vadd.f32 %v7927, %v8208
    %v8210 = vpop.f32.mrf.mxu0
    %v8211 = vadd.f32 %v7932, %v8210
    %8212 = vmatmul.bf16.gmra.mxu0 %v8037
    %v8213 = vpop.f32.mrf.mxu0
    %v8214 = vadd.f32 %v7937, %v8213
    %v8215 = vpop.f32.mrf.mxu0
    %v8216 = vadd.f32 %v7942, %v8215
    %8217 = vmatmul.bf16.gmra.mxu0 %v8038
    %v8218 = vpop.f32.mrf.mxu0
    %v8219 = vadd.f32 %v7947, %v8218
    %v8220 = vpop.f32.mrf.mxu0
    %v8221 = vadd.f32 %v7952, %v8220
    %8222 = vmatmul.bf16.gmra.mxu0 %v8039
    %v8223 = vpop.f32.mrf.mxu0
    %v8224 = vadd.f32 %v7957, %v8223
    %v8225 = vpop.f32.mrf.mxu0
    %v8226 = vadd.f32 %v7962, %v8225
    %8227 = vmatmul.bf16.gmra.mxu0 %v8040
    %v8228 = vpop.f32.mrf.mxu0
    %v8229 = vadd.f32 %v7967, %v8228
    %v8230 = vpop.f32.mrf.mxu0
    %v8231 = vadd.f32 %v7972, %v8230
    %8232 = vmatmul.bf16.gmra.mxu0 %v8041
    %v8233 = vpop.f32.mrf.mxu0
    %v8234 = vadd.f32 %v7977, %v8233
    %v8235 = vpop.f32.mrf.mxu0
    %v8236 = vadd.f32 %v7982, %v8235
    %8237 = vmatmul.bf16.gmra.mxu0 %v8042
    %v8238 = vpop.f32.mrf.mxu0
    %v8239 = vadd.f32 %v7987, %v8238
    %v8240 = vpop.f32.mrf.mxu0
    %v8241 = vadd.f32 %v7992, %v8240
    %8242 = vmatmul.bf16.gmra.mxu0 %v8043
    %v8243 = vpop.f32.mrf.mxu0
    %v8244 = vadd.f32 %v7997, %v8243
    %v8245 = vpop.f32.mrf.mxu0
    %v8246 = vadd.f32 %v8002, %v8245
    %8247 = vdwg.mxu0
    %8248 = vmatpush.bf16.msra.mxu0 %v7904
    %8249 = vmatpush.bf16.msra.mxu0 %v7896
    %8250 = vmatpush.bf16.msra.mxu0 %v7888
    %8251 = vmatpush.bf16.msra.mxu0 %v7880
    %8252 = vmatpush.bf16.msra.mxu0 %v7872
    %8253 = vmatpush.bf16.msra.mxu0 %v7864
    %8254 = vmatpush.bf16.msra.mxu0 %v7856
    %8255 = vmatpush.bf16.msra.mxu0 %v7848
    %8256 = vmatmul.bf16.gmra.mxu0 %v8036
    %v8257 = vpop.f32.mrf.mxu0
    %v8258 = vadd.f32 %v7927, %v8257
    %v8259 = vpop.f32.mrf.mxu0
    %v8260 = vadd.f32 %v7932, %v8259
    %8261 = vmatmul.bf16.gmra.mxu0 %v8037
    %v8262 = vpop.f32.mrf.mxu0
    %v8263 = vadd.f32 %v7937, %v8262
    %v8264 = vpop.f32.mrf.mxu0
    %v8265 = vadd.f32 %v7942, %v8264
    %8266 = vmatmul.bf16.gmra.mxu0 %v8038
    %v8267 = vpop.f32.mrf.mxu0
    %v8268 = vadd.f32 %v7947, %v8267
    %v8269 = vpop.f32.mrf.mxu0
    %v8270 = vadd.f32 %v7952, %v8269
    %8271 = vmatmul.bf16.gmra.mxu0 %v8039
    %v8272 = vpop.f32.mrf.mxu0
    %v8273 = vadd.f32 %v7957, %v8272
    %v8274 = vpop.f32.mrf.mxu0
    %v8275 = vadd.f32 %v7962, %v8274
    %8276 = vmatmul.bf16.gmra.mxu0 %v8040
    %v8277 = vpop.f32.mrf.mxu0
    %v8278 = vadd.f32 %v7967, %v8277
    %v8279 = vpop.f32.mrf.mxu0
    %v8280 = vadd.f32 %v7972, %v8279
    %8281 = vmatmul.bf16.gmra.mxu0 %v8041
    %v8282 = vpop.f32.mrf.mxu0
    %v8283 = vadd.f32 %v7977, %v8282
    %v8284 = vpop.f32.mrf.mxu0
    %v8285 = vadd.f32 %v7982, %v8284
    %8286 = vmatmul.bf16.gmra.mxu0 %v8042
    %v8287 = vpop.f32.mrf.mxu0
    %v8288 = vadd.f32 %v7987, %v8287
    %v8289 = vpop.f32.mrf.mxu0
    %v8290 = vadd.f32 %v7992, %v8289
    %8291 = vmatmul.bf16.gmra.mxu0 %v8043
    %v8292 = vpop.f32.mrf.mxu0
    %v8293 = vadd.f32 %v7997, %v8292
    %v8294 = vpop.f32.mrf.mxu0
    %v8295 = vadd.f32 %v8002, %v8294
    %8296 = vdwg.mxu0
    %8297 = vmatpush.bf16.msra.mxu0 %v7905
    %8298 = vmatpush.bf16.msra.mxu0 %v7897
    %8299 = vmatpush.bf16.msra.mxu0 %v7889
    %8300 = vmatpush.bf16.msra.mxu0 %v7881
    %8301 = vmatpush.bf16.msra.mxu0 %v7873
    %8302 = vmatpush.bf16.msra.mxu0 %v7865
    %8303 = vmatpush.bf16.msra.mxu0 %v7857
    %8304 = vmatpush.bf16.msra.mxu0 %v7849
    %8305 = vmatmul.bf16.gmra.mxu0 %v8036
    %v8306 = vpop.f32.mrf.mxu0
    %v8307 = vadd.f32 %v7927, %v8306
    %v8308 = vpop.f32.mrf.mxu0
    %v8309 = vadd.f32 %v7932, %v8308
    %8310 = vmatmul.bf16.gmra.mxu0 %v8037
    %v8311 = vpop.f32.mrf.mxu0
    %v8312 = vadd.f32 %v7937, %v8311
    %v8313 = vpop.f32.mrf.mxu0
    %v8314 = vadd.f32 %v7942, %v8313
    %8315 = vmatmul.bf16.gmra.mxu0 %v8038
    %v8316 = vpop.f32.mrf.mxu0
    %v8317 = vadd.f32 %v7947, %v8316
    %v8318 = vpop.f32.mrf.mxu0
    %v8319 = vadd.f32 %v7952, %v8318
    %8320 = vmatmul.bf16.gmra.mxu0 %v8039
    %v8321 = vpop.f32.mrf.mxu0
    %v8322 = vadd.f32 %v7957, %v8321
    %v8323 = vpop.f32.mrf.mxu0
    %v8324 = vadd.f32 %v7962, %v8323
    %8325 = vmatmul.bf16.gmra.mxu0 %v8040
    %v8326 = vpop.f32.mrf.mxu0
    %v8327 = vadd.f32 %v7967, %v8326
    %v8328 = vpop.f32.mrf.mxu0
    %v8329 = vadd.f32 %v7972, %v8328
    %8330 = vmatmul.bf16.gmra.mxu0 %v8041
    %v8331 = vpop.f32.mrf.mxu0
    %v8332 = vadd.f32 %v7977, %v8331
    %v8333 = vpop.f32.mrf.mxu0
    %v8334 = vadd.f32 %v7982, %v8333
    %8335 = vmatmul.bf16.gmra.mxu0 %v8042
    %v8336 = vpop.f32.mrf.mxu0
    %v8337 = vadd.f32 %v7987, %v8336
    %v8338 = vpop.f32.mrf.mxu0
    %v8339 = vadd.f32 %v7992, %v8338
    %8340 = vmatmul.bf16.gmra.mxu0 %v8043
    %v8341 = vpop.f32.mrf.mxu0
    %v8342 = vadd.f32 %v7997, %v8341
    %v8343 = vpop.f32.mrf.mxu0
    %v8344 = vadd.f32 %v8002, %v8343
    %8345 = vdwg.mxu0
    %8346 = vmatpush.bf16.msra.mxu0 %v7906
    %8347 = vmatpush.bf16.msra.mxu0 %v7898
    %8348 = vmatpush.bf16.msra.mxu0 %v7890
    %8349 = vmatpush.bf16.msra.mxu0 %v7882
    %8350 = vmatpush.bf16.msra.mxu0 %v7874
    %8351 = vmatpush.bf16.msra.mxu0 %v7866
    %8352 = vmatpush.bf16.msra.mxu0 %v7858
    %8353 = vmatpush.bf16.msra.mxu0 %v7850
    %8354 = vmatmul.bf16.gmra.mxu0 %v8036
    %v8355 = vpop.f32.mrf.mxu0
    %v8356 = vadd.f32 %v7927, %v8355
    %v8357 = vpop.f32.mrf.mxu0
    %v8358 = vadd.f32 %v7932, %v8357
    %8359 = vmatmul.bf16.gmra.mxu0 %v8037
    %v8360 = vpop.f32.mrf.mxu0
    %v8361 = vadd.f32 %v7937, %v8360
    %v8362 = vpop.f32.mrf.mxu0
    %v8363 = vadd.f32 %v7942, %v8362
    %8364 = vmatmul.bf16.gmra.mxu0 %v8038
    %v8365 = vpop.f32.mrf.mxu0
    %v8366 = vadd.f32 %v7947, %v8365
    %v8367 = vpop.f32.mrf.mxu0
    %v8368 = vadd.f32 %v7952, %v8367
    %8369 = vmatmul.bf16.gmra.mxu0 %v8039
    %v8370 = vpop.f32.mrf.mxu0
    %v8371 = vadd.f32 %v7957, %v8370
    %v8372 = vpop.f32.mrf.mxu0
    %v8373 = vadd.f32 %v7962, %v8372
    %8374 = vmatmul.bf16.gmra.mxu0 %v8040
    %v8375 = vpop.f32.mrf.mxu0
    %v8376 = vadd.f32 %v7967, %v8375
    %v8377 = vpop.f32.mrf.mxu0
    %v8378 = vadd.f32 %v7972, %v8377
    %8379 = vmatmul.bf16.gmra.mxu0 %v8041
    %v8380 = vpop.f32.mrf.mxu0
    %v8381 = vadd.f32 %v7977, %v8380
    %v8382 = vpop.f32.mrf.mxu0
    %v8383 = vadd.f32 %v7982, %v8382
    %8384 = vmatmul.bf16.gmra.mxu0 %v8042
    %v8385 = vpop.f32.mrf.mxu0
    %v8386 = vadd.f32 %v7987, %v8385
    %v8387 = vpop.f32.mrf.mxu0
    %v8388 = vadd.f32 %v7992, %v8387
    %8389 = vmatmul.bf16.gmra.mxu0 %v8043
    %v8390 = vpop.f32.mrf.mxu0
    %v8391 = vadd.f32 %v7997, %v8390
    %v8392 = vpop.f32.mrf.mxu0
    %v8393 = vadd.f32 %v8002, %v8392
    %8394 = vdwg.mxu0
    %8395 = vmatpush.bf16.msra.mxu0 %v7907
    %8396 = vmatpush.bf16.msra.mxu0 %v7899
    %8397 = vmatpush.bf16.msra.mxu0 %v7891
    %8398 = vmatpush.bf16.msra.mxu0 %v7883
    %8399 = vmatpush.bf16.msra.mxu0 %v7875
    %8400 = vmatpush.bf16.msra.mxu0 %v7867
    %8401 = vmatpush.bf16.msra.mxu0 %v7859
    %8402 = vmatpush.bf16.msra.mxu0 %v7851
    %8403 = vmatmul.bf16.gmra.mxu0 %v8036
    %v8404 = vpop.f32.mrf.mxu0
    %v8405 = vadd.f32 %v7927, %v8404
    %v8406 = vpop.f32.mrf.mxu0
    %v8407 = vadd.f32 %v7932, %v8406
    %8408 = vmatmul.bf16.gmra.mxu0 %v8037
    %v8409 = vpop.f32.mrf.mxu0
    %v8410 = vadd.f32 %v7937, %v8409
    %v8411 = vpop.f32.mrf.mxu0
    %v8412 = vadd.f32 %v7942, %v8411
    %8413 = vmatmul.bf16.gmra.mxu0 %v8038
    %v8414 = vpop.f32.mrf.mxu0
    %v8415 = vadd.f32 %v7947, %v8414
    %v8416 = vpop.f32.mrf.mxu0
    %v8417 = vadd.f32 %v7952, %v8416
    %8418 = vmatmul.bf16.gmra.mxu0 %v8039
    %v8419 = vpop.f32.mrf.mxu0
    %v8420 = vadd.f32 %v7957, %v8419
    %v8421 = vpop.f32.mrf.mxu0
    %v8422 = vadd.f32 %v7962, %v8421
    %8423 = vmatmul.bf16.gmra.mxu0 %v8040
    %v8424 = vpop.f32.mrf.mxu0
    %v8425 = vadd.f32 %v7967, %v8424
    %v8426 = vpop.f32.mrf.mxu0
    %v8427 = vadd.f32 %v7972, %v8426
    %8428 = vmatmul.bf16.gmra.mxu0 %v8041
    %v8429 = vpop.f32.mrf.mxu0
    %v8430 = vadd.f32 %v7977, %v8429
    %v8431 = vpop.f32.mrf.mxu0
    %v8432 = vadd.f32 %v7982, %v8431
    %8433 = vmatmul.bf16.gmra.mxu0 %v8042
    %v8434 = vpop.f32.mrf.mxu0
    %v8435 = vadd.f32 %v7987, %v8434
    %v8436 = vpop.f32.mrf.mxu0
    %v8437 = vadd.f32 %v7992, %v8436
    %8438 = vmatmul.bf16.gmra.mxu0 %v8043
    %v8439 = vpop.f32.mrf.mxu0
    %v8440 = vadd.f32 %v7997, %v8439
    %v8441 = vpop.f32.mrf.mxu0
    %v8442 = vadd.f32 %v8002, %v8441
    %8443 = vdwg.mxu0
    %v8444 = vmul.f32 %v8062, 50.0
    %v8445 = vmul.f32 %v8111, 50.0
    %v8446 = vmul.f32 %v8160, 50.0
    %v8447 = vmul.f32 %v8209, 50.0
    %v8448 = vmul.f32 %v8258, 50.0
    %v8449 = vmul.f32 %v8307, 50.0
    %v8450 = vmul.f32 %v8356, 50.0
    %v8451 = vmul.f32 %v8405, 50.0
    %v8452 = vmul.f32 %v8064, 50.0
    %v8453 = vmul.f32 %v8113, 50.0
    %v8454 = vmul.f32 %v8162, 50.0
    %v8455 = vmul.f32 %v8211, 50.0
    %v8456 = vmul.f32 %v8260, 50.0
    %v8457 = vmul.f32 %v8309, 50.0
    %v8458 = vmul.f32 %v8358, 50.0
    %v8459 = vmul.f32 %v8407, 50.0
    %v8460 = vmul.f32 %v8067, 50.0
    %v8461 = vmul.f32 %v8116, 50.0
    %v8462 = vmul.f32 %v8165, 50.0
    %v8463 = vmul.f32 %v8214, 50.0
    %v8464 = vmul.f32 %v8263, 50.0
    %v8465 = vmul.f32 %v8312, 50.0
    %v8466 = vmul.f32 %v8361, 50.0
    %v8467 = vmul.f32 %v8410, 50.0
    %v8468 = vmul.f32 %v8069, 50.0
    %v8469 = vmul.f32 %v8118, 50.0
    %v8470 = vmul.f32 %v8167, 50.0
    %v8471 = vmul.f32 %v8216, 50.0
    %v8472 = vmul.f32 %v8265, 50.0
    %v8473 = vmul.f32 %v8314, 50.0
    %v8474 = vmul.f32 %v8363, 50.0
    %v8475 = vmul.f32 %v8412, 50.0
    %v8476 = vmul.f32 %v8072, 50.0
    %v8477 = vmul.f32 %v8121, 50.0
    %v8478 = vmul.f32 %v8170, 50.0
    %v8479 = vmul.f32 %v8219, 50.0
    %v8480 = vmul.f32 %v8268, 50.0
    %v8481 = vmul.f32 %v8317, 50.0
    %v8482 = vmul.f32 %v8366, 50.0
    %v8483 = vmul.f32 %v8415, 50.0
    %v8484 = vmul.f32 %v8074, 50.0
    %v8485 = vmul.f32 %v8123, 50.0
    %v8486 = vmul.f32 %v8172, 50.0
    %v8487 = vmul.f32 %v8221, 50.0
    %v8488 = vmul.f32 %v8270, 50.0
    %v8489 = vmul.f32 %v8319, 50.0
    %v8490 = vmul.f32 %v8368, 50.0
    %v8491 = vmul.f32 %v8417, 50.0
    %v8492 = vmul.f32 %v8077, 50.0
    %v8493 = vmul.f32 %v8126, 50.0
    %v8494 = vmul.f32 %v8175, 50.0
    %v8495 = vmul.f32 %v8224, 50.0
    %v8496 = vmul.f32 %v8273, 50.0
    %v8497 = vmul.f32 %v8322, 50.0
    %v8498 = vmul.f32 %v8371, 50.0
    %v8499 = vmul.f32 %v8420, 50.0
    %v8500 = vmul.f32 %v8079, 50.0
    %v8501 = vmul.f32 %v8128, 50.0
    %v8502 = vmul.f32 %v8177, 50.0
    %v8503 = vmul.f32 %v8226, 50.0
    %v8504 = vmul.f32 %v8275, 50.0
    %v8505 = vmul.f32 %v8324, 50.0
    %v8506 = vmul.f32 %v8373, 50.0
    %v8507 = vmul.f32 %v8422, 50.0
    %v8508 = vmul.f32 %v8082, 50.0
    %v8509 = vmul.f32 %v8131, 50.0
    %v8510 = vmul.f32 %v8180, 50.0
    %v8511 = vmul.f32 %v8229, 50.0
    %v8512 = vmul.f32 %v8278, 50.0
    %v8513 = vmul.f32 %v8327, 50.0
    %v8514 = vmul.f32 %v8376, 50.0
    %v8515 = vmul.f32 %v8425, 50.0
    %v8516 = vmul.f32 %v8084, 50.0
    %v8517 = vmul.f32 %v8133, 50.0
    %v8518 = vmul.f32 %v8182, 50.0
    %v8519 = vmul.f32 %v8231, 50.0
    %v8520 = vmul.f32 %v8280, 50.0
    %v8521 = vmul.f32 %v8329, 50.0
    %v8522 = vmul.f32 %v8378, 50.0
    %v8523 = vmul.f32 %v8427, 50.0
    %v8524 = vmul.f32 %v8087, 50.0
    %v8525 = vmul.f32 %v8136, 50.0
    %v8526 = vmul.f32 %v8185, 50.0
    %v8527 = vmul.f32 %v8234, 50.0
    %v8528 = vmul.f32 %v8283, 50.0
    %v8529 = vmul.f32 %v8332, 50.0
    %v8530 = vmul.f32 %v8381, 50.0
    %v8531 = vmul.f32 %v8430, 50.0
    %v8532 = vmul.f32 %v8089, 50.0
    %v8533 = vmul.f32 %v8138, 50.0
    %v8534 = vmul.f32 %v8187, 50.0
    %v8535 = vmul.f32 %v8236, 50.0
    %v8536 = vmul.f32 %v8285, 50.0
    %v8537 = vmul.f32 %v8334, 50.0
    %v8538 = vmul.f32 %v8383, 50.0
    %v8539 = vmul.f32 %v8432, 50.0
    %v8540 = vmul.f32 %v8092, 50.0
    %v8541 = vmul.f32 %v8141, 50.0
    %v8542 = vmul.f32 %v8190, 50.0
    %v8543 = vmul.f32 %v8239, 50.0
    %v8544 = vmul.f32 %v8288, 50.0
    %v8545 = vmul.f32 %v8337, 50.0
    %v8546 = vmul.f32 %v8386, 50.0
    %v8547 = vmul.f32 %v8435, 50.0
    %v8548 = vmul.f32 %v8094, 50.0
    %v8549 = vmul.f32 %v8143, 50.0
    %v8550 = vmul.f32 %v8192, 50.0
    %v8551 = vmul.f32 %v8241, 50.0
    %v8552 = vmul.f32 %v8290, 50.0
    %v8553 = vmul.f32 %v8339, 50.0
    %v8554 = vmul.f32 %v8388, 50.0
    %v8555 = vmul.f32 %v8437, 50.0
    %v8556 = vmul.f32 %v8097, 50.0
    %v8557 = vmul.f32 %v8146, 50.0
    %v8558 = vmul.f32 %v8195, 50.0
    %v8559 = vmul.f32 %v8244, 50.0
    %v8560 = vmul.f32 %v8293, 50.0
    %v8561 = vmul.f32 %v8342, 50.0
    %v8562 = vmul.f32 %v8391, 50.0
    %v8563 = vmul.f32 %v8440, 50.0
    %v8564 = vmul.f32 %v8099, 50.0
    %v8565 = vmul.f32 %v8148, 50.0
    %v8566 = vmul.f32 %v8197, 50.0
    %v8567 = vmul.f32 %v8246, 50.0
    %v8568 = vmul.f32 %v8295, 50.0
    %v8569 = vmul.f32 %v8344, 50.0
    %v8570 = vmul.f32 %v8393, 50.0
    %v8571 = vmul.f32 %v8442, 50.0
    %v8572 = vmin.f32 %v8444, 20.0
    %v8573 = vmin.f32 %v8445, 20.0
    %v8574 = vmin.f32 %v8446, 20.0
    %v8575 = vmin.f32 %v8447, 20.0
    %v8576 = vmin.f32 %v8448, 20.0
    %v8577 = vmin.f32 %v8449, 20.0
    %v8578 = vmin.f32 %v8450, 20.0
    %v8579 = vmin.f32 %v8451, 20.0
    %v8580 = vmin.f32 %v8452, 20.0
    %v8581 = vmin.f32 %v8453, 20.0
    %v8582 = vmin.f32 %v8454, 20.0
    %v8583 = vmin.f32 %v8455, 20.0
    %v8584 = vmin.f32 %v8456, 20.0
    %v8585 = vmin.f32 %v8457, 20.0
    %v8586 = vmin.f32 %v8458, 20.0
    %v8587 = vmin.f32 %v8459, 20.0
    %v8588 = vmin.f32 %v8460, 20.0
    %v8589 = vmin.f32 %v8461, 20.0
    %v8590 = vmin.f32 %v8462, 20.0
    %v8591 = vmin.f32 %v8463, 20.0
    %v8592 = vmin.f32 %v8464, 20.0
    %v8593 = vmin.f32 %v8465, 20.0
    %v8594 = vmin.f32 %v8466, 20.0
    %v8595 = vmin.f32 %v8467, 20.0
    %v8596 = vmin.f32 %v8468, 20.0
    %v8597 = vmin.f32 %v8469, 20.0
    %v8598 = vmin.f32 %v8470, 20.0
    %v8599 = vmin.f32 %v8471, 20.0
    %v8600 = vmin.f32 %v8472, 20.0
    %v8601 = vmin.f32 %v8473, 20.0
    %v8602 = vmin.f32 %v8474, 20.0
    %v8603 = vmin.f32 %v8475, 20.0
    %v8604 = vmin.f32 %v8476, 20.0
    %v8605 = vmin.f32 %v8477, 20.0
    %v8606 = vmin.f32 %v8478, 20.0
    %v8607 = vmin.f32 %v8479, 20.0
    %v8608 = vmin.f32 %v8480, 20.0
    %v8609 = vmin.f32 %v8481, 20.0
    %v8610 = vmin.f32 %v8482, 20.0
    %v8611 = vmin.f32 %v8483, 20.0
    %v8612 = vmin.f32 %v8484, 20.0
    %v8613 = vmin.f32 %v8485, 20.0
    %v8614 = vmin.f32 %v8486, 20.0
    %v8615 = vmin.f32 %v8487, 20.0
    %v8616 = vmin.f32 %v8488, 20.0
    %v8617 = vmin.f32 %v8489, 20.0
    %v8618 = vmin.f32 %v8490, 20.0
    %v8619 = vmin.f32 %v8491, 20.0
    %v8620 = vmin.f32 %v8492, 20.0
    %v8621 = vmin.f32 %v8493, 20.0
    %v8622 = vmin.f32 %v8494, 20.0
    %v8623 = vmin.f32 %v8495, 20.0
    %v8624 = vmin.f32 %v8496, 20.0
    %v8625 = vmin.f32 %v8497, 20.0
    %v8626 = vmin.f32 %v8498, 20.0
    %v8627 = vmin.f32 %v8499, 20.0
    %v8628 = vmin.f32 %v8500, 20.0
    %v8629 = vmin.f32 %v8501, 20.0
    %v8630 = vmin.f32 %v8502, 20.0
    %v8631 = vmin.f32 %v8503, 20.0
    %v8632 = vmin.f32 %v8504, 20.0
    %v8633 = vmin.f32 %v8505, 20.0
    %v8634 = vmin.f32 %v8506, 20.0
    %v8635 = vmin.f32 %v8507, 20.0
    %v8636 = vmin.f32 %v8508, 20.0
    %v8637 = vmin.f32 %v8509, 20.0
    %v8638 = vmin.f32 %v8510, 20.0
    %v8639 = vmin.f32 %v8511, 20.0
    %v8640 = vmin.f32 %v8512, 20.0
    %v8641 = vmin.f32 %v8513, 20.0
    %v8642 = vmin.f32 %v8514, 20.0
    %v8643 = vmin.f32 %v8515, 20.0
    %v8644 = vmin.f32 %v8516, 20.0
    %v8645 = vmin.f32 %v8517, 20.0
    %v8646 = vmin.f32 %v8518, 20.0
    %v8647 = vmin.f32 %v8519, 20.0
    %v8648 = vmin.f32 %v8520, 20.0
    %v8649 = vmin.f32 %v8521, 20.0
    %v8650 = vmin.f32 %v8522, 20.0
    %v8651 = vmin.f32 %v8523, 20.0
    %v8652 = vmin.f32 %v8524, 20.0
    %v8653 = vmin.f32 %v8525, 20.0
    %v8654 = vmin.f32 %v8526, 20.0
    %v8655 = vmin.f32 %v8527, 20.0
    %v8656 = vmin.f32 %v8528, 20.0
    %v8657 = vmin.f32 %v8529, 20.0
    %v8658 = vmin.f32 %v8530, 20.0
    %v8659 = vmin.f32 %v8531, 20.0
    %v8660 = vmin.f32 %v8532, 20.0
    %v8661 = vmin.f32 %v8533, 20.0
    %v8662 = vmin.f32 %v8534, 20.0
    %v8663 = vmin.f32 %v8535, 20.0
    %v8664 = vmin.f32 %v8536, 20.0
    %v8665 = vmin.f32 %v8537, 20.0
    %v8666 = vmin.f32 %v8538, 20.0
    %v8667 = vmin.f32 %v8539, 20.0
    %v8668 = vmin.f32 %v8540, 20.0
    %v8669 = vmin.f32 %v8541, 20.0
    %v8670 = vmin.f32 %v8542, 20.0
    %v8671 = vmin.f32 %v8543, 20.0
    %v8672 = vmin.f32 %v8544, 20.0
    %v8673 = vmin.f32 %v8545, 20.0
    %v8674 = vmin.f32 %v8546, 20.0
    %v8675 = vmin.f32 %v8547, 20.0
    %v8676 = vmin.f32 %v8548, 20.0
    %v8677 = vmin.f32 %v8549, 20.0
    %v8678 = vmin.f32 %v8550, 20.0
    %v8679 = vmin.f32 %v8551, 20.0
    %v8680 = vmin.f32 %v8552, 20.0
    %v8681 = vmin.f32 %v8553, 20.0
    %v8682 = vmin.f32 %v8554, 20.0
    %v8683 = vmin.f32 %v8555, 20.0
    %v8684 = vmin.f32 %v8556, 20.0
    %v8685 = vmin.f32 %v8557, 20.0
    %v8686 = vmin.f32 %v8558, 20.0
    %v8687 = vmin.f32 %v8559, 20.0
    %v8688 = vmin.f32 %v8560, 20.0
    %v8689 = vmin.f32 %v8561, 20.0
    %v8690 = vmin.f32 %v8562, 20.0
    %v8691 = vmin.f32 %v8563, 20.0
    %v8692 = vmin.f32 %v8564, 20.0
    %v8693 = vmin.f32 %v8565, 20.0
    %v8694 = vmin.f32 %v8566, 20.0
    %v8695 = vmin.f32 %v8567, 20.0
    %v8696 = vmin.f32 %v8568, 20.0
    %v8697 = vmin.f32 %v8569, 20.0
    %v8698 = vmin.f32 %v8570, 20.0
    %v8699 = vmin.f32 %v8571, 20.0
    %vm8700 = vcmp.gt.f32.partialorder %v8444, 20.0
    %vm8701 = vcmp.gt.f32.partialorder %v8445, 20.0
    %vm8702 = vcmp.gt.f32.partialorder %v8446, 20.0
    %vm8703 = vcmp.gt.f32.partialorder %v8447, 20.0
    %vm8704 = vcmp.gt.f32.partialorder %v8448, 20.0
    %vm8705 = vcmp.gt.f32.partialorder %v8449, 20.0
    %vm8706 = vcmp.gt.f32.partialorder %v8450, 20.0
    %vm8707 = vcmp.gt.f32.partialorder %v8451, 20.0
    %vm8708 = vcmp.gt.f32.partialorder %v8452, 20.0
    %vm8709 = vcmp.gt.f32.partialorder %v8453, 20.0
    %vm8710 = vcmp.gt.f32.partialorder %v8454, 20.0
    %vm8711 = vcmp.gt.f32.partialorder %v8455, 20.0
    %vm8712 = vcmp.gt.f32.partialorder %v8456, 20.0
    %vm8713 = vcmp.gt.f32.partialorder %v8457, 20.0
    %vm8714 = vcmp.gt.f32.partialorder %v8458, 20.0
    %vm8715 = vcmp.gt.f32.partialorder %v8459, 20.0
    %vm8716 = vcmp.gt.f32.partialorder %v8460, 20.0
    %vm8717 = vcmp.gt.f32.partialorder %v8461, 20.0
    %vm8718 = vcmp.gt.f32.partialorder %v8462, 20.0
    %vm8719 = vcmp.gt.f32.partialorder %v8463, 20.0
    %vm8720 = vcmp.gt.f32.partialorder %v8464, 20.0
    %vm8721 = vcmp.gt.f32.partialorder %v8465, 20.0
    %vm8722 = vcmp.gt.f32.partialorder %v8466, 20.0
    %vm8723 = vcmp.gt.f32.partialorder %v8467, 20.0
    %vm8724 = vcmp.gt.f32.partialorder %v8468, 20.0
    %vm8725 = vcmp.gt.f32.partialorder %v8469, 20.0
    %vm8726 = vcmp.gt.f32.partialorder %v8470, 20.0
    %vm8727 = vcmp.gt.f32.partialorder %v8471, 20.0
    %vm8728 = vcmp.gt.f32.partialorder %v8472, 20.0
    %vm8729 = vcmp.gt.f32.partialorder %v8473, 20.0
    %vm8730 = vcmp.gt.f32.partialorder %v8474, 20.0
    %vm8731 = vcmp.gt.f32.partialorder %v8475, 20.0
    %vm8732 = vcmp.gt.f32.partialorder %v8476, 20.0
    %vm8733 = vcmp.gt.f32.partialorder %v8477, 20.0
    %vm8734 = vcmp.gt.f32.partialorder %v8478, 20.0
    %vm8735 = vcmp.gt.f32.partialorder %v8479, 20.0
    %vm8736 = vcmp.gt.f32.partialorder %v8480, 20.0
    %vm8737 = vcmp.gt.f32.partialorder %v8481, 20.0
    %vm8738 = vcmp.gt.f32.partialorder %v8482, 20.0
    %vm8739 = vcmp.gt.f32.partialorder %v8483, 20.0
    %vm8740 = vcmp.gt.f32.partialorder %v8484, 20.0
    %vm8741 = vcmp.gt.f32.partialorder %v8485, 20.0
    %vm8742 = vcmp.gt.f32.partialorder %v8486, 20.0
    %vm8743 = vcmp.gt.f32.partialorder %v8487, 20.0
    %vm8744 = vcmp.gt.f32.partialorder %v8488, 20.0
    %vm8745 = vcmp.gt.f32.partialorder %v8489, 20.0
    %vm8746 = vcmp.gt.f32.partialorder %v8490, 20.0
    %vm8747 = vcmp.gt.f32.partialorder %v8491, 20.0
    %vm8748 = vcmp.gt.f32.partialorder %v8492, 20.0
    %vm8749 = vcmp.gt.f32.partialorder %v8493, 20.0
    %vm8750 = vcmp.gt.f32.partialorder %v8494, 20.0
    %vm8751 = vcmp.gt.f32.partialorder %v8495, 20.0
    %vm8752 = vcmp.gt.f32.partialorder %v8496, 20.0
    %vm8753 = vcmp.gt.f32.partialorder %v8497, 20.0
    %vm8754 = vcmp.gt.f32.partialorder %v8498, 20.0
    %vm8755 = vcmp.gt.f32.partialorder %v8499, 20.0
    %vm8756 = vcmp.gt.f32.partialorder %v8500, 20.0
    %vm8757 = vcmp.gt.f32.partialorder %v8501, 20.0
    %vm8758 = vcmp.gt.f32.partialorder %v8502, 20.0
    %vm8759 = vcmp.gt.f32.partialorder %v8503, 20.0
    %vm8760 = vcmp.gt.f32.partialorder %v8504, 20.0
    %vm8761 = vcmp.gt.f32.partialorder %v8505, 20.0
    %vm8762 = vcmp.gt.f32.partialorder %v8506, 20.0
    %vm8763 = vcmp.gt.f32.partialorder %v8507, 20.0
    %vm8764 = vcmp.gt.f32.partialorder %v8508, 20.0
    %vm8765 = vcmp.gt.f32.partialorder %v8509, 20.0
    %vm8766 = vcmp.gt.f32.partialorder %v8510, 20.0
    %vm8767 = vcmp.gt.f32.partialorder %v8511, 20.0
    %vm8768 = vcmp.gt.f32.partialorder %v8512, 20.0
    %vm8769 = vcmp.gt.f32.partialorder %v8513, 20.0
    %vm8770 = vcmp.gt.f32.partialorder %v8514, 20.0
    %vm8771 = vcmp.gt.f32.partialorder %v8515, 20.0
    %vm8772 = vcmp.gt.f32.partialorder %v8516, 20.0
    %vm8773 = vcmp.gt.f32.partialorder %v8517, 20.0
    %vm8774 = vcmp.gt.f32.partialorder %v8518, 20.0
    %vm8775 = vcmp.gt.f32.partialorder %v8519, 20.0
    %vm8776 = vcmp.gt.f32.partialorder %v8520, 20.0
    %vm8777 = vcmp.gt.f32.partialorder %v8521, 20.0
    %vm8778 = vcmp.gt.f32.partialorder %v8522, 20.0
    %vm8779 = vcmp.gt.f32.partialorder %v8523, 20.0
    %vm8780 = vcmp.gt.f32.partialorder %v8524, 20.0
    %vm8781 = vcmp.gt.f32.partialorder %v8525, 20.0
    %vm8782 = vcmp.gt.f32.partialorder %v8526, 20.0
    %vm8783 = vcmp.gt.f32.partialorder %v8527, 20.0
    %vm8784 = vcmp.gt.f32.partialorder %v8528, 20.0
    %vm8785 = vcmp.gt.f32.partialorder %v8529, 20.0
    %vm8786 = vcmp.gt.f32.partialorder %v8530, 20.0
    %vm8787 = vcmp.gt.f32.partialorder %v8531, 20.0
    %vm8788 = vcmp.gt.f32.partialorder %v8532, 20.0
    %vm8789 = vcmp.gt.f32.partialorder %v8533, 20.0
    %vm8790 = vcmp.gt.f32.partialorder %v8534, 20.0
    %vm8791 = vcmp.gt.f32.partialorder %v8535, 20.0
    %vm8792 = vcmp.gt.f32.partialorder %v8536, 20.0
    %vm8793 = vcmp.gt.f32.partialorder %v8537, 20.0
    %vm8794 = vcmp.gt.f32.partialorder %v8538, 20.0
    %vm8795 = vcmp.gt.f32.partialorder %v8539, 20.0
    %vm8796 = vcmp.gt.f32.partialorder %v8540, 20.0
    %vm8797 = vcmp.gt.f32.partialorder %v8541, 20.0
    %vm8798 = vcmp.gt.f32.partialorder %v8542, 20.0
    %vm8799 = vcmp.gt.f32.partialorder %v8543, 20.0
    %vm8800 = vcmp.gt.f32.partialorder %v8544, 20.0
    %vm8801 = vcmp.gt.f32.partialorder %v8545, 20.0
    %vm8802 = vcmp.gt.f32.partialorder %v8546, 20.0
    %vm8803 = vcmp.gt.f32.partialorder %v8547, 20.0
    %vm8804 = vcmp.gt.f32.partialorder %v8548, 20.0
    %vm8805 = vcmp.gt.f32.partialorder %v8549, 20.0
    %vm8806 = vcmp.gt.f32.partialorder %v8550, 20.0
    %vm8807 = vcmp.gt.f32.partialorder %v8551, 20.0
    %vm8808 = vcmp.gt.f32.partialorder %v8552, 20.0
    %vm8809 = vcmp.gt.f32.partialorder %v8553, 20.0
    %vm8810 = vcmp.gt.f32.partialorder %v8554, 20.0
    %vm8811 = vcmp.gt.f32.partialorder %v8555, 20.0
    %vm8812 = vcmp.gt.f32.partialorder %v8556, 20.0
    %vm8813 = vcmp.gt.f32.partialorder %v8557, 20.0
    %vm8814 = vcmp.gt.f32.partialorder %v8558, 20.0
    %vm8815 = vcmp.gt.f32.partialorder %v8559, 20.0
    %vm8816 = vcmp.gt.f32.partialorder %v8560, 20.0
    %vm8817 = vcmp.gt.f32.partialorder %v8561, 20.0
    %vm8818 = vcmp.gt.f32.partialorder %v8562, 20.0
    %vm8819 = vcmp.gt.f32.partialorder %v8563, 20.0
    %vm8820 = vcmp.gt.f32.partialorder %v8564, 20.0
    %vm8821 = vcmp.gt.f32.partialorder %v8565, 20.0
    %vm8822 = vcmp.gt.f32.partialorder %v8566, 20.0
    %vm8823 = vcmp.gt.f32.partialorder %v8567, 20.0
    %vm8824 = vcmp.gt.f32.partialorder %v8568, 20.0
    %vm8825 = vcmp.gt.f32.partialorder %v8569, 20.0
    %vm8826 = vcmp.gt.f32.partialorder %v8570, 20.0
    %vm8827 = vcmp.gt.f32.partialorder %v8571, 20.0
    %v8828 = vmul.f32 %v8572, 1.442695
    %v8829 = vpow.pop %v8828
    %v8830 = vmul.f32 %v8573, 1.442695
    %v8831 = vpow.pop %v8830
    %v8832 = vmul.f32 %v8574, 1.442695
    %v8833 = vpow.pop %v8832
    %v8834 = vmul.f32 %v8575, 1.442695
    %v8835 = vpow.pop %v8834
    %v8836 = vmul.f32 %v8576, 1.442695
    %v8837 = vpow.pop %v8836
    %v8838 = vmul.f32 %v8577, 1.442695
    %v8839 = vpow.pop %v8838
    %v8840 = vmul.f32 %v8578, 1.442695
    %v8841 = vpow.pop %v8840
    %v8842 = vmul.f32 %v8579, 1.442695
    %v8843 = vpow.pop %v8842
    %v8844 = vmul.f32 %v8580, 1.442695
    %v8845 = vpow.pop %v8844
    %v8846 = vmul.f32 %v8581, 1.442695
    %v8847 = vpow.pop %v8846
    %v8848 = vmul.f32 %v8582, 1.442695
    %v8849 = vpow.pop %v8848
    %v8850 = vmul.f32 %v8583, 1.442695
    %v8851 = vpow.pop %v8850
    %v8852 = vmul.f32 %v8584, 1.442695
    %v8853 = vpow.pop %v8852
    %v8854 = vmul.f32 %v8585, 1.442695
    %v8855 = vpow.pop %v8854
    %v8856 = vmul.f32 %v8586, 1.442695
    %v8857 = vpow.pop %v8856
    %v8858 = vmul.f32 %v8587, 1.442695
    %v8859 = vpow.pop %v8858
    %v8860 = vmul.f32 %v8588, 1.442695
    %v8861 = vpow.pop %v8860
    %v8862 = vmul.f32 %v8589, 1.442695
    %v8863 = vpow.pop %v8862
    %v8864 = vmul.f32 %v8590, 1.442695
    %v8865 = vpow.pop %v8864
    %v8866 = vmul.f32 %v8591, 1.442695
    %v8867 = vpow.pop %v8866
    %v8868 = vmul.f32 %v8592, 1.442695
    %v8869 = vpow.pop %v8868
    %v8870 = vmul.f32 %v8593, 1.442695
    %v8871 = vpow.pop %v8870
    %v8872 = vmul.f32 %v8594, 1.442695
    %v8873 = vpow.pop %v8872
    %v8874 = vmul.f32 %v8595, 1.442695
    %v8875 = vpow.pop %v8874
    %v8876 = vmul.f32 %v8596, 1.442695
    %v8877 = vpow.pop %v8876
    %v8878 = vmul.f32 %v8597, 1.442695
    %v8879 = vpow.pop %v8878
    %v8880 = vmul.f32 %v8598, 1.442695
    %v8881 = vpow.pop %v8880
    %v8882 = vmul.f32 %v8599, 1.442695
    %v8883 = vpow.pop %v8882
    %v8884 = vmul.f32 %v8600, 1.442695
    %v8885 = vpow.pop %v8884
    %v8886 = vmul.f32 %v8601, 1.442695
    %v8887 = vpow.pop %v8886
    %v8888 = vmul.f32 %v8602, 1.442695
    %v8889 = vpow.pop %v8888
    %v8890 = vmul.f32 %v8603, 1.442695
    %v8891 = vpow.pop %v8890
    %v8892 = vmul.f32 %v8604, 1.442695
    %v8893 = vpow.pop %v8892
    %v8894 = vmul.f32 %v8605, 1.442695
    %v8895 = vpow.pop %v8894
    %v8896 = vmul.f32 %v8606, 1.442695
    %v8897 = vpow.pop %v8896
    %v8898 = vmul.f32 %v8607, 1.442695
    %v8899 = vpow.pop %v8898
    %v8900 = vmul.f32 %v8608, 1.442695
    %v8901 = vpow.pop %v8900
    %v8902 = vmul.f32 %v8609, 1.442695
    %v8903 = vpow.pop %v8902
    %v8904 = vmul.f32 %v8610, 1.442695
    %v8905 = vpow.pop %v8904
    %v8906 = vmul.f32 %v8611, 1.442695
    %v8907 = vpow.pop %v8906
    %v8908 = vmul.f32 %v8612, 1.442695
    %v8909 = vpow.pop %v8908
    %v8910 = vmul.f32 %v8613, 1.442695
    %v8911 = vpow.pop %v8910
    %v8912 = vmul.f32 %v8614, 1.442695
    %v8913 = vpow.pop %v8912
    %v8914 = vmul.f32 %v8615, 1.442695
    %v8915 = vpow.pop %v8914
    %v8916 = vmul.f32 %v8616, 1.442695
    %v8917 = vpow.pop %v8916
    %v8918 = vmul.f32 %v8617, 1.442695
    %v8919 = vpow.pop %v8918
    %v8920 = vmul.f32 %v8618, 1.442695
    %v8921 = vpow.pop %v8920
    %v8922 = vmul.f32 %v8619, 1.442695
    %v8923 = vpow.pop %v8922
    %v8924 = vmul.f32 %v8620, 1.442695
    %v8925 = vpow.pop %v8924
    %v8926 = vmul.f32 %v8621, 1.442695
    %v8927 = vpow.pop %v8926
    %v8928 = vmul.f32 %v8622, 1.442695
    %v8929 = vpow.pop %v8928
    %v8930 = vmul.f32 %v8623, 1.442695
    %v8931 = vpow.pop %v8930
    %v8932 = vmul.f32 %v8624, 1.442695
    %v8933 = vpow.pop %v8932
    %v8934 = vmul.f32 %v8625, 1.442695
    %v8935 = vpow.pop %v8934
    %v8936 = vmul.f32 %v8626, 1.442695
    %v8937 = vpow.pop %v8936
    %v8938 = vmul.f32 %v8627, 1.442695
    %v8939 = vpow.pop %v8938
    %v8940 = vmul.f32 %v8628, 1.442695
    %v8941 = vpow.pop %v8940
    %v8942 = vmul.f32 %v8629, 1.442695
    %v8943 = vpow.pop %v8942
    %v8944 = vmul.f32 %v8630, 1.442695
    %v8945 = vpow.pop %v8944
    %v8946 = vmul.f32 %v8631, 1.442695
    %v8947 = vpow.pop %v8946
    %v8948 = vmul.f32 %v8632, 1.442695
    %v8949 = vpow.pop %v8948
    %v8950 = vmul.f32 %v8633, 1.442695
    %v8951 = vpow.pop %v8950
    %v8952 = vmul.f32 %v8634, 1.442695
    %v8953 = vpow.pop %v8952
    %v8954 = vmul.f32 %v8635, 1.442695
    %v8955 = vpow.pop %v8954
    %v8956 = vmul.f32 %v8636, 1.442695
    %v8957 = vpow.pop %v8956
    %v8958 = vmul.f32 %v8637, 1.442695
    %v8959 = vpow.pop %v8958
    %v8960 = vmul.f32 %v8638, 1.442695
    %v8961 = vpow.pop %v8960
    %v8962 = vmul.f32 %v8639, 1.442695
    %v8963 = vpow.pop %v8962
    %v8964 = vmul.f32 %v8640, 1.442695
    %v8965 = vpow.pop %v8964
    %v8966 = vmul.f32 %v8641, 1.442695
    %v8967 = vpow.pop %v8966
    %v8968 = vmul.f32 %v8642, 1.442695
    %v8969 = vpow.pop %v8968
    %v8970 = vmul.f32 %v8643, 1.442695
    %v8971 = vpow.pop %v8970
    %v8972 = vmul.f32 %v8644, 1.442695
    %v8973 = vpow.pop %v8972
    %v8974 = vmul.f32 %v8645, 1.442695
    %v8975 = vpow.pop %v8974
    %v8976 = vmul.f32 %v8646, 1.442695
    %v8977 = vpow.pop %v8976
    %v8978 = vmul.f32 %v8647, 1.442695
    %v8979 = vpow.pop %v8978
    %v8980 = vmul.f32 %v8648, 1.442695
    %v8981 = vpow.pop %v8980
    %v8982 = vmul.f32 %v8649, 1.442695
    %v8983 = vpow.pop %v8982
    %v8984 = vmul.f32 %v8650, 1.442695
    %v8985 = vpow.pop %v8984
    %v8986 = vmul.f32 %v8651, 1.442695
    %v8987 = vpow.pop %v8986
    %v8988 = vmul.f32 %v8652, 1.442695
    %v8989 = vpow.pop %v8988
    %v8990 = vmul.f32 %v8653, 1.442695
    %v8991 = vpow.pop %v8990
    %v8992 = vmul.f32 %v8654, 1.442695
    %v8993 = vpow.pop %v8992
    %v8994 = vmul.f32 %v8655, 1.442695
    %v8995 = vpow.pop %v8994
    %v8996 = vmul.f32 %v8656, 1.442695
    %v8997 = vpow.pop %v8996
    %v8998 = vmul.f32 %v8657, 1.442695
    %v8999 = vpow.pop %v8998
    %v9000 = vmul.f32 %v8658, 1.442695
    %v9001 = vpow.pop %v9000
    %v9002 = vmul.f32 %v8659, 1.442695
    %v9003 = vpow.pop %v9002
    %v9004 = vmul.f32 %v8660, 1.442695
    %v9005 = vpow.pop %v9004
    %v9006 = vmul.f32 %v8661, 1.442695
    %v9007 = vpow.pop %v9006
    %v9008 = vmul.f32 %v8662, 1.442695
    %v9009 = vpow.pop %v9008
    %v9010 = vmul.f32 %v8663, 1.442695
    %v9011 = vpow.pop %v9010
    %v9012 = vmul.f32 %v8664, 1.442695
    %v9013 = vpow.pop %v9012
    %v9014 = vmul.f32 %v8665, 1.442695
    %v9015 = vpow.pop %v9014
    %v9016 = vmul.f32 %v8666, 1.442695
    %v9017 = vpow.pop %v9016
    %v9018 = vmul.f32 %v8667, 1.442695
    %v9019 = vpow.pop %v9018
    %v9020 = vmul.f32 %v8668, 1.442695
    %v9021 = vpow.pop %v9020
    %v9022 = vmul.f32 %v8669, 1.442695
    %v9023 = vpow.pop %v9022
    %v9024 = vmul.f32 %v8670, 1.442695
    %v9025 = vpow.pop %v9024
    %v9026 = vmul.f32 %v8671, 1.442695
    %v9027 = vpow.pop %v9026
    %v9028 = vmul.f32 %v8672, 1.442695
    %v9029 = vpow.pop %v9028
    %v9030 = vmul.f32 %v8673, 1.442695
    %v9031 = vpow.pop %v9030
    %v9032 = vmul.f32 %v8674, 1.442695
    %v9033 = vpow.pop %v9032
    %v9034 = vmul.f32 %v8675, 1.442695
    %v9035 = vpow.pop %v9034
    %v9036 = vmul.f32 %v8676, 1.442695
    %v9037 = vpow.pop %v9036
    %v9038 = vmul.f32 %v8677, 1.442695
    %v9039 = vpow.pop %v9038
    %v9040 = vmul.f32 %v8678, 1.442695
    %v9041 = vpow.pop %v9040
    %v9042 = vmul.f32 %v8679, 1.442695
    %v9043 = vpow.pop %v9042
    %v9044 = vmul.f32 %v8680, 1.442695
    %v9045 = vpow.pop %v9044
    %v9046 = vmul.f32 %v8681, 1.442695
    %v9047 = vpow.pop %v9046
    %v9048 = vmul.f32 %v8682, 1.442695
    %v9049 = vpow.pop %v9048
    %v9050 = vmul.f32 %v8683, 1.442695
    %v9051 = vpow.pop %v9050
    %v9052 = vmul.f32 %v8684, 1.442695
    %v9053 = vpow.pop %v9052
    %v9054 = vmul.f32 %v8685, 1.442695
    %v9055 = vpow.pop %v9054
    %v9056 = vmul.f32 %v8686, 1.442695
    %v9057 = vpow.pop %v9056
    %v9058 = vmul.f32 %v8687, 1.442695
    %v9059 = vpow.pop %v9058
    %v9060 = vmul.f32 %v8688, 1.442695
    %v9061 = vpow.pop %v9060
    %v9062 = vmul.f32 %v8689, 1.442695
    %v9063 = vpow.pop %v9062
    %v9064 = vmul.f32 %v8690, 1.442695
    %v9065 = vpow.pop %v9064
    %v9066 = vmul.f32 %v8691, 1.442695
    %v9067 = vpow.pop %v9066
    %v9068 = vmul.f32 %v8692, 1.442695
    %v9069 = vpow.pop %v9068
    %v9070 = vmul.f32 %v8693, 1.442695
    %v9071 = vpow.pop %v9070
    %v9072 = vmul.f32 %v8694, 1.442695
    %v9073 = vpow.pop %v9072
    %v9074 = vmul.f32 %v8695, 1.442695
    %v9075 = vpow.pop %v9074
    %v9076 = vmul.f32 %v8696, 1.442695
    %v9077 = vpow.pop %v9076
    %v9078 = vmul.f32 %v8697, 1.442695
    %v9079 = vpow.pop %v9078
    %v9080 = vmul.f32 %v8698, 1.442695
    %v9081 = vpow.pop %v9080
    %v9082 = vmul.f32 %v8699, 1.442695
    %v9083 = vpow.pop %v9082
    %v9084 = vadd.f32 %v8829, 1.0
    %v9085 = vlog2.pop %v9084
    %v9086 = vmul.f32 %v9085, 0.6931472
    %v9087 = vmul.f32 -0.5, %v8829
    %v9088 = vadd.f32 %v9087, 1.0
    %v9089 = vmul.f32 %v9088, %v8829
    %v9090 = vand.u32 2147483647, %v8829
    %vm9091 = vcmp.lt.f32.partialorder %v9090, 0.0004427343
    %v9092 = vsel %vm9091, %v9089, %v9086
    %v9093 = vadd.f32 %v8831, 1.0
    %v9094 = vlog2.pop %v9093
    %v9095 = vmul.f32 %v9094, 0.6931472
    %v9096 = vmul.f32 -0.5, %v8831
    %v9097 = vadd.f32 %v9096, 1.0
    %v9098 = vmul.f32 %v9097, %v8831
    %v9099 = vand.u32 2147483647, %v8831
    %vm9100 = vcmp.lt.f32.partialorder %v9099, 0.0004427343
    %v9101 = vsel %vm9100, %v9098, %v9095
    %v9102 = vadd.f32 %v8833, 1.0
    %v9103 = vlog2.pop %v9102
    %v9104 = vmul.f32 %v9103, 0.6931472
    %v9105 = vmul.f32 -0.5, %v8833
    %v9106 = vadd.f32 %v9105, 1.0
    %v9107 = vmul.f32 %v9106, %v8833
    %v9108 = vand.u32 2147483647, %v8833
    %vm9109 = vcmp.lt.f32.partialorder %v9108, 0.0004427343
    %v9110 = vsel %vm9109, %v9107, %v9104
    %v9111 = vadd.f32 %v8835, 1.0
    %v9112 = vlog2.pop %v9111
    %v9113 = vmul.f32 %v9112, 0.6931472
    %v9114 = vmul.f32 -0.5, %v8835
    %v9115 = vadd.f32 %v9114, 1.0
    %v9116 = vmul.f32 %v9115, %v8835
    %v9117 = vand.u32 2147483647, %v8835
    %vm9118 = vcmp.lt.f32.partialorder %v9117, 0.0004427343
    %v9119 = vsel %vm9118, %v9116, %v9113
    %v9120 = vadd.f32 %v8837, 1.0
    %v9121 = vlog2.pop %v9120
    %v9122 = vmul.f32 %v9121, 0.6931472
    %v9123 = vmul.f32 -0.5, %v8837
    %v9124 = vadd.f32 %v9123, 1.0
    %v9125 = vmul.f32 %v9124, %v8837
    %v9126 = vand.u32 2147483647, %v8837
    %vm9127 = vcmp.lt.f32.partialorder %v9126, 0.0004427343
    %v9128 = vsel %vm9127, %v9125, %v9122
    %v9129 = vadd.f32 %v8839, 1.0
    %v9130 = vlog2.pop %v9129
    %v9131 = vmul.f32 %v9130, 0.6931472
    %v9132 = vmul.f32 -0.5, %v8839
    %v9133 = vadd.f32 %v9132, 1.0
    %v9134 = vmul.f32 %v9133, %v8839
    %v9135 = vand.u32 2147483647, %v8839
    %vm9136 = vcmp.lt.f32.partialorder %v9135, 0.0004427343
    %v9137 = vsel %vm9136, %v9134, %v9131
    %v9138 = vadd.f32 %v8841, 1.0
    %v9139 = vlog2.pop %v9138
    %v9140 = vmul.f32 %v9139, 0.6931472
    %v9141 = vmul.f32 -0.5, %v8841
    %v9142 = vadd.f32 %v9141, 1.0
    %v9143 = vmul.f32 %v9142, %v8841
    %v9144 = vand.u32 2147483647, %v8841
    %vm9145 = vcmp.lt.f32.partialorder %v9144, 0.0004427343
    %v9146 = vsel %vm9145, %v9143, %v9140
    %v9147 = vadd.f32 %v8843, 1.0
    %v9148 = vlog2.pop %v9147
    %v9149 = vmul.f32 %v9148, 0.6931472
    %v9150 = vmul.f32 -0.5, %v8843
    %v9151 = vadd.f32 %v9150, 1.0
    %v9152 = vmul.f32 %v9151, %v8843
    %v9153 = vand.u32 2147483647, %v8843
    %vm9154 = vcmp.lt.f32.partialorder %v9153, 0.0004427343
    %v9155 = vsel %vm9154, %v9152, %v9149
    %v9156 = vadd.f32 %v8845, 1.0
    %v9157 = vlog2.pop %v9156
    %v9158 = vmul.f32 %v9157, 0.6931472
    %v9159 = vmul.f32 -0.5, %v8845
    %v9160 = vadd.f32 %v9159, 1.0
    %v9161 = vmul.f32 %v9160, %v8845
    %v9162 = vand.u32 2147483647, %v8845
    %vm9163 = vcmp.lt.f32.partialorder %v9162, 0.0004427343
    %v9164 = vsel %vm9163, %v9161, %v9158
    %v9165 = vadd.f32 %v8847, 1.0
    %v9166 = vlog2.pop %v9165
    %v9167 = vmul.f32 %v9166, 0.6931472
    %v9168 = vmul.f32 -0.5, %v8847
    %v9169 = vadd.f32 %v9168, 1.0
    %v9170 = vmul.f32 %v9169, %v8847
    %v9171 = vand.u32 2147483647, %v8847
    %vm9172 = vcmp.lt.f32.partialorder %v9171, 0.0004427343
    %v9173 = vsel %vm9172, %v9170, %v9167
    %v9174 = vadd.f32 %v8849, 1.0
    %v9175 = vlog2.pop %v9174
    %v9176 = vmul.f32 %v9175, 0.6931472
    %v9177 = vmul.f32 -0.5, %v8849
    %v9178 = vadd.f32 %v9177, 1.0
    %v9179 = vmul.f32 %v9178, %v8849
    %v9180 = vand.u32 2147483647, %v8849
    %vm9181 = vcmp.lt.f32.partialorder %v9180, 0.0004427343
    %v9182 = vsel %vm9181, %v9179, %v9176
    %v9183 = vadd.f32 %v8851, 1.0
    %v9184 = vlog2.pop %v9183
    %v9185 = vmul.f32 %v9184, 0.6931472
    %v9186 = vmul.f32 -0.5, %v8851
    %v9187 = vadd.f32 %v9186, 1.0
    %v9188 = vmul.f32 %v9187, %v8851
    %v9189 = vand.u32 2147483647, %v8851
    %vm9190 = vcmp.lt.f32.partialorder %v9189, 0.0004427343
    %v9191 = vsel %vm9190, %v9188, %v9185
    %v9192 = vadd.f32 %v8853, 1.0
    %v9193 = vlog2.pop %v9192
    %v9194 = vmul.f32 %v9193, 0.6931472
    %v9195 = vmul.f32 -0.5, %v8853
    %v9196 = vadd.f32 %v9195, 1.0
    %v9197 = vmul.f32 %v9196, %v8853
    %v9198 = vand.u32 2147483647, %v8853
    %vm9199 = vcmp.lt.f32.partialorder %v9198, 0.0004427343
    %v9200 = vsel %vm9199, %v9197, %v9194
    %v9201 = vadd.f32 %v8855, 1.0
    %v9202 = vlog2.pop %v9201
    %v9203 = vmul.f32 %v9202, 0.6931472
    %v9204 = vmul.f32 -0.5, %v8855
    %v9205 = vadd.f32 %v9204, 1.0
    %v9206 = vmul.f32 %v9205, %v8855
    %v9207 = vand.u32 2147483647, %v8855
    %vm9208 = vcmp.lt.f32.partialorder %v9207, 0.0004427343
    %v9209 = vsel %vm9208, %v9206, %v9203
    %v9210 = vadd.f32 %v8857, 1.0
    %v9211 = vlog2.pop %v9210
    %v9212 = vmul.f32 %v9211, 0.6931472
    %v9213 = vmul.f32 -0.5, %v8857
    %v9214 = vadd.f32 %v9213, 1.0
    %v9215 = vmul.f32 %v9214, %v8857
    %v9216 = vand.u32 2147483647, %v8857
    %vm9217 = vcmp.lt.f32.partialorder %v9216, 0.0004427343
    %v9218 = vsel %vm9217, %v9215, %v9212
    %v9219 = vadd.f32 %v8859, 1.0
    %v9220 = vlog2.pop %v9219
    %v9221 = vmul.f32 %v9220, 0.6931472
    %v9222 = vmul.f32 -0.5, %v8859
    %v9223 = vadd.f32 %v9222, 1.0
    %v9224 = vmul.f32 %v9223, %v8859
    %v9225 = vand.u32 2147483647, %v8859
    %vm9226 = vcmp.lt.f32.partialorder %v9225, 0.0004427343
    %v9227 = vsel %vm9226, %v9224, %v9221
    %v9228 = vadd.f32 %v8861, 1.0
    %v9229 = vlog2.pop %v9228
    %v9230 = vmul.f32 %v9229, 0.6931472
    %v9231 = vmul.f32 -0.5, %v8861
    %v9232 = vadd.f32 %v9231, 1.0
    %v9233 = vmul.f32 %v9232, %v8861
    %v9234 = vand.u32 2147483647, %v8861
    %vm9235 = vcmp.lt.f32.partialorder %v9234, 0.0004427343
    %v9236 = vsel %vm9235, %v9233, %v9230
    %v9237 = vadd.f32 %v8863, 1.0
    %v9238 = vlog2.pop %v9237
    %v9239 = vmul.f32 %v9238, 0.6931472
    %v9240 = vmul.f32 -0.5, %v8863
    %v9241 = vadd.f32 %v9240, 1.0
    %v9242 = vmul.f32 %v9241, %v8863
    %v9243 = vand.u32 2147483647, %v8863
    %vm9244 = vcmp.lt.f32.partialorder %v9243, 0.0004427343
    %v9245 = vsel %vm9244, %v9242, %v9239
    %v9246 = vadd.f32 %v8865, 1.0
    %v9247 = vlog2.pop %v9246
    %v9248 = vmul.f32 %v9247, 0.6931472
    %v9249 = vmul.f32 -0.5, %v8865
    %v9250 = vadd.f32 %v9249, 1.0
    %v9251 = vmul.f32 %v9250, %v8865
    %v9252 = vand.u32 2147483647, %v8865
    %vm9253 = vcmp.lt.f32.partialorder %v9252, 0.0004427343
    %v9254 = vsel %vm9253, %v9251, %v9248
    %v9255 = vadd.f32 %v8867, 1.0
    %v9256 = vlog2.pop %v9255
    %v9257 = vmul.f32 %v9256, 0.6931472
    %v9258 = vmul.f32 -0.5, %v8867
    %v9259 = vadd.f32 %v9258, 1.0
    %v9260 = vmul.f32 %v9259, %v8867
    %v9261 = vand.u32 2147483647, %v8867
    %vm9262 = vcmp.lt.f32.partialorder %v9261, 0.0004427343
    %v9263 = vsel %vm9262, %v9260, %v9257
    %v9264 = vadd.f32 %v8869, 1.0
    %v9265 = vlog2.pop %v9264
    %v9266 = vmul.f32 %v9265, 0.6931472
    %v9267 = vmul.f32 -0.5, %v8869
    %v9268 = vadd.f32 %v9267, 1.0
    %v9269 = vmul.f32 %v9268, %v8869
    %v9270 = vand.u32 2147483647, %v8869
    %vm9271 = vcmp.lt.f32.partialorder %v9270, 0.0004427343
    %v9272 = vsel %vm9271, %v9269, %v9266
    %v9273 = vadd.f32 %v8871, 1.0
    %v9274 = vlog2.pop %v9273
    %v9275 = vmul.f32 %v9274, 0.6931472
    %v9276 = vmul.f32 -0.5, %v8871
    %v9277 = vadd.f32 %v9276, 1.0
    %v9278 = vmul.f32 %v9277, %v8871
    %v9279 = vand.u32 2147483647, %v8871
    %vm9280 = vcmp.lt.f32.partialorder %v9279, 0.0004427343
    %v9281 = vsel %vm9280, %v9278, %v9275
    %v9282 = vadd.f32 %v8873, 1.0
    %v9283 = vlog2.pop %v9282
    %v9284 = vmul.f32 %v9283, 0.6931472
    %v9285 = vmul.f32 -0.5, %v8873
    %v9286 = vadd.f32 %v9285, 1.0
    %v9287 = vmul.f32 %v9286, %v8873
    %v9288 = vand.u32 2147483647, %v8873
    %vm9289 = vcmp.lt.f32.partialorder %v9288, 0.0004427343
    %v9290 = vsel %vm9289, %v9287, %v9284
    %v9291 = vadd.f32 %v8875, 1.0
    %v9292 = vlog2.pop %v9291
    %v9293 = vmul.f32 %v9292, 0.6931472
    %v9294 = vmul.f32 -0.5, %v8875
    %v9295 = vadd.f32 %v9294, 1.0
    %v9296 = vmul.f32 %v9295, %v8875
    %v9297 = vand.u32 2147483647, %v8875
    %vm9298 = vcmp.lt.f32.partialorder %v9297, 0.0004427343
    %v9299 = vsel %vm9298, %v9296, %v9293
    %v9300 = vadd.f32 %v8877, 1.0
    %v9301 = vlog2.pop %v9300
    %v9302 = vmul.f32 %v9301, 0.6931472
    %v9303 = vmul.f32 -0.5, %v8877
    %v9304 = vadd.f32 %v9303, 1.0
    %v9305 = vmul.f32 %v9304, %v8877
    %v9306 = vand.u32 2147483647, %v8877
    %vm9307 = vcmp.lt.f32.partialorder %v9306, 0.0004427343
    %v9308 = vsel %vm9307, %v9305, %v9302
    %v9309 = vadd.f32 %v8879, 1.0
    %v9310 = vlog2.pop %v9309
    %v9311 = vmul.f32 %v9310, 0.6931472
    %v9312 = vmul.f32 -0.5, %v8879
    %v9313 = vadd.f32 %v9312, 1.0
    %v9314 = vmul.f32 %v9313, %v8879
    %v9315 = vand.u32 2147483647, %v8879
    %vm9316 = vcmp.lt.f32.partialorder %v9315, 0.0004427343
    %v9317 = vsel %vm9316, %v9314, %v9311
    %v9318 = vadd.f32 %v8881, 1.0
    %v9319 = vlog2.pop %v9318
    %v9320 = vmul.f32 %v9319, 0.6931472
    %v9321 = vmul.f32 -0.5, %v8881
    %v9322 = vadd.f32 %v9321, 1.0
    %v9323 = vmul.f32 %v9322, %v8881
    %v9324 = vand.u32 2147483647, %v8881
    %vm9325 = vcmp.lt.f32.partialorder %v9324, 0.0004427343
    %v9326 = vsel %vm9325, %v9323, %v9320
    %v9327 = vadd.f32 %v8883, 1.0
    %v9328 = vlog2.pop %v9327
    %v9329 = vmul.f32 %v9328, 0.6931472
    %v9330 = vmul.f32 -0.5, %v8883
    %v9331 = vadd.f32 %v9330, 1.0
    %v9332 = vmul.f32 %v9331, %v8883
    %v9333 = vand.u32 2147483647, %v8883
    %vm9334 = vcmp.lt.f32.partialorder %v9333, 0.0004427343
    %v9335 = vsel %vm9334, %v9332, %v9329
    %v9336 = vadd.f32 %v8885, 1.0
    %v9337 = vlog2.pop %v9336
    %v9338 = vmul.f32 %v9337, 0.6931472
    %v9339 = vmul.f32 -0.5, %v8885
    %v9340 = vadd.f32 %v9339, 1.0
    %v9341 = vmul.f32 %v9340, %v8885
    %v9342 = vand.u32 2147483647, %v8885
    %vm9343 = vcmp.lt.f32.partialorder %v9342, 0.0004427343
    %v9344 = vsel %vm9343, %v9341, %v9338
    %v9345 = vadd.f32 %v8887, 1.0
    %v9346 = vlog2.pop %v9345
    %v9347 = vmul.f32 %v9346, 0.6931472
    %v9348 = vmul.f32 -0.5, %v8887
    %v9349 = vadd.f32 %v9348, 1.0
    %v9350 = vmul.f32 %v9349, %v8887
    %v9351 = vand.u32 2147483647, %v8887
    %vm9352 = vcmp.lt.f32.partialorder %v9351, 0.0004427343
    %v9353 = vsel %vm9352, %v9350, %v9347
    %v9354 = vadd.f32 %v8889, 1.0
    %v9355 = vlog2.pop %v9354
    %v9356 = vmul.f32 %v9355, 0.6931472
    %v9357 = vmul.f32 -0.5, %v8889
    %v9358 = vadd.f32 %v9357, 1.0
    %v9359 = vmul.f32 %v9358, %v8889
    %v9360 = vand.u32 2147483647, %v8889
    %vm9361 = vcmp.lt.f32.partialorder %v9360, 0.0004427343
    %v9362 = vsel %vm9361, %v9359, %v9356
    %v9363 = vadd.f32 %v8891, 1.0
    %v9364 = vlog2.pop %v9363
    %v9365 = vmul.f32 %v9364, 0.6931472
    %v9366 = vmul.f32 -0.5, %v8891
    %v9367 = vadd.f32 %v9366, 1.0
    %v9368 = vmul.f32 %v9367, %v8891
    %v9369 = vand.u32 2147483647, %v8891
    %vm9370 = vcmp.lt.f32.partialorder %v9369, 0.0004427343
    %v9371 = vsel %vm9370, %v9368, %v9365
    %v9372 = vadd.f32 %v8893, 1.0
    %v9373 = vlog2.pop %v9372
    %v9374 = vmul.f32 %v9373, 0.6931472
    %v9375 = vmul.f32 -0.5, %v8893
    %v9376 = vadd.f32 %v9375, 1.0
    %v9377 = vmul.f32 %v9376, %v8893
    %v9378 = vand.u32 2147483647, %v8893
    %vm9379 = vcmp.lt.f32.partialorder %v9378, 0.0004427343
    %v9380 = vsel %vm9379, %v9377, %v9374
    %v9381 = vadd.f32 %v8895, 1.0
    %v9382 = vlog2.pop %v9381
    %v9383 = vmul.f32 %v9382, 0.6931472
    %v9384 = vmul.f32 -0.5, %v8895
    %v9385 = vadd.f32 %v9384, 1.0
    %v9386 = vmul.f32 %v9385, %v8895
    %v9387 = vand.u32 2147483647, %v8895
    %vm9388 = vcmp.lt.f32.partialorder %v9387, 0.0004427343
    %v9389 = vsel %vm9388, %v9386, %v9383
    %v9390 = vadd.f32 %v8897, 1.0
    %v9391 = vlog2.pop %v9390
    %v9392 = vmul.f32 %v9391, 0.6931472
    %v9393 = vmul.f32 -0.5, %v8897
    %v9394 = vadd.f32 %v9393, 1.0
    %v9395 = vmul.f32 %v9394, %v8897
    %v9396 = vand.u32 2147483647, %v8897
    %vm9397 = vcmp.lt.f32.partialorder %v9396, 0.0004427343
    %v9398 = vsel %vm9397, %v9395, %v9392
    %v9399 = vadd.f32 %v8899, 1.0
    %v9400 = vlog2.pop %v9399
    %v9401 = vmul.f32 %v9400, 0.6931472
    %v9402 = vmul.f32 -0.5, %v8899
    %v9403 = vadd.f32 %v9402, 1.0
    %v9404 = vmul.f32 %v9403, %v8899
    %v9405 = vand.u32 2147483647, %v8899
    %vm9406 = vcmp.lt.f32.partialorder %v9405, 0.0004427343
    %v9407 = vsel %vm9406, %v9404, %v9401
    %v9408 = vadd.f32 %v8901, 1.0
    %v9409 = vlog2.pop %v9408
    %v9410 = vmul.f32 %v9409, 0.6931472
    %v9411 = vmul.f32 -0.5, %v8901
    %v9412 = vadd.f32 %v9411, 1.0
    %v9413 = vmul.f32 %v9412, %v8901
    %v9414 = vand.u32 2147483647, %v8901
    %vm9415 = vcmp.lt.f32.partialorder %v9414, 0.0004427343
    %v9416 = vsel %vm9415, %v9413, %v9410
    %v9417 = vadd.f32 %v8903, 1.0
    %v9418 = vlog2.pop %v9417
    %v9419 = vmul.f32 %v9418, 0.6931472
    %v9420 = vmul.f32 -0.5, %v8903
    %v9421 = vadd.f32 %v9420, 1.0
    %v9422 = vmul.f32 %v9421, %v8903
    %v9423 = vand.u32 2147483647, %v8903
    %vm9424 = vcmp.lt.f32.partialorder %v9423, 0.0004427343
    %v9425 = vsel %vm9424, %v9422, %v9419
    %v9426 = vadd.f32 %v8905, 1.0
    %v9427 = vlog2.pop %v9426
    %v9428 = vmul.f32 %v9427, 0.6931472
    %v9429 = vmul.f32 -0.5, %v8905
    %v9430 = vadd.f32 %v9429, 1.0
    %v9431 = vmul.f32 %v9430, %v8905
    %v9432 = vand.u32 2147483647, %v8905
    %vm9433 = vcmp.lt.f32.partialorder %v9432, 0.0004427343
    %v9434 = vsel %vm9433, %v9431, %v9428
    %v9435 = vadd.f32 %v8907, 1.0
    %v9436 = vlog2.pop %v9435
    %v9437 = vmul.f32 %v9436, 0.6931472
    %v9438 = vmul.f32 -0.5, %v8907
    %v9439 = vadd.f32 %v9438, 1.0
    %v9440 = vmul.f32 %v9439, %v8907
    %v9441 = vand.u32 2147483647, %v8907
    %vm9442 = vcmp.lt.f32.partialorder %v9441, 0.0004427343
    %v9443 = vsel %vm9442, %v9440, %v9437
    %v9444 = vadd.f32 %v8909, 1.0
    %v9445 = vlog2.pop %v9444
    %v9446 = vmul.f32 %v9445, 0.6931472
    %v9447 = vmul.f32 -0.5, %v8909
    %v9448 = vadd.f32 %v9447, 1.0
    %v9449 = vmul.f32 %v9448, %v8909
    %v9450 = vand.u32 2147483647, %v8909
    %vm9451 = vcmp.lt.f32.partialorder %v9450, 0.0004427343
    %v9452 = vsel %vm9451, %v9449, %v9446
    %v9453 = vadd.f32 %v8911, 1.0
    %v9454 = vlog2.pop %v9453
    %v9455 = vmul.f32 %v9454, 0.6931472
    %v9456 = vmul.f32 -0.5, %v8911
    %v9457 = vadd.f32 %v9456, 1.0
    %v9458 = vmul.f32 %v9457, %v8911
    %v9459 = vand.u32 2147483647, %v8911
    %vm9460 = vcmp.lt.f32.partialorder %v9459, 0.0004427343
    %v9461 = vsel %vm9460, %v9458, %v9455
    %v9462 = vadd.f32 %v8913, 1.0
    %v9463 = vlog2.pop %v9462
    %v9464 = vmul.f32 %v9463, 0.6931472
    %v9465 = vmul.f32 -0.5, %v8913
    %v9466 = vadd.f32 %v9465, 1.0
    %v9467 = vmul.f32 %v9466, %v8913
    %v9468 = vand.u32 2147483647, %v8913
    %vm9469 = vcmp.lt.f32.partialorder %v9468, 0.0004427343
    %v9470 = vsel %vm9469, %v9467, %v9464
    %v9471 = vadd.f32 %v8915, 1.0
    %v9472 = vlog2.pop %v9471
    %v9473 = vmul.f32 %v9472, 0.6931472
    %v9474 = vmul.f32 -0.5, %v8915
    %v9475 = vadd.f32 %v9474, 1.0
    %v9476 = vmul.f32 %v9475, %v8915
    %v9477 = vand.u32 2147483647, %v8915
    %vm9478 = vcmp.lt.f32.partialorder %v9477, 0.0004427343
    %v9479 = vsel %vm9478, %v9476, %v9473
    %v9480 = vadd.f32 %v8917, 1.0
    %v9481 = vlog2.pop %v9480
    %v9482 = vmul.f32 %v9481, 0.6931472
    %v9483 = vmul.f32 -0.5, %v8917
    %v9484 = vadd.f32 %v9483, 1.0
    %v9485 = vmul.f32 %v9484, %v8917
    %v9486 = vand.u32 2147483647, %v8917
    %vm9487 = vcmp.lt.f32.partialorder %v9486, 0.0004427343
    %v9488 = vsel %vm9487, %v9485, %v9482
    %v9489 = vadd.f32 %v8919, 1.0
    %v9490 = vlog2.pop %v9489
    %v9491 = vmul.f32 %v9490, 0.6931472
    %v9492 = vmul.f32 -0.5, %v8919
    %v9493 = vadd.f32 %v9492, 1.0
    %v9494 = vmul.f32 %v9493, %v8919
    %v9495 = vand.u32 2147483647, %v8919
    %vm9496 = vcmp.lt.f32.partialorder %v9495, 0.0004427343
    %v9497 = vsel %vm9496, %v9494, %v9491
    %v9498 = vadd.f32 %v8921, 1.0
    %v9499 = vlog2.pop %v9498
    %v9500 = vmul.f32 %v9499, 0.6931472
    %v9501 = vmul.f32 -0.5, %v8921
    %v9502 = vadd.f32 %v9501, 1.0
    %v9503 = vmul.f32 %v9502, %v8921
    %v9504 = vand.u32 2147483647, %v8921
    %vm9505 = vcmp.lt.f32.partialorder %v9504, 0.0004427343
    %v9506 = vsel %vm9505, %v9503, %v9500
    %v9507 = vadd.f32 %v8923, 1.0
    %v9508 = vlog2.pop %v9507
    %v9509 = vmul.f32 %v9508, 0.6931472
    %v9510 = vmul.f32 -0.5, %v8923
    %v9511 = vadd.f32 %v9510, 1.0
    %v9512 = vmul.f32 %v9511, %v8923
    %v9513 = vand.u32 2147483647, %v8923
    %vm9514 = vcmp.lt.f32.partialorder %v9513, 0.0004427343
    %v9515 = vsel %vm9514, %v9512, %v9509
    %v9516 = vadd.f32 %v8925, 1.0
    %v9517 = vlog2.pop %v9516
    %v9518 = vmul.f32 %v9517, 0.6931472
    %v9519 = vmul.f32 -0.5, %v8925
    %v9520 = vadd.f32 %v9519, 1.0
    %v9521 = vmul.f32 %v9520, %v8925
    %v9522 = vand.u32 2147483647, %v8925
    %vm9523 = vcmp.lt.f32.partialorder %v9522, 0.0004427343
    %v9524 = vsel %vm9523, %v9521, %v9518
    %v9525 = vadd.f32 %v8927, 1.0
    %v9526 = vlog2.pop %v9525
    %v9527 = vmul.f32 %v9526, 0.6931472
    %v9528 = vmul.f32 -0.5, %v8927
    %v9529 = vadd.f32 %v9528, 1.0
    %v9530 = vmul.f32 %v9529, %v8927
    %v9531 = vand.u32 2147483647, %v8927
    %vm9532 = vcmp.lt.f32.partialorder %v9531, 0.0004427343
    %v9533 = vsel %vm9532, %v9530, %v9527
    %v9534 = vadd.f32 %v8929, 1.0
    %v9535 = vlog2.pop %v9534
    %v9536 = vmul.f32 %v9535, 0.6931472
    %v9537 = vmul.f32 -0.5, %v8929
    %v9538 = vadd.f32 %v9537, 1.0
    %v9539 = vmul.f32 %v9538, %v8929
    %v9540 = vand.u32 2147483647, %v8929
    %vm9541 = vcmp.lt.f32.partialorder %v9540, 0.0004427343
    %v9542 = vsel %vm9541, %v9539, %v9536
    %v9543 = vadd.f32 %v8931, 1.0
    %v9544 = vlog2.pop %v9543
    %v9545 = vmul.f32 %v9544, 0.6931472
    %v9546 = vmul.f32 -0.5, %v8931
    %v9547 = vadd.f32 %v9546, 1.0
    %v9548 = vmul.f32 %v9547, %v8931
    %v9549 = vand.u32 2147483647, %v8931
    %vm9550 = vcmp.lt.f32.partialorder %v9549, 0.0004427343
    %v9551 = vsel %vm9550, %v9548, %v9545
    %v9552 = vadd.f32 %v8933, 1.0
    %v9553 = vlog2.pop %v9552
    %v9554 = vmul.f32 %v9553, 0.6931472
    %v9555 = vmul.f32 -0.5, %v8933
    %v9556 = vadd.f32 %v9555, 1.0
    %v9557 = vmul.f32 %v9556, %v8933
    %v9558 = vand.u32 2147483647, %v8933
    %vm9559 = vcmp.lt.f32.partialorder %v9558, 0.0004427343
    %v9560 = vsel %vm9559, %v9557, %v9554
    %v9561 = vadd.f32 %v8935, 1.0
    %v9562 = vlog2.pop %v9561
    %v9563 = vmul.f32 %v9562, 0.6931472
    %v9564 = vmul.f32 -0.5, %v8935
    %v9565 = vadd.f32 %v9564, 1.0
    %v9566 = vmul.f32 %v9565, %v8935
    %v9567 = vand.u32 2147483647, %v8935
    %vm9568 = vcmp.lt.f32.partialorder %v9567, 0.0004427343
    %v9569 = vsel %vm9568, %v9566, %v9563
    %v9570 = vadd.f32 %v8937, 1.0
    %v9571 = vlog2.pop %v9570
    %v9572 = vmul.f32 %v9571, 0.6931472
    %v9573 = vmul.f32 -0.5, %v8937
    %v9574 = vadd.f32 %v9573, 1.0
    %v9575 = vmul.f32 %v9574, %v8937
    %v9576 = vand.u32 2147483647, %v8937
    %vm9577 = vcmp.lt.f32.partialorder %v9576, 0.0004427343
    %v9578 = vsel %vm9577, %v9575, %v9572
    %v9579 = vadd.f32 %v8939, 1.0
    %v9580 = vlog2.pop %v9579
    %v9581 = vmul.f32 %v9580, 0.6931472
    %v9582 = vmul.f32 -0.5, %v8939
    %v9583 = vadd.f32 %v9582, 1.0
    %v9584 = vmul.f32 %v9583, %v8939
    %v9585 = vand.u32 2147483647, %v8939
    %vm9586 = vcmp.lt.f32.partialorder %v9585, 0.0004427343
    %v9587 = vsel %vm9586, %v9584, %v9581
    %v9588 = vadd.f32 %v8941, 1.0
    %v9589 = vlog2.pop %v9588
    %v9590 = vmul.f32 %v9589, 0.6931472
    %v9591 = vmul.f32 -0.5, %v8941
    %v9592 = vadd.f32 %v9591, 1.0
    %v9593 = vmul.f32 %v9592, %v8941
    %v9594 = vand.u32 2147483647, %v8941
    %vm9595 = vcmp.lt.f32.partialorder %v9594, 0.0004427343
    %v9596 = vsel %vm9595, %v9593, %v9590
    %v9597 = vadd.f32 %v8943, 1.0
    %v9598 = vlog2.pop %v9597
    %v9599 = vmul.f32 %v9598, 0.6931472
    %v9600 = vmul.f32 -0.5, %v8943
    %v9601 = vadd.f32 %v9600, 1.0
    %v9602 = vmul.f32 %v9601, %v8943
    %v9603 = vand.u32 2147483647, %v8943
    %vm9604 = vcmp.lt.f32.partialorder %v9603, 0.0004427343
    %v9605 = vsel %vm9604, %v9602, %v9599
    %v9606 = vadd.f32 %v8945, 1.0
    %v9607 = vlog2.pop %v9606
    %v9608 = vmul.f32 %v9607, 0.6931472
    %v9609 = vmul.f32 -0.5, %v8945
    %v9610 = vadd.f32 %v9609, 1.0
    %v9611 = vmul.f32 %v9610, %v8945
    %v9612 = vand.u32 2147483647, %v8945
    %vm9613 = vcmp.lt.f32.partialorder %v9612, 0.0004427343
    %v9614 = vsel %vm9613, %v9611, %v9608
    %v9615 = vadd.f32 %v8947, 1.0
    %v9616 = vlog2.pop %v9615
    %v9617 = vmul.f32 %v9616, 0.6931472
    %v9618 = vmul.f32 -0.5, %v8947
    %v9619 = vadd.f32 %v9618, 1.0
    %v9620 = vmul.f32 %v9619, %v8947
    %v9621 = vand.u32 2147483647, %v8947
    %vm9622 = vcmp.lt.f32.partialorder %v9621, 0.0004427343
    %v9623 = vsel %vm9622, %v9620, %v9617
    %v9624 = vadd.f32 %v8949, 1.0
    %v9625 = vlog2.pop %v9624
    %v9626 = vmul.f32 %v9625, 0.6931472
    %v9627 = vmul.f32 -0.5, %v8949
    %v9628 = vadd.f32 %v9627, 1.0
    %v9629 = vmul.f32 %v9628, %v8949
    %v9630 = vand.u32 2147483647, %v8949
    %vm9631 = vcmp.lt.f32.partialorder %v9630, 0.0004427343
    %v9632 = vsel %vm9631, %v9629, %v9626
    %v9633 = vadd.f32 %v8951, 1.0
    %v9634 = vlog2.pop %v9633
    %v9635 = vmul.f32 %v9634, 0.6931472
    %v9636 = vmul.f32 -0.5, %v8951
    %v9637 = vadd.f32 %v9636, 1.0
    %v9638 = vmul.f32 %v9637, %v8951
    %v9639 = vand.u32 2147483647, %v8951
    %vm9640 = vcmp.lt.f32.partialorder %v9639, 0.0004427343
    %v9641 = vsel %vm9640, %v9638, %v9635
    %v9642 = vadd.f32 %v8953, 1.0
    %v9643 = vlog2.pop %v9642
    %v9644 = vmul.f32 %v9643, 0.6931472
    %v9645 = vmul.f32 -0.5, %v8953
    %v9646 = vadd.f32 %v9645, 1.0
    %v9647 = vmul.f32 %v9646, %v8953
    %v9648 = vand.u32 2147483647, %v8953
    %vm9649 = vcmp.lt.f32.partialorder %v9648, 0.0004427343
    %v9650 = vsel %vm9649, %v9647, %v9644
    %v9651 = vadd.f32 %v8955, 1.0
    %v9652 = vlog2.pop %v9651
    %v9653 = vmul.f32 %v9652, 0.6931472
    %v9654 = vmul.f32 -0.5, %v8955
    %v9655 = vadd.f32 %v9654, 1.0
    %v9656 = vmul.f32 %v9655, %v8955
    %v9657 = vand.u32 2147483647, %v8955
    %vm9658 = vcmp.lt.f32.partialorder %v9657, 0.0004427343
    %v9659 = vsel %vm9658, %v9656, %v9653
    %v9660 = vadd.f32 %v8957, 1.0
    %v9661 = vlog2.pop %v9660
    %v9662 = vmul.f32 %v9661, 0.6931472
    %v9663 = vmul.f32 -0.5, %v8957
    %v9664 = vadd.f32 %v9663, 1.0
    %v9665 = vmul.f32 %v9664, %v8957
    %v9666 = vand.u32 2147483647, %v8957
    %vm9667 = vcmp.lt.f32.partialorder %v9666, 0.0004427343
    %v9668 = vsel %vm9667, %v9665, %v9662
    %v9669 = vadd.f32 %v8959, 1.0
    %v9670 = vlog2.pop %v9669
    %v9671 = vmul.f32 %v9670, 0.6931472
    %v9672 = vmul.f32 -0.5, %v8959
    %v9673 = vadd.f32 %v9672, 1.0
    %v9674 = vmul.f32 %v9673, %v8959
    %v9675 = vand.u32 2147483647, %v8959
    %vm9676 = vcmp.lt.f32.partialorder %v9675, 0.0004427343
    %v9677 = vsel %vm9676, %v9674, %v9671
    %v9678 = vadd.f32 %v8961, 1.0
    %v9679 = vlog2.pop %v9678
    %v9680 = vmul.f32 %v9679, 0.6931472
    %v9681 = vmul.f32 -0.5, %v8961
    %v9682 = vadd.f32 %v9681, 1.0
    %v9683 = vmul.f32 %v9682, %v8961
    %v9684 = vand.u32 2147483647, %v8961
    %vm9685 = vcmp.lt.f32.partialorder %v9684, 0.0004427343
    %v9686 = vsel %vm9685, %v9683, %v9680
    %v9687 = vadd.f32 %v8963, 1.0
    %v9688 = vlog2.pop %v9687
    %v9689 = vmul.f32 %v9688, 0.6931472
    %v9690 = vmul.f32 -0.5, %v8963
    %v9691 = vadd.f32 %v9690, 1.0
    %v9692 = vmul.f32 %v9691, %v8963
    %v9693 = vand.u32 2147483647, %v8963
    %vm9694 = vcmp.lt.f32.partialorder %v9693, 0.0004427343
    %v9695 = vsel %vm9694, %v9692, %v9689
    %v9696 = vadd.f32 %v8965, 1.0
    %v9697 = vlog2.pop %v9696
    %v9698 = vmul.f32 %v9697, 0.6931472
    %v9699 = vmul.f32 -0.5, %v8965
    %v9700 = vadd.f32 %v9699, 1.0
    %v9701 = vmul.f32 %v9700, %v8965
    %v9702 = vand.u32 2147483647, %v8965
    %vm9703 = vcmp.lt.f32.partialorder %v9702, 0.0004427343
    %v9704 = vsel %vm9703, %v9701, %v9698
    %v9705 = vadd.f32 %v8967, 1.0
    %v9706 = vlog2.pop %v9705
    %v9707 = vmul.f32 %v9706, 0.6931472
    %v9708 = vmul.f32 -0.5, %v8967
    %v9709 = vadd.f32 %v9708, 1.0
    %v9710 = vmul.f32 %v9709, %v8967
    %v9711 = vand.u32 2147483647, %v8967
    %vm9712 = vcmp.lt.f32.partialorder %v9711, 0.0004427343
    %v9713 = vsel %vm9712, %v9710, %v9707
    %v9714 = vadd.f32 %v8969, 1.0
    %v9715 = vlog2.pop %v9714
    %v9716 = vmul.f32 %v9715, 0.6931472
    %v9717 = vmul.f32 -0.5, %v8969
    %v9718 = vadd.f32 %v9717, 1.0
    %v9719 = vmul.f32 %v9718, %v8969
    %v9720 = vand.u32 2147483647, %v8969
    %vm9721 = vcmp.lt.f32.partialorder %v9720, 0.0004427343
    %v9722 = vsel %vm9721, %v9719, %v9716
    %v9723 = vadd.f32 %v8971, 1.0
    %v9724 = vlog2.pop %v9723
    %v9725 = vmul.f32 %v9724, 0.6931472
    %v9726 = vmul.f32 -0.5, %v8971
    %v9727 = vadd.f32 %v9726, 1.0
    %v9728 = vmul.f32 %v9727, %v8971
    %v9729 = vand.u32 2147483647, %v8971
    %vm9730 = vcmp.lt.f32.partialorder %v9729, 0.0004427343
    %v9731 = vsel %vm9730, %v9728, %v9725
    %v9732 = vadd.f32 %v8973, 1.0
    %v9733 = vlog2.pop %v9732
    %v9734 = vmul.f32 %v9733, 0.6931472
    %v9735 = vmul.f32 -0.5, %v8973
    %v9736 = vadd.f32 %v9735, 1.0
    %v9737 = vmul.f32 %v9736, %v8973
    %v9738 = vand.u32 2147483647, %v8973
    %vm9739 = vcmp.lt.f32.partialorder %v9738, 0.0004427343
    %v9740 = vsel %vm9739, %v9737, %v9734
    %v9741 = vadd.f32 %v8975, 1.0
    %v9742 = vlog2.pop %v9741
    %v9743 = vmul.f32 %v9742, 0.6931472
    %v9744 = vmul.f32 -0.5, %v8975
    %v9745 = vadd.f32 %v9744, 1.0
    %v9746 = vmul.f32 %v9745, %v8975
    %v9747 = vand.u32 2147483647, %v8975
    %vm9748 = vcmp.lt.f32.partialorder %v9747, 0.0004427343
    %v9749 = vsel %vm9748, %v9746, %v9743
    %v9750 = vadd.f32 %v8977, 1.0
    %v9751 = vlog2.pop %v9750
    %v9752 = vmul.f32 %v9751, 0.6931472
    %v9753 = vmul.f32 -0.5, %v8977
    %v9754 = vadd.f32 %v9753, 1.0
    %v9755 = vmul.f32 %v9754, %v8977
    %v9756 = vand.u32 2147483647, %v8977
    %vm9757 = vcmp.lt.f32.partialorder %v9756, 0.0004427343
    %v9758 = vsel %vm9757, %v9755, %v9752
    %v9759 = vadd.f32 %v8979, 1.0
    %v9760 = vlog2.pop %v9759
    %v9761 = vmul.f32 %v9760, 0.6931472
    %v9762 = vmul.f32 -0.5, %v8979
    %v9763 = vadd.f32 %v9762, 1.0
    %v9764 = vmul.f32 %v9763, %v8979
    %v9765 = vand.u32 2147483647, %v8979
    %vm9766 = vcmp.lt.f32.partialorder %v9765, 0.0004427343
    %v9767 = vsel %vm9766, %v9764, %v9761
    %v9768 = vadd.f32 %v8981, 1.0
    %v9769 = vlog2.pop %v9768
    %v9770 = vmul.f32 %v9769, 0.6931472
    %v9771 = vmul.f32 -0.5, %v8981
    %v9772 = vadd.f32 %v9771, 1.0
    %v9773 = vmul.f32 %v9772, %v8981
    %v9774 = vand.u32 2147483647, %v8981
    %vm9775 = vcmp.lt.f32.partialorder %v9774, 0.0004427343
    %v9776 = vsel %vm9775, %v9773, %v9770
    %v9777 = vadd.f32 %v8983, 1.0
    %v9778 = vlog2.pop %v9777
    %v9779 = vmul.f32 %v9778, 0.6931472
    %v9780 = vmul.f32 -0.5, %v8983
    %v9781 = vadd.f32 %v9780, 1.0
    %v9782 = vmul.f32 %v9781, %v8983
    %v9783 = vand.u32 2147483647, %v8983
    %vm9784 = vcmp.lt.f32.partialorder %v9783, 0.0004427343
    %v9785 = vsel %vm9784, %v9782, %v9779
    %v9786 = vadd.f32 %v8985, 1.0
    %v9787 = vlog2.pop %v9786
    %v9788 = vmul.f32 %v9787, 0.6931472
    %v9789 = vmul.f32 -0.5, %v8985
    %v9790 = vadd.f32 %v9789, 1.0
    %v9791 = vmul.f32 %v9790, %v8985
    %v9792 = vand.u32 2147483647, %v8985
    %vm9793 = vcmp.lt.f32.partialorder %v9792, 0.0004427343
    %v9794 = vsel %vm9793, %v9791, %v9788
    %v9795 = vadd.f32 %v8987, 1.0
    %v9796 = vlog2.pop %v9795
    %v9797 = vmul.f32 %v9796, 0.6931472
    %v9798 = vmul.f32 -0.5, %v8987
    %v9799 = vadd.f32 %v9798, 1.0
    %v9800 = vmul.f32 %v9799, %v8987
    %v9801 = vand.u32 2147483647, %v8987
    %vm9802 = vcmp.lt.f32.partialorder %v9801, 0.0004427343
    %v9803 = vsel %vm9802, %v9800, %v9797
    %v9804 = vadd.f32 %v8989, 1.0
    %v9805 = vlog2.pop %v9804
    %v9806 = vmul.f32 %v9805, 0.6931472
    %v9807 = vmul.f32 -0.5, %v8989
    %v9808 = vadd.f32 %v9807, 1.0
    %v9809 = vmul.f32 %v9808, %v8989
    %v9810 = vand.u32 2147483647, %v8989
    %vm9811 = vcmp.lt.f32.partialorder %v9810, 0.0004427343
    %v9812 = vsel %vm9811, %v9809, %v9806
    %v9813 = vadd.f32 %v8991, 1.0
    %v9814 = vlog2.pop %v9813
    %v9815 = vmul.f32 %v9814, 0.6931472
    %v9816 = vmul.f32 -0.5, %v8991
    %v9817 = vadd.f32 %v9816, 1.0
    %v9818 = vmul.f32 %v9817, %v8991
    %v9819 = vand.u32 2147483647, %v8991
    %vm9820 = vcmp.lt.f32.partialorder %v9819, 0.0004427343
    %v9821 = vsel %vm9820, %v9818, %v9815
    %v9822 = vadd.f32 %v8993, 1.0
    %v9823 = vlog2.pop %v9822
    %v9824 = vmul.f32 %v9823, 0.6931472
    %v9825 = vmul.f32 -0.5, %v8993
    %v9826 = vadd.f32 %v9825, 1.0
    %v9827 = vmul.f32 %v9826, %v8993
    %v9828 = vand.u32 2147483647, %v8993
    %vm9829 = vcmp.lt.f32.partialorder %v9828, 0.0004427343
    %v9830 = vsel %vm9829, %v9827, %v9824
    %v9831 = vadd.f32 %v8995, 1.0
    %v9832 = vlog2.pop %v9831
    %v9833 = vmul.f32 %v9832, 0.6931472
    %v9834 = vmul.f32 -0.5, %v8995
    %v9835 = vadd.f32 %v9834, 1.0
    %v9836 = vmul.f32 %v9835, %v8995
    %v9837 = vand.u32 2147483647, %v8995
    %vm9838 = vcmp.lt.f32.partialorder %v9837, 0.0004427343
    %v9839 = vsel %vm9838, %v9836, %v9833
    %v9840 = vadd.f32 %v8997, 1.0
    %v9841 = vlog2.pop %v9840
    %v9842 = vmul.f32 %v9841, 0.6931472
    %v9843 = vmul.f32 -0.5, %v8997
    %v9844 = vadd.f32 %v9843, 1.0
    %v9845 = vmul.f32 %v9844, %v8997
    %v9846 = vand.u32 2147483647, %v8997
    %vm9847 = vcmp.lt.f32.partialorder %v9846, 0.0004427343
    %v9848 = vsel %vm9847, %v9845, %v9842
    %v9849 = vadd.f32 %v8999, 1.0
    %v9850 = vlog2.pop %v9849
    %v9851 = vmul.f32 %v9850, 0.6931472
    %v9852 = vmul.f32 -0.5, %v8999
    %v9853 = vadd.f32 %v9852, 1.0
    %v9854 = vmul.f32 %v9853, %v8999
    %v9855 = vand.u32 2147483647, %v8999
    %vm9856 = vcmp.lt.f32.partialorder %v9855, 0.0004427343
    %v9857 = vsel %vm9856, %v9854, %v9851
    %v9858 = vadd.f32 %v9001, 1.0
    %v9859 = vlog2.pop %v9858
    %v9860 = vmul.f32 %v9859, 0.6931472
    %v9861 = vmul.f32 -0.5, %v9001
    %v9862 = vadd.f32 %v9861, 1.0
    %v9863 = vmul.f32 %v9862, %v9001
    %v9864 = vand.u32 2147483647, %v9001
    %vm9865 = vcmp.lt.f32.partialorder %v9864, 0.0004427343
    %v9866 = vsel %vm9865, %v9863, %v9860
    %v9867 = vadd.f32 %v9003, 1.0
    %v9868 = vlog2.pop %v9867
    %v9869 = vmul.f32 %v9868, 0.6931472
    %v9870 = vmul.f32 -0.5, %v9003
    %v9871 = vadd.f32 %v9870, 1.0
    %v9872 = vmul.f32 %v9871, %v9003
    %v9873 = vand.u32 2147483647, %v9003
    %vm9874 = vcmp.lt.f32.partialorder %v9873, 0.0004427343
    %v9875 = vsel %vm9874, %v9872, %v9869
    %v9876 = vadd.f32 %v9005, 1.0
    %v9877 = vlog2.pop %v9876
    %v9878 = vmul.f32 %v9877, 0.6931472
    %v9879 = vmul.f32 -0.5, %v9005
    %v9880 = vadd.f32 %v9879, 1.0
    %v9881 = vmul.f32 %v9880, %v9005
    %v9882 = vand.u32 2147483647, %v9005
    %vm9883 = vcmp.lt.f32.partialorder %v9882, 0.0004427343
    %v9884 = vsel %vm9883, %v9881, %v9878
    %v9885 = vadd.f32 %v9007, 1.0
    %v9886 = vlog2.pop %v9885
    %v9887 = vmul.f32 %v9886, 0.6931472
    %v9888 = vmul.f32 -0.5, %v9007
    %v9889 = vadd.f32 %v9888, 1.0
    %v9890 = vmul.f32 %v9889, %v9007
    %v9891 = vand.u32 2147483647, %v9007
    %vm9892 = vcmp.lt.f32.partialorder %v9891, 0.0004427343
    %v9893 = vsel %vm9892, %v9890, %v9887
    %v9894 = vadd.f32 %v9009, 1.0
    %v9895 = vlog2.pop %v9894
    %v9896 = vmul.f32 %v9895, 0.6931472
    %v9897 = vmul.f32 -0.5, %v9009
    %v9898 = vadd.f32 %v9897, 1.0
    %v9899 = vmul.f32 %v9898, %v9009
    %v9900 = vand.u32 2147483647, %v9009
    %vm9901 = vcmp.lt.f32.partialorder %v9900, 0.0004427343
    %v9902 = vsel %vm9901, %v9899, %v9896
    %v9903 = vadd.f32 %v9011, 1.0
    %v9904 = vlog2.pop %v9903
    %v9905 = vmul.f32 %v9904, 0.6931472
    %v9906 = vmul.f32 -0.5, %v9011
    %v9907 = vadd.f32 %v9906, 1.0
    %v9908 = vmul.f32 %v9907, %v9011
    %v9909 = vand.u32 2147483647, %v9011
    %vm9910 = vcmp.lt.f32.partialorder %v9909, 0.0004427343
    %v9911 = vsel %vm9910, %v9908, %v9905
    %v9912 = vadd.f32 %v9013, 1.0
    %v9913 = vlog2.pop %v9912
    %v9914 = vmul.f32 %v9913, 0.6931472
    %v9915 = vmul.f32 -0.5, %v9013
    %v9916 = vadd.f32 %v9915, 1.0
    %v9917 = vmul.f32 %v9916, %v9013
    %v9918 = vand.u32 2147483647, %v9013
    %vm9919 = vcmp.lt.f32.partialorder %v9918, 0.0004427343
    %v9920 = vsel %vm9919, %v9917, %v9914
    %v9921 = vadd.f32 %v9015, 1.0
    %v9922 = vlog2.pop %v9921
    %v9923 = vmul.f32 %v9922, 0.6931472
    %v9924 = vmul.f32 -0.5, %v9015
    %v9925 = vadd.f32 %v9924, 1.0
    %v9926 = vmul.f32 %v9925, %v9015
    %v9927 = vand.u32 2147483647, %v9015
    %vm9928 = vcmp.lt.f32.partialorder %v9927, 0.0004427343
    %v9929 = vsel %vm9928, %v9926, %v9923
    %v9930 = vadd.f32 %v9017, 1.0
    %v9931 = vlog2.pop %v9930
    %v9932 = vmul.f32 %v9931, 0.6931472
    %v9933 = vmul.f32 -0.5, %v9017
    %v9934 = vadd.f32 %v9933, 1.0
    %v9935 = vmul.f32 %v9934, %v9017
    %v9936 = vand.u32 2147483647, %v9017
    %vm9937 = vcmp.lt.f32.partialorder %v9936, 0.0004427343
    %v9938 = vsel %vm9937, %v9935, %v9932
    %v9939 = vadd.f32 %v9019, 1.0
    %v9940 = vlog2.pop %v9939
    %v9941 = vmul.f32 %v9940, 0.6931472
    %v9942 = vmul.f32 -0.5, %v9019
    %v9943 = vadd.f32 %v9942, 1.0
    %v9944 = vmul.f32 %v9943, %v9019
    %v9945 = vand.u32 2147483647, %v9019
    %vm9946 = vcmp.lt.f32.partialorder %v9945, 0.0004427343
    %v9947 = vsel %vm9946, %v9944, %v9941
    %v9948 = vadd.f32 %v9021, 1.0
    %v9949 = vlog2.pop %v9948
    %v9950 = vmul.f32 %v9949, 0.6931472
    %v9951 = vmul.f32 -0.5, %v9021
    %v9952 = vadd.f32 %v9951, 1.0
    %v9953 = vmul.f32 %v9952, %v9021
    %v9954 = vand.u32 2147483647, %v9021
    %vm9955 = vcmp.lt.f32.partialorder %v9954, 0.0004427343
    %v9956 = vsel %vm9955, %v9953, %v9950
    %v9957 = vadd.f32 %v9023, 1.0
    %v9958 = vlog2.pop %v9957
    %v9959 = vmul.f32 %v9958, 0.6931472
    %v9960 = vmul.f32 -0.5, %v9023
    %v9961 = vadd.f32 %v9960, 1.0
    %v9962 = vmul.f32 %v9961, %v9023
    %v9963 = vand.u32 2147483647, %v9023
    %vm9964 = vcmp.lt.f32.partialorder %v9963, 0.0004427343
    %v9965 = vsel %vm9964, %v9962, %v9959
    %v9966 = vadd.f32 %v9025, 1.0
    %v9967 = vlog2.pop %v9966
    %v9968 = vmul.f32 %v9967, 0.6931472
    %v9969 = vmul.f32 -0.5, %v9025
    %v9970 = vadd.f32 %v9969, 1.0
    %v9971 = vmul.f32 %v9970, %v9025
    %v9972 = vand.u32 2147483647, %v9025
    %vm9973 = vcmp.lt.f32.partialorder %v9972, 0.0004427343
    %v9974 = vsel %vm9973, %v9971, %v9968
    %v9975 = vadd.f32 %v9027, 1.0
    %v9976 = vlog2.pop %v9975
    %v9977 = vmul.f32 %v9976, 0.6931472
    %v9978 = vmul.f32 -0.5, %v9027
    %v9979 = vadd.f32 %v9978, 1.0
    %v9980 = vmul.f32 %v9979, %v9027
    %v9981 = vand.u32 2147483647, %v9027
    %vm9982 = vcmp.lt.f32.partialorder %v9981, 0.0004427343
    %v9983 = vsel %vm9982, %v9980, %v9977
    %v9984 = vadd.f32 %v9029, 1.0
    %v9985 = vlog2.pop %v9984
    %v9986 = vmul.f32 %v9985, 0.6931472
    %v9987 = vmul.f32 -0.5, %v9029
    %v9988 = vadd.f32 %v9987, 1.0
    %v9989 = vmul.f32 %v9988, %v9029
    %v9990 = vand.u32 2147483647, %v9029
    %vm9991 = vcmp.lt.f32.partialorder %v9990, 0.0004427343
    %v9992 = vsel %vm9991, %v9989, %v9986
    %v9993 = vadd.f32 %v9031, 1.0
    %v9994 = vlog2.pop %v9993
    %v9995 = vmul.f32 %v9994, 0.6931472
    %v9996 = vmul.f32 -0.5, %v9031
    %v9997 = vadd.f32 %v9996, 1.0
    %v9998 = vmul.f32 %v9997, %v9031
    %v9999 = vand.u32 2147483647, %v9031
    %vm10000 = vcmp.lt.f32.partialorder %v9999, 0.0004427343
    %v10001 = vsel %vm10000, %v9998, %v9995
    %v10002 = vadd.f32 %v9033, 1.0
    %v10003 = vlog2.pop %v10002
    %v10004 = vmul.f32 %v10003, 0.6931472
    %v10005 = vmul.f32 -0.5, %v9033
    %v10006 = vadd.f32 %v10005, 1.0
    %v10007 = vmul.f32 %v10006, %v9033
    %v10008 = vand.u32 2147483647, %v9033
    %vm10009 = vcmp.lt.f32.partialorder %v10008, 0.0004427343
    %v10010 = vsel %vm10009, %v10007, %v10004
    %v10011 = vadd.f32 %v9035, 1.0
    %v10012 = vlog2.pop %v10011
    %v10013 = vmul.f32 %v10012, 0.6931472
    %v10014 = vmul.f32 -0.5, %v9035
    %v10015 = vadd.f32 %v10014, 1.0
    %v10016 = vmul.f32 %v10015, %v9035
    %v10017 = vand.u32 2147483647, %v9035
    %vm10018 = vcmp.lt.f32.partialorder %v10017, 0.0004427343
    %v10019 = vsel %vm10018, %v10016, %v10013
    %v10020 = vadd.f32 %v9037, 1.0
    %v10021 = vlog2.pop %v10020
    %v10022 = vmul.f32 %v10021, 0.6931472
    %v10023 = vmul.f32 -0.5, %v9037
    %v10024 = vadd.f32 %v10023, 1.0
    %v10025 = vmul.f32 %v10024, %v9037
    %v10026 = vand.u32 2147483647, %v9037
    %vm10027 = vcmp.lt.f32.partialorder %v10026, 0.0004427343
    %v10028 = vsel %vm10027, %v10025, %v10022
    %v10029 = vadd.f32 %v9039, 1.0
    %v10030 = vlog2.pop %v10029
    %v10031 = vmul.f32 %v10030, 0.6931472
    %v10032 = vmul.f32 -0.5, %v9039
    %v10033 = vadd.f32 %v10032, 1.0
    %v10034 = vmul.f32 %v10033, %v9039
    %v10035 = vand.u32 2147483647, %v9039
    %vm10036 = vcmp.lt.f32.partialorder %v10035, 0.0004427343
    %v10037 = vsel %vm10036, %v10034, %v10031
    %v10038 = vadd.f32 %v9041, 1.0
    %v10039 = vlog2.pop %v10038
    %v10040 = vmul.f32 %v10039, 0.6931472
    %v10041 = vmul.f32 -0.5, %v9041
    %v10042 = vadd.f32 %v10041, 1.0
    %v10043 = vmul.f32 %v10042, %v9041
    %v10044 = vand.u32 2147483647, %v9041
    %vm10045 = vcmp.lt.f32.partialorder %v10044, 0.0004427343
    %v10046 = vsel %vm10045, %v10043, %v10040
    %v10047 = vadd.f32 %v9043, 1.0
    %v10048 = vlog2.pop %v10047
    %v10049 = vmul.f32 %v10048, 0.6931472
    %v10050 = vmul.f32 -0.5, %v9043
    %v10051 = vadd.f32 %v10050, 1.0
    %v10052 = vmul.f32 %v10051, %v9043
    %v10053 = vand.u32 2147483647, %v9043
    %vm10054 = vcmp.lt.f32.partialorder %v10053, 0.0004427343
    %v10055 = vsel %vm10054, %v10052, %v10049
    %v10056 = vadd.f32 %v9045, 1.0
    %v10057 = vlog2.pop %v10056
    %v10058 = vmul.f32 %v10057, 0.6931472
    %v10059 = vmul.f32 -0.5, %v9045
    %v10060 = vadd.f32 %v10059, 1.0
    %v10061 = vmul.f32 %v10060, %v9045
    %v10062 = vand.u32 2147483647, %v9045
    %vm10063 = vcmp.lt.f32.partialorder %v10062, 0.0004427343
    %v10064 = vsel %vm10063, %v10061, %v10058
    %v10065 = vadd.f32 %v9047, 1.0
    %v10066 = vlog2.pop %v10065
    %v10067 = vmul.f32 %v10066, 0.6931472
    %v10068 = vmul.f32 -0.5, %v9047
    %v10069 = vadd.f32 %v10068, 1.0
    %v10070 = vmul.f32 %v10069, %v9047
    %v10071 = vand.u32 2147483647, %v9047
    %vm10072 = vcmp.lt.f32.partialorder %v10071, 0.0004427343
    %v10073 = vsel %vm10072, %v10070, %v10067
    %v10074 = vadd.f32 %v9049, 1.0
    %v10075 = vlog2.pop %v10074
    %v10076 = vmul.f32 %v10075, 0.6931472
    %v10077 = vmul.f32 -0.5, %v9049
    %v10078 = vadd.f32 %v10077, 1.0
    %v10079 = vmul.f32 %v10078, %v9049
    %v10080 = vand.u32 2147483647, %v9049
    %vm10081 = vcmp.lt.f32.partialorder %v10080, 0.0004427343
    %v10082 = vsel %vm10081, %v10079, %v10076
    %v10083 = vadd.f32 %v9051, 1.0
    %v10084 = vlog2.pop %v10083
    %v10085 = vmul.f32 %v10084, 0.6931472
    %v10086 = vmul.f32 -0.5, %v9051
    %v10087 = vadd.f32 %v10086, 1.0
    %v10088 = vmul.f32 %v10087, %v9051
    %v10089 = vand.u32 2147483647, %v9051
    %vm10090 = vcmp.lt.f32.partialorder %v10089, 0.0004427343
    %v10091 = vsel %vm10090, %v10088, %v10085
    %v10092 = vadd.f32 %v9053, 1.0
    %v10093 = vlog2.pop %v10092
    %v10094 = vmul.f32 %v10093, 0.6931472
    %v10095 = vmul.f32 -0.5, %v9053
    %v10096 = vadd.f32 %v10095, 1.0
    %v10097 = vmul.f32 %v10096, %v9053
    %v10098 = vand.u32 2147483647, %v9053
    %vm10099 = vcmp.lt.f32.partialorder %v10098, 0.0004427343
    %v10100 = vsel %vm10099, %v10097, %v10094
    %v10101 = vadd.f32 %v9055, 1.0
    %v10102 = vlog2.pop %v10101
    %v10103 = vmul.f32 %v10102, 0.6931472
    %v10104 = vmul.f32 -0.5, %v9055
    %v10105 = vadd.f32 %v10104, 1.0
    %v10106 = vmul.f32 %v10105, %v9055
    %v10107 = vand.u32 2147483647, %v9055
    %vm10108 = vcmp.lt.f32.partialorder %v10107, 0.0004427343
    %v10109 = vsel %vm10108, %v10106, %v10103
    %v10110 = vadd.f32 %v9057, 1.0
    %v10111 = vlog2.pop %v10110
    %v10112 = vmul.f32 %v10111, 0.6931472
    %v10113 = vmul.f32 -0.5, %v9057
    %v10114 = vadd.f32 %v10113, 1.0
    %v10115 = vmul.f32 %v10114, %v9057
    %v10116 = vand.u32 2147483647, %v9057
    %vm10117 = vcmp.lt.f32.partialorder %v10116, 0.0004427343
    %v10118 = vsel %vm10117, %v10115, %v10112
    %v10119 = vadd.f32 %v9059, 1.0
    %v10120 = vlog2.pop %v10119
    %v10121 = vmul.f32 %v10120, 0.6931472
    %v10122 = vmul.f32 -0.5, %v9059
    %v10123 = vadd.f32 %v10122, 1.0
    %v10124 = vmul.f32 %v10123, %v9059
    %v10125 = vand.u32 2147483647, %v9059
    %vm10126 = vcmp.lt.f32.partialorder %v10125, 0.0004427343
    %v10127 = vsel %vm10126, %v10124, %v10121
    %v10128 = vadd.f32 %v9061, 1.0
    %v10129 = vlog2.pop %v10128
    %v10130 = vmul.f32 %v10129, 0.6931472
    %v10131 = vmul.f32 -0.5, %v9061
    %v10132 = vadd.f32 %v10131, 1.0
    %v10133 = vmul.f32 %v10132, %v9061
    %v10134 = vand.u32 2147483647, %v9061
    %vm10135 = vcmp.lt.f32.partialorder %v10134, 0.0004427343
    %v10136 = vsel %vm10135, %v10133, %v10130
    %v10137 = vadd.f32 %v9063, 1.0
    %v10138 = vlog2.pop %v10137
    %v10139 = vmul.f32 %v10138, 0.6931472
    %v10140 = vmul.f32 -0.5, %v9063
    %v10141 = vadd.f32 %v10140, 1.0
    %v10142 = vmul.f32 %v10141, %v9063
    %v10143 = vand.u32 2147483647, %v9063
    %vm10144 = vcmp.lt.f32.partialorder %v10143, 0.0004427343
    %v10145 = vsel %vm10144, %v10142, %v10139
    %v10146 = vadd.f32 %v9065, 1.0
    %v10147 = vlog2.pop %v10146
    %v10148 = vmul.f32 %v10147, 0.6931472
    %v10149 = vmul.f32 -0.5, %v9065
    %v10150 = vadd.f32 %v10149, 1.0
    %v10151 = vmul.f32 %v10150, %v9065
    %v10152 = vand.u32 2147483647, %v9065
    %vm10153 = vcmp.lt.f32.partialorder %v10152, 0.0004427343
    %v10154 = vsel %vm10153, %v10151, %v10148
    %v10155 = vadd.f32 %v9067, 1.0
    %v10156 = vlog2.pop %v10155
    %v10157 = vmul.f32 %v10156, 0.6931472
    %v10158 = vmul.f32 -0.5, %v9067
    %v10159 = vadd.f32 %v10158, 1.0
    %v10160 = vmul.f32 %v10159, %v9067
    %v10161 = vand.u32 2147483647, %v9067
    %vm10162 = vcmp.lt.f32.partialorder %v10161, 0.0004427343
    %v10163 = vsel %vm10162, %v10160, %v10157
    %v10164 = vadd.f32 %v9069, 1.0
    %v10165 = vlog2.pop %v10164
    %v10166 = vmul.f32 %v10165, 0.6931472
    %v10167 = vmul.f32 -0.5, %v9069
    %v10168 = vadd.f32 %v10167, 1.0
    %v10169 = vmul.f32 %v10168, %v9069
    %v10170 = vand.u32 2147483647, %v9069
    %vm10171 = vcmp.lt.f32.partialorder %v10170, 0.0004427343
    %v10172 = vsel %vm10171, %v10169, %v10166
    %v10173 = vadd.f32 %v9071, 1.0
    %v10174 = vlog2.pop %v10173
    %v10175 = vmul.f32 %v10174, 0.6931472
    %v10176 = vmul.f32 -0.5, %v9071
    %v10177 = vadd.f32 %v10176, 1.0
    %v10178 = vmul.f32 %v10177, %v9071
    %v10179 = vand.u32 2147483647, %v9071
    %vm10180 = vcmp.lt.f32.partialorder %v10179, 0.0004427343
    %v10181 = vsel %vm10180, %v10178, %v10175
    %v10182 = vadd.f32 %v9073, 1.0
    %v10183 = vlog2.pop %v10182
    %v10184 = vmul.f32 %v10183, 0.6931472
    %v10185 = vmul.f32 -0.5, %v9073
    %v10186 = vadd.f32 %v10185, 1.0
    %v10187 = vmul.f32 %v10186, %v9073
    %v10188 = vand.u32 2147483647, %v9073
    %vm10189 = vcmp.lt.f32.partialorder %v10188, 0.0004427343
    %v10190 = vsel %vm10189, %v10187, %v10184
    %v10191 = vadd.f32 %v9075, 1.0
    %v10192 = vlog2.pop %v10191
    %v10193 = vmul.f32 %v10192, 0.6931472
    %v10194 = vmul.f32 -0.5, %v9075
    %v10195 = vadd.f32 %v10194, 1.0
    %v10196 = vmul.f32 %v10195, %v9075
    %v10197 = vand.u32 2147483647, %v9075
    %vm10198 = vcmp.lt.f32.partialorder %v10197, 0.0004427343
    %v10199 = vsel %vm10198, %v10196, %v10193
    %v10200 = vadd.f32 %v9077, 1.0
    %v10201 = vlog2.pop %v10200
    %v10202 = vmul.f32 %v10201, 0.6931472
    %v10203 = vmul.f32 -0.5, %v9077
    %v10204 = vadd.f32 %v10203, 1.0
    %v10205 = vmul.f32 %v10204, %v9077
    %v10206 = vand.u32 2147483647, %v9077
    %vm10207 = vcmp.lt.f32.partialorder %v10206, 0.0004427343
    %v10208 = vsel %vm10207, %v10205, %v10202
    %v10209 = vadd.f32 %v9079, 1.0
    %v10210 = vlog2.pop %v10209
    %v10211 = vmul.f32 %v10210, 0.6931472
    %v10212 = vmul.f32 -0.5, %v9079
    %v10213 = vadd.f32 %v10212, 1.0
    %v10214 = vmul.f32 %v10213, %v9079
    %v10215 = vand.u32 2147483647, %v9079
    %vm10216 = vcmp.lt.f32.partialorder %v10215, 0.0004427343
    %v10217 = vsel %vm10216, %v10214, %v10211
    %v10218 = vadd.f32 %v9081, 1.0
    %v10219 = vlog2.pop %v10218
    %v10220 = vmul.f32 %v10219, 0.6931472
    %v10221 = vmul.f32 -0.5, %v9081
    %v10222 = vadd.f32 %v10221, 1.0
    %v10223 = vmul.f32 %v10222, %v9081
    %v10224 = vand.u32 2147483647, %v9081
    %vm10225 = vcmp.lt.f32.partialorder %v10224, 0.0004427343
    %v10226 = vsel %vm10225, %v10223, %v10220
    %v10227 = vadd.f32 %v9083, 1.0
    %v10228 = vlog2.pop %v10227
    %v10229 = vmul.f32 %v10228, 0.6931472
    %v10230 = vmul.f32 -0.5, %v9083
    %v10231 = vadd.f32 %v10230, 1.0
    %v10232 = vmul.f32 %v10231, %v9083
    %v10233 = vand.u32 2147483647, %v9083
    %vm10234 = vcmp.lt.f32.partialorder %v10233, 0.0004427343
    %v10235 = vsel %vm10234, %v10232, %v10229
    %v10236 = vmul.f32 %v9092, 0.02
    %v10237 = vmul.f32 %v9101, 0.02
    %v10238 = vmul.f32 %v9110, 0.02
    %v10239 = vmul.f32 %v9119, 0.02
    %v10240 = vmul.f32 %v9128, 0.02
    %v10241 = vmul.f32 %v9137, 0.02
    %v10242 = vmul.f32 %v9146, 0.02
    %v10243 = vmul.f32 %v9155, 0.02
    %v10244 = vmul.f32 %v9164, 0.02
    %v10245 = vmul.f32 %v9173, 0.02
    %v10246 = vmul.f32 %v9182, 0.02
    %v10247 = vmul.f32 %v9191, 0.02
    %v10248 = vmul.f32 %v9200, 0.02
    %v10249 = vmul.f32 %v9209, 0.02
    %v10250 = vmul.f32 %v9218, 0.02
    %v10251 = vmul.f32 %v9227, 0.02
    %v10252 = vmul.f32 %v9236, 0.02
    %v10253 = vmul.f32 %v9245, 0.02
    %v10254 = vmul.f32 %v9254, 0.02
    %v10255 = vmul.f32 %v9263, 0.02
    %v10256 = vmul.f32 %v9272, 0.02
    %v10257 = vmul.f32 %v9281, 0.02
    %v10258 = vmul.f32 %v9290, 0.02
    %v10259 = vmul.f32 %v9299, 0.02
    %v10260 = vmul.f32 %v9308, 0.02
    %v10261 = vmul.f32 %v9317, 0.02
    %v10262 = vmul.f32 %v9326, 0.02
    %v10263 = vmul.f32 %v9335, 0.02
    %v10264 = vmul.f32 %v9344, 0.02
    %v10265 = vmul.f32 %v9353, 0.02
    %v10266 = vmul.f32 %v9362, 0.02
    %v10267 = vmul.f32 %v9371, 0.02
    %v10268 = vmul.f32 %v9380, 0.02
    %v10269 = vmul.f32 %v9389, 0.02
    %v10270 = vmul.f32 %v9398, 0.02
    %v10271 = vmul.f32 %v9407, 0.02
    %v10272 = vmul.f32 %v9416, 0.02
    %v10273 = vmul.f32 %v9425, 0.02
    %v10274 = vmul.f32 %v9434, 0.02
    %v10275 = vmul.f32 %v9443, 0.02
    %v10276 = vmul.f32 %v9452, 0.02
    %v10277 = vmul.f32 %v9461, 0.02
    %v10278 = vmul.f32 %v9470, 0.02
    %v10279 = vmul.f32 %v9479, 0.02
    %v10280 = vmul.f32 %v9488, 0.02
    %v10281 = vmul.f32 %v9497, 0.02
    %v10282 = vmul.f32 %v9506, 0.02
    %v10283 = vmul.f32 %v9515, 0.02
    %v10284 = vmul.f32 %v9524, 0.02
    %v10285 = vmul.f32 %v9533, 0.02
    %v10286 = vmul.f32 %v9542, 0.02
    %v10287 = vmul.f32 %v9551, 0.02
    %v10288 = vmul.f32 %v9560, 0.02
    %v10289 = vmul.f32 %v9569, 0.02
    %v10290 = vmul.f32 %v9578, 0.02
    %v10291 = vmul.f32 %v9587, 0.02
    %v10292 = vmul.f32 %v9596, 0.02
    %v10293 = vmul.f32 %v9605, 0.02
    %v10294 = vmul.f32 %v9614, 0.02
    %v10295 = vmul.f32 %v9623, 0.02
    %v10296 = vmul.f32 %v9632, 0.02
    %v10297 = vmul.f32 %v9641, 0.02
    %v10298 = vmul.f32 %v9650, 0.02
    %v10299 = vmul.f32 %v9659, 0.02
    %v10300 = vmul.f32 %v9668, 0.02
    %v10301 = vmul.f32 %v9677, 0.02
    %v10302 = vmul.f32 %v9686, 0.02
    %v10303 = vmul.f32 %v9695, 0.02
    %v10304 = vmul.f32 %v9704, 0.02
    %v10305 = vmul.f32 %v9713, 0.02
    %v10306 = vmul.f32 %v9722, 0.02
    %v10307 = vmul.f32 %v9731, 0.02
    %v10308 = vmul.f32 %v9740, 0.02
    %v10309 = vmul.f32 %v9749, 0.02
    %v10310 = vmul.f32 %v9758, 0.02
    %v10311 = vmul.f32 %v9767, 0.02
    %v10312 = vmul.f32 %v9776, 0.02
    %v10313 = vmul.f32 %v9785, 0.02
    %v10314 = vmul.f32 %v9794, 0.02
    %v10315 = vmul.f32 %v9803, 0.02
    %v10316 = vmul.f32 %v9812, 0.02
    %v10317 = vmul.f32 %v9821, 0.02
    %v10318 = vmul.f32 %v9830, 0.02
    %v10319 = vmul.f32 %v9839, 0.02
    %v10320 = vmul.f32 %v9848, 0.02
    %v10321 = vmul.f32 %v9857, 0.02
    %v10322 = vmul.f32 %v9866, 0.02
    %v10323 = vmul.f32 %v9875, 0.02
    %v10324 = vmul.f32 %v9884, 0.02
    %v10325 = vmul.f32 %v9893, 0.02
    %v10326 = vmul.f32 %v9902, 0.02
    %v10327 = vmul.f32 %v9911, 0.02
    %v10328 = vmul.f32 %v9920, 0.02
    %v10329 = vmul.f32 %v9929, 0.02
    %v10330 = vmul.f32 %v9938, 0.02
    %v10331 = vmul.f32 %v9947, 0.02
    %v10332 = vmul.f32 %v9956, 0.02
    %v10333 = vmul.f32 %v9965, 0.02
    %v10334 = vmul.f32 %v9974, 0.02
    %v10335 = vmul.f32 %v9983, 0.02
    %v10336 = vmul.f32 %v9992, 0.02
    %v10337 = vmul.f32 %v10001, 0.02
    %v10338 = vmul.f32 %v10010, 0.02
    %v10339 = vmul.f32 %v10019, 0.02
    %v10340 = vmul.f32 %v10028, 0.02
    %v10341 = vmul.f32 %v10037, 0.02
    %v10342 = vmul.f32 %v10046, 0.02
    %v10343 = vmul.f32 %v10055, 0.02
    %v10344 = vmul.f32 %v10064, 0.02
    %v10345 = vmul.f32 %v10073, 0.02
    %v10346 = vmul.f32 %v10082, 0.02
    %v10347 = vmul.f32 %v10091, 0.02
    %v10348 = vmul.f32 %v10100, 0.02
    %v10349 = vmul.f32 %v10109, 0.02
    %v10350 = vmul.f32 %v10118, 0.02
    %v10351 = vmul.f32 %v10127, 0.02
    %v10352 = vmul.f32 %v10136, 0.02
    %v10353 = vmul.f32 %v10145, 0.02
    %v10354 = vmul.f32 %v10154, 0.02
    %v10355 = vmul.f32 %v10163, 0.02
    %v10356 = vmul.f32 %v10172, 0.02
    %v10357 = vmul.f32 %v10181, 0.02
    %v10358 = vmul.f32 %v10190, 0.02
    %v10359 = vmul.f32 %v10199, 0.02
    %v10360 = vmul.f32 %v10208, 0.02
    %v10361 = vmul.f32 %v10217, 0.02
    %v10362 = vmul.f32 %v10226, 0.02
    %v10363 = vmul.f32 %v10235, 0.02
    %v10364 = vsel %vm8700, %v8062, %v10236
    %v10365 = vsel %vm8701, %v8111, %v10237
    %v10366 = vsel %vm8702, %v8160, %v10238
    %v10367 = vsel %vm8703, %v8209, %v10239
    %v10368 = vsel %vm8704, %v8258, %v10240
    %v10369 = vsel %vm8705, %v8307, %v10241
    %v10370 = vsel %vm8706, %v8356, %v10242
    %v10371 = vsel %vm8707, %v8405, %v10243
    %v10372 = vsel %vm8708, %v8064, %v10244
    %v10373 = vsel %vm8709, %v8113, %v10245
    %v10374 = vsel %vm8710, %v8162, %v10246
    %v10375 = vsel %vm8711, %v8211, %v10247
    %v10376 = vsel %vm8712, %v8260, %v10248
    %v10377 = vsel %vm8713, %v8309, %v10249
    %v10378 = vsel %vm8714, %v8358, %v10250
    %v10379 = vsel %vm8715, %v8407, %v10251
    %v10380 = vsel %vm8716, %v8067, %v10252
    %v10381 = vsel %vm8717, %v8116, %v10253
    %v10382 = vsel %vm8718, %v8165, %v10254
    %v10383 = vsel %vm8719, %v8214, %v10255
    %v10384 = vsel %vm8720, %v8263, %v10256
    %v10385 = vsel %vm8721, %v8312, %v10257
    %v10386 = vsel %vm8722, %v8361, %v10258
    %v10387 = vsel %vm8723, %v8410, %v10259
    %v10388 = vsel %vm8724, %v8069, %v10260
    %v10389 = vsel %vm8725, %v8118, %v10261
    %v10390 = vsel %vm8726, %v8167, %v10262
    %v10391 = vsel %vm8727, %v8216, %v10263
    %v10392 = vsel %vm8728, %v8265, %v10264
    %v10393 = vsel %vm8729, %v8314, %v10265
    %v10394 = vsel %vm8730, %v8363, %v10266
    %v10395 = vsel %vm8731, %v8412, %v10267
    %v10396 = vsel %vm8732, %v8072, %v10268
    %v10397 = vsel %vm8733, %v8121, %v10269
    %v10398 = vsel %vm8734, %v8170, %v10270
    %v10399 = vsel %vm8735, %v8219, %v10271
    %v10400 = vsel %vm8736, %v8268, %v10272
    %v10401 = vsel %vm8737, %v8317, %v10273
    %v10402 = vsel %vm8738, %v8366, %v10274
    %v10403 = vsel %vm8739, %v8415, %v10275
    %v10404 = vsel %vm8740, %v8074, %v10276
    %v10405 = vsel %vm8741, %v8123, %v10277
    %v10406 = vsel %vm8742, %v8172, %v10278
    %v10407 = vsel %vm8743, %v8221, %v10279
    %v10408 = vsel %vm8744, %v8270, %v10280
    %v10409 = vsel %vm8745, %v8319, %v10281
    %v10410 = vsel %vm8746, %v8368, %v10282
    %v10411 = vsel %vm8747, %v8417, %v10283
    %v10412 = vsel %vm8748, %v8077, %v10284
    %v10413 = vsel %vm8749, %v8126, %v10285
    %v10414 = vsel %vm8750, %v8175, %v10286
    %v10415 = vsel %vm8751, %v8224, %v10287
    %v10416 = vsel %vm8752, %v8273, %v10288
    %v10417 = vsel %vm8753, %v8322, %v10289
    %v10418 = vsel %vm8754, %v8371, %v10290
    %v10419 = vsel %vm8755, %v8420, %v10291
    %v10420 = vsel %vm8756, %v8079, %v10292
    %v10421 = vsel %vm8757, %v8128, %v10293
    %v10422 = vsel %vm8758, %v8177, %v10294
    %v10423 = vsel %vm8759, %v8226, %v10295
    %v10424 = vsel %vm8760, %v8275, %v10296
    %v10425 = vsel %vm8761, %v8324, %v10297
    %v10426 = vsel %vm8762, %v8373, %v10298
    %v10427 = vsel %vm8763, %v8422, %v10299
    %v10428 = vsel %vm8764, %v8082, %v10300
    %v10429 = vsel %vm8765, %v8131, %v10301
    %v10430 = vsel %vm8766, %v8180, %v10302
    %v10431 = vsel %vm8767, %v8229, %v10303
    %v10432 = vsel %vm8768, %v8278, %v10304
    %v10433 = vsel %vm8769, %v8327, %v10305
    %v10434 = vsel %vm8770, %v8376, %v10306
    %v10435 = vsel %vm8771, %v8425, %v10307
    %v10436 = vsel %vm8772, %v8084, %v10308
    %v10437 = vsel %vm8773, %v8133, %v10309
    %v10438 = vsel %vm8774, %v8182, %v10310
    %v10439 = vsel %vm8775, %v8231, %v10311
    %v10440 = vsel %vm8776, %v8280, %v10312
    %v10441 = vsel %vm8777, %v8329, %v10313
    %v10442 = vsel %vm8778, %v8378, %v10314
    %v10443 = vsel %vm8779, %v8427, %v10315
    %v10444 = vsel %vm8780, %v8087, %v10316
    %v10445 = vsel %vm8781, %v8136, %v10317
    %v10446 = vsel %vm8782, %v8185, %v10318
    %v10447 = vsel %vm8783, %v8234, %v10319
    %v10448 = vsel %vm8784, %v8283, %v10320
    %v10449 = vsel %vm8785, %v8332, %v10321
    %v10450 = vsel %vm8786, %v8381, %v10322
    %v10451 = vsel %vm8787, %v8430, %v10323
    %v10452 = vsel %vm8788, %v8089, %v10324
    %v10453 = vsel %vm8789, %v8138, %v10325
    %v10454 = vsel %vm8790, %v8187, %v10326
    %v10455 = vsel %vm8791, %v8236, %v10327
    %v10456 = vsel %vm8792, %v8285, %v10328
    %v10457 = vsel %vm8793, %v8334, %v10329
    %v10458 = vsel %vm8794, %v8383, %v10330
    %v10459 = vsel %vm8795, %v8432, %v10331
    %v10460 = vsel %vm8796, %v8092, %v10332
    %v10461 = vsel %vm8797, %v8141, %v10333
    %v10462 = vsel %vm8798, %v8190, %v10334
    %v10463 = vsel %vm8799, %v8239, %v10335
    %v10464 = vsel %vm8800, %v8288, %v10336
    %v10465 = vsel %vm8801, %v8337, %v10337
    %v10466 = vsel %vm8802, %v8386, %v10338
    %v10467 = vsel %vm8803, %v8435, %v10339
    %v10468 = vsel %vm8804, %v8094, %v10340
    %v10469 = vsel %vm8805, %v8143, %v10341
    %v10470 = vsel %vm8806, %v8192, %v10342
    %v10471 = vsel %vm8807, %v8241, %v10343
    %v10472 = vsel %vm8808, %v8290, %v10344
    %v10473 = vsel %vm8809, %v8339, %v10345
    %v10474 = vsel %vm8810, %v8388, %v10346
    %v10475 = vsel %vm8811, %v8437, %v10347
    %v10476 = vsel %vm8812, %v8097, %v10348
    %v10477 = vsel %vm8813, %v8146, %v10349
    %v10478 = vsel %vm8814, %v8195, %v10350
    %v10479 = vsel %vm8815, %v8244, %v10351
    %v10480 = vsel %vm8816, %v8293, %v10352
    %v10481 = vsel %vm8817, %v8342, %v10353
    %v10482 = vsel %vm8818, %v8391, %v10354
    %v10483 = vsel %vm8819, %v8440, %v10355
    %v10484 = vsel %vm8820, %v8099, %v10356
    %v10485 = vsel %vm8821, %v8148, %v10357
    %v10486 = vsel %vm8822, %v8197, %v10358
    %v10487 = vsel %vm8823, %v8246, %v10359
    %v10488 = vsel %vm8824, %v8295, %v10360
    %v10489 = vsel %vm8825, %v8344, %v10361
    %v10490 = vsel %vm8826, %v8393, %v10362
    %v10491 = vsel %vm8827, %v8442, %v10363
    %v10492 = vld [vmem:[%s5] sm:$0x3]
    %v10493 = vpack.c.bf16 %v10372, %v10364
    %v10494 = vpack.c.bf16 %v10373, %v10365
    %v10495 = vpack.c.bf16 %v10374, %v10366
    %v10496 = vpack.c.bf16 %v10375, %v10367
    %v10497 = vpack.c.bf16 %v10376, %v10368
    %v10498 = vpack.c.bf16 %v10377, %v10369
    %v10499 = vpack.c.bf16 %v10378, %v10370
    %v10500 = vpack.c.bf16 %v10379, %v10371
    %v10501 = vpack.c.bf16 %v10388, %v10380
    %v10502 = vpack.c.bf16 %v10389, %v10381
    %v10503 = vpack.c.bf16 %v10390, %v10382
    %v10504 = vpack.c.bf16 %v10391, %v10383
    %v10505 = vpack.c.bf16 %v10392, %v10384
    %v10506 = vpack.c.bf16 %v10393, %v10385
    %v10507 = vpack.c.bf16 %v10394, %v10386
    %v10508 = vpack.c.bf16 %v10395, %v10387
    %v10509 = vpack.c.bf16 %v10404, %v10396
    %v10510 = vpack.c.bf16 %v10405, %v10397
    %v10511 = vpack.c.bf16 %v10406, %v10398
    %v10512 = vpack.c.bf16 %v10407, %v10399
    %v10513 = vpack.c.bf16 %v10408, %v10400
    %v10514 = vpack.c.bf16 %v10409, %v10401
    %v10515 = vpack.c.bf16 %v10410, %v10402
    %v10516 = vpack.c.bf16 %v10411, %v10403
    %v10517 = vpack.c.bf16 %v10420, %v10412
    %v10518 = vpack.c.bf16 %v10421, %v10413
    %v10519 = vpack.c.bf16 %v10422, %v10414
    %v10520 = vpack.c.bf16 %v10423, %v10415
    %v10521 = vpack.c.bf16 %v10424, %v10416
    %v10522 = vpack.c.bf16 %v10425, %v10417
    %v10523 = vpack.c.bf16 %v10426, %v10418
    %v10524 = vpack.c.bf16 %v10427, %v10419
    %v10525 = vpack.c.bf16 %v10436, %v10428
    %v10526 = vpack.c.bf16 %v10437, %v10429
    %v10527 = vpack.c.bf16 %v10438, %v10430
    %v10528 = vpack.c.bf16 %v10439, %v10431
    %v10529 = vpack.c.bf16 %v10440, %v10432
    %v10530 = vpack.c.bf16 %v10441, %v10433
    %v10531 = vpack.c.bf16 %v10442, %v10434
    %v10532 = vpack.c.bf16 %v10443, %v10435
    %v10533 = vpack.c.bf16 %v10452, %v10444
    %v10534 = vpack.c.bf16 %v10453, %v10445
    %v10535 = vpack.c.bf16 %v10454, %v10446
    %v10536 = vpack.c.bf16 %v10455, %v10447
    %v10537 = vpack.c.bf16 %v10456, %v10448
    %v10538 = vpack.c.bf16 %v10457, %v10449
    %v10539 = vpack.c.bf16 %v10458, %v10450
    %v10540 = vpack.c.bf16 %v10459, %v10451
    %v10541 = vpack.c.bf16 %v10468, %v10460
    %v10542 = vpack.c.bf16 %v10469, %v10461
    %v10543 = vpack.c.bf16 %v10470, %v10462
    %v10544 = vpack.c.bf16 %v10471, %v10463
    %v10545 = vpack.c.bf16 %v10472, %v10464
    %v10546 = vpack.c.bf16 %v10473, %v10465
    %v10547 = vpack.c.bf16 %v10474, %v10466
    %v10548 = vpack.c.bf16 %v10475, %v10467
    %v10549 = vpack.c.bf16 %v10484, %v10476
    %v10550 = vpack.c.bf16 %v10485, %v10477
    %v10551 = vpack.c.bf16 %v10486, %v10478
    %v10552 = vpack.c.bf16 %v10487, %v10479
    %v10553 = vpack.c.bf16 %v10488, %v10480
    %v10554 = vpack.c.bf16 %v10489, %v10481
    %v10555 = vpack.c.bf16 %v10490, %v10482
    %v10556 = vpack.c.bf16 %v10491, %v10483
    %v10557 = vld [vmem:[%s6] sm:$0x7]
    %10559 = vset.pattern.permute.xlu0 0
    %10560 = vperm.xlu0 %10559, %v10557
    %v10561 = vpop.permute.xlu0 %10560
    %10563 = vmatpush.bf16.msra.mxu0 %v10549
    %10564 = vmatpush.bf16.msra.mxu0 %v10541
    %10565 = vmatpush.bf16.msra.mxu0 %v10533
    %10566 = vmatpush.bf16.msra.mxu0 %v10525
    %10567 = vmatpush.bf16.msra.mxu0 %v10517
    %10568 = vmatpush.bf16.msra.mxu0 %v10509
    %10569 = vmatpush.bf16.msra.mxu0 %v10501
    %10570 = vmatpush.bf16.msra.mxu0 %v10493
    %10571 = vmatmul.bf16.gmra.mxu0 %v10492
    %v10572 = vpop.f32.mrf.mxu0
    %v10573 = vadd.f32 %v10561, %v10572
    %v10574 = vpop.f32.mrf.mxu0
    %10575 = vdwg.mxu0
    %10576 = vmatpush.bf16.msra.mxu0 %v10550
    %10577 = vmatpush.bf16.msra.mxu0 %v10542
    %10578 = vmatpush.bf16.msra.mxu0 %v10534
    %10579 = vmatpush.bf16.msra.mxu0 %v10526
    %10580 = vmatpush.bf16.msra.mxu0 %v10518
    %10581 = vmatpush.bf16.msra.mxu0 %v10510
    %10582 = vmatpush.bf16.msra.mxu0 %v10502
    %10583 = vmatpush.bf16.msra.mxu0 %v10494
    %10584 = vmatmul.bf16.gmra.mxu0 %v10492
    %v10585 = vpop.f32.mrf.mxu0
    %v10586 = vadd.f32 %v10561, %v10585
    %v10587 = vpop.f32.mrf.mxu0
    %10588 = vdwg.mxu0
    %10589 = vmatpush.bf16.msra.mxu0 %v10551
    %10590 = vmatpush.bf16.msra.mxu0 %v10543
    %10591 = vmatpush.bf16.msra.mxu0 %v10535
    %10592 = vmatpush.bf16.msra.mxu0 %v10527
    %10593 = vmatpush.bf16.msra.mxu0 %v10519
    %10594 = vmatpush.bf16.msra.mxu0 %v10511
    %10595 = vmatpush.bf16.msra.mxu0 %v10503
    %10596 = vmatpush.bf16.msra.mxu0 %v10495
    %10597 = vmatmul.bf16.gmra.mxu0 %v10492
    %v10598 = vpop.f32.mrf.mxu0
    %v10599 = vadd.f32 %v10561, %v10598
    %v10600 = vpop.f32.mrf.mxu0
    %10601 = vdwg.mxu0
    %10602 = vmatpush.bf16.msra.mxu0 %v10552
    %10603 = vmatpush.bf16.msra.mxu0 %v10544
    %10604 = vmatpush.bf16.msra.mxu0 %v10536
    %10605 = vmatpush.bf16.msra.mxu0 %v10528
    %10606 = vmatpush.bf16.msra.mxu0 %v10520
    %10607 = vmatpush.bf16.msra.mxu0 %v10512
    %10608 = vmatpush.bf16.msra.mxu0 %v10504
    %10609 = vmatpush.bf16.msra.mxu0 %v10496
    %10610 = vmatmul.bf16.gmra.mxu0 %v10492
    %v10611 = vpop.f32.mrf.mxu0
    %v10612 = vadd.f32 %v10561, %v10611
    %v10613 = vpop.f32.mrf.mxu0
    %10614 = vdwg.mxu0
    %10615 = vmatpush.bf16.msra.mxu0 %v10553
    %10616 = vmatpush.bf16.msra.mxu0 %v10545
    %10617 = vmatpush.bf16.msra.mxu0 %v10537
    %10618 = vmatpush.bf16.msra.mxu0 %v10529
    %10619 = vmatpush.bf16.msra.mxu0 %v10521
    %10620 = vmatpush.bf16.msra.mxu0 %v10513
    %10621 = vmatpush.bf16.msra.mxu0 %v10505
    %10622 = vmatpush.bf16.msra.mxu0 %v10497
    %10623 = vmatmul.bf16.gmra.mxu0 %v10492
    %v10624 = vpop.f32.mrf.mxu0
    %v10625 = vadd.f32 %v10561, %v10624
    %v10626 = vpop.f32.mrf.mxu0
    %10627 = vdwg.mxu0
    %10628 = vmatpush.bf16.msra.mxu0 %v10554
    %10629 = vmatpush.bf16.msra.mxu0 %v10546
    %10630 = vmatpush.bf16.msra.mxu0 %v10538
    %10631 = vmatpush.bf16.msra.mxu0 %v10530
    %10632 = vmatpush.bf16.msra.mxu0 %v10522
    %10633 = vmatpush.bf16.msra.mxu0 %v10514
    %10634 = vmatpush.bf16.msra.mxu0 %v10506
    %10635 = vmatpush.bf16.msra.mxu0 %v10498
    %10636 = vmatmul.bf16.gmra.mxu0 %v10492
    %v10637 = vpop.f32.mrf.mxu0
    %v10638 = vadd.f32 %v10561, %v10637
    %v10639 = vpop.f32.mrf.mxu0
    %10640 = vdwg.mxu0
    %10641 = vmatpush.bf16.msra.mxu0 %v10555
    %10642 = vmatpush.bf16.msra.mxu0 %v10547
    %10643 = vmatpush.bf16.msra.mxu0 %v10539
    %10644 = vmatpush.bf16.msra.mxu0 %v10531
    %10645 = vmatpush.bf16.msra.mxu0 %v10523
    %10646 = vmatpush.bf16.msra.mxu0 %v10515
    %10647 = vmatpush.bf16.msra.mxu0 %v10507
    %10648 = vmatpush.bf16.msra.mxu0 %v10499
    %10649 = vmatmul.bf16.gmra.mxu0 %v10492
    %v10650 = vpop.f32.mrf.mxu0
    %v10651 = vadd.f32 %v10561, %v10650
    %v10652 = vpop.f32.mrf.mxu0
    %10653 = vdwg.mxu0
    %10654 = vmatpush.bf16.msra.mxu0 %v10556
    %10655 = vmatpush.bf16.msra.mxu0 %v10548
    %10656 = vmatpush.bf16.msra.mxu0 %v10540
    %10657 = vmatpush.bf16.msra.mxu0 %v10532
    %10658 = vmatpush.bf16.msra.mxu0 %v10524
    %10659 = vmatpush.bf16.msra.mxu0 %v10516
    %10660 = vmatpush.bf16.msra.mxu0 %v10508
    %10661 = vmatpush.bf16.msra.mxu0 %v10500
    %10662 = vmatmul.bf16.gmra.mxu0 %v10492
    %v10663 = vpop.f32.mrf.mxu0
    %v10664 = vadd.f32 %v10561, %v10663
    %v10665 = vpop.f32.mrf.mxu0
    %10666 = vdwg.mxu0
    %v10675 = vrot.slane %v10586, 4
    %v10676 = vrot.slane %v10612, 4
    %v10677 = vrot.slane %v10638, 4
    %v10678 = vrot.slane %v10664, 4
    %vm10679 = vcmask 1043456
    %v10680 = vsel %vm10679, %v10573, %v10675
    %v10681 = vsel %vm10679, %v10599, %v10676
    %v10682 = vsel %vm10679, %v10625, %v10677
    %v10683 = vsel %vm10679, %v10651, %v10678
    %10688 = vst [vmem:[#allocation2] sm:$0x77] %v10680
    %10689 = vst [vmem:[#allocation2 + $0x8] sm:$0x77] %v10681
    %10690 = vst [vmem:[#allocation2 + $0x10] sm:$0x77] %v10682
    %10691 = vst [vmem:[#allocation2 + $0x18] sm:$0x77] %v10683
    // Predicated region
    $region30: #{tpu_custom_call.1} parent=1 // pred_check
      _
    $region31: #{tpu_custom_call.1} parent=1 // pred_check_branch
      %10693 = sbr.rel (0) target = $region33
    $region32: #{tpu_custom_call.1} parent=1 // pred_region
      %10695 = vsyncadd [#allocation3], 0
      %s10697 = sshll.u32 [#allocation2], 4
      %s10698 = int_to_ptr.vmem [resolvable:$true] %s10697
      %s10699 = sshll.u32 %s7, 4
      %s10700 = int_to_ptr.hbm [resolvable:$true] %s10699
      %10702 = dma.vmem_to_hbm [thread:$0]  %s10698, 512, %s10700, [#allocation3]
    $region33: #{tpu_custom_call.1} parent=1 // pred_fallthru
      _
    // Predicated region
    $region34: #{tpu_custom_call.1} parent=1 // pred_check
      _
    $region35: #{tpu_custom_call.1} parent=1 // pred_check_branch
      %10704 = sbr.rel (0) target = $region37
    $region36: #{tpu_custom_call.1} parent=1 // pred_region
      %10706 = dma.done [#allocation3], 512
    $region37: #{tpu_custom_call.1} parent=1 // pred_fallthru
      _
    %10707 = vsyncpa [#allocation3], 1

</llo_original>
